<compile_context>
chip_gen: v7x
topology: tpu7x:2x2x1
jax: 0.10.0
libtpu: 0.0.40
codegen_flags: <defaults>
</compile_context>

<pallas_src>
import functools

import jax
import jax.numpy as jnp
from jax.experimental import pallas as pl
from jax.experimental.pallas import tpu as pltpu

_HIGHEST = jax.lax.Precision.HIGHEST   # used only by the pure-JAX reference
_MARGIN = 128                          # lane-tile aligned zero margin of the flat buffers
_LANE = 128


# ----------------------------- helpers ------------------------------------- #

def _interp_matrix_align_corners(n_out, n_in):
    """(n_out, n_in) bilinear interpolation matrix, PyTorch align_corners=True."""
    src = jnp.arange(n_out, dtype=jnp.float32) * ((n_in - 1) / (n_out - 1))
    i0f = jnp.clip(jnp.floor(src), 0.0, n_in - 1)
    frac = src - i0f
    i0 = i0f.astype(jnp.int32)
    i1 = jnp.minimum(i0 + 1, n_in - 1)
    rows = jnp.arange(n_out)
    a = jnp.zeros((n_out, n_in), jnp.float32)
    a = a.at[rows, i0].add(1.0 - frac)
    a = a.at[rows, i1].add(frac)
    return a


def _conv3x3_accum(w_ref, src_buf, cout, pp, offs):
    """3x3 conv as 9 shallow-K MXU matmuls on shifted slices of a flat buffer.

    w_ref  : (9*Cout, Cin) bf16, tap-major rows
    src_buf: (Cin, MARGIN + PP + MARGIN) bf16 flat padded plane
    returns: (Cout, PP) f32 accumulator
    """
    acc = None
    for t, off in enumerate(offs):
        s = _MARGIN + off
        part = jnp.dot(w_ref[t * cout:(t + 1) * cout, :],
                       src_buf[:, s:s + pp],
                       preferred_element_type=jnp.float32)
        acc = part if acc is None else acc + part
    return acc


# ------------------------------ kernel ------------------------------------- #

def decoder_up_kernel(x_ref, mup_ref, w1_ref, s1_ref, b1_ref,
                      w2_ref, s2_ref, b2_ref, mask_ref,
                      o_ref, up_buf, a1_buf, *, wp):
    """One batch element per grid step, everything VMEM-resident.

    x_ref   : (1, Cin, Hin*Win) f32     flattened NCHW input slab
    mup_ref : (Hin*Win, PP)    bf16     padded bilinear upsample map (PP lane-padded)
    w*_ref  : (9*Cout, Cin*)   bf16     tap-major conv weights (rows t*Cout:(t+1)*Cout)
    s*/b*   : (Cout, 1)        f32      folded BN scale / bias (incl. conv bias)
    mask_ref: (1, PP)          f32      1.0 at interior pixels, 0.0 on pad ring / tail
    o_ref   : (1, Cout, PP)    f32      padded-flat output (ring/tail sliced off outside)
    """
    cin = x_ref.shape[1]
    cout = s1_ref.shape[0]
    pp = mask_ref.shape[1]
    # 3x3 tap offsets in flattened padded (Hp, Wp) coordinates, tap-major order.
    offs = [(dy - 1) * wp + (dx - 1) for dy in range(3) for dx in range(3)]

    # Zero ONLY the 128-lane margins (interior lanes are fully overwritten below);
    # done every step so the invariant holds per-core under megacore "parallel".
    up_buf[:, :_MARGIN] = jnp.zeros((cin, _MARGIN), jnp.bfloat16)
    up_buf[:, _MARGIN + pp:] = jnp.zeros((cin, _MARGIN), jnp.bfloat16)
    a1_buf[:, :_MARGIN] = jnp.zeros((cout, _MARGIN), jnp.bfloat16)
    a1_buf[:, _MARGIN + pp:] = jnp.zeros((cout, _MARGIN), jnp.bfloat16)

    # ---- bilinear x2 upsample + zero padding fused into one matmul (bf16 MXU) ----
    x = x_ref[0].astype(jnp.bfloat16)                               # (Cin, Hin*Win)
    up = jnp.dot(x, mup_ref[...], preferred_element_type=jnp.float32)   # (Cin, PP)
    up_buf[:, _MARGIN:_MARGIN + pp] = up.astype(jnp.bfloat16)

    # ---- conv1 (3x3, pad 1) + folded BN + ReLU: 9 accumulated shallow matmuls ----
    y1 = _conv3x3_accum(w1_ref, up_buf, cout, pp, offs)             # (Cout, PP) f32
    # mask re-zeroes the pad ring / dead tail (ReLU(bias) would otherwise pollute
    # the padding seen by conv2).
    y1 = jnp.maximum(y1 * s1_ref[...] + b1_ref[...], 0.0) * mask_ref[...]
    a1_buf[:, _MARGIN:_MARGIN + pp] = y1.astype(jnp.bfloat16)

    # ---- conv2 (3x3, pad 1) + folded BN + ReLU ----
    y2 = _conv3x3_accum(w2_ref, a1_buf, cout, pp, offs)             # (Cout, PP) f32
    o_ref[0] = jnp.maximum(y2 * s2_ref[...] + b2_ref[...], 0.0)


# ------------------------------ wrapper ------------------------------------ #

@jax.jit
def decoder_up_forward(x_nchw, params):
    n, cin, hin, win = x_nchw.shape
    cout = params["w1"].shape[0]
    hout, wout = 2 * hin, 2 * win
    hp, wp = hout + 2, wout + 2
    p = hp * wp                                   # 1156 for 16x16 input
    p_pad = ((p + _LANE - 1) // _LANE) * _LANE    # 1280: lane-dense plane width
    pw = p_pad + 2 * _MARGIN

    # Shape-only constants (built once per call on tiny arrays).
    a_h = _interp_matrix_align_corners(hout, hin)                   # (Hout, Hin)
    a_w = _interp_matrix_align_corners(wout, win)                   # (Wout, Win)
    a_hp = jnp.pad(a_h, ((1, 1), (0, 0)))                           # zero pad rows
    a_wp = jnp.pad(a_w, ((1, 1), (0, 0)))
    # mup[p*Win+q, i*Wp+j] = a_hp[i,p] * a_wp[j,q]  -> upsample + zero-pad in one map
    # NOTE: O((H*W)^2); fine at this size, make separable / gate before scaling up.
    mup = jnp.einsum("ip,jq->pqij", a_hp, a_wp).reshape(hin * win, p)
    mup = jnp.pad(mup, ((0, 0), (0, p_pad - p))).astype(jnp.bfloat16)
    mask = jnp.zeros((hp, wp), jnp.float32).at[1:-1, 1:-1].set(1.0).reshape(1, p)
    mask = jnp.pad(mask, ((0, 0), (0, p_pad - p)))

    # Tap-major weights: rows [t*Cout:(t+1)*Cout] = W[:, :, dy, dx] (t = 3*dy + dx).
    w1m = jnp.transpose(params["w1"], (2, 3, 0, 1)).reshape(9 * cout, cin).astype(jnp.bfloat16)
    w2m = jnp.transpose(params["w2"], (2, 3, 0, 1)).reshape(9 * cout, cout).astype(jnp.bfloat16)
    s1 = params["scale1"].reshape(cout, 1)
    b1 = params["bias1"].reshape(cout, 1)
    s2 = params["scale2"].reshape(cout, 1)
    b2 = params["bias2"].reshape(cout, 1)

    xflat = x_nchw.reshape(n, cin, hin * win)

    flops = int(2 * n * (cin * hin * win + 9 * cin * cout + 9 * cout * cout) * p_pad)
    bytes_accessed = int(xflat.size * 4 + n * cout * p_pad * 4
                         + mup.size * 2 + (w1m.size + w2m.size) * 2
                         + mask.size * 4 + 4 * cout * 4)

    kernel = functools.partial(decoder_up_kernel, wp=wp)
    out_flat = pl.pallas_call(
        kernel,
        out_shape=jax.ShapeDtypeStruct((n, cout, p_pad), jnp.float32),
        grid_spec=pltpu.PrefetchScalarGridSpec(
            num_scalar_prefetch=0,
            grid=(n,),
            in_specs=[
                pl.BlockSpec((1, cin, hin * win), lambda b: (b, 0, 0)),
                pl.BlockSpec((hin * win, p_pad), lambda b: (0, 0)),
                pl.BlockSpec((9 * cout, cin), lambda b: (0, 0)),
                pl.BlockSpec((cout, 1), lambda b: (0, 0)),
                pl.BlockSpec((cout, 1), lambda b: (0, 0)),
                pl.BlockSpec((9 * cout, cout), lambda b: (0, 0)),
                pl.BlockSpec((cout, 1), lambda b: (0, 0)),
                pl.BlockSpec((cout, 1), lambda b: (0, 0)),
                pl.BlockSpec((1, p_pad), lambda b: (0, 0)),
            ],
            out_specs=pl.BlockSpec((1, cout, p_pad), lambda b: (b, 0, 0)),
            scratch_shapes=[
                pltpu.VMEM((cin, pw), jnp.bfloat16),    # padded-flat upsampled plane
                pltpu.VMEM((cout, pw), jnp.bfloat16),   # padded-flat conv1 activation
            ],
        ),
        compiler_params=pltpu.CompilerParams(dimension_semantics=("parallel",)),
        cost_estimate=pl.CostEstimate(flops=flops, transcendentals=0,
                                      bytes_accessed=bytes_accessed),
    )(xflat, mup, w1m, s1, b1, w2m, s2, b2, mask)

    # Drop the dead tail lanes and the zero-pad ring; output is NCHW like PyTorch.
    return out_flat[:, :, :p].reshape(n, cout, hp, wp)[:, :, 1:-1, 1:-1]


# ------------------------ params & pure-JAX reference ---------------------- #

def init_params(key, in_channel, out_channel):
    eps = 1e-5
    keys = iter(jax.random.split(key, 16))

    def conv_bn(cin, cout):
        w = 0.1 * jax.random.normal(next(keys), (cout, cin, 3, 3), jnp.float32)
        b = 0.05 * jax.random.normal(next(keys), (cout,), jnp.float32)
        gamma = 1.0 + 0.1 * jax.random.normal(next(keys), (cout,), jnp.float32)
        beta = 0.1 * jax.random.normal(next(keys), (cout,), jnp.float32)
        rmean = 0.1 * jax.random.normal(next(keys), (cout,), jnp.float32)
        rvar = 1.0 + 0.1 * jnp.abs(jax.random.normal(next(keys), (cout,), jnp.float32))
        # fold eval-mode BN (and conv bias) into per-channel scale / bias
        scale = gamma / jnp.sqrt(rvar + eps)
        bias = (b - rmean) * scale + beta
        return w, scale, bias

    w1, s1, b1 = conv_bn(in_channel, out_channel)
    w2, s2, b2 = conv_bn(out_channel, out_channel)
    return {"w1": w1, "scale1": s1, "bias1": b1,
            "w2": w2, "scale2": s2, "bias2": b2}


def ref_forward(x, params):
    n, cin, hin, win = x.shape
    a_h = _interp_matrix_align_corners(2 * hin, hin)
    a_w = _interp_matrix_align_corners(2 * win, win)
    up = jnp.einsum("ih,nchw->nciw", a_h, x, precision=_HIGHEST)
    up = jnp.einsum("jw,nciw->ncij", a_w, up, precision=_HIGHEST)

    def conv_bn_relu(z, w, scale, bias):
        y = jax.lax.conv_general_dilated(
            z, w, window_strides=(1, 1), padding=((1, 1), (1, 1)),
            dimension_numbers=("NCHW", "OIHW", "NCHW"), precision=_HIGHEST)
        return jnp.maximum(
            y * scale[None, :, None, None] + bias[None, :, None, None], 0.0)

    z = conv_bn_relu(up, params["w1"], params["scale1"], params["bias1"])
    z = conv_bn_relu(z, params["w2"], params["scale2"], params["bias2"])
    return z


# --------------------------------- main ------------------------------------ #

if __name__ == "__main__":
    key = jax.random.PRNGKey(0)
    k_x, k_p = jax.random.split(key)

    N, Cin, Cout, H, W = 2, 32, 16, 16, 16        # decoder block: 32 -> 16 channels
    x = jax.random.normal(k_x, (N, Cin, H, W), jnp.float32)   # NCHW
    params = init_params(k_p, Cin, Cout)

    out = jax.block_until_ready(decoder_up_forward(x, params))
    assert out.shape == (N, Cout, 2 * H, 2 * W), out.shape

    # Kernel runs the matmuls in a single bf16 MXU pass (f32 accumulation); the
    # reference is f32-exact, so the tolerance is relaxed vs. the old HIGHEST path.
    ref = ref_forward(x, params)
    if not jnp.allclose(out, ref, atol=5e-2, rtol=5e-2):
        err = float(jnp.max(jnp.abs(out - ref)))
        raise AssertionError(f"mismatch vs reference, max abs err = {err}")

    print("KERNEL_OK")
</pallas_src>

<mosaic_0001>
module attributes {stable_mosaic.version = 11 : i64} {
  func.func private @main(%arg0: i32) attributes {dimension_semantics = [#tpu.dimension_semantics<core_parallel>], iteration_bounds = array<i64: 2>, tpu.core_type = #tpu.core_type<sc_scalar_subcore>, window_params = []} {
    return
  }
}

module attributes {stable_mosaic.version = 11 : i64} {
  func.func private @main(%arg0: i32) attributes {dimension_semantics = [#tpu.dimension_semantics<core_parallel>], iteration_bounds = array<i64: 2>, tpu.core_type = #tpu.core_type<sc_scalar_subcore>, window_params = []} {
    return
  }
}

module attributes {stable_mosaic.version = 11 : i64} {
  func.func @decoder_up_kernel(%arg0: i32, %arg1: memref<1x32x256xf32, #tpu.memory_space<vmem>>, %arg2: memref<256x1280xbf16, #tpu.memory_space<vmem>>, %arg3: memref<144x32xbf16, #tpu.memory_space<vmem>>, %arg4: memref<16x1xf32, #tpu.memory_space<vmem>>, %arg5: memref<16x1xf32, #tpu.memory_space<vmem>>, %arg6: memref<144x16xbf16, #tpu.memory_space<vmem>>, %arg7: memref<16x1xf32, #tpu.memory_space<vmem>>, %arg8: memref<16x1xf32, #tpu.memory_space<vmem>>, %arg9: memref<1x1280xf32, #tpu.memory_space<vmem>>, %arg10: memref<1x16x1280xf32, #tpu.memory_space<vmem>>, %arg11: memref<32x1536xbf16, #tpu.memory_space<vmem>>, %arg12: memref<16x1536xbf16, #tpu.memory_space<vmem>>) attributes {dimension_semantics = [#tpu.dimension_semantics<parallel>], iteration_bounds = array<i64: 2>, scalar_prefetch = 0 : i64, scratch_operands = 2 : i64, tpu.core_type = #tpu.core_type<tc>, window_params = [{transform_indices = @transform_0, window_bounds = array<i64: 1, 32, 256>}, {pipeline_mode = #tpu.pipeline_mode<synchronous>, transform_indices = @transform_1, window_bounds = array<i64: 256, 1280>}, {pipeline_mode = #tpu.pipeline_mode<synchronous>, transform_indices = @transform_2, window_bounds = array<i64: 144, 32>}, {pipeline_mode = #tpu.pipeline_mode<synchronous>, transform_indices = @transform_3, window_bounds = array<i64: 16, 1>}, {pipeline_mode = #tpu.pipeline_mode<synchronous>, transform_indices = @transform_4, window_bounds = array<i64: 16, 1>}, {pipeline_mode = #tpu.pipeline_mode<synchronous>, transform_indices = @transform_5, window_bounds = array<i64: 144, 16>}, {pipeline_mode = #tpu.pipeline_mode<synchronous>, transform_indices = @transform_6, window_bounds = array<i64: 16, 1>}, {pipeline_mode = #tpu.pipeline_mode<synchronous>, transform_indices = @transform_7, window_bounds = array<i64: 16, 1>}, {pipeline_mode = #tpu.pipeline_mode<synchronous>, transform_indices = @transform_8, window_bounds = array<i64: 1, 1280>}, {transform_indices = @transform_9, window_bounds = array<i64: 1, 16, 1280>}]} {
    %cst = arith.constant 0.000000e+00 : bf16
    %0 = vector.broadcast %cst : bf16 to vector<32x128xbf16>
    %c0 = arith.constant 0 : index
    %c0_0 = arith.constant 0 : index
    %1 = vector.load %arg11[%c0, %c0_0] : memref<32x1536xbf16, #tpu.memory_space<vmem>>, vector<32x128xbf16>
    tpu.vector_store %arg11[%c0, %c0_0], %0 {strides = array<i32>} : memref<32x1536xbf16, #tpu.memory_space<vmem>>, vector<32x128xbf16>,
    %cst_1 = arith.constant 0.000000e+00 : bf16
    %2 = vector.broadcast %cst_1 : bf16 to vector<32x128xbf16>
    %c0_2 = arith.constant 0 : index
    %c1408 = arith.constant 1408 : index
    %3 = vector.load %arg11[%c0_2, %c1408] : memref<32x1536xbf16, #tpu.memory_space<vmem>>, vector<32x128xbf16>
    tpu.vector_store %arg11[%c0_2, %c1408], %2 {strides = array<i32>} : memref<32x1536xbf16, #tpu.memory_space<vmem>>, vector<32x128xbf16>,
    %cst_3 = arith.constant 0.000000e+00 : bf16
    %4 = vector.broadcast %cst_3 : bf16 to vector<16x128xbf16>
    %c0_4 = arith.constant 0 : index
    %c0_5 = arith.constant 0 : index
    %5 = vector.load %arg12[%c0_4, %c0_5] : memref<16x1536xbf16, #tpu.memory_space<vmem>>, vector<16x128xbf16>
    tpu.vector_store %arg12[%c0_4, %c0_5], %4 {strides = array<i32>} : memref<16x1536xbf16, #tpu.memory_space<vmem>>, vector<16x128xbf16>,
    %cst_6 = arith.constant 0.000000e+00 : bf16
    %6 = vector.broadcast %cst_6 : bf16 to vector<16x128xbf16>
    %c0_7 = arith.constant 0 : index
    %c1408_8 = arith.constant 1408 : index
    %7 = vector.load %arg12[%c0_7, %c1408_8] : memref<16x1536xbf16, #tpu.memory_space<vmem>>, vector<16x128xbf16>
    tpu.vector_store %arg12[%c0_7, %c1408_8], %6 {strides = array<i32>} : memref<16x1536xbf16, #tpu.memory_space<vmem>>, vector<16x128xbf16>,
    %c0_9 = arith.constant 0 : index
    %c0_10 = arith.constant 0 : index
    %c0_11 = arith.constant 0 : index
    %8 = vector.load %arg1[%c0_9, %c0_10, %c0_11] : memref<1x32x256xf32, #tpu.memory_space<vmem>>, vector<1x32x256xf32>
    %9 = vector.shape_cast %8 : vector<1x32x256xf32> to vector<32x256xf32>
    %10 = arith.truncf %9 : vector<32x256xf32> to vector<32x256xbf16>
    %c0_12 = arith.constant 0 : index
    %c0_13 = arith.constant 0 : index
    %11 = vector.load %arg2[%c0_12, %c0_13] : memref<256x1280xbf16, #tpu.memory_space<vmem>>, vector<256x1280xbf16>
    %cst_14 = arith.constant dense<0.000000e+00> : vector<32x1280xf32>
    %12 = tpu.matmul %10, %11, %cst_14 {dimension_numbers = #tpu.dot_dimension_numbers<[1], [0], [0], [1], [0, 0, 1, 1], [], []>} : vector<32x256xbf16>, vector<256x1280xbf16>, vector<32x1280xf32> -> vector<32x1280xf32>
    %13 = arith.truncf %12 : vector<32x1280xf32> to vector<32x1280xbf16>
    %c0_15 = arith.constant 0 : index
    %c128 = arith.constant 128 : index
    %14 = vector.load %arg11[%c0_15, %c128] : memref<32x1536xbf16, #tpu.memory_space<vmem>>, vector<32x1280xbf16>
    tpu.vector_store %arg11[%c0_15, %c128], %13 {strides = array<i32>} : memref<32x1536xbf16, #tpu.memory_space<vmem>>, vector<32x1280xbf16>,
    %c0_16 = arith.constant 0 : index
    %c0_17 = arith.constant 0 : index
    %15 = vector.load %arg3[%c0_16, %c0_17] : memref<144x32xbf16, #tpu.memory_space<vmem>>, vector<16x32xbf16>
    %c0_18 = arith.constant 0 : index
    %c93 = arith.constant 93 : index
    %16 = vector.load %arg11[%c0_18, %c93] : memref<32x1536xbf16, #tpu.memory_space<vmem>>, vector<32x1280xbf16>
    %cst_19 = arith.constant dense<0.000000e+00> : vector<16x1280xf32>
    %17 = tpu.matmul %15, %16, %cst_19 {dimension_numbers = #tpu.dot_dimension_numbers<[1], [0], [0], [1], [0, 0, 1, 1], [], []>} : vector<16x32xbf16>, vector<32x1280xbf16>, vector<16x1280xf32> -> vector<16x1280xf32>
    %c16 = arith.constant 16 : index
    %c0_20 = arith.constant 0 : index
    %18 = vector.load %arg3[%c16, %c0_20] : memref<144x32xbf16, #tpu.memory_space<vmem>>, vector<16x32xbf16>
    %c0_21 = arith.constant 0 : index
    %c94 = arith.constant 94 : index
    %19 = vector.load %arg11[%c0_21, %c94] : memref<32x1536xbf16, #tpu.memory_space<vmem>>, vector<32x1280xbf16>
    %cst_22 = arith.constant dense<0.000000e+00> : vector<16x1280xf32>
    %20 = tpu.matmul %18, %19, %cst_22 {dimension_numbers = #tpu.dot_dimension_numbers<[1], [0], [0], [1], [0, 0, 1, 1], [], []>} : vector<16x32xbf16>, vector<32x1280xbf16>, vector<16x1280xf32> -> vector<16x1280xf32>
    %21 = arith.addf %17, %20 : vector<16x1280xf32>
    %c32 = arith.constant 32 : index
    %c0_23 = arith.constant 0 : index
    %22 = vector.load %arg3[%c32, %c0_23] : memref<144x32xbf16, #tpu.memory_space<vmem>>, vector<16x32xbf16>
    %c0_24 = arith.constant 0 : index
    %c95 = arith.constant 95 : index
    %23 = vector.load %arg11[%c0_24, %c95] : memref<32x1536xbf16, #tpu.memory_space<vmem>>, vector<32x1280xbf16>
    %cst_25 = arith.constant dense<0.000000e+00> : vector<16x1280xf32>
    %24 = tpu.matmul %22, %23, %cst_25 {dimension_numbers = #tpu.dot_dimension_numbers<[1], [0], [0], [1], [0, 0, 1, 1], [], []>} : vector<16x32xbf16>, vector<32x1280xbf16>, vector<16x1280xf32> -> vector<16x1280xf32>
    %25 = arith.addf %21, %24 : vector<16x1280xf32>
    %c48 = arith.constant 48 : index
    %c0_26 = arith.constant 0 : index
    %26 = vector.load %arg3[%c48, %c0_26] : memref<144x32xbf16, #tpu.memory_space<vmem>>, vector<16x32xbf16>
    %c0_27 = arith.constant 0 : index
    %c127 = arith.constant 127 : index
    %27 = vector.load %arg11[%c0_27, %c127] : memref<32x1536xbf16, #tpu.memory_space<vmem>>, vector<32x1280xbf16>
    %cst_28 = arith.constant dense<0.000000e+00> : vector<16x1280xf32>
    %28 = tpu.matmul %26, %27, %cst_28 {dimension_numbers = #tpu.dot_dimension_numbers<[1], [0], [0], [1], [0, 0, 1, 1], [], []>} : vector<16x32xbf16>, vector<32x1280xbf16>, vector<16x1280xf32> -> vector<16x1280xf32>
    %29 = arith.addf %25, %28 : vector<16x1280xf32>
    %c64 = arith.constant 64 : index
    %c0_29 = arith.constant 0 : index
    %30 = vector.load %arg3[%c64, %c0_29] : memref<144x32xbf16, #tpu.memory_space<vmem>>, vector<16x32xbf16>
    %c0_30 = arith.constant 0 : index
    %c128_31 = arith.constant 128 : index
    %31 = vector.load %arg11[%c0_30, %c128_31] : memref<32x1536xbf16, #tpu.memory_space<vmem>>, vector<32x1280xbf16>
    %cst_32 = arith.constant dense<0.000000e+00> : vector<16x1280xf32>
    %32 = tpu.matmul %30, %31, %cst_32 {dimension_numbers = #tpu.dot_dimension_numbers<[1], [0], [0], [1], [0, 0, 1, 1], [], []>} : vector<16x32xbf16>, vector<32x1280xbf16>, vector<16x1280xf32> -> vector<16x1280xf32>
    %33 = arith.addf %29, %32 : vector<16x1280xf32>
    %c80 = arith.constant 80 : index
    %c0_33 = arith.constant 0 : index
    %34 = vector.load %arg3[%c80, %c0_33] : memref<144x32xbf16, #tpu.memory_space<vmem>>, vector<16x32xbf16>
    %c0_34 = arith.constant 0 : index
    %c129 = arith.constant 129 : index
    %35 = vector.load %arg11[%c0_34, %c129] : memref<32x1536xbf16, #tpu.memory_space<vmem>>, vector<32x1280xbf16>
    %cst_35 = arith.constant dense<0.000000e+00> : vector<16x1280xf32>
    %36 = tpu.matmul %34, %35, %cst_35 {dimension_numbers = #tpu.dot_dimension_numbers<[1], [0], [0], [1], [0, 0, 1, 1], [], []>} : vector<16x32xbf16>, vector<32x1280xbf16>, vector<16x1280xf32> -> vector<16x1280xf32>
    %37 = arith.addf %33, %36 : vector<16x1280xf32>
    %c96 = arith.constant 96 : index
    %c0_36 = arith.constant 0 : index
    %38 = vector.load %arg3[%c96, %c0_36] : memref<144x32xbf16, #tpu.memory_space<vmem>>, vector<16x32xbf16>
    %c0_37 = arith.constant 0 : index
    %c161 = arith.constant 161 : index
    %39 = vector.load %arg11[%c0_37, %c161] : memref<32x1536xbf16, #tpu.memory_space<vmem>>, vector<32x1280xbf16>
    %cst_38 = arith.constant dense<0.000000e+00> : vector<16x1280xf32>
    %40 = tpu.matmul %38, %39, %cst_38 {dimension_numbers = #tpu.dot_dimension_numbers<[1], [0], [0], [1], [0, 0, 1, 1], [], []>} : vector<16x32xbf16>, vector<32x1280xbf16>, vector<16x1280xf32> -> vector<16x1280xf32>
    %41 = arith.addf %37, %40 : vector<16x1280xf32>
    %c112 = arith.constant 112 : index
    %c0_39 = arith.constant 0 : index
    %42 = vector.load %arg3[%c112, %c0_39] : memref<144x32xbf16, #tpu.memory_space<vmem>>, vector<16x32xbf16>
    %c0_40 = arith.constant 0 : index
    %c162 = arith.constant 162 : index
    %43 = vector.load %arg11[%c0_40, %c162] : memref<32x1536xbf16, #tpu.memory_space<vmem>>, vector<32x1280xbf16>
    %cst_41 = arith.constant dense<0.000000e+00> : vector<16x1280xf32>
    %44 = tpu.matmul %42, %43, %cst_41 {dimension_numbers = #tpu.dot_dimension_numbers<[1], [0], [0], [1], [0, 0, 1, 1], [], []>} : vector<16x32xbf16>, vector<32x1280xbf16>, vector<16x1280xf32> -> vector<16x1280xf32>
    %45 = arith.addf %41, %44 : vector<16x1280xf32>
    %c128_42 = arith.constant 128 : index
    %c0_43 = arith.constant 0 : index
    %46 = vector.load %arg3[%c128_42, %c0_43] : memref<144x32xbf16, #tpu.memory_space<vmem>>, vector<16x32xbf16>
    %c0_44 = arith.constant 0 : index
    %c163 = arith.constant 163 : index
    %47 = vector.load %arg11[%c0_44, %c163] : memref<32x1536xbf16, #tpu.memory_space<vmem>>, vector<32x1280xbf16>
    %cst_45 = arith.constant dense<0.000000e+00> : vector<16x1280xf32>
    %48 = tpu.matmul %46, %47, %cst_45 {dimension_numbers = #tpu.dot_dimension_numbers<[1], [0], [0], [1], [0, 0, 1, 1], [], []>} : vector<16x32xbf16>, vector<32x1280xbf16>, vector<16x1280xf32> -> vector<16x1280xf32>
    %49 = arith.addf %45, %48 : vector<16x1280xf32>
    %c0_46 = arith.constant 0 : index
    %c0_47 = arith.constant 0 : index
    %50 = vector.load %arg4[%c0_46, %c0_47] : memref<16x1xf32, #tpu.memory_space<vmem>>, vector<16x1xf32>
    %51 = vector.broadcast %50 : vector<16x1xf32> to vector<16x1280xf32>
    %52 = arith.mulf %49, %51 : vector<16x1280xf32>
    %c0_48 = arith.constant 0 : index
    %c0_49 = arith.constant 0 : index
    %53 = vector.load %arg5[%c0_48, %c0_49] : memref<16x1xf32, #tpu.memory_space<vmem>>, vector<16x1xf32>
    %54 = vector.broadcast %53 : vector<16x1xf32> to vector<16x1280xf32>
    %55 = arith.addf %52, %54 : vector<16x1280xf32>
    %cst_50 = arith.constant 0.000000e+00 : f32
    %56 = vector.broadcast %cst_50 : f32 to vector<16x1280xf32>
    %57 = arith.maximumf %55, %56 : vector<16x1280xf32>
    %c0_51 = arith.constant 0 : index
    %c0_52 = arith.constant 0 : index
    %58 = vector.load %arg9[%c0_51, %c0_52] : memref<1x1280xf32, #tpu.memory_space<vmem>>, vector<1x1280xf32>
    %59 = vector.broadcast %58 : vector<1x1280xf32> to vector<16x1280xf32>
    %60 = arith.mulf %57, %59 : vector<16x1280xf32>
    %61 = arith.truncf %60 : vector<16x1280xf32> to vector<16x1280xbf16>
    %c0_53 = arith.constant 0 : index
    %c128_54 = arith.constant 128 : index
    %62 = vector.load %arg12[%c0_53, %c128_54] : memref<16x1536xbf16, #tpu.memory_space<vmem>>, vector<16x1280xbf16>
    tpu.vector_store %arg12[%c0_53, %c128_54], %61 {strides = array<i32>} : memref<16x1536xbf16, #tpu.memory_space<vmem>>, vector<16x1280xbf16>,
    %c0_55 = arith.constant 0 : index
    %c0_56 = arith.constant 0 : index
    %63 = vector.load %arg6[%c0_55, %c0_56] : memref<144x16xbf16, #tpu.memory_space<vmem>>, vector<16x16xbf16>
    %c0_57 = arith.constant 0 : index
    %c93_58 = arith.constant 93 : index
    %64 = vector.load %arg12[%c0_57, %c93_58] : memref<16x1536xbf16, #tpu.memory_space<vmem>>, vector<16x1280xbf16>
    %cst_59 = arith.constant dense<0.000000e+00> : vector<16x1280xf32>
    %65 = tpu.matmul %63, %64, %cst_59 {dimension_numbers = #tpu.dot_dimension_numbers<[1], [0], [0], [1], [0, 0, 1, 1], [], []>} : vector<16x16xbf16>, vector<16x1280xbf16>, vector<16x1280xf32> -> vector<16x1280xf32>
    %c16_60 = arith.constant 16 : index
    %c0_61 = arith.constant 0 : index
    %66 = vector.load %arg6[%c16_60, %c0_61] : memref<144x16xbf16, #tpu.memory_space<vmem>>, vector<16x16xbf16>
    %c0_62 = arith.constant 0 : index
    %c94_63 = arith.constant 94 : index
    %67 = vector.load %arg12[%c0_62, %c94_63] : memref<16x1536xbf16, #tpu.memory_space<vmem>>, vector<16x1280xbf16>
    %cst_64 = arith.constant dense<0.000000e+00> : vector<16x1280xf32>
    %68 = tpu.matmul %66, %67, %cst_64 {dimension_numbers = #tpu.dot_dimension_numbers<[1], [0], [0], [1], [0, 0, 1, 1], [], []>} : vector<16x16xbf16>, vector<16x1280xbf16>, vector<16x1280xf32> -> vector<16x1280xf32>
    %69 = arith.addf %65, %68 : vector<16x1280xf32>
    %c32_65 = arith.constant 32 : index
    %c0_66 = arith.constant 0 : index
    %70 = vector.load %arg6[%c32_65, %c0_66] : memref<144x16xbf16, #tpu.memory_space<vmem>>, vector<16x16xbf16>
    %c0_67 = arith.constant 0 : index
    %c95_68 = arith.constant 95 : index
    %71 = vector.load %arg12[%c0_67, %c95_68] : memref<16x1536xbf16, #tpu.memory_space<vmem>>, vector<16x1280xbf16>
    %cst_69 = arith.constant dense<0.000000e+00> : vector<16x1280xf32>
    %72 = tpu.matmul %70, %71, %cst_69 {dimension_numbers = #tpu.dot_dimension_numbers<[1], [0], [0], [1], [0, 0, 1, 1], [], []>} : vector<16x16xbf16>, vector<16x1280xbf16>, vector<16x1280xf32> -> vector<16x1280xf32>
    %73 = arith.addf %69, %72 : vector<16x1280xf32>
    %c48_70 = arith.constant 48 : index
    %c0_71 = arith.constant 0 : index
    %74 = vector.load %arg6[%c48_70, %c0_71] : memref<144x16xbf16, #tpu.memory_space<vmem>>, vector<16x16xbf16>
    %c0_72 = arith.constant 0 : index
    %c127_73 = arith.constant 127 : index
    %75 = vector.load %arg12[%c0_72, %c127_73] : memref<16x1536xbf16, #tpu.memory_space<vmem>>, vector<16x1280xbf16>
    %cst_74 = arith.constant dense<0.000000e+00> : vector<16x1280xf32>
    %76 = tpu.matmul %74, %75, %cst_74 {dimension_numbers = #tpu.dot_dimension_numbers<[1], [0], [0], [1], [0, 0, 1, 1], [], []>} : vector<16x16xbf16>, vector<16x1280xbf16>, vector<16x1280xf32> -> vector<16x1280xf32>
    %77 = arith.addf %73, %76 : vector<16x1280xf32>
    %c64_75 = arith.constant 64 : index
    %c0_76 = arith.constant 0 : index
    %78 = vector.load %arg6[%c64_75, %c0_76] : memref<144x16xbf16, #tpu.memory_space<vmem>>, vector<16x16xbf16>
    %c0_77 = arith.constant 0 : index
    %c128_78 = arith.constant 128 : index
    %79 = vector.load %arg12[%c0_77, %c128_78] : memref<16x1536xbf16, #tpu.memory_space<vmem>>, vector<16x1280xbf16>
    %cst_79 = arith.constant dense<0.000000e+00> : vector<16x1280xf32>
    %80 = tpu.matmul %78, %79, %cst_79 {dimension_numbers = #tpu.dot_dimension_numbers<[1], [0], [0], [1], [0, 0, 1, 1], [], []>} : vector<16x16xbf16>, vector<16x1280xbf16>, vector<16x1280xf32> -> vector<16x1280xf32>
    %81 = arith.addf %77, %80 : vector<16x1280xf32>
    %c80_80 = arith.constant 80 : index
    %c0_81 = arith.constant 0 : index
    %82 = vector.load %arg6[%c80_80, %c0_81] : memref<144x16xbf16, #tpu.memory_space<vmem>>, vector<16x16xbf16>
    %c0_82 = arith.constant 0 : index
    %c129_83 = arith.constant 129 : index
    %83 = vector.load %arg12[%c0_82, %c129_83] : memref<16x1536xbf16, #tpu.memory_space<vmem>>, vector<16x1280xbf16>
    %cst_84 = arith.constant dense<0.000000e+00> : vector<16x1280xf32>
    %84 = tpu.matmul %82, %83, %cst_84 {dimension_numbers = #tpu.dot_dimension_numbers<[1], [0], [0], [1], [0, 0, 1, 1], [], []>} : vector<16x16xbf16>, vector<16x1280xbf16>, vector<16x1280xf32> -> vector<16x1280xf32>
    %85 = arith.addf %81, %84 : vector<16x1280xf32>
    %c96_85 = arith.constant 96 : index
    %c0_86 = arith.constant 0 : index
    %86 = vector.load %arg6[%c96_85, %c0_86] : memref<144x16xbf16, #tpu.memory_space<vmem>>, vector<16x16xbf16>
    %c0_87 = arith.constant 0 : index
    %c161_88 = arith.constant 161 : index
    %87 = vector.load %arg12[%c0_87, %c161_88] : memref<16x1536xbf16, #tpu.memory_space<vmem>>, vector<16x1280xbf16>
    %cst_89 = arith.constant dense<0.000000e+00> : vector<16x1280xf32>
    %88 = tpu.matmul %86, %87, %cst_89 {dimension_numbers = #tpu.dot_dimension_numbers<[1], [0], [0], [1], [0, 0, 1, 1], [], []>} : vector<16x16xbf16>, vector<16x1280xbf16>, vector<16x1280xf32> -> vector<16x1280xf32>
    %89 = arith.addf %85, %88 : vector<16x1280xf32>
    %c112_90 = arith.constant 112 : index
    %c0_91 = arith.constant 0 : index
    %90 = vector.load %arg6[%c112_90, %c0_91] : memref<144x16xbf16, #tpu.memory_space<vmem>>, vector<16x16xbf16>
    %c0_92 = arith.constant 0 : index
    %c162_93 = arith.constant 162 : index
    %91 = vector.load %arg12[%c0_92, %c162_93] : memref<16x1536xbf16, #tpu.memory_space<vmem>>, vector<16x1280xbf16>
    %cst_94 = arith.constant dense<0.000000e+00> : vector<16x1280xf32>
    %92 = tpu.matmul %90, %91, %cst_94 {dimension_numbers = #tpu.dot_dimension_numbers<[1], [0], [0], [1], [0, 0, 1, 1], [], []>} : vector<16x16xbf16>, vector<16x1280xbf16>, vector<16x1280xf32> -> vector<16x1280xf32>
    %93 = arith.addf %89, %92 : vector<16x1280xf32>
    %c128_95 = arith.constant 128 : index
    %c0_96 = arith.constant 0 : index
    %94 = vector.load %arg6[%c128_95, %c0_96] : memref<144x16xbf16, #tpu.memory_space<vmem>>, vector<16x16xbf16>
    %c0_97 = arith.constant 0 : index
    %c163_98 = arith.constant 163 : index
    %95 = vector.load %arg12[%c0_97, %c163_98] : memref<16x1536xbf16, #tpu.memory_space<vmem>>, vector<16x1280xbf16>
    %cst_99 = arith.constant dense<0.000000e+00> : vector<16x1280xf32>
    %96 = tpu.matmul %94, %95, %cst_99 {dimension_numbers = #tpu.dot_dimension_numbers<[1], [0], [0], [1], [0, 0, 1, 1], [], []>} : vector<16x16xbf16>, vector<16x1280xbf16>, vector<16x1280xf32> -> vector<16x1280xf32>
    %97 = arith.addf %93, %96 : vector<16x1280xf32>
    %c0_100 = arith.constant 0 : index
    %c0_101 = arith.constant 0 : index
    %98 = vector.load %arg7[%c0_100, %c0_101] : memref<16x1xf32, #tpu.memory_space<vmem>>, vector<16x1xf32>
    %99 = vector.broadcast %98 : vector<16x1xf32> to vector<16x1280xf32>
    %100 = arith.mulf %97, %99 : vector<16x1280xf32>
    %c0_102 = arith.constant 0 : index
    %c0_103 = arith.constant 0 : index
    %101 = vector.load %arg8[%c0_102, %c0_103] : memref<16x1xf32, #tpu.memory_space<vmem>>, vector<16x1xf32>
    %102 = vector.broadcast %101 : vector<16x1xf32> to vector<16x1280xf32>
    %103 = arith.addf %100, %102 : vector<16x1280xf32>
    %cst_104 = arith.constant 0.000000e+00 : f32
    %104 = vector.broadcast %cst_104 : f32 to vector<16x1280xf32>
    %105 = arith.maximumf %103, %104 : vector<16x1280xf32>
    %c0_105 = arith.constant 0 : index
    %c0_106 = arith.constant 0 : index
    %c0_107 = arith.constant 0 : index
    %106 = vector.load %arg10[%c0_105, %c0_106, %c0_107] : memref<1x16x1280xf32, #tpu.memory_space<vmem>>, vector<1x16x1280xf32>
    %107 = vector.shape_cast %106 : vector<1x16x1280xf32> to vector<16x1280xf32>
    %108 = vector.shape_cast %105 : vector<16x1280xf32> to vector<1x16x1280xf32>
    tpu.vector_store %arg10[%c0_105, %c0_106, %c0_107], %108 {strides = array<i32>} : memref<1x16x1280xf32, #tpu.memory_space<vmem>>, vector<1x16x1280xf32>,
    return
  }
  func.func @transform_0(%arg0: i32) -> (i32, i32, i32) {
    %c0_i32 = arith.constant 0 : i32
    %c0_i32_0 = arith.constant 0 : i32
    %c0_i32_1 = arith.constant 0 : i32
    return %arg0, %c0_i32, %c0_i32_0 : i32, i32, i32
  }
  func.func @transform_1(%arg0: i32) -> (i32, i32) {
    %c0_i32 = arith.constant 0 : i32
    %c0_i32_0 = arith.constant 0 : i32
    %c0_i32_1 = arith.constant 0 : i32
    return %c0_i32, %c0_i32_0 : i32, i32
  }
  func.func @transform_2(%arg0: i32) -> (i32, i32) {
    %c0_i32 = arith.constant 0 : i32
    %c0_i32_0 = arith.constant 0 : i32
    %c0_i32_1 = arith.constant 0 : i32
    return %c0_i32, %c0_i32_0 : i32, i32
  }
  func.func @transform_3(%arg0: i32) -> (i32, i32) {
    %c0_i32 = arith.constant 0 : i32
    %c0_i32_0 = arith.constant 0 : i32
    %c0_i32_1 = arith.constant 0 : i32
    return %c0_i32, %c0_i32_0 : i32, i32
  }
  func.func @transform_4(%arg0: i32) -> (i32, i32) {
    %c0_i32 = arith.constant 0 : i32
    %c0_i32_0 = arith.constant 0 : i32
    %c0_i32_1 = arith.constant 0 : i32
    return %c0_i32, %c0_i32_0 : i32, i32
  }
  func.func @transform_5(%arg0: i32) -> (i32, i32) {
    %c0_i32 = arith.constant 0 : i32
    %c0_i32_0 = arith.constant 0 : i32
    %c0_i32_1 = arith.constant 0 : i32
    return %c0_i32, %c0_i32_0 : i32, i32
  }
  func.func @transform_6(%arg0: i32) -> (i32, i32) {
    %c0_i32 = arith.constant 0 : i32
    %c0_i32_0 = arith.constant 0 : i32
    %c0_i32_1 = arith.constant 0 : i32
    return %c0_i32, %c0_i32_0 : i32, i32
  }
  func.func @transform_7(%arg0: i32) -> (i32, i32) {
    %c0_i32 = arith.constant 0 : i32
    %c0_i32_0 = arith.constant 0 : i32
    %c0_i32_1 = arith.constant 0 : i32
    return %c0_i32, %c0_i32_0 : i32, i32
  }
  func.func @transform_8(%arg0: i32) -> (i32, i32) {
    %c0_i32 = arith.constant 0 : i32
    %c0_i32_0 = arith.constant 0 : i32
    %c0_i32_1 = arith.constant 0 : i32
    return %c0_i32, %c0_i32_0 : i32, i32
  }
  func.func @transform_9(%arg0: i32) -> (i32, i32, i32) {
    %c0_i32 = arith.constant 0 : i32
    %c0_i32_0 = arith.constant 0 : i32
    %c0_i32_1 = arith.constant 0 : i32
    return %arg0, %c0_i32, %c0_i32_0 : i32, i32, i32
  }
}

</mosaic_0001>

<llo_original>
// kernel: decoder_up_forward.1
$region0: #{decoder_up_forward.1}
  #allocation0 [shape = 'u32[]', space=smem, size = 0x4, offset = 0x4, fixed_abs, tag = 'smem constant byte address 0x4 - core index']
  #allocation1 [shape = 'u32[144,128]{1,0:T(1,128)}', space=vmem, size = 0x12000, scoped, tag = 'internal scratch']
  #allocation2 [shape = 'bf16[32,1536]{1,0:T(16,128)(2,1)}', space=vmem, size = 0x18000, scoped, tag = 'scratch operand']
  #allocation3 [shape = 'bf16[16,1536]{1,0:T(16,128)(2,1)}', space=vmem, size = 0xc000, scoped, tag = 'scratch operand']
  %s0 = inlined_call_operand.vmem [shape: f32[2,32,256], index: 0, kind: input, shape index: {}]
  %s1 = inlined_call_operand.vmem [shape: bf16[256,1280], index: 1, kind: input, shape index: {}]
  %s2 = inlined_call_operand.vmem [shape: bf16[144,32], index: 2, kind: input, shape index: {}]
  %s3 = inlined_call_operand.vmem [shape: f32[16,1], index: 3, kind: input, shape index: {}]
  %s4 = inlined_call_operand.vmem [shape: f32[16,1], index: 4, kind: input, shape index: {}]
  %s5 = inlined_call_operand.vmem [shape: bf16[144,16], index: 5, kind: input, shape index: {}]
  %s6 = inlined_call_operand.vmem [shape: f32[16,1], index: 6, kind: input, shape index: {}]
  %s7 = inlined_call_operand.vmem [shape: f32[16,1], index: 7, kind: input, shape index: {}]
  %s8 = inlined_call_operand.vmem [shape: f32[1,1280], index: 8, kind: input, shape index: {}]
  %s9 = inlined_call_operand.vmem [shape: f32[2,16,1280], index: 9, kind: output, shape index: {}]
  %s10 = sld [smem:[#allocation0]]
  $region69: #{decoder_up_forward.1} parent=0
    _
  %s12 = ssub.s32 1, %s10
  %s13 = scalar_select 0, %s12, %s10
  loop: start=0, step=1, limit=4
  $region2: #{decoder_up_forward.1} parent=0 // loop_pre_header
    _
  $region3: #{decoder_up_forward.1} parent=0 // loop_header
    %s15 = sphi 0, %s19
    %p16 = scmp.ge.s32.totalorder %s15, 4
    %s25 = sphi 0, %s27
    %s28 = sphi 0, %s25
    %s29 = sphi 0, %s28
    %s45 = sphi 0, %s29
    %s49 = sphi 0, %s49
    %s51 = sphi 0, %s49
    %s52 = sphi 0, %s51
    %s66 = sphi 0, %s52
    %s70 = sphi 0, %s70
    %s72 = sphi 0, %s70
    %s73 = sphi 0, %s72
    %s87 = sphi 0, %s73
    %s91 = sphi 0, %s91
    %s93 = sphi 0, %s91
    %s94 = sphi 0, %s93
    %s108 = sphi 0, %s94
    %s112 = sphi 0, %s112
    %s114 = sphi 0, %s112
    %s115 = sphi 0, %s114
    %s129 = sphi 0, %s115
    %s133 = sphi 0, %s133
    %s135 = sphi 0, %s133
    %s136 = sphi 0, %s135
    %s150 = sphi 0, %s136
    %s154 = sphi 0, %s154
    %s156 = sphi 0, %s154
    %s157 = sphi 0, %s156
    %s171 = sphi 0, %s157
    %s175 = sphi 0, %s175
    %s177 = sphi 0, %s175
    %s178 = sphi 0, %s177
    %s192 = sphi 0, %s178
    %s196 = sphi 0, %s196
    %s198 = sphi 0, %s196
    %s199 = sphi 0, %s198
    %s213 = sphi 0, %s199
    %s219 = sphi 0, %s221
    %s222 = sphi 0, %s219
    %s223 = sphi 0, %s222
    %s239 = sphi 0, %s223
  $region4: #{decoder_up_forward.1} parent=0 // loop_header_branch
    %18 = sbr.rel (%p16) target = $region8
  $region5: #{decoder_up_forward.1} parent=0 // loop_body
    %s20 = ssub.s32 %s15, 1
    %s21 = ssub.s32 %s15, 2
    %s22 = sadd.s32 %s15, 1
    %s23 = ssub.s32 %s15, %s22
    %p24 = scmp.eq.s32.totalorder %s23, 0
    %s26 = sadd.s32 %s25, 1
    %s27 = scalar_select %p24, %s25, %s26
    %p30 = pneg %p24
    %p31 = scmp.eq.s32.totalorder %s15, 1
    %p32 = por %p30, %p31
    %p33 = scmp.ne.s32.totalorder %s25, %s28
    %p34 = scmp.eq.s32.totalorder %s15, 0
    %p35 = por %p33, %p34
    %p36 = scmp.ne.s32.totalorder %s25, %s28
    %p37 = scmp.eq.s32.totalorder %s20, 1
    %p38 = por %p36, %p37
    %p39 = scmp.ne.s32.totalorder %s28, %s29
    %p40 = scmp.eq.s32.totalorder %s20, 0
    %p41 = por %p39, %p40
    %p42 = scmp.ne.s32.totalorder %s28, %s29
    %p43 = scmp.eq.s32.totalorder %s21, 1
    %p44 = por %p42, %p43
    %p46 = scmp.ne.s32.totalorder %s29, %s45
    %p47 = scmp.eq.s32.totalorder %s21, 0
    %p48 = por %p46, %p47
    %s50 = sadd.s32 %s49, 1
    %p53 = scmp.eq.s32.totalorder %s15, 1
    %p54 = scmp.ne.s32.totalorder %s49, %s51
    %p55 = scmp.eq.s32.totalorder %s15, 0
    %p56 = por %p54, %p55
    %p57 = scmp.ne.s32.totalorder %s49, %s51
    %p58 = scmp.eq.s32.totalorder %s20, 1
    %p59 = por %p57, %p58
    %p60 = scmp.ne.s32.totalorder %s51, %s52
    %p61 = scmp.eq.s32.totalorder %s20, 0
    %p62 = por %p60, %p61
    %p63 = scmp.ne.s32.totalorder %s51, %s52
    %p64 = scmp.eq.s32.totalorder %s21, 1
    %p65 = por %p63, %p64
    %p67 = scmp.ne.s32.totalorder %s52, %s66
    %p68 = scmp.eq.s32.totalorder %s21, 0
    %p69 = por %p67, %p68
    %s71 = sadd.s32 %s70, 1
    %p74 = scmp.eq.s32.totalorder %s15, 1
    %p75 = scmp.ne.s32.totalorder %s70, %s72
    %p76 = scmp.eq.s32.totalorder %s15, 0
    %p77 = por %p75, %p76
    %p78 = scmp.ne.s32.totalorder %s70, %s72
    %p79 = scmp.eq.s32.totalorder %s20, 1
    %p80 = por %p78, %p79
    %p81 = scmp.ne.s32.totalorder %s72, %s73
    %p82 = scmp.eq.s32.totalorder %s20, 0
    %p83 = por %p81, %p82
    %p84 = scmp.ne.s32.totalorder %s72, %s73
    %p85 = scmp.eq.s32.totalorder %s21, 1
    %p86 = por %p84, %p85
    %p88 = scmp.ne.s32.totalorder %s73, %s87
    %p89 = scmp.eq.s32.totalorder %s21, 0
    %p90 = por %p88, %p89
    %s92 = sadd.s32 %s91, 1
    %p95 = scmp.eq.s32.totalorder %s15, 1
    %p96 = scmp.ne.s32.totalorder %s91, %s93
    %p97 = scmp.eq.s32.totalorder %s15, 0
    %p98 = por %p96, %p97
    %p99 = scmp.ne.s32.totalorder %s91, %s93
    %p100 = scmp.eq.s32.totalorder %s20, 1
    %p101 = por %p99, %p100
    %p102 = scmp.ne.s32.totalorder %s93, %s94
    %p103 = scmp.eq.s32.totalorder %s20, 0
    %p104 = por %p102, %p103
    %p105 = scmp.ne.s32.totalorder %s93, %s94
    %p106 = scmp.eq.s32.totalorder %s21, 1
    %p107 = por %p105, %p106
    %p109 = scmp.ne.s32.totalorder %s94, %s108
    %p110 = scmp.eq.s32.totalorder %s21, 0
    %p111 = por %p109, %p110
    %s113 = sadd.s32 %s112, 1
    %p116 = scmp.eq.s32.totalorder %s15, 1
    %p117 = scmp.ne.s32.totalorder %s112, %s114
    %p118 = scmp.eq.s32.totalorder %s15, 0
    %p119 = por %p117, %p118
    %p120 = scmp.ne.s32.totalorder %s112, %s114
    %p121 = scmp.eq.s32.totalorder %s20, 1
    %p122 = por %p120, %p121
    %p123 = scmp.ne.s32.totalorder %s114, %s115
    %p124 = scmp.eq.s32.totalorder %s20, 0
    %p125 = por %p123, %p124
    %p126 = scmp.ne.s32.totalorder %s114, %s115
    %p127 = scmp.eq.s32.totalorder %s21, 1
    %p128 = por %p126, %p127
    %p130 = scmp.ne.s32.totalorder %s115, %s129
    %p131 = scmp.eq.s32.totalorder %s21, 0
    %p132 = por %p130, %p131
    %s134 = sadd.s32 %s133, 1
    %p137 = scmp.eq.s32.totalorder %s15, 1
    %p138 = scmp.ne.s32.totalorder %s133, %s135
    %p139 = scmp.eq.s32.totalorder %s15, 0
    %p140 = por %p138, %p139
    %p141 = scmp.ne.s32.totalorder %s133, %s135
    %p142 = scmp.eq.s32.totalorder %s20, 1
    %p143 = por %p141, %p142
    %p144 = scmp.ne.s32.totalorder %s135, %s136
    %p145 = scmp.eq.s32.totalorder %s20, 0
    %p146 = por %p144, %p145
    %p147 = scmp.ne.s32.totalorder %s135, %s136
    %p148 = scmp.eq.s32.totalorder %s21, 1
    %p149 = por %p147, %p148
    %p151 = scmp.ne.s32.totalorder %s136, %s150
    %p152 = scmp.eq.s32.totalorder %s21, 0
    %p153 = por %p151, %p152
    %s155 = sadd.s32 %s154, 1
    %p158 = scmp.eq.s32.totalorder %s15, 1
    %p159 = scmp.ne.s32.totalorder %s154, %s156
    %p160 = scmp.eq.s32.totalorder %s15, 0
    %p161 = por %p159, %p160
    %p162 = scmp.ne.s32.totalorder %s154, %s156
    %p163 = scmp.eq.s32.totalorder %s20, 1
    %p164 = por %p162, %p163
    %p165 = scmp.ne.s32.totalorder %s156, %s157
    %p166 = scmp.eq.s32.totalorder %s20, 0
    %p167 = por %p165, %p166
    %p168 = scmp.ne.s32.totalorder %s156, %s157
    %p169 = scmp.eq.s32.totalorder %s21, 1
    %p170 = por %p168, %p169
    %p172 = scmp.ne.s32.totalorder %s157, %s171
    %p173 = scmp.eq.s32.totalorder %s21, 0
    %p174 = por %p172, %p173
    %s176 = sadd.s32 %s175, 1
    %p179 = scmp.eq.s32.totalorder %s15, 1
    %p180 = scmp.ne.s32.totalorder %s175, %s177
    %p181 = scmp.eq.s32.totalorder %s15, 0
    %p182 = por %p180, %p181
    %p183 = scmp.ne.s32.totalorder %s175, %s177
    %p184 = scmp.eq.s32.totalorder %s20, 1
    %p185 = por %p183, %p184
    %p186 = scmp.ne.s32.totalorder %s177, %s178
    %p187 = scmp.eq.s32.totalorder %s20, 0
    %p188 = por %p186, %p187
    %p189 = scmp.ne.s32.totalorder %s177, %s178
    %p190 = scmp.eq.s32.totalorder %s21, 1
    %p191 = por %p189, %p190
    %p193 = scmp.ne.s32.totalorder %s178, %s192
    %p194 = scmp.eq.s32.totalorder %s21, 0
    %p195 = por %p193, %p194
    %s197 = sadd.s32 %s196, 1
    %p200 = scmp.eq.s32.totalorder %s15, 1
    %p201 = scmp.ne.s32.totalorder %s196, %s198
    %p202 = scmp.eq.s32.totalorder %s15, 0
    %p203 = por %p201, %p202
    %p204 = scmp.ne.s32.totalorder %s196, %s198
    %p205 = scmp.eq.s32.totalorder %s20, 1
    %p206 = por %p204, %p205
    %p207 = scmp.ne.s32.totalorder %s198, %s199
    %p208 = scmp.eq.s32.totalorder %s20, 0
    %p209 = por %p207, %p208
    %p210 = scmp.ne.s32.totalorder %s198, %s199
    %p211 = scmp.eq.s32.totalorder %s21, 1
    %p212 = por %p210, %p211
    %p214 = scmp.ne.s32.totalorder %s199, %s213
    %p215 = scmp.eq.s32.totalorder %s21, 0
    %p216 = por %p214, %p215
    %s217 = ssub.s32 %s15, %s22
    %p218 = scmp.eq.s32.totalorder %s217, 0
    %s220 = sadd.s32 %s219, 1
    %s221 = scalar_select %p218, %s219, %s220
    %p224 = pneg %p218
    %p225 = scmp.eq.s32.totalorder %s15, 1
    %p226 = por %p224, %p225
    %p227 = scmp.ne.s32.totalorder %s219, %s222
    %p228 = scmp.eq.s32.totalorder %s15, 0
    %p229 = por %p227, %p228
    %p230 = scmp.ne.s32.totalorder %s219, %s222
    %p231 = scmp.eq.s32.totalorder %s20, 1
    %p232 = por %p230, %p231
    %p233 = scmp.ne.s32.totalorder %s222, %s223
    %p234 = scmp.eq.s32.totalorder %s20, 0
    %p235 = por %p233, %p234
    %p236 = scmp.ne.s32.totalorder %s222, %s223
    %p237 = scmp.eq.s32.totalorder %s21, 1
    %p238 = por %p236, %p237
    %p240 = scmp.ne.s32.totalorder %s223, %s239
    %p241 = scmp.eq.s32.totalorder %s21, 0
    %p242 = por %p240, %p241
    %p243 = scmp.le.s32.totalorder 1, %s15
    %p244 = scmp.lt.s32.totalorder %s15, 3
    %p245 = pnand %p243, %p244
    %p246 = pneg %p245
    // Predicated region
    $region9: #{decoder_up_forward.1} parent=5 // pred_check
      _
    $region10: #{decoder_up_forward.1} parent=5 // pred_check_branch
      %248 = sbr.rel (%p245) target = $region12
    $region11: #{decoder_up_forward.1} parent=5 // pred_region
      %s249 = ssub.s32 %s15, 1
      // Predicated region
      $region13: #{decoder_up_forward.1} parent=11 // pred_check
        %p250 = pneg %p62
      $region14: #{decoder_up_forward.1} parent=11 // pred_check_branch
        %252 = sbr.rel (%p250) target = $region16
      $region15: #{decoder_up_forward.1} parent=11 // pred_region
        _
      $region16: #{decoder_up_forward.1} parent=11 // pred_fallthru
        _
      // Predicated region
      $region17: #{decoder_up_forward.1} parent=11 // pred_check
        %p253 = pneg %p83
      $region18: #{decoder_up_forward.1} parent=11 // pred_check_branch
        %255 = sbr.rel (%p253) target = $region20
      $region19: #{decoder_up_forward.1} parent=11 // pred_region
        _
      $region20: #{decoder_up_forward.1} parent=11 // pred_fallthru
        _
      // Predicated region
      $region21: #{decoder_up_forward.1} parent=11 // pred_check
        %p256 = pneg %p104
      $region22: #{decoder_up_forward.1} parent=11 // pred_check_branch
        %258 = sbr.rel (%p256) target = $region24
      $region23: #{decoder_up_forward.1} parent=11 // pred_region
        _
      $region24: #{decoder_up_forward.1} parent=11 // pred_fallthru
        _
      // Predicated region
      $region25: #{decoder_up_forward.1} parent=11 // pred_check
        %p259 = pneg %p125
      $region26: #{decoder_up_forward.1} parent=11 // pred_check_branch
        %261 = sbr.rel (%p259) target = $region28
      $region27: #{decoder_up_forward.1} parent=11 // pred_region
        _
      $region28: #{decoder_up_forward.1} parent=11 // pred_fallthru
        _
      // Predicated region
      $region29: #{decoder_up_forward.1} parent=11 // pred_check
        %p262 = pneg %p146
      $region30: #{decoder_up_forward.1} parent=11 // pred_check_branch
        %264 = sbr.rel (%p262) target = $region32
      $region31: #{decoder_up_forward.1} parent=11 // pred_region
        _
      $region32: #{decoder_up_forward.1} parent=11 // pred_fallthru
        _
      // Predicated region
      $region33: #{decoder_up_forward.1} parent=11 // pred_check
        %p265 = pneg %p167
      $region34: #{decoder_up_forward.1} parent=11 // pred_check_branch
        %267 = sbr.rel (%p265) target = $region36
      $region35: #{decoder_up_forward.1} parent=11 // pred_region
        _
      $region36: #{decoder_up_forward.1} parent=11 // pred_fallthru
        _
      // Predicated region
      $region37: #{decoder_up_forward.1} parent=11 // pred_check
        %p268 = pneg %p188
      $region38: #{decoder_up_forward.1} parent=11 // pred_check_branch
        %270 = sbr.rel (%p268) target = $region40
      $region39: #{decoder_up_forward.1} parent=11 // pred_region
        _
      $region40: #{decoder_up_forward.1} parent=11 // pred_fallthru
        _
      // Predicated region
      $region41: #{decoder_up_forward.1} parent=11 // pred_check
        %p271 = pneg %p209
      $region42: #{decoder_up_forward.1} parent=11 // pred_check_branch
        %273 = sbr.rel (%p271) target = $region44
      $region43: #{decoder_up_forward.1} parent=11 // pred_region
        _
      $region44: #{decoder_up_forward.1} parent=11 // pred_fallthru
        _
    $region12: #{decoder_up_forward.1} parent=5 // pred_fallthru
      _
    %p274 = scmp.lt.s32.totalorder %s15, 2
    // Predicated region
    $region45: #{decoder_up_forward.1} parent=5 // pred_check
      %p275 = pneg %p274
    $region46: #{decoder_up_forward.1} parent=5 // pred_check_branch
      %277 = sbr.rel (%p275) target = $region48
    $region47: #{decoder_up_forward.1} parent=5 // pred_region
      // Predicated region
      $region49: #{decoder_up_forward.1} parent=47 // pred_check
        %p278 = pneg %p35
      $region50: #{decoder_up_forward.1} parent=47 // pred_check_branch
        %280 = sbr.rel (%p278) target = $region52
      $region51: #{decoder_up_forward.1} parent=47 // pred_region
        %p281 = scmp.lt.s32.totalorder %s15, 1
        %s282 = scalar_select %p281, %s15, 1
        %s283 = smul.addr %s282, 8
        %s284 = smul.addr %s283, 8
        %s285 = scalar_lea.vmem %s0, %s284
      $region52: #{decoder_up_forward.1} parent=47 // pred_fallthru
        _
    $region48: #{decoder_up_forward.1} parent=5 // pred_fallthru
      _
    %p286 = scmp.le.s32.totalorder 1, %s15
    %p287 = scmp.lt.s32.totalorder %s15, 3
    %p288 = pnand %p286, %p287
    %p289 = pneg %p288
    // Predicated region
    $region53: #{decoder_up_forward.1} parent=5 // pred_check
      _
    $region54: #{decoder_up_forward.1} parent=5 // pred_check_branch
      %291 = sbr.rel (%p288) target = $region56
    $region55: #{decoder_up_forward.1} parent=5 // pred_region
      %s292 = ssub.s32 %s15, 1
      %p293 = scmp.lt.s32.totalorder %s20, 1
      %s294 = scalar_select %p293, %s20, 1
      %s295 = smul.addr %s294, 8
      %s296 = smul.addr %s295, 8
      %s297 = scalar_lea.vmem %s0, %s296
      %p298 = pneg %p41
      %p299 = pneg %p38
      %p300 = pneg %p62
      %p301 = pneg %p59
      %p302 = pneg %p83
      %p303 = pneg %p80
      %p304 = pneg %p104
      %p305 = pneg %p101
      %p306 = pneg %p125
      %p307 = pneg %p122
      %p308 = pneg %p146
      %p309 = pneg %p143
      %p310 = pneg %p167
      %p311 = pneg %p164
      %p312 = pneg %p188
      %p313 = pneg %p185
      %p314 = pneg %p209
      %p315 = pneg %p206
      %p316 = pneg %p235
      %p317 = pneg %p232
      %p318 = scmp.lt.s32.totalorder %s20, 1
      %s319 = scalar_select %p318, %s20, 1
      %s320 = smul.addr %s319, 20
      %s321 = smul.addr %s320, 8
      %s322 = scalar_lea.vmem %s9, %s321
      %p323 = scmp.lt.s32.totalorder %s20, 1
      %s324 = scalar_select %p323, %s20, 1
      %s325 = smul.addr %s324, 8
      %s326 = smul.addr %s325, 8
      %s327 = scalar_lea.vmem %s0, %s326
      %p328 = scmp.lt.s32.totalorder %s20, 1
      %s329 = scalar_select %p328, %s20, 1
      %s330 = smul.addr %s329, 20
      %s331 = smul.addr %s330, 8
      %s332 = scalar_lea.vmem %s9, %s331
      %334 = vst [vmem:[#allocation2] sm:$0xff] 0
      %335 = vst [vmem:[#allocation2 + $0x60] sm:$0xff] 0
      %336 = vst [vmem:[#allocation2 + $0x58] sm:$0xff] 0
      %337 = vst [vmem:[#allocation2 + $0xb8] sm:$0xff] 0
      %338 = vst [vmem:[#allocation3] sm:$0xff] 0
      %339 = vst [vmem:[#allocation3 + $0x58] sm:$0xff] 0
      %v340 = vld [vmem:[%s327] sm:$0xff]
      %v341 = vld [vmem:[%s327 + $0x8] sm:$0xff]
      %v342 = vld [vmem:[%s327 + $0x10] sm:$0xff]
      %v343 = vld [vmem:[%s327 + $0x18] sm:$0xff]
      %v344 = vld [vmem:[%s327 + $0x20] sm:$0xff]
      %v345 = vld [vmem:[%s327 + $0x28] sm:$0xff]
      %v346 = vld [vmem:[%s327 + $0x30] sm:$0xff]
      %v347 = vld [vmem:[%s327 + $0x38] sm:$0xff]
      %v348 = vpack.c.bf16 %v342, %v340
      %v349 = vpack.c.bf16 %v343, %v341
      %v350 = vpack.c.bf16 %v346, %v344
      %v351 = vpack.c.bf16 %v347, %v345
      %v352 = vld [vmem:[%s1] sm:$0xff]
      %v353 = vld [vmem:[%s1 + $0x8] sm:$0xff]
      %v354 = vld [vmem:[%s1 + $0x10] sm:$0xff]
      %v355 = vld [vmem:[%s1 + $0x18] sm:$0xff]
      %v356 = vld [vmem:[%s1 + $0x20] sm:$0xff]
      %v357 = vld [vmem:[%s1 + $0x28] sm:$0xff]
      %v358 = vld [vmem:[%s1 + $0x30] sm:$0xff]
      %v359 = vld [vmem:[%s1 + $0x38] sm:$0xff]
      %v360 = vld [vmem:[%s1 + $0x40] sm:$0xff]
      %v361 = vld [vmem:[%s1 + $0x48] sm:$0xff]
      %v362 = vld [vmem:[%s1 + $0x50] sm:$0xff]
      %v363 = vld [vmem:[%s1 + $0x58] sm:$0xff]
      %v364 = vld [vmem:[%s1 + $0x60] sm:$0xff]
      %v365 = vld [vmem:[%s1 + $0x68] sm:$0xff]
      %v366 = vld [vmem:[%s1 + $0x70] sm:$0xff]
      %v367 = vld [vmem:[%s1 + $0x78] sm:$0xff]
      %v368 = vld [vmem:[%s1 + $0x80] sm:$0xff]
      %v369 = vld [vmem:[%s1 + $0x88] sm:$0xff]
      %v370 = vld [vmem:[%s1 + $0x90] sm:$0xff]
      %v371 = vld [vmem:[%s1 + $0x98] sm:$0xff]
      %v372 = vld [vmem:[%s1 + $0xa0] sm:$0xff]
      %v373 = vld [vmem:[%s1 + $0xa8] sm:$0xff]
      %v374 = vld [vmem:[%s1 + $0xb0] sm:$0xff]
      %v375 = vld [vmem:[%s1 + $0xb8] sm:$0xff]
      %v376 = vld [vmem:[%s1 + $0xc0] sm:$0xff]
      %v377 = vld [vmem:[%s1 + $0xc8] sm:$0xff]
      %v378 = vld [vmem:[%s1 + $0xd0] sm:$0xff]
      %v379 = vld [vmem:[%s1 + $0xd8] sm:$0xff]
      %v380 = vld [vmem:[%s1 + $0xe0] sm:$0xff]
      %v381 = vld [vmem:[%s1 + $0xe8] sm:$0xff]
      %v382 = vld [vmem:[%s1 + $0xf0] sm:$0xff]
      %v383 = vld [vmem:[%s1 + $0xf8] sm:$0xff]
      %v384 = vld [vmem:[%s1 + $0x100] sm:$0xff]
      %v385 = vld [vmem:[%s1 + $0x108] sm:$0xff]
      %v386 = vld [vmem:[%s1 + $0x110] sm:$0xff]
      %v387 = vld [vmem:[%s1 + $0x118] sm:$0xff]
      %v388 = vld [vmem:[%s1 + $0x120] sm:$0xff]
      %v389 = vld [vmem:[%s1 + $0x128] sm:$0xff]
      %v390 = vld [vmem:[%s1 + $0x130] sm:$0xff]
      %v391 = vld [vmem:[%s1 + $0x138] sm:$0xff]
      %v392 = vld [vmem:[%s1 + $0x140] sm:$0xff]
      %v393 = vld [vmem:[%s1 + $0x148] sm:$0xff]
      %v394 = vld [vmem:[%s1 + $0x150] sm:$0xff]
      %v395 = vld [vmem:[%s1 + $0x158] sm:$0xff]
      %v396 = vld [vmem:[%s1 + $0x160] sm:$0xff]
      %v397 = vld [vmem:[%s1 + $0x168] sm:$0xff]
      %v398 = vld [vmem:[%s1 + $0x170] sm:$0xff]
      %v399 = vld [vmem:[%s1 + $0x178] sm:$0xff]
      %v400 = vld [vmem:[%s1 + $0x180] sm:$0xff]
      %v401 = vld [vmem:[%s1 + $0x188] sm:$0xff]
      %v402 = vld [vmem:[%s1 + $0x190] sm:$0xff]
      %v403 = vld [vmem:[%s1 + $0x198] sm:$0xff]
      %v404 = vld [vmem:[%s1 + $0x1a0] sm:$0xff]
      %v405 = vld [vmem:[%s1 + $0x1a8] sm:$0xff]
      %v406 = vld [vmem:[%s1 + $0x1b0] sm:$0xff]
      %v407 = vld [vmem:[%s1 + $0x1b8] sm:$0xff]
      %v408 = vld [vmem:[%s1 + $0x1c0] sm:$0xff]
      %v409 = vld [vmem:[%s1 + $0x1c8] sm:$0xff]
      %v410 = vld [vmem:[%s1 + $0x1d0] sm:$0xff]
      %v411 = vld [vmem:[%s1 + $0x1d8] sm:$0xff]
      %v412 = vld [vmem:[%s1 + $0x1e0] sm:$0xff]
      %v413 = vld [vmem:[%s1 + $0x1e8] sm:$0xff]
      %v414 = vld [vmem:[%s1 + $0x1f0] sm:$0xff]
      %v415 = vld [vmem:[%s1 + $0x1f8] sm:$0xff]
      %v416 = vld [vmem:[%s1 + $0x200] sm:$0xff]
      %v417 = vld [vmem:[%s1 + $0x208] sm:$0xff]
      %v418 = vld [vmem:[%s1 + $0x210] sm:$0xff]
      %v419 = vld [vmem:[%s1 + $0x218] sm:$0xff]
      %v420 = vld [vmem:[%s1 + $0x220] sm:$0xff]
      %v421 = vld [vmem:[%s1 + $0x228] sm:$0xff]
      %v422 = vld [vmem:[%s1 + $0x230] sm:$0xff]
      %v423 = vld [vmem:[%s1 + $0x238] sm:$0xff]
      %v424 = vld [vmem:[%s1 + $0x240] sm:$0xff]
      %v425 = vld [vmem:[%s1 + $0x248] sm:$0xff]
      %v426 = vld [vmem:[%s1 + $0x250] sm:$0xff]
      %v427 = vld [vmem:[%s1 + $0x258] sm:$0xff]
      %v428 = vld [vmem:[%s1 + $0x260] sm:$0xff]
      %v429 = vld [vmem:[%s1 + $0x268] sm:$0xff]
      %v430 = vld [vmem:[%s1 + $0x270] sm:$0xff]
      %v431 = vld [vmem:[%s1 + $0x278] sm:$0xff]
      %v432 = vld [vmem:[%s1 + $0x280] sm:$0xff]
      %v433 = vld [vmem:[%s1 + $0x288] sm:$0xff]
      %v434 = vld [vmem:[%s1 + $0x290] sm:$0xff]
      %v435 = vld [vmem:[%s1 + $0x298] sm:$0xff]
      %v436 = vld [vmem:[%s1 + $0x2a0] sm:$0xff]
      %v437 = vld [vmem:[%s1 + $0x2a8] sm:$0xff]
      %v438 = vld [vmem:[%s1 + $0x2b0] sm:$0xff]
      %v439 = vld [vmem:[%s1 + $0x2b8] sm:$0xff]
      %v440 = vld [vmem:[%s1 + $0x2c0] sm:$0xff]
      %v441 = vld [vmem:[%s1 + $0x2c8] sm:$0xff]
      %v442 = vld [vmem:[%s1 + $0x2d0] sm:$0xff]
      %v443 = vld [vmem:[%s1 + $0x2d8] sm:$0xff]
      %v444 = vld [vmem:[%s1 + $0x2e0] sm:$0xff]
      %v445 = vld [vmem:[%s1 + $0x2e8] sm:$0xff]
      %v446 = vld [vmem:[%s1 + $0x2f0] sm:$0xff]
      %v447 = vld [vmem:[%s1 + $0x2f8] sm:$0xff]
      %v448 = vld [vmem:[%s1 + $0x300] sm:$0xff]
      %v449 = vld [vmem:[%s1 + $0x308] sm:$0xff]
      %v450 = vld [vmem:[%s1 + $0x310] sm:$0xff]
      %v451 = vld [vmem:[%s1 + $0x318] sm:$0xff]
      %v452 = vld [vmem:[%s1 + $0x320] sm:$0xff]
      %v453 = vld [vmem:[%s1 + $0x328] sm:$0xff]
      %v454 = vld [vmem:[%s1 + $0x330] sm:$0xff]
      %v455 = vld [vmem:[%s1 + $0x338] sm:$0xff]
      %v456 = vld [vmem:[%s1 + $0x340] sm:$0xff]
      %v457 = vld [vmem:[%s1 + $0x348] sm:$0xff]
      %v458 = vld [vmem:[%s1 + $0x350] sm:$0xff]
      %v459 = vld [vmem:[%s1 + $0x358] sm:$0xff]
      %v460 = vld [vmem:[%s1 + $0x360] sm:$0xff]
      %v461 = vld [vmem:[%s1 + $0x368] sm:$0xff]
      %v462 = vld [vmem:[%s1 + $0x370] sm:$0xff]
      %v463 = vld [vmem:[%s1 + $0x378] sm:$0xff]
      %v464 = vld [vmem:[%s1 + $0x380] sm:$0xff]
      %v465 = vld [vmem:[%s1 + $0x388] sm:$0xff]
      %v466 = vld [vmem:[%s1 + $0x390] sm:$0xff]
      %v467 = vld [vmem:[%s1 + $0x398] sm:$0xff]
      %v468 = vld [vmem:[%s1 + $0x3a0] sm:$0xff]
      %v469 = vld [vmem:[%s1 + $0x3a8] sm:$0xff]
      %v470 = vld [vmem:[%s1 + $0x3b0] sm:$0xff]
      %v471 = vld [vmem:[%s1 + $0x3b8] sm:$0xff]
      %v472 = vld [vmem:[%s1 + $0x3c0] sm:$0xff]
      %v473 = vld [vmem:[%s1 + $0x3c8] sm:$0xff]
      %v474 = vld [vmem:[%s1 + $0x3d0] sm:$0xff]
      %v475 = vld [vmem:[%s1 + $0x3d8] sm:$0xff]
      %v476 = vld [vmem:[%s1 + $0x3e0] sm:$0xff]
      %v477 = vld [vmem:[%s1 + $0x3e8] sm:$0xff]
      %v478 = vld [vmem:[%s1 + $0x3f0] sm:$0xff]
      %v479 = vld [vmem:[%s1 + $0x3f8] sm:$0xff]
      %v480 = vld [vmem:[%s1 + $0x400] sm:$0xff]
      %v481 = vld [vmem:[%s1 + $0x408] sm:$0xff]
      %v482 = vld [vmem:[%s1 + $0x410] sm:$0xff]
      %v483 = vld [vmem:[%s1 + $0x418] sm:$0xff]
      %v484 = vld [vmem:[%s1 + $0x420] sm:$0xff]
      %v485 = vld [vmem:[%s1 + $0x428] sm:$0xff]
      %v486 = vld [vmem:[%s1 + $0x430] sm:$0xff]
      %v487 = vld [vmem:[%s1 + $0x438] sm:$0xff]
      %v488 = vld [vmem:[%s1 + $0x440] sm:$0xff]
      %v489 = vld [vmem:[%s1 + $0x448] sm:$0xff]
      %v490 = vld [vmem:[%s1 + $0x450] sm:$0xff]
      %v491 = vld [vmem:[%s1 + $0x458] sm:$0xff]
      %v492 = vld [vmem:[%s1 + $0x460] sm:$0xff]
      %v493 = vld [vmem:[%s1 + $0x468] sm:$0xff]
      %v494 = vld [vmem:[%s1 + $0x470] sm:$0xff]
      %v495 = vld [vmem:[%s1 + $0x478] sm:$0xff]
      %v496 = vld [vmem:[%s1 + $0x480] sm:$0xff]
      %v497 = vld [vmem:[%s1 + $0x488] sm:$0xff]
      %v498 = vld [vmem:[%s1 + $0x490] sm:$0xff]
      %v499 = vld [vmem:[%s1 + $0x498] sm:$0xff]
      %v500 = vld [vmem:[%s1 + $0x4a0] sm:$0xff]
      %v501 = vld [vmem:[%s1 + $0x4a8] sm:$0xff]
      %v502 = vld [vmem:[%s1 + $0x4b0] sm:$0xff]
      %v503 = vld [vmem:[%s1 + $0x4b8] sm:$0xff]
      %v504 = vld [vmem:[%s1 + $0x4c0] sm:$0xff]
      %v505 = vld [vmem:[%s1 + $0x4c8] sm:$0xff]
      %v506 = vld [vmem:[%s1 + $0x4d0] sm:$0xff]
      %v507 = vld [vmem:[%s1 + $0x4d8] sm:$0xff]
      %v508 = vld [vmem:[%s1 + $0x4e0] sm:$0xff]
      %v509 = vld [vmem:[%s1 + $0x4e8] sm:$0xff]
      %v510 = vld [vmem:[%s1 + $0x4f0] sm:$0xff]
      %v511 = vld [vmem:[%s1 + $0x4f8] sm:$0xff]
      %v672 = vunpack.c.l.b16 %v352
      %v673 = vunpack.c.h.b16 %v352
      %v674 = vunpack.c.l.b16 %v353
      %v675 = vunpack.c.h.b16 %v353
      %v676 = vunpack.c.l.b16 %v354
      %v677 = vunpack.c.h.b16 %v354
      %v678 = vunpack.c.l.b16 %v355
      %v679 = vunpack.c.h.b16 %v355
      %v680 = vunpack.c.l.b16 %v356
      %v681 = vunpack.c.h.b16 %v356
      %v682 = vunpack.c.l.b16 %v357
      %v683 = vunpack.c.h.b16 %v357
      %v684 = vunpack.c.l.b16 %v358
      %v685 = vunpack.c.h.b16 %v358
      %v686 = vunpack.c.l.b16 %v359
      %v687 = vunpack.c.h.b16 %v359
      %v688 = vunpack.c.l.b16 %v360
      %v689 = vunpack.c.h.b16 %v360
      %v690 = vunpack.c.l.b16 %v361
      %v691 = vunpack.c.h.b16 %v361
      %v692 = vunpack.c.l.b16 %v362
      %v693 = vunpack.c.h.b16 %v362
      %v694 = vunpack.c.l.b16 %v363
      %v695 = vunpack.c.h.b16 %v363
      %v696 = vunpack.c.l.b16 %v364
      %v697 = vunpack.c.h.b16 %v364
      %v698 = vunpack.c.l.b16 %v365
      %v699 = vunpack.c.h.b16 %v365
      %v700 = vunpack.c.l.b16 %v366
      %v701 = vunpack.c.h.b16 %v366
      %v702 = vunpack.c.l.b16 %v367
      %v703 = vunpack.c.h.b16 %v367
      %v704 = vunpack.c.l.b16 %v368
      %v705 = vunpack.c.h.b16 %v368
      %v706 = vunpack.c.l.b16 %v369
      %v707 = vunpack.c.h.b16 %v369
      %v708 = vunpack.c.l.b16 %v370
      %v709 = vunpack.c.h.b16 %v370
      %v710 = vunpack.c.l.b16 %v371
      %v711 = vunpack.c.h.b16 %v371
      %v712 = vunpack.c.l.b16 %v372
      %v713 = vunpack.c.h.b16 %v372
      %v714 = vunpack.c.l.b16 %v373
      %v715 = vunpack.c.h.b16 %v373
      %v716 = vunpack.c.l.b16 %v374
      %v717 = vunpack.c.h.b16 %v374
      %v718 = vunpack.c.l.b16 %v375
      %v719 = vunpack.c.h.b16 %v375
      %v720 = vunpack.c.l.b16 %v376
      %v721 = vunpack.c.h.b16 %v376
      %v722 = vunpack.c.l.b16 %v377
      %v723 = vunpack.c.h.b16 %v377
      %v724 = vunpack.c.l.b16 %v378
      %v725 = vunpack.c.h.b16 %v378
      %v726 = vunpack.c.l.b16 %v379
      %v727 = vunpack.c.h.b16 %v379
      %v728 = vunpack.c.l.b16 %v380
      %v729 = vunpack.c.h.b16 %v380
      %v730 = vunpack.c.l.b16 %v381
      %v731 = vunpack.c.h.b16 %v381
      %v732 = vunpack.c.l.b16 %v382
      %v733 = vunpack.c.h.b16 %v382
      %v734 = vunpack.c.l.b16 %v383
      %v735 = vunpack.c.h.b16 %v383
      %v736 = vunpack.c.l.b16 %v384
      %v737 = vunpack.c.h.b16 %v384
      %v738 = vunpack.c.l.b16 %v385
      %v739 = vunpack.c.h.b16 %v385
      %v740 = vunpack.c.l.b16 %v386
      %v741 = vunpack.c.h.b16 %v386
      %v742 = vunpack.c.l.b16 %v387
      %v743 = vunpack.c.h.b16 %v387
      %v744 = vunpack.c.l.b16 %v388
      %v745 = vunpack.c.h.b16 %v388
      %v746 = vunpack.c.l.b16 %v389
      %v747 = vunpack.c.h.b16 %v389
      %v748 = vunpack.c.l.b16 %v390
      %v749 = vunpack.c.h.b16 %v390
      %v750 = vunpack.c.l.b16 %v391
      %v751 = vunpack.c.h.b16 %v391
      %v752 = vunpack.c.l.b16 %v392
      %v753 = vunpack.c.h.b16 %v392
      %v754 = vunpack.c.l.b16 %v393
      %v755 = vunpack.c.h.b16 %v393
      %v756 = vunpack.c.l.b16 %v394
      %v757 = vunpack.c.h.b16 %v394
      %v758 = vunpack.c.l.b16 %v395
      %v759 = vunpack.c.h.b16 %v395
      %v760 = vunpack.c.l.b16 %v396
      %v761 = vunpack.c.h.b16 %v396
      %v762 = vunpack.c.l.b16 %v397
      %v763 = vunpack.c.h.b16 %v397
      %v764 = vunpack.c.l.b16 %v398
      %v765 = vunpack.c.h.b16 %v398
      %v766 = vunpack.c.l.b16 %v399
      %v767 = vunpack.c.h.b16 %v399
      %v768 = vunpack.c.l.b16 %v400
      %v769 = vunpack.c.h.b16 %v400
      %v770 = vunpack.c.l.b16 %v401
      %v771 = vunpack.c.h.b16 %v401
      %v772 = vunpack.c.l.b16 %v402
      %v773 = vunpack.c.h.b16 %v402
      %v774 = vunpack.c.l.b16 %v403
      %v775 = vunpack.c.h.b16 %v403
      %v776 = vunpack.c.l.b16 %v404
      %v777 = vunpack.c.h.b16 %v404
      %v778 = vunpack.c.l.b16 %v405
      %v779 = vunpack.c.h.b16 %v405
      %v780 = vunpack.c.l.b16 %v406
      %v781 = vunpack.c.h.b16 %v406
      %v782 = vunpack.c.l.b16 %v407
      %v783 = vunpack.c.h.b16 %v407
      %v784 = vunpack.c.l.b16 %v408
      %v785 = vunpack.c.h.b16 %v408
      %v786 = vunpack.c.l.b16 %v409
      %v787 = vunpack.c.h.b16 %v409
      %v788 = vunpack.c.l.b16 %v410
      %v789 = vunpack.c.h.b16 %v410
      %v790 = vunpack.c.l.b16 %v411
      %v791 = vunpack.c.h.b16 %v411
      %v792 = vunpack.c.l.b16 %v412
      %v793 = vunpack.c.h.b16 %v412
      %v794 = vunpack.c.l.b16 %v413
      %v795 = vunpack.c.h.b16 %v413
      %v796 = vunpack.c.l.b16 %v414
      %v797 = vunpack.c.h.b16 %v414
      %v798 = vunpack.c.l.b16 %v415
      %v799 = vunpack.c.h.b16 %v415
      %v800 = vunpack.c.l.b16 %v416
      %v801 = vunpack.c.h.b16 %v416
      %v802 = vunpack.c.l.b16 %v417
      %v803 = vunpack.c.h.b16 %v417
      %v804 = vunpack.c.l.b16 %v418
      %v805 = vunpack.c.h.b16 %v418
      %v806 = vunpack.c.l.b16 %v419
      %v807 = vunpack.c.h.b16 %v419
      %v808 = vunpack.c.l.b16 %v420
      %v809 = vunpack.c.h.b16 %v420
      %v810 = vunpack.c.l.b16 %v421
      %v811 = vunpack.c.h.b16 %v421
      %v812 = vunpack.c.l.b16 %v422
      %v813 = vunpack.c.h.b16 %v422
      %v814 = vunpack.c.l.b16 %v423
      %v815 = vunpack.c.h.b16 %v423
      %v816 = vunpack.c.l.b16 %v424
      %v817 = vunpack.c.h.b16 %v424
      %v818 = vunpack.c.l.b16 %v425
      %v819 = vunpack.c.h.b16 %v425
      %v820 = vunpack.c.l.b16 %v426
      %v821 = vunpack.c.h.b16 %v426
      %v822 = vunpack.c.l.b16 %v427
      %v823 = vunpack.c.h.b16 %v427
      %v824 = vunpack.c.l.b16 %v428
      %v825 = vunpack.c.h.b16 %v428
      %v826 = vunpack.c.l.b16 %v429
      %v827 = vunpack.c.h.b16 %v429
      %v828 = vunpack.c.l.b16 %v430
      %v829 = vunpack.c.h.b16 %v430
      %v830 = vunpack.c.l.b16 %v431
      %v831 = vunpack.c.h.b16 %v431
      %v832 = vunpack.c.l.b16 %v432
      %v833 = vunpack.c.h.b16 %v432
      %v834 = vunpack.c.l.b16 %v433
      %v835 = vunpack.c.h.b16 %v433
      %v836 = vunpack.c.l.b16 %v434
      %v837 = vunpack.c.h.b16 %v434
      %v838 = vunpack.c.l.b16 %v435
      %v839 = vunpack.c.h.b16 %v435
      %v840 = vunpack.c.l.b16 %v436
      %v841 = vunpack.c.h.b16 %v436
      %v842 = vunpack.c.l.b16 %v437
      %v843 = vunpack.c.h.b16 %v437
      %v844 = vunpack.c.l.b16 %v438
      %v845 = vunpack.c.h.b16 %v438
      %v846 = vunpack.c.l.b16 %v439
      %v847 = vunpack.c.h.b16 %v439
      %v848 = vunpack.c.l.b16 %v440
      %v849 = vunpack.c.h.b16 %v440
      %v850 = vunpack.c.l.b16 %v441
      %v851 = vunpack.c.h.b16 %v441
      %v852 = vunpack.c.l.b16 %v442
      %v853 = vunpack.c.h.b16 %v442
      %v854 = vunpack.c.l.b16 %v443
      %v855 = vunpack.c.h.b16 %v443
      %v856 = vunpack.c.l.b16 %v444
      %v857 = vunpack.c.h.b16 %v444
      %v858 = vunpack.c.l.b16 %v445
      %v859 = vunpack.c.h.b16 %v445
      %v860 = vunpack.c.l.b16 %v446
      %v861 = vunpack.c.h.b16 %v446
      %v862 = vunpack.c.l.b16 %v447
      %v863 = vunpack.c.h.b16 %v447
      %v864 = vunpack.c.l.b16 %v448
      %v865 = vunpack.c.h.b16 %v448
      %v866 = vunpack.c.l.b16 %v449
      %v867 = vunpack.c.h.b16 %v449
      %v868 = vunpack.c.l.b16 %v450
      %v869 = vunpack.c.h.b16 %v450
      %v870 = vunpack.c.l.b16 %v451
      %v871 = vunpack.c.h.b16 %v451
      %v872 = vunpack.c.l.b16 %v452
      %v873 = vunpack.c.h.b16 %v452
      %v874 = vunpack.c.l.b16 %v453
      %v875 = vunpack.c.h.b16 %v453
      %v876 = vunpack.c.l.b16 %v454
      %v877 = vunpack.c.h.b16 %v454
      %v878 = vunpack.c.l.b16 %v455
      %v879 = vunpack.c.h.b16 %v455
      %v880 = vunpack.c.l.b16 %v456
      %v881 = vunpack.c.h.b16 %v456
      %v882 = vunpack.c.l.b16 %v457
      %v883 = vunpack.c.h.b16 %v457
      %v884 = vunpack.c.l.b16 %v458
      %v885 = vunpack.c.h.b16 %v458
      %v886 = vunpack.c.l.b16 %v459
      %v887 = vunpack.c.h.b16 %v459
      %v888 = vunpack.c.l.b16 %v460
      %v889 = vunpack.c.h.b16 %v460
      %v890 = vunpack.c.l.b16 %v461
      %v891 = vunpack.c.h.b16 %v461
      %v892 = vunpack.c.l.b16 %v462
      %v893 = vunpack.c.h.b16 %v462
      %v894 = vunpack.c.l.b16 %v463
      %v895 = vunpack.c.h.b16 %v463
      %v896 = vunpack.c.l.b16 %v464
      %v897 = vunpack.c.h.b16 %v464
      %v898 = vunpack.c.l.b16 %v465
      %v899 = vunpack.c.h.b16 %v465
      %v900 = vunpack.c.l.b16 %v466
      %v901 = vunpack.c.h.b16 %v466
      %v902 = vunpack.c.l.b16 %v467
      %v903 = vunpack.c.h.b16 %v467
      %v904 = vunpack.c.l.b16 %v468
      %v905 = vunpack.c.h.b16 %v468
      %v906 = vunpack.c.l.b16 %v469
      %v907 = vunpack.c.h.b16 %v469
      %v908 = vunpack.c.l.b16 %v470
      %v909 = vunpack.c.h.b16 %v470
      %v910 = vunpack.c.l.b16 %v471
      %v911 = vunpack.c.h.b16 %v471
      %v912 = vunpack.c.l.b16 %v472
      %v913 = vunpack.c.h.b16 %v472
      %v914 = vunpack.c.l.b16 %v473
      %v915 = vunpack.c.h.b16 %v473
      %v916 = vunpack.c.l.b16 %v474
      %v917 = vunpack.c.h.b16 %v474
      %v918 = vunpack.c.l.b16 %v475
      %v919 = vunpack.c.h.b16 %v475
      %v920 = vunpack.c.l.b16 %v476
      %v921 = vunpack.c.h.b16 %v476
      %v922 = vunpack.c.l.b16 %v477
      %v923 = vunpack.c.h.b16 %v477
      %v924 = vunpack.c.l.b16 %v478
      %v925 = vunpack.c.h.b16 %v478
      %v926 = vunpack.c.l.b16 %v479
      %v927 = vunpack.c.h.b16 %v479
      %v928 = vunpack.c.l.b16 %v480
      %v929 = vunpack.c.h.b16 %v480
      %v930 = vunpack.c.l.b16 %v481
      %v931 = vunpack.c.h.b16 %v481
      %v932 = vunpack.c.l.b16 %v482
      %v933 = vunpack.c.h.b16 %v482
      %v934 = vunpack.c.l.b16 %v483
      %v935 = vunpack.c.h.b16 %v483
      %v936 = vunpack.c.l.b16 %v484
      %v937 = vunpack.c.h.b16 %v484
      %v938 = vunpack.c.l.b16 %v485
      %v939 = vunpack.c.h.b16 %v485
      %v940 = vunpack.c.l.b16 %v486
      %v941 = vunpack.c.h.b16 %v486
      %v942 = vunpack.c.l.b16 %v487
      %v943 = vunpack.c.h.b16 %v487
      %v944 = vunpack.c.l.b16 %v488
      %v945 = vunpack.c.h.b16 %v488
      %v946 = vunpack.c.l.b16 %v489
      %v947 = vunpack.c.h.b16 %v489
      %v948 = vunpack.c.l.b16 %v490
      %v949 = vunpack.c.h.b16 %v490
      %v950 = vunpack.c.l.b16 %v491
      %v951 = vunpack.c.h.b16 %v491
      %v952 = vunpack.c.l.b16 %v492
      %v953 = vunpack.c.h.b16 %v492
      %v954 = vunpack.c.l.b16 %v493
      %v955 = vunpack.c.h.b16 %v493
      %v956 = vunpack.c.l.b16 %v494
      %v957 = vunpack.c.h.b16 %v494
      %v958 = vunpack.c.l.b16 %v495
      %v959 = vunpack.c.h.b16 %v495
      %v960 = vunpack.c.l.b16 %v496
      %v961 = vunpack.c.h.b16 %v496
      %v962 = vunpack.c.l.b16 %v497
      %v963 = vunpack.c.h.b16 %v497
      %v964 = vunpack.c.l.b16 %v498
      %v965 = vunpack.c.h.b16 %v498
      %v966 = vunpack.c.l.b16 %v499
      %v967 = vunpack.c.h.b16 %v499
      %v968 = vunpack.c.l.b16 %v500
      %v969 = vunpack.c.h.b16 %v500
      %v970 = vunpack.c.l.b16 %v501
      %v971 = vunpack.c.h.b16 %v501
      %v972 = vunpack.c.l.b16 %v502
      %v973 = vunpack.c.h.b16 %v502
      %v974 = vunpack.c.l.b16 %v503
      %v975 = vunpack.c.h.b16 %v503
      %v976 = vunpack.c.l.b16 %v504
      %v977 = vunpack.c.h.b16 %v504
      %v978 = vunpack.c.l.b16 %v505
      %v979 = vunpack.c.h.b16 %v505
      %v980 = vunpack.c.l.b16 %v506
      %v981 = vunpack.c.h.b16 %v506
      %v982 = vunpack.c.l.b16 %v507
      %v983 = vunpack.c.h.b16 %v507
      %v984 = vunpack.c.l.b16 %v508
      %v985 = vunpack.c.h.b16 %v508
      %v986 = vunpack.c.l.b16 %v509
      %v987 = vunpack.c.h.b16 %v509
      %v988 = vunpack.c.l.b16 %v510
      %v989 = vunpack.c.h.b16 %v510
      %v990 = vunpack.c.l.b16 %v511
      %v991 = vunpack.c.h.b16 %v511
      %v992 = vpack.c.b16 %v682, %v672
      %v993 = vpack.c.b16 %v683, %v673
      %v994 = vpack.c.b16 %v684, %v674
      %v995 = vpack.c.b16 %v685, %v675
      %v996 = vpack.c.b16 %v686, %v676
      %v997 = vpack.c.b16 %v687, %v677
      %v998 = vpack.c.b16 %v688, %v678
      %v999 = vpack.c.b16 %v689, %v679
      %v1000 = vpack.c.b16 %v690, %v680
      %v1001 = vpack.c.b16 %v691, %v681
      %v1002 = vpack.c.b16 %v702, %v692
      %v1003 = vpack.c.b16 %v703, %v693
      %v1004 = vpack.c.b16 %v704, %v694
      %v1005 = vpack.c.b16 %v705, %v695
      %v1006 = vpack.c.b16 %v706, %v696
      %v1007 = vpack.c.b16 %v707, %v697
      %v1008 = vpack.c.b16 %v708, %v698
      %v1009 = vpack.c.b16 %v709, %v699
      %v1010 = vpack.c.b16 %v710, %v700
      %v1011 = vpack.c.b16 %v711, %v701
      %v1012 = vpack.c.b16 %v722, %v712
      %v1013 = vpack.c.b16 %v723, %v713
      %v1014 = vpack.c.b16 %v724, %v714
      %v1015 = vpack.c.b16 %v725, %v715
      %v1016 = vpack.c.b16 %v726, %v716
      %v1017 = vpack.c.b16 %v727, %v717
      %v1018 = vpack.c.b16 %v728, %v718
      %v1019 = vpack.c.b16 %v729, %v719
      %v1020 = vpack.c.b16 %v730, %v720
      %v1021 = vpack.c.b16 %v731, %v721
      %v1022 = vpack.c.b16 %v742, %v732
      %v1023 = vpack.c.b16 %v743, %v733
      %v1024 = vpack.c.b16 %v744, %v734
      %v1025 = vpack.c.b16 %v745, %v735
      %v1026 = vpack.c.b16 %v746, %v736
      %v1027 = vpack.c.b16 %v747, %v737
      %v1028 = vpack.c.b16 %v748, %v738
      %v1029 = vpack.c.b16 %v749, %v739
      %v1030 = vpack.c.b16 %v750, %v740
      %v1031 = vpack.c.b16 %v751, %v741
      %v1032 = vpack.c.b16 %v762, %v752
      %v1033 = vpack.c.b16 %v763, %v753
      %v1034 = vpack.c.b16 %v764, %v754
      %v1035 = vpack.c.b16 %v765, %v755
      %v1036 = vpack.c.b16 %v766, %v756
      %v1037 = vpack.c.b16 %v767, %v757
      %v1038 = vpack.c.b16 %v768, %v758
      %v1039 = vpack.c.b16 %v769, %v759
      %v1040 = vpack.c.b16 %v770, %v760
      %v1041 = vpack.c.b16 %v771, %v761
      %v1042 = vpack.c.b16 %v782, %v772
      %v1043 = vpack.c.b16 %v783, %v773
      %v1044 = vpack.c.b16 %v784, %v774
      %v1045 = vpack.c.b16 %v785, %v775
      %v1046 = vpack.c.b16 %v786, %v776
      %v1047 = vpack.c.b16 %v787, %v777
      %v1048 = vpack.c.b16 %v788, %v778
      %v1049 = vpack.c.b16 %v789, %v779
      %v1050 = vpack.c.b16 %v790, %v780
      %v1051 = vpack.c.b16 %v791, %v781
      %v1052 = vpack.c.b16 %v802, %v792
      %v1053 = vpack.c.b16 %v803, %v793
      %v1054 = vpack.c.b16 %v804, %v794
      %v1055 = vpack.c.b16 %v805, %v795
      %v1056 = vpack.c.b16 %v806, %v796
      %v1057 = vpack.c.b16 %v807, %v797
      %v1058 = vpack.c.b16 %v808, %v798
      %v1059 = vpack.c.b16 %v809, %v799
      %v1060 = vpack.c.b16 %v810, %v800
      %v1061 = vpack.c.b16 %v811, %v801
      %v1062 = vpack.c.b16 %v822, %v812
      %v1063 = vpack.c.b16 %v823, %v813
      %v1064 = vpack.c.b16 %v824, %v814
      %v1065 = vpack.c.b16 %v825, %v815
      %v1066 = vpack.c.b16 %v826, %v816
      %v1067 = vpack.c.b16 %v827, %v817
      %v1068 = vpack.c.b16 %v828, %v818
      %v1069 = vpack.c.b16 %v829, %v819
      %v1070 = vpack.c.b16 %v830, %v820
      %v1071 = vpack.c.b16 %v831, %v821
      %v1072 = vpack.c.b16 %v842, %v832
      %v1073 = vpack.c.b16 %v843, %v833
      %v1074 = vpack.c.b16 %v844, %v834
      %v1075 = vpack.c.b16 %v845, %v835
      %v1076 = vpack.c.b16 %v846, %v836
      %v1077 = vpack.c.b16 %v847, %v837
      %v1078 = vpack.c.b16 %v848, %v838
      %v1079 = vpack.c.b16 %v849, %v839
      %v1080 = vpack.c.b16 %v850, %v840
      %v1081 = vpack.c.b16 %v851, %v841
      %v1082 = vpack.c.b16 %v862, %v852
      %v1083 = vpack.c.b16 %v863, %v853
      %v1084 = vpack.c.b16 %v864, %v854
      %v1085 = vpack.c.b16 %v865, %v855
      %v1086 = vpack.c.b16 %v866, %v856
      %v1087 = vpack.c.b16 %v867, %v857
      %v1088 = vpack.c.b16 %v868, %v858
      %v1089 = vpack.c.b16 %v869, %v859
      %v1090 = vpack.c.b16 %v870, %v860
      %v1091 = vpack.c.b16 %v871, %v861
      %v1092 = vpack.c.b16 %v882, %v872
      %v1093 = vpack.c.b16 %v883, %v873
      %v1094 = vpack.c.b16 %v884, %v874
      %v1095 = vpack.c.b16 %v885, %v875
      %v1096 = vpack.c.b16 %v886, %v876
      %v1097 = vpack.c.b16 %v887, %v877
      %v1098 = vpack.c.b16 %v888, %v878
      %v1099 = vpack.c.b16 %v889, %v879
      %v1100 = vpack.c.b16 %v890, %v880
      %v1101 = vpack.c.b16 %v891, %v881
      %v1102 = vpack.c.b16 %v902, %v892
      %v1103 = vpack.c.b16 %v903, %v893
      %v1104 = vpack.c.b16 %v904, %v894
      %v1105 = vpack.c.b16 %v905, %v895
      %v1106 = vpack.c.b16 %v906, %v896
      %v1107 = vpack.c.b16 %v907, %v897
      %v1108 = vpack.c.b16 %v908, %v898
      %v1109 = vpack.c.b16 %v909, %v899
      %v1110 = vpack.c.b16 %v910, %v900
      %v1111 = vpack.c.b16 %v911, %v901
      %v1112 = vpack.c.b16 %v922, %v912
      %v1113 = vpack.c.b16 %v923, %v913
      %v1114 = vpack.c.b16 %v924, %v914
      %v1115 = vpack.c.b16 %v925, %v915
      %v1116 = vpack.c.b16 %v926, %v916
      %v1117 = vpack.c.b16 %v927, %v917
      %v1118 = vpack.c.b16 %v928, %v918
      %v1119 = vpack.c.b16 %v929, %v919
      %v1120 = vpack.c.b16 %v930, %v920
      %v1121 = vpack.c.b16 %v931, %v921
      %v1122 = vpack.c.b16 %v942, %v932
      %v1123 = vpack.c.b16 %v943, %v933
      %v1124 = vpack.c.b16 %v944, %v934
      %v1125 = vpack.c.b16 %v945, %v935
      %v1126 = vpack.c.b16 %v946, %v936
      %v1127 = vpack.c.b16 %v947, %v937
      %v1128 = vpack.c.b16 %v948, %v938
      %v1129 = vpack.c.b16 %v949, %v939
      %v1130 = vpack.c.b16 %v950, %v940
      %v1131 = vpack.c.b16 %v951, %v941
      %v1132 = vpack.c.b16 %v962, %v952
      %v1133 = vpack.c.b16 %v963, %v953
      %v1134 = vpack.c.b16 %v964, %v954
      %v1135 = vpack.c.b16 %v965, %v955
      %v1136 = vpack.c.b16 %v966, %v956
      %v1137 = vpack.c.b16 %v967, %v957
      %v1138 = vpack.c.b16 %v968, %v958
      %v1139 = vpack.c.b16 %v969, %v959
      %v1140 = vpack.c.b16 %v970, %v960
      %v1141 = vpack.c.b16 %v971, %v961
      %v1142 = vpack.c.b16 %v982, %v972
      %v1143 = vpack.c.b16 %v983, %v973
      %v1144 = vpack.c.b16 %v984, %v974
      %v1145 = vpack.c.b16 %v985, %v975
      %v1146 = vpack.c.b16 %v986, %v976
      %v1147 = vpack.c.b16 %v987, %v977
      %v1148 = vpack.c.b16 %v988, %v978
      %v1149 = vpack.c.b16 %v989, %v979
      %v1150 = vpack.c.b16 %v990, %v980
      %v1151 = vpack.c.b16 %v991, %v981
      %1312 = vmatprep.subr.bf16.mxu0 %v993
      %1313 = vmatpush1.bf16.msra.mxu0 %v992
      %1314 = vmatprep.subr.bf16.mxu0 %v1003
      %1315 = vmatpush1.bf16.msra.mxu0 %v1002
      %1316 = vmatprep.subr.bf16.mxu0 %v1013
      %1317 = vmatpush1.bf16.msra.mxu0 %v1012
      %1318 = vmatprep.subr.bf16.mxu0 %v1023
      %1319 = vmatpush1.bf16.msra.mxu0 %v1022
      %1320 = vmatprep.subr.bf16.mxu0 %v1033
      %1321 = vmatpush1.bf16.msra.mxu0 %v1032
      %1322 = vmatprep.subr.bf16.mxu0 %v1043
      %1323 = vmatpush1.bf16.msra.mxu0 %v1042
      %1324 = vmatprep.subr.bf16.mxu0 %v1053
      %1325 = vmatpush1.bf16.msra.mxu0 %v1052
      %1326 = vmatprep.subr.bf16.mxu0 %v1063
      %1327 = vmatpush1.bf16.msra.mxu0 %v1062
      %1328 = vmatprep.subr.bf16.mxu0 %v1073
      %1329 = vmatpush1.bf16.msra.mxu0 %v1072
      %1330 = vmatprep.subr.bf16.mxu0 %v1083
      %1331 = vmatpush1.bf16.msra.mxu0 %v1082
      %1332 = vmatprep.subr.bf16.mxu0 %v1093
      %1333 = vmatpush1.bf16.msra.mxu0 %v1092
      %1334 = vmatprep.subr.bf16.mxu0 %v1103
      %1335 = vmatpush1.bf16.msra.mxu0 %v1102
      %1336 = vmatprep.subr.bf16.mxu0 %v1113
      %1337 = vmatpush1.bf16.msra.mxu0 %v1112
      %1338 = vmatprep.subr.bf16.mxu0 %v1123
      %1339 = vmatpush1.bf16.msra.mxu0 %v1122
      %1340 = vmatprep.subr.bf16.mxu0 %v1133
      %1341 = vmatpush1.bf16.msra.mxu0 %v1132
      %1342 = vmatprep.subr.bf16.mxu0 %v1143
      %1343 = vmatpush1.bf16.msra.mxu0 %v1142
      %1344 = vmatprep.mubr.bf16.mxu0 %v349
      %1345 = vmatmul.mubr.bf16.gmra.mrb[0].mxu0 %v348
      %v1346 = vpop.f32.mrb[0].mxu0
      %v1347 = vadd.f32 0.0, %v1346
      %v1348 = vpop.f32.mrb[0].mxu0
      %v1349 = vadd.f32 0.0, %v1348
      %v1350 = vpop.f32.mrb[0].mxu0
      %v1351 = vadd.f32 0.0, %v1350
      %v1352 = vpop.f32.mrb[0].mxu0
      %v1353 = vadd.f32 0.0, %v1352
      %1354 = vmatprep.mubr.bf16.mxu0 %v351
      %1355 = vmatmul.mubr.bf16.gmra.mrb[0].mxu0 %v350
      %v1356 = vpop.f32.mrb[0].mxu0
      %v1357 = vadd.f32 0.0, %v1356
      %v1358 = vpop.f32.mrb[0].mxu0
      %v1359 = vadd.f32 0.0, %v1358
      %v1360 = vpop.f32.mrb[0].mxu0
      %v1361 = vadd.f32 0.0, %v1360
      %v1362 = vpop.f32.mrb[0].mxu0
      %v1363 = vadd.f32 0.0, %v1362
      %1364 = vdwg.mxu0
      %1365 = vmatprep.subr.bf16.mxu0 %v995
      %1366 = vmatpush1.bf16.msra.mxu0 %v994
      %1367 = vmatprep.subr.bf16.mxu0 %v1005
      %1368 = vmatpush1.bf16.msra.mxu0 %v1004
      %1369 = vmatprep.subr.bf16.mxu0 %v1015
      %1370 = vmatpush1.bf16.msra.mxu0 %v1014
      %1371 = vmatprep.subr.bf16.mxu0 %v1025
      %1372 = vmatpush1.bf16.msra.mxu0 %v1024
      %1373 = vmatprep.subr.bf16.mxu0 %v1035
      %1374 = vmatpush1.bf16.msra.mxu0 %v1034
      %1375 = vmatprep.subr.bf16.mxu0 %v1045
      %1376 = vmatpush1.bf16.msra.mxu0 %v1044
      %1377 = vmatprep.subr.bf16.mxu0 %v1055
      %1378 = vmatpush1.bf16.msra.mxu0 %v1054
      %1379 = vmatprep.subr.bf16.mxu0 %v1065
      %1380 = vmatpush1.bf16.msra.mxu0 %v1064
      %1381 = vmatprep.subr.bf16.mxu0 %v1075
      %1382 = vmatpush1.bf16.msra.mxu0 %v1074
      %1383 = vmatprep.subr.bf16.mxu0 %v1085
      %1384 = vmatpush1.bf16.msra.mxu0 %v1084
      %1385 = vmatprep.subr.bf16.mxu0 %v1095
      %1386 = vmatpush1.bf16.msra.mxu0 %v1094
      %1387 = vmatprep.subr.bf16.mxu0 %v1105
      %1388 = vmatpush1.bf16.msra.mxu0 %v1104
      %1389 = vmatprep.subr.bf16.mxu0 %v1115
      %1390 = vmatpush1.bf16.msra.mxu0 %v1114
      %1391 = vmatprep.subr.bf16.mxu0 %v1125
      %1392 = vmatpush1.bf16.msra.mxu0 %v1124
      %1393 = vmatprep.subr.bf16.mxu0 %v1135
      %1394 = vmatpush1.bf16.msra.mxu0 %v1134
      %1395 = vmatprep.subr.bf16.mxu0 %v1145
      %1396 = vmatpush1.bf16.msra.mxu0 %v1144
      %1397 = vmatprep.mubr.bf16.mxu0 %v349
      %1398 = vmatmul.mubr.bf16.gmra.mrb[0].mxu0 %v348
      %v1399 = vpop.f32.mrb[0].mxu0
      %v1400 = vadd.f32 0.0, %v1399
      %v1401 = vpop.f32.mrb[0].mxu0
      %v1402 = vadd.f32 0.0, %v1401
      %v1403 = vpop.f32.mrb[0].mxu0
      %v1404 = vadd.f32 0.0, %v1403
      %v1405 = vpop.f32.mrb[0].mxu0
      %v1406 = vadd.f32 0.0, %v1405
      %1407 = vmatprep.mubr.bf16.mxu0 %v351
      %1408 = vmatmul.mubr.bf16.gmra.mrb[0].mxu0 %v350
      %v1409 = vpop.f32.mrb[0].mxu0
      %v1410 = vadd.f32 0.0, %v1409
      %v1411 = vpop.f32.mrb[0].mxu0
      %v1412 = vadd.f32 0.0, %v1411
      %v1413 = vpop.f32.mrb[0].mxu0
      %v1414 = vadd.f32 0.0, %v1413
      %v1415 = vpop.f32.mrb[0].mxu0
      %v1416 = vadd.f32 0.0, %v1415
      %1417 = vdwg.mxu0
      %1418 = vmatprep.subr.bf16.mxu0 %v997
      %1419 = vmatpush1.bf16.msra.mxu0 %v996
      %1420 = vmatprep.subr.bf16.mxu0 %v1007
      %1421 = vmatpush1.bf16.msra.mxu0 %v1006
      %1422 = vmatprep.subr.bf16.mxu0 %v1017
      %1423 = vmatpush1.bf16.msra.mxu0 %v1016
      %1424 = vmatprep.subr.bf16.mxu0 %v1027
      %1425 = vmatpush1.bf16.msra.mxu0 %v1026
      %1426 = vmatprep.subr.bf16.mxu0 %v1037
      %1427 = vmatpush1.bf16.msra.mxu0 %v1036
      %1428 = vmatprep.subr.bf16.mxu0 %v1047
      %1429 = vmatpush1.bf16.msra.mxu0 %v1046
      %1430 = vmatprep.subr.bf16.mxu0 %v1057
      %1431 = vmatpush1.bf16.msra.mxu0 %v1056
      %1432 = vmatprep.subr.bf16.mxu0 %v1067
      %1433 = vmatpush1.bf16.msra.mxu0 %v1066
      %1434 = vmatprep.subr.bf16.mxu0 %v1077
      %1435 = vmatpush1.bf16.msra.mxu0 %v1076
      %1436 = vmatprep.subr.bf16.mxu0 %v1087
      %1437 = vmatpush1.bf16.msra.mxu0 %v1086
      %1438 = vmatprep.subr.bf16.mxu0 %v1097
      %1439 = vmatpush1.bf16.msra.mxu0 %v1096
      %1440 = vmatprep.subr.bf16.mxu0 %v1107
      %1441 = vmatpush1.bf16.msra.mxu0 %v1106
      %1442 = vmatprep.subr.bf16.mxu0 %v1117
      %1443 = vmatpush1.bf16.msra.mxu0 %v1116
      %1444 = vmatprep.subr.bf16.mxu0 %v1127
      %1445 = vmatpush1.bf16.msra.mxu0 %v1126
      %1446 = vmatprep.subr.bf16.mxu0 %v1137
      %1447 = vmatpush1.bf16.msra.mxu0 %v1136
      %1448 = vmatprep.subr.bf16.mxu0 %v1147
      %1449 = vmatpush1.bf16.msra.mxu0 %v1146
      %1450 = vmatprep.mubr.bf16.mxu0 %v349
      %1451 = vmatmul.mubr.bf16.gmra.mrb[0].mxu0 %v348
      %v1452 = vpop.f32.mrb[0].mxu0
      %v1453 = vadd.f32 0.0, %v1452
      %v1454 = vpop.f32.mrb[0].mxu0
      %v1455 = vadd.f32 0.0, %v1454
      %v1456 = vpop.f32.mrb[0].mxu0
      %v1457 = vadd.f32 0.0, %v1456
      %v1458 = vpop.f32.mrb[0].mxu0
      %v1459 = vadd.f32 0.0, %v1458
      %1460 = vmatprep.mubr.bf16.mxu0 %v351
      %1461 = vmatmul.mubr.bf16.gmra.mrb[0].mxu0 %v350
      %v1462 = vpop.f32.mrb[0].mxu0
      %v1463 = vadd.f32 0.0, %v1462
      %v1464 = vpop.f32.mrb[0].mxu0
      %v1465 = vadd.f32 0.0, %v1464
      %v1466 = vpop.f32.mrb[0].mxu0
      %v1467 = vadd.f32 0.0, %v1466
      %v1468 = vpop.f32.mrb[0].mxu0
      %v1469 = vadd.f32 0.0, %v1468
      %1470 = vdwg.mxu0
      %1471 = vmatprep.subr.bf16.mxu0 %v999
      %1472 = vmatpush1.bf16.msra.mxu0 %v998
      %1473 = vmatprep.subr.bf16.mxu0 %v1009
      %1474 = vmatpush1.bf16.msra.mxu0 %v1008
      %1475 = vmatprep.subr.bf16.mxu0 %v1019
      %1476 = vmatpush1.bf16.msra.mxu0 %v1018
      %1477 = vmatprep.subr.bf16.mxu0 %v1029
      %1478 = vmatpush1.bf16.msra.mxu0 %v1028
      %1479 = vmatprep.subr.bf16.mxu0 %v1039
      %1480 = vmatpush1.bf16.msra.mxu0 %v1038
      %1481 = vmatprep.subr.bf16.mxu0 %v1049
      %1482 = vmatpush1.bf16.msra.mxu0 %v1048
      %1483 = vmatprep.subr.bf16.mxu0 %v1059
      %1484 = vmatpush1.bf16.msra.mxu0 %v1058
      %1485 = vmatprep.subr.bf16.mxu0 %v1069
      %1486 = vmatpush1.bf16.msra.mxu0 %v1068
      %1487 = vmatprep.subr.bf16.mxu0 %v1079
      %1488 = vmatpush1.bf16.msra.mxu0 %v1078
      %1489 = vmatprep.subr.bf16.mxu0 %v1089
      %1490 = vmatpush1.bf16.msra.mxu0 %v1088
      %1491 = vmatprep.subr.bf16.mxu0 %v1099
      %1492 = vmatpush1.bf16.msra.mxu0 %v1098
      %1493 = vmatprep.subr.bf16.mxu0 %v1109
      %1494 = vmatpush1.bf16.msra.mxu0 %v1108
      %1495 = vmatprep.subr.bf16.mxu0 %v1119
      %1496 = vmatpush1.bf16.msra.mxu0 %v1118
      %1497 = vmatprep.subr.bf16.mxu0 %v1129
      %1498 = vmatpush1.bf16.msra.mxu0 %v1128
      %1499 = vmatprep.subr.bf16.mxu0 %v1139
      %1500 = vmatpush1.bf16.msra.mxu0 %v1138
      %1501 = vmatprep.subr.bf16.mxu0 %v1149
      %1502 = vmatpush1.bf16.msra.mxu0 %v1148
      %1503 = vmatprep.mubr.bf16.mxu0 %v349
      %1504 = vmatmul.mubr.bf16.gmra.mrb[0].mxu0 %v348
      %v1505 = vpop.f32.mrb[0].mxu0
      %v1506 = vadd.f32 0.0, %v1505
      %v1507 = vpop.f32.mrb[0].mxu0
      %v1508 = vadd.f32 0.0, %v1507
      %v1509 = vpop.f32.mrb[0].mxu0
      %v1510 = vadd.f32 0.0, %v1509
      %v1511 = vpop.f32.mrb[0].mxu0
      %v1512 = vadd.f32 0.0, %v1511
      %1513 = vmatprep.mubr.bf16.mxu0 %v351
      %1514 = vmatmul.mubr.bf16.gmra.mrb[0].mxu0 %v350
      %v1515 = vpop.f32.mrb[0].mxu0
      %v1516 = vadd.f32 0.0, %v1515
      %v1517 = vpop.f32.mrb[0].mxu0
      %v1518 = vadd.f32 0.0, %v1517
      %v1519 = vpop.f32.mrb[0].mxu0
      %v1520 = vadd.f32 0.0, %v1519
      %v1521 = vpop.f32.mrb[0].mxu0
      %v1522 = vadd.f32 0.0, %v1521
      %1523 = vdwg.mxu0
      %1524 = vmatprep.subr.bf16.mxu0 %v1001
      %1525 = vmatpush1.bf16.msra.mxu0 %v1000
      %1526 = vmatprep.subr.bf16.mxu0 %v1011
      %1527 = vmatpush1.bf16.msra.mxu0 %v1010
      %1528 = vmatprep.subr.bf16.mxu0 %v1021
      %1529 = vmatpush1.bf16.msra.mxu0 %v1020
      %1530 = vmatprep.subr.bf16.mxu0 %v1031
      %1531 = vmatpush1.bf16.msra.mxu0 %v1030
      %1532 = vmatprep.subr.bf16.mxu0 %v1041
      %1533 = vmatpush1.bf16.msra.mxu0 %v1040
      %1534 = vmatprep.subr.bf16.mxu0 %v1051
      %1535 = vmatpush1.bf16.msra.mxu0 %v1050
      %1536 = vmatprep.subr.bf16.mxu0 %v1061
      %1537 = vmatpush1.bf16.msra.mxu0 %v1060
      %1538 = vmatprep.subr.bf16.mxu0 %v1071
      %1539 = vmatpush1.bf16.msra.mxu0 %v1070
      %1540 = vmatprep.subr.bf16.mxu0 %v1081
      %1541 = vmatpush1.bf16.msra.mxu0 %v1080
      %1542 = vmatprep.subr.bf16.mxu0 %v1091
      %1543 = vmatpush1.bf16.msra.mxu0 %v1090
      %1544 = vmatprep.subr.bf16.mxu0 %v1101
      %1545 = vmatpush1.bf16.msra.mxu0 %v1100
      %1546 = vmatprep.subr.bf16.mxu0 %v1111
      %1547 = vmatpush1.bf16.msra.mxu0 %v1110
      %1548 = vmatprep.subr.bf16.mxu0 %v1121
      %1549 = vmatpush1.bf16.msra.mxu0 %v1120
      %1550 = vmatprep.subr.bf16.mxu0 %v1131
      %1551 = vmatpush1.bf16.msra.mxu0 %v1130
      %1552 = vmatprep.subr.bf16.mxu0 %v1141
      %1553 = vmatpush1.bf16.msra.mxu0 %v1140
      %1554 = vmatprep.subr.bf16.mxu0 %v1151
      %1555 = vmatpush1.bf16.msra.mxu0 %v1150
      %1556 = vmatprep.mubr.bf16.mxu0 %v349
      %1557 = vmatmul.mubr.bf16.gmra.mrb[0].mxu0 %v348
      %v1558 = vpop.f32.mrb[0].mxu0
      %v1559 = vadd.f32 0.0, %v1558
      %v1560 = vpop.f32.mrb[0].mxu0
      %v1561 = vadd.f32 0.0, %v1560
      %v1562 = vpop.f32.mrb[0].mxu0
      %v1563 = vadd.f32 0.0, %v1562
      %v1564 = vpop.f32.mrb[0].mxu0
      %v1565 = vadd.f32 0.0, %v1564
      %1566 = vmatprep.mubr.bf16.mxu0 %v351
      %1567 = vmatmul.mubr.bf16.gmra.mrb[0].mxu0 %v350
      %v1568 = vpop.f32.mrb[0].mxu0
      %v1569 = vadd.f32 0.0, %v1568
      %v1570 = vpop.f32.mrb[0].mxu0
      %v1571 = vadd.f32 0.0, %v1570
      %v1572 = vpop.f32.mrb[0].mxu0
      %v1573 = vadd.f32 0.0, %v1572
      %v1574 = vpop.f32.mrb[0].mxu0
      %v1575 = vadd.f32 0.0, %v1574
      %1576 = vdwg.mxu0
      %v1577 = vpack.c.bf16 %v1351, %v1347
      %v1578 = vpack.c.bf16 %v1353, %v1349
      %v1579 = vpack.c.bf16 %v1404, %v1400
      %v1580 = vpack.c.bf16 %v1406, %v1402
      %v1581 = vpack.c.bf16 %v1457, %v1453
      %v1582 = vpack.c.bf16 %v1459, %v1455
      %v1583 = vpack.c.bf16 %v1510, %v1506
      %v1584 = vpack.c.bf16 %v1512, %v1508
      %v1585 = vpack.c.bf16 %v1563, %v1559
      %v1586 = vpack.c.bf16 %v1565, %v1561
      %v1587 = vpack.c.bf16 %v1361, %v1357
      %v1588 = vpack.c.bf16 %v1363, %v1359
      %v1589 = vpack.c.bf16 %v1414, %v1410
      %v1590 = vpack.c.bf16 %v1416, %v1412
      %v1591 = vpack.c.bf16 %v1467, %v1463
      %v1592 = vpack.c.bf16 %v1469, %v1465
      %v1593 = vpack.c.bf16 %v1520, %v1516
      %v1594 = vpack.c.bf16 %v1522, %v1518
      %v1595 = vpack.c.bf16 %v1573, %v1569
      %v1596 = vpack.c.bf16 %v1575, %v1571
      %1597 = vst [vmem:[#allocation2 + $0x8] sm:$0xff] %v1577
      %1598 = vst [vmem:[#allocation2 + $0x10] sm:$0xff] %v1578
      %1599 = vst [vmem:[#allocation2 + $0x18] sm:$0xff] %v1579
      %1600 = vst [vmem:[#allocation2 + $0x20] sm:$0xff] %v1580
      %1601 = vst [vmem:[#allocation2 + $0x28] sm:$0xff] %v1581
      %1602 = vst [vmem:[#allocation2 + $0x30] sm:$0xff] %v1582
      %1603 = vst [vmem:[#allocation2 + $0x38] sm:$0xff] %v1583
      %1604 = vst [vmem:[#allocation2 + $0x40] sm:$0xff] %v1584
      %1605 = vst [vmem:[#allocation2 + $0x48] sm:$0xff] %v1585
      %1606 = vst [vmem:[#allocation2 + $0x50] sm:$0xff] %v1586
      %1607 = vst [vmem:[#allocation2 + $0x68] sm:$0xff] %v1587
      %1608 = vst [vmem:[#allocation2 + $0x70] sm:$0xff] %v1588
      %1609 = vst [vmem:[#allocation2 + $0x78] sm:$0xff] %v1589
      %1610 = vst [vmem:[#allocation2 + $0x80] sm:$0xff] %v1590
      %1611 = vst [vmem:[#allocation2 + $0x88] sm:$0xff] %v1591
      %1612 = vst [vmem:[#allocation2 + $0x90] sm:$0xff] %v1592
      %1613 = vst [vmem:[#allocation2 + $0x98] sm:$0xff] %v1593
      %1614 = vst [vmem:[#allocation2 + $0xa0] sm:$0xff] %v1594
      %1615 = vst [vmem:[#allocation2 + $0xa8] sm:$0xff] %v1595
      %1616 = vst [vmem:[#allocation2 + $0xb0] sm:$0xff] %v1596
      %v1617 = vld [vmem:[%s2] sm:$0xf]
      %v1618 = vld [vmem:[%s2 + $0x4] sm:$0xf]
      %v1619 = vld [vmem:[#allocation2] sm:$0xff]
      %v1620 = vld [vmem:[#allocation2 + $0x8] sm:$0xff]
      %v1621 = vld [vmem:[#allocation2 + $0x10] sm:$0xff]
      %v1622 = vld [vmem:[#allocation2 + $0x18] sm:$0xff]
      %v1623 = vld [vmem:[#allocation2 + $0x20] sm:$0xff]
      %v1624 = vld [vmem:[#allocation2 + $0x28] sm:$0xff]
      %v1625 = vld [vmem:[#allocation2 + $0x30] sm:$0xff]
      %v1626 = vld [vmem:[#allocation2 + $0x38] sm:$0xff]
      %v1627 = vld [vmem:[#allocation2 + $0x40] sm:$0xff]
      %v1628 = vld [vmem:[#allocation2 + $0x48] sm:$0xff]
      %v1629 = vld [vmem:[#allocation2 + $0x50] sm:$0xff]
      %v1630 = vld [vmem:[#allocation2 + $0x60] sm:$0xff]
      %v1631 = vld [vmem:[#allocation2 + $0x68] sm:$0xff]
      %v1632 = vld [vmem:[#allocation2 + $0x70] sm:$0xff]
      %v1633 = vld [vmem:[#allocation2 + $0x78] sm:$0xff]
      %v1634 = vld [vmem:[#allocation2 + $0x80] sm:$0xff]
      %v1635 = vld [vmem:[#allocation2 + $0x88] sm:$0xff]
      %v1636 = vld [vmem:[#allocation2 + $0x90] sm:$0xff]
      %v1637 = vld [vmem:[#allocation2 + $0x98] sm:$0xff]
      %v1638 = vld [vmem:[#allocation2 + $0xa0] sm:$0xff]
      %v1639 = vld [vmem:[#allocation2 + $0xa8] sm:$0xff]
      %v1640 = vld [vmem:[#allocation2 + $0xb0] sm:$0xff]
      %v1641 = vld [vmem:[%s2 + $0x8] sm:$0xf]
      %v1642 = vld [vmem:[%s2 + $0xc] sm:$0xf]
      %v1645 = vunpack.c.l.b16 %v1641
      %v1646 = vunpack.c.l.b16 %v1642
      %v1647 = vpack.c.b16 %v1646, %v1645
      %1670 = vrot.lane.b32.xlu0 %v1619, 34
      %v1671 = vpop.permute.xlu0 %1670
      %1672 = vrot.lane.b32.xlu0 %v1620, 34
      %v1673 = vpop.permute.xlu0 %1672
      %1674 = vrot.lane.b32.xlu0 %v1621, 34
      %v1675 = vpop.permute.xlu0 %1674
      %1676 = vrot.lane.b32.xlu0 %v1622, 34
      %v1677 = vpop.permute.xlu0 %1676
      %1678 = vrot.lane.b32.xlu0 %v1623, 34
      %v1679 = vpop.permute.xlu0 %1678
      %1680 = vrot.lane.b32.xlu0 %v1624, 34
      %v1681 = vpop.permute.xlu0 %1680
      %1682 = vrot.lane.b32.xlu0 %v1625, 34
      %v1683 = vpop.permute.xlu0 %1682
      %1684 = vrot.lane.b32.xlu0 %v1626, 34
      %v1685 = vpop.permute.xlu0 %1684
      %1686 = vrot.lane.b32.xlu0 %v1627, 34
      %v1687 = vpop.permute.xlu0 %1686
      %1688 = vrot.lane.b32.xlu0 %v1628, 34
      %v1689 = vpop.permute.xlu0 %1688
      %1690 = vrot.lane.b32.xlu0 %v1629, 34
      %v1691 = vpop.permute.xlu0 %1690
      %1692 = vrot.lane.b32.xlu0 %v1630, 34
      %v1693 = vpop.permute.xlu0 %1692
      %1694 = vrot.lane.b32.xlu0 %v1631, 34
      %v1695 = vpop.permute.xlu0 %1694
      %1696 = vrot.lane.b32.xlu0 %v1632, 34
      %v1697 = vpop.permute.xlu0 %1696
      %1698 = vrot.lane.b32.xlu0 %v1633, 34
      %v1699 = vpop.permute.xlu0 %1698
      %1700 = vrot.lane.b32.xlu0 %v1634, 34
      %v1701 = vpop.permute.xlu0 %1700
      %1702 = vrot.lane.b32.xlu0 %v1635, 34
      %v1703 = vpop.permute.xlu0 %1702
      %1704 = vrot.lane.b32.xlu0 %v1636, 34
      %v1705 = vpop.permute.xlu0 %1704
      %1706 = vrot.lane.b32.xlu0 %v1637, 34
      %v1707 = vpop.permute.xlu0 %1706
      %1708 = vrot.lane.b32.xlu0 %v1638, 34
      %v1709 = vpop.permute.xlu0 %1708
      %1710 = vrot.lane.b32.xlu0 %v1639, 34
      %v1711 = vpop.permute.xlu0 %1710
      %1712 = vrot.lane.b32.xlu0 %v1640, 34
      %v1713 = vpop.permute.xlu0 %1712
      %vm1714 = vcmask 277504
      %v1715 = vsel %vm1714, %v1671, %v1673
      %v1716 = vsel %vm1714, %v1673, %v1675
      %v1717 = vsel %vm1714, %v1675, %v1677
      %v1718 = vsel %vm1714, %v1677, %v1679
      %v1719 = vsel %vm1714, %v1679, %v1681
      %v1720 = vsel %vm1714, %v1681, %v1683
      %v1721 = vsel %vm1714, %v1683, %v1685
      %v1722 = vsel %vm1714, %v1685, %v1687
      %v1723 = vsel %vm1714, %v1687, %v1689
      %v1724 = vsel %vm1714, %v1689, %v1691
      %v1725 = vsel %vm1714, %v1693, %v1695
      %v1726 = vsel %vm1714, %v1695, %v1697
      %v1727 = vsel %vm1714, %v1697, %v1699
      %v1728 = vsel %vm1714, %v1699, %v1701
      %v1729 = vsel %vm1714, %v1701, %v1703
      %v1730 = vsel %vm1714, %v1703, %v1705
      %v1731 = vsel %vm1714, %v1705, %v1707
      %v1732 = vsel %vm1714, %v1707, %v1709
      %v1733 = vsel %vm1714, %v1709, %v1711
      %v1734 = vsel %vm1714, %v1711, %v1713
      %vm1755 = vcmask 261120
      %v1757 = vsel %vm1755, %v1647, 0
      %1759 = vmatprep.subr.bf16.mxu0 %v1716
      %1760 = vmatpush1.bf16.msra.mxu0 %v1715
      %1761 = vmatprep.subr.bf16.mxu0 %v1726
      %1762 = vmatpush1.bf16.msra.mxu0 %v1725
      %1763 = vmatprep.subr.bf16.mxu0 0
      %1764 = vmatpush1.bf16.msra.mxu0 0
      %1765 = vmatprep.subr.bf16.mxu0 0
      %1766 = vmatpush1.bf16.msra.mxu0 0
      %1767 = vmatprep.subr.bf16.mxu0 0
      %1768 = vmatpush1.bf16.msra.mxu0 0
      %1769 = vmatprep.subr.bf16.mxu0 0
      %1770 = vmatpush1.bf16.msra.mxu0 0
      %1771 = vmatprep.subr.bf16.mxu0 0
      %1772 = vmatpush1.bf16.msra.mxu0 0
      %1773 = vmatprep.subr.bf16.mxu0 0
      %1774 = vmatpush1.bf16.msra.mxu0 0
      %1775 = vmatprep.subr.bf16.mxu0 0
      %1776 = vmatpush1.bf16.msra.mxu0 0
      %1777 = vmatprep.subr.bf16.mxu0 0
      %1778 = vmatpush1.bf16.msra.mxu0 0
      %1779 = vmatprep.subr.bf16.mxu0 0
      %1780 = vmatpush1.bf16.msra.mxu0 0
      %1781 = vmatprep.subr.bf16.mxu0 0
      %1782 = vmatpush1.bf16.msra.mxu0 0
      %1783 = vmatprep.subr.bf16.mxu0 0
      %1784 = vmatpush1.bf16.msra.mxu0 0
      %1785 = vmatprep.subr.bf16.mxu0 0
      %1786 = vmatpush1.bf16.msra.mxu0 0
      %1787 = vmatprep.subr.bf16.mxu0 0
      %1788 = vmatpush1.bf16.msra.mxu0 0
      %1789 = vmatprep.subr.bf16.mxu0 0
      %1790 = vmatpush1.bf16.msra.mxu0 0
      %1791 = vmatprep.mubr.bf16.mxu0 0
      %1792 = vmatmul.mubr.bf16.gmra.mrb[0].mxu0 %v1757
      %v1793 = vpop.f32.mrb[0].mxu0
      %v1794 = vadd.f32 0.0, %v1793
      %v1795 = vpop.f32.mrb[0].mxu0
      %v1796 = vadd.f32 0.0, %v1795
      %v1797 = vpop.f32.mrb[0].mxu0
      %v1798 = vadd.f32 0.0, %v1797
      %v1799 = vpop.f32.mrb[0].mxu0
      %v1800 = vadd.f32 0.0, %v1799
      %1801 = vdwg.mxu0
      %1802 = vmatprep.subr.bf16.mxu0 %v1718
      %1803 = vmatpush1.bf16.msra.mxu0 %v1717
      %1804 = vmatprep.subr.bf16.mxu0 %v1728
      %1805 = vmatpush1.bf16.msra.mxu0 %v1727
      %1806 = vmatprep.subr.bf16.mxu0 0
      %1807 = vmatpush1.bf16.msra.mxu0 0
      %1808 = vmatprep.subr.bf16.mxu0 0
      %1809 = vmatpush1.bf16.msra.mxu0 0
      %1810 = vmatprep.subr.bf16.mxu0 0
      %1811 = vmatpush1.bf16.msra.mxu0 0
      %1812 = vmatprep.subr.bf16.mxu0 0
      %1813 = vmatpush1.bf16.msra.mxu0 0
      %1814 = vmatprep.subr.bf16.mxu0 0
      %1815 = vmatpush1.bf16.msra.mxu0 0
      %1816 = vmatprep.subr.bf16.mxu0 0
      %1817 = vmatpush1.bf16.msra.mxu0 0
      %1818 = vmatprep.subr.bf16.mxu0 0
      %1819 = vmatpush1.bf16.msra.mxu0 0
      %1820 = vmatprep.subr.bf16.mxu0 0
      %1821 = vmatpush1.bf16.msra.mxu0 0
      %1822 = vmatprep.subr.bf16.mxu0 0
      %1823 = vmatpush1.bf16.msra.mxu0 0
      %1824 = vmatprep.subr.bf16.mxu0 0
      %1825 = vmatpush1.bf16.msra.mxu0 0
      %1826 = vmatprep.subr.bf16.mxu0 0
      %1827 = vmatpush1.bf16.msra.mxu0 0
      %1828 = vmatprep.subr.bf16.mxu0 0
      %1829 = vmatpush1.bf16.msra.mxu0 0
      %1830 = vmatprep.subr.bf16.mxu0 0
      %1831 = vmatpush1.bf16.msra.mxu0 0
      %1832 = vmatprep.subr.bf16.mxu0 0
      %1833 = vmatpush1.bf16.msra.mxu0 0
      %1834 = vmatprep.mubr.bf16.mxu0 0
      %1835 = vmatmul.mubr.bf16.gmra.mrb[0].mxu0 %v1757
      %v1836 = vpop.f32.mrb[0].mxu0
      %v1837 = vadd.f32 0.0, %v1836
      %v1838 = vpop.f32.mrb[0].mxu0
      %v1839 = vadd.f32 0.0, %v1838
      %v1840 = vpop.f32.mrb[0].mxu0
      %v1841 = vadd.f32 0.0, %v1840
      %v1842 = vpop.f32.mrb[0].mxu0
      %v1843 = vadd.f32 0.0, %v1842
      %1844 = vdwg.mxu0
      %1845 = vmatprep.subr.bf16.mxu0 %v1720
      %1846 = vmatpush1.bf16.msra.mxu0 %v1719
      %1847 = vmatprep.subr.bf16.mxu0 %v1730
      %1848 = vmatpush1.bf16.msra.mxu0 %v1729
      %1849 = vmatprep.subr.bf16.mxu0 0
      %1850 = vmatpush1.bf16.msra.mxu0 0
      %1851 = vmatprep.subr.bf16.mxu0 0
      %1852 = vmatpush1.bf16.msra.mxu0 0
      %1853 = vmatprep.subr.bf16.mxu0 0
      %1854 = vmatpush1.bf16.msra.mxu0 0
      %1855 = vmatprep.subr.bf16.mxu0 0
      %1856 = vmatpush1.bf16.msra.mxu0 0
      %1857 = vmatprep.subr.bf16.mxu0 0
      %1858 = vmatpush1.bf16.msra.mxu0 0
      %1859 = vmatprep.subr.bf16.mxu0 0
      %1860 = vmatpush1.bf16.msra.mxu0 0
      %1861 = vmatprep.subr.bf16.mxu0 0
      %1862 = vmatpush1.bf16.msra.mxu0 0
      %1863 = vmatprep.subr.bf16.mxu0 0
      %1864 = vmatpush1.bf16.msra.mxu0 0
      %1865 = vmatprep.subr.bf16.mxu0 0
      %1866 = vmatpush1.bf16.msra.mxu0 0
      %1867 = vmatprep.subr.bf16.mxu0 0
      %1868 = vmatpush1.bf16.msra.mxu0 0
      %1869 = vmatprep.subr.bf16.mxu0 0
      %1870 = vmatpush1.bf16.msra.mxu0 0
      %1871 = vmatprep.subr.bf16.mxu0 0
      %1872 = vmatpush1.bf16.msra.mxu0 0
      %1873 = vmatprep.subr.bf16.mxu0 0
      %1874 = vmatpush1.bf16.msra.mxu0 0
      %1875 = vmatprep.subr.bf16.mxu0 0
      %1876 = vmatpush1.bf16.msra.mxu0 0
      %1877 = vmatprep.mubr.bf16.mxu0 0
      %1878 = vmatmul.mubr.bf16.gmra.mrb[0].mxu0 %v1757
      %v1879 = vpop.f32.mrb[0].mxu0
      %v1880 = vadd.f32 0.0, %v1879
      %v1881 = vpop.f32.mrb[0].mxu0
      %v1882 = vadd.f32 0.0, %v1881
      %v1883 = vpop.f32.mrb[0].mxu0
      %v1884 = vadd.f32 0.0, %v1883
      %v1885 = vpop.f32.mrb[0].mxu0
      %v1886 = vadd.f32 0.0, %v1885
      %1887 = vdwg.mxu0
      %1888 = vmatprep.subr.bf16.mxu0 %v1722
      %1889 = vmatpush1.bf16.msra.mxu0 %v1721
      %1890 = vmatprep.subr.bf16.mxu0 %v1732
      %1891 = vmatpush1.bf16.msra.mxu0 %v1731
      %1892 = vmatprep.subr.bf16.mxu0 0
      %1893 = vmatpush1.bf16.msra.mxu0 0
      %1894 = vmatprep.subr.bf16.mxu0 0
      %1895 = vmatpush1.bf16.msra.mxu0 0
      %1896 = vmatprep.subr.bf16.mxu0 0
      %1897 = vmatpush1.bf16.msra.mxu0 0
      %1898 = vmatprep.subr.bf16.mxu0 0
      %1899 = vmatpush1.bf16.msra.mxu0 0
      %1900 = vmatprep.subr.bf16.mxu0 0
      %1901 = vmatpush1.bf16.msra.mxu0 0
      %1902 = vmatprep.subr.bf16.mxu0 0
      %1903 = vmatpush1.bf16.msra.mxu0 0
      %1904 = vmatprep.subr.bf16.mxu0 0
      %1905 = vmatpush1.bf16.msra.mxu0 0
      %1906 = vmatprep.subr.bf16.mxu0 0
      %1907 = vmatpush1.bf16.msra.mxu0 0
      %1908 = vmatprep.subr.bf16.mxu0 0
      %1909 = vmatpush1.bf16.msra.mxu0 0
      %1910 = vmatprep.subr.bf16.mxu0 0
      %1911 = vmatpush1.bf16.msra.mxu0 0
      %1912 = vmatprep.subr.bf16.mxu0 0
      %1913 = vmatpush1.bf16.msra.mxu0 0
      %1914 = vmatprep.subr.bf16.mxu0 0
      %1915 = vmatpush1.bf16.msra.mxu0 0
      %1916 = vmatprep.subr.bf16.mxu0 0
      %1917 = vmatpush1.bf16.msra.mxu0 0
      %1918 = vmatprep.subr.bf16.mxu0 0
      %1919 = vmatpush1.bf16.msra.mxu0 0
      %1920 = vmatprep.mubr.bf16.mxu0 0
      %1921 = vmatmul.mubr.bf16.gmra.mrb[0].mxu0 %v1757
      %v1922 = vpop.f32.mrb[0].mxu0
      %v1923 = vadd.f32 0.0, %v1922
      %v1924 = vpop.f32.mrb[0].mxu0
      %v1925 = vadd.f32 0.0, %v1924
      %v1926 = vpop.f32.mrb[0].mxu0
      %v1927 = vadd.f32 0.0, %v1926
      %v1928 = vpop.f32.mrb[0].mxu0
      %v1929 = vadd.f32 0.0, %v1928
      %1930 = vdwg.mxu0
      %1931 = vmatprep.subr.bf16.mxu0 %v1724
      %1932 = vmatpush1.bf16.msra.mxu0 %v1723
      %1933 = vmatprep.subr.bf16.mxu0 %v1734
      %1934 = vmatpush1.bf16.msra.mxu0 %v1733
      %1935 = vmatprep.subr.bf16.mxu0 0
      %1936 = vmatpush1.bf16.msra.mxu0 0
      %1937 = vmatprep.subr.bf16.mxu0 0
      %1938 = vmatpush1.bf16.msra.mxu0 0
      %1939 = vmatprep.subr.bf16.mxu0 0
      %1940 = vmatpush1.bf16.msra.mxu0 0
      %1941 = vmatprep.subr.bf16.mxu0 0
      %1942 = vmatpush1.bf16.msra.mxu0 0
      %1943 = vmatprep.subr.bf16.mxu0 0
      %1944 = vmatpush1.bf16.msra.mxu0 0
      %1945 = vmatprep.subr.bf16.mxu0 0
      %1946 = vmatpush1.bf16.msra.mxu0 0
      %1947 = vmatprep.subr.bf16.mxu0 0
      %1948 = vmatpush1.bf16.msra.mxu0 0
      %1949 = vmatprep.subr.bf16.mxu0 0
      %1950 = vmatpush1.bf16.msra.mxu0 0
      %1951 = vmatprep.subr.bf16.mxu0 0
      %1952 = vmatpush1.bf16.msra.mxu0 0
      %1953 = vmatprep.subr.bf16.mxu0 0
      %1954 = vmatpush1.bf16.msra.mxu0 0
      %1955 = vmatprep.subr.bf16.mxu0 0
      %1956 = vmatpush1.bf16.msra.mxu0 0
      %1957 = vmatprep.subr.bf16.mxu0 0
      %1958 = vmatpush1.bf16.msra.mxu0 0
      %1959 = vmatprep.subr.bf16.mxu0 0
      %1960 = vmatpush1.bf16.msra.mxu0 0
      %1961 = vmatprep.subr.bf16.mxu0 0
      %1962 = vmatpush1.bf16.msra.mxu0 0
      %1963 = vmatprep.mubr.bf16.mxu0 0
      %1964 = vmatmul.mubr.bf16.gmra.mrb[0].mxu0 %v1757
      %v1965 = vpop.f32.mrb[0].mxu0
      %v1966 = vadd.f32 0.0, %v1965
      %v1967 = vpop.f32.mrb[0].mxu0
      %v1968 = vadd.f32 0.0, %v1967
      %v1969 = vpop.f32.mrb[0].mxu0
      %v1970 = vadd.f32 0.0, %v1969
      %v1971 = vpop.f32.mrb[0].mxu0
      %v1972 = vadd.f32 0.0, %v1971
      %1973 = vdwg.mxu0
      %v1976 = vunpack.c.l.b16 %v1617
      %v1977 = vunpack.c.l.b16 %v1618
      %v1978 = vpack.c.b16 %v1977, %v1976
      %1979 = vrot.lane.b32.xlu0 %v1619, 35
      %v1980 = vpop.permute.xlu0 %1979
      %1981 = vrot.lane.b32.xlu0 %v1620, 35
      %v1982 = vpop.permute.xlu0 %1981
      %1983 = vrot.lane.b32.xlu0 %v1621, 35
      %v1984 = vpop.permute.xlu0 %1983
      %1985 = vrot.lane.b32.xlu0 %v1622, 35
      %v1986 = vpop.permute.xlu0 %1985
      %1987 = vrot.lane.b32.xlu0 %v1623, 35
      %v1988 = vpop.permute.xlu0 %1987
      %1989 = vrot.lane.b32.xlu0 %v1624, 35
      %v1990 = vpop.permute.xlu0 %1989
      %1991 = vrot.lane.b32.xlu0 %v1625, 35
      %v1992 = vpop.permute.xlu0 %1991
      %1993 = vrot.lane.b32.xlu0 %v1626, 35
      %v1994 = vpop.permute.xlu0 %1993
      %1995 = vrot.lane.b32.xlu0 %v1627, 35
      %v1996 = vpop.permute.xlu0 %1995
      %1997 = vrot.lane.b32.xlu0 %v1628, 35
      %v1998 = vpop.permute.xlu0 %1997
      %1999 = vrot.lane.b32.xlu0 %v1629, 35
      %v2000 = vpop.permute.xlu0 %1999
      %2001 = vrot.lane.b32.xlu0 %v1630, 35
      %v2002 = vpop.permute.xlu0 %2001
      %2003 = vrot.lane.b32.xlu0 %v1631, 35
      %v2004 = vpop.permute.xlu0 %2003
      %2005 = vrot.lane.b32.xlu0 %v1632, 35
      %v2006 = vpop.permute.xlu0 %2005
      %2007 = vrot.lane.b32.xlu0 %v1633, 35
      %v2008 = vpop.permute.xlu0 %2007
      %2009 = vrot.lane.b32.xlu0 %v1634, 35
      %v2010 = vpop.permute.xlu0 %2009
      %2011 = vrot.lane.b32.xlu0 %v1635, 35
      %v2012 = vpop.permute.xlu0 %2011
      %2013 = vrot.lane.b32.xlu0 %v1636, 35
      %v2014 = vpop.permute.xlu0 %2013
      %2015 = vrot.lane.b32.xlu0 %v1637, 35
      %v2016 = vpop.permute.xlu0 %2015
      %2017 = vrot.lane.b32.xlu0 %v1638, 35
      %v2018 = vpop.permute.xlu0 %2017
      %2019 = vrot.lane.b32.xlu0 %v1639, 35
      %v2020 = vpop.permute.xlu0 %2019
      %2021 = vrot.lane.b32.xlu0 %v1640, 35
      %v2022 = vpop.permute.xlu0 %2021
      %vm2023 = vcmask 285696
      %v2024 = vsel %vm2023, %v1980, %v1982
      %v2025 = vsel %vm2023, %v1982, %v1984
      %v2026 = vsel %vm2023, %v1984, %v1986
      %v2027 = vsel %vm2023, %v1986, %v1988
      %v2028 = vsel %vm2023, %v1988, %v1990
      %v2029 = vsel %vm2023, %v1990, %v1992
      %v2030 = vsel %vm2023, %v1992, %v1994
      %v2031 = vsel %vm2023, %v1994, %v1996
      %v2032 = vsel %vm2023, %v1996, %v1998
      %v2033 = vsel %vm2023, %v1998, %v2000
      %v2034 = vsel %vm2023, %v2002, %v2004
      %v2035 = vsel %vm2023, %v2004, %v2006
      %v2036 = vsel %vm2023, %v2006, %v2008
      %v2037 = vsel %vm2023, %v2008, %v2010
      %v2038 = vsel %vm2023, %v2010, %v2012
      %v2039 = vsel %vm2023, %v2012, %v2014
      %v2040 = vsel %vm2023, %v2014, %v2016
      %v2041 = vsel %vm2023, %v2016, %v2018
      %v2042 = vsel %vm2023, %v2018, %v2020
      %v2043 = vsel %vm2023, %v2020, %v2022
      %v2065 = vsel %vm1755, %v1978, 0
      %2067 = vmatprep.subr.bf16.mxu0 %v2025
      %2068 = vmatpush1.bf16.msra.mxu0 %v2024
      %2069 = vmatprep.subr.bf16.mxu0 %v2035
      %2070 = vmatpush1.bf16.msra.mxu0 %v2034
      %2071 = vmatprep.subr.bf16.mxu0 0
      %2072 = vmatpush1.bf16.msra.mxu0 0
      %2073 = vmatprep.subr.bf16.mxu0 0
      %2074 = vmatpush1.bf16.msra.mxu0 0
      %2075 = vmatprep.subr.bf16.mxu0 0
      %2076 = vmatpush1.bf16.msra.mxu0 0
      %2077 = vmatprep.subr.bf16.mxu0 0
      %2078 = vmatpush1.bf16.msra.mxu0 0
      %2079 = vmatprep.subr.bf16.mxu0 0
      %2080 = vmatpush1.bf16.msra.mxu0 0
      %2081 = vmatprep.subr.bf16.mxu0 0
      %2082 = vmatpush1.bf16.msra.mxu0 0
      %2083 = vmatprep.subr.bf16.mxu0 0
      %2084 = vmatpush1.bf16.msra.mxu0 0
      %2085 = vmatprep.subr.bf16.mxu0 0
      %2086 = vmatpush1.bf16.msra.mxu0 0
      %2087 = vmatprep.subr.bf16.mxu0 0
      %2088 = vmatpush1.bf16.msra.mxu0 0
      %2089 = vmatprep.subr.bf16.mxu0 0
      %2090 = vmatpush1.bf16.msra.mxu0 0
      %2091 = vmatprep.subr.bf16.mxu0 0
      %2092 = vmatpush1.bf16.msra.mxu0 0
      %2093 = vmatprep.subr.bf16.mxu0 0
      %2094 = vmatpush1.bf16.msra.mxu0 0
      %2095 = vmatprep.subr.bf16.mxu0 0
      %2096 = vmatpush1.bf16.msra.mxu0 0
      %2097 = vmatprep.subr.bf16.mxu0 0
      %2098 = vmatpush1.bf16.msra.mxu0 0
      %2099 = vmatprep.mubr.bf16.mxu0 0
      %2100 = vmatmul.mubr.bf16.gmra.mrb[0].mxu0 %v2065
      %v2101 = vpop.f32.mrb[0].mxu0
      %v2102 = vadd.f32 %v1794, %v2101
      %v2103 = vpop.f32.mrb[0].mxu0
      %v2104 = vadd.f32 %v1796, %v2103
      %v2105 = vpop.f32.mrb[0].mxu0
      %v2106 = vadd.f32 %v1798, %v2105
      %v2107 = vpop.f32.mrb[0].mxu0
      %v2108 = vadd.f32 %v1800, %v2107
      %2109 = vdwg.mxu0
      %2110 = vmatprep.subr.bf16.mxu0 %v2027
      %2111 = vmatpush1.bf16.msra.mxu0 %v2026
      %2112 = vmatprep.subr.bf16.mxu0 %v2037
      %2113 = vmatpush1.bf16.msra.mxu0 %v2036
      %2114 = vmatprep.subr.bf16.mxu0 0
      %2115 = vmatpush1.bf16.msra.mxu0 0
      %2116 = vmatprep.subr.bf16.mxu0 0
      %2117 = vmatpush1.bf16.msra.mxu0 0
      %2118 = vmatprep.subr.bf16.mxu0 0
      %2119 = vmatpush1.bf16.msra.mxu0 0
      %2120 = vmatprep.subr.bf16.mxu0 0
      %2121 = vmatpush1.bf16.msra.mxu0 0
      %2122 = vmatprep.subr.bf16.mxu0 0
      %2123 = vmatpush1.bf16.msra.mxu0 0
      %2124 = vmatprep.subr.bf16.mxu0 0
      %2125 = vmatpush1.bf16.msra.mxu0 0
      %2126 = vmatprep.subr.bf16.mxu0 0
      %2127 = vmatpush1.bf16.msra.mxu0 0
      %2128 = vmatprep.subr.bf16.mxu0 0
      %2129 = vmatpush1.bf16.msra.mxu0 0
      %2130 = vmatprep.subr.bf16.mxu0 0
      %2131 = vmatpush1.bf16.msra.mxu0 0
      %2132 = vmatprep.subr.bf16.mxu0 0
      %2133 = vmatpush1.bf16.msra.mxu0 0
      %2134 = vmatprep.subr.bf16.mxu0 0
      %2135 = vmatpush1.bf16.msra.mxu0 0
      %2136 = vmatprep.subr.bf16.mxu0 0
      %2137 = vmatpush1.bf16.msra.mxu0 0
      %2138 = vmatprep.subr.bf16.mxu0 0
      %2139 = vmatpush1.bf16.msra.mxu0 0
      %2140 = vmatprep.subr.bf16.mxu0 0
      %2141 = vmatpush1.bf16.msra.mxu0 0
      %2142 = vmatprep.mubr.bf16.mxu0 0
      %2143 = vmatmul.mubr.bf16.gmra.mrb[0].mxu0 %v2065
      %v2144 = vpop.f32.mrb[0].mxu0
      %v2145 = vadd.f32 %v1837, %v2144
      %v2146 = vpop.f32.mrb[0].mxu0
      %v2147 = vadd.f32 %v1839, %v2146
      %v2148 = vpop.f32.mrb[0].mxu0
      %v2149 = vadd.f32 %v1841, %v2148
      %v2150 = vpop.f32.mrb[0].mxu0
      %v2151 = vadd.f32 %v1843, %v2150
      %2152 = vdwg.mxu0
      %2153 = vmatprep.subr.bf16.mxu0 %v2029
      %2154 = vmatpush1.bf16.msra.mxu0 %v2028
      %2155 = vmatprep.subr.bf16.mxu0 %v2039
      %2156 = vmatpush1.bf16.msra.mxu0 %v2038
      %2157 = vmatprep.subr.bf16.mxu0 0
      %2158 = vmatpush1.bf16.msra.mxu0 0
      %2159 = vmatprep.subr.bf16.mxu0 0
      %2160 = vmatpush1.bf16.msra.mxu0 0
      %2161 = vmatprep.subr.bf16.mxu0 0
      %2162 = vmatpush1.bf16.msra.mxu0 0
      %2163 = vmatprep.subr.bf16.mxu0 0
      %2164 = vmatpush1.bf16.msra.mxu0 0
      %2165 = vmatprep.subr.bf16.mxu0 0
      %2166 = vmatpush1.bf16.msra.mxu0 0
      %2167 = vmatprep.subr.bf16.mxu0 0
      %2168 = vmatpush1.bf16.msra.mxu0 0
      %2169 = vmatprep.subr.bf16.mxu0 0
      %2170 = vmatpush1.bf16.msra.mxu0 0
      %2171 = vmatprep.subr.bf16.mxu0 0
      %2172 = vmatpush1.bf16.msra.mxu0 0
      %2173 = vmatprep.subr.bf16.mxu0 0
      %2174 = vmatpush1.bf16.msra.mxu0 0
      %2175 = vmatprep.subr.bf16.mxu0 0
      %2176 = vmatpush1.bf16.msra.mxu0 0
      %2177 = vmatprep.subr.bf16.mxu0 0
      %2178 = vmatpush1.bf16.msra.mxu0 0
      %2179 = vmatprep.subr.bf16.mxu0 0
      %2180 = vmatpush1.bf16.msra.mxu0 0
      %2181 = vmatprep.subr.bf16.mxu0 0
      %2182 = vmatpush1.bf16.msra.mxu0 0
      %2183 = vmatprep.subr.bf16.mxu0 0
      %2184 = vmatpush1.bf16.msra.mxu0 0
      %2185 = vmatprep.mubr.bf16.mxu0 0
      %2186 = vmatmul.mubr.bf16.gmra.mrb[0].mxu0 %v2065
      %v2187 = vpop.f32.mrb[0].mxu0
      %v2188 = vadd.f32 %v1880, %v2187
      %v2189 = vpop.f32.mrb[0].mxu0
      %v2190 = vadd.f32 %v1882, %v2189
      %v2191 = vpop.f32.mrb[0].mxu0
      %v2192 = vadd.f32 %v1884, %v2191
      %v2193 = vpop.f32.mrb[0].mxu0
      %v2194 = vadd.f32 %v1886, %v2193
      %2195 = vdwg.mxu0
      %2196 = vmatprep.subr.bf16.mxu0 %v2031
      %2197 = vmatpush1.bf16.msra.mxu0 %v2030
      %2198 = vmatprep.subr.bf16.mxu0 %v2041
      %2199 = vmatpush1.bf16.msra.mxu0 %v2040
      %2200 = vmatprep.subr.bf16.mxu0 0
      %2201 = vmatpush1.bf16.msra.mxu0 0
      %2202 = vmatprep.subr.bf16.mxu0 0
      %2203 = vmatpush1.bf16.msra.mxu0 0
      %2204 = vmatprep.subr.bf16.mxu0 0
      %2205 = vmatpush1.bf16.msra.mxu0 0
      %2206 = vmatprep.subr.bf16.mxu0 0
      %2207 = vmatpush1.bf16.msra.mxu0 0
      %2208 = vmatprep.subr.bf16.mxu0 0
      %2209 = vmatpush1.bf16.msra.mxu0 0
      %2210 = vmatprep.subr.bf16.mxu0 0
      %2211 = vmatpush1.bf16.msra.mxu0 0
      %2212 = vmatprep.subr.bf16.mxu0 0
      %2213 = vmatpush1.bf16.msra.mxu0 0
      %2214 = vmatprep.subr.bf16.mxu0 0
      %2215 = vmatpush1.bf16.msra.mxu0 0
      %2216 = vmatprep.subr.bf16.mxu0 0
      %2217 = vmatpush1.bf16.msra.mxu0 0
      %2218 = vmatprep.subr.bf16.mxu0 0
      %2219 = vmatpush1.bf16.msra.mxu0 0
      %2220 = vmatprep.subr.bf16.mxu0 0
      %2221 = vmatpush1.bf16.msra.mxu0 0
      %2222 = vmatprep.subr.bf16.mxu0 0
      %2223 = vmatpush1.bf16.msra.mxu0 0
      %2224 = vmatprep.subr.bf16.mxu0 0
      %2225 = vmatpush1.bf16.msra.mxu0 0
      %2226 = vmatprep.subr.bf16.mxu0 0
      %2227 = vmatpush1.bf16.msra.mxu0 0
      %2228 = vmatprep.mubr.bf16.mxu0 0
      %2229 = vmatmul.mubr.bf16.gmra.mrb[0].mxu0 %v2065
      %v2230 = vpop.f32.mrb[0].mxu0
      %v2231 = vadd.f32 %v1923, %v2230
      %v2232 = vpop.f32.mrb[0].mxu0
      %v2233 = vadd.f32 %v1925, %v2232
      %v2234 = vpop.f32.mrb[0].mxu0
      %v2235 = vadd.f32 %v1927, %v2234
      %v2236 = vpop.f32.mrb[0].mxu0
      %v2237 = vadd.f32 %v1929, %v2236
      %2238 = vdwg.mxu0
      %2239 = vmatprep.subr.bf16.mxu0 %v2033
      %2240 = vmatpush1.bf16.msra.mxu0 %v2032
      %2241 = vmatprep.subr.bf16.mxu0 %v2043
      %2242 = vmatpush1.bf16.msra.mxu0 %v2042
      %2243 = vmatprep.subr.bf16.mxu0 0
      %2244 = vmatpush1.bf16.msra.mxu0 0
      %2245 = vmatprep.subr.bf16.mxu0 0
      %2246 = vmatpush1.bf16.msra.mxu0 0
      %2247 = vmatprep.subr.bf16.mxu0 0
      %2248 = vmatpush1.bf16.msra.mxu0 0
      %2249 = vmatprep.subr.bf16.mxu0 0
      %2250 = vmatpush1.bf16.msra.mxu0 0
      %2251 = vmatprep.subr.bf16.mxu0 0
      %2252 = vmatpush1.bf16.msra.mxu0 0
      %2253 = vmatprep.subr.bf16.mxu0 0
      %2254 = vmatpush1.bf16.msra.mxu0 0
      %2255 = vmatprep.subr.bf16.mxu0 0
      %2256 = vmatpush1.bf16.msra.mxu0 0
      %2257 = vmatprep.subr.bf16.mxu0 0
      %2258 = vmatpush1.bf16.msra.mxu0 0
      %2259 = vmatprep.subr.bf16.mxu0 0
      %2260 = vmatpush1.bf16.msra.mxu0 0
      %2261 = vmatprep.subr.bf16.mxu0 0
      %2262 = vmatpush1.bf16.msra.mxu0 0
      %2263 = vmatprep.subr.bf16.mxu0 0
      %2264 = vmatpush1.bf16.msra.mxu0 0
      %2265 = vmatprep.subr.bf16.mxu0 0
      %2266 = vmatpush1.bf16.msra.mxu0 0
      %2267 = vmatprep.subr.bf16.mxu0 0
      %2268 = vmatpush1.bf16.msra.mxu0 0
      %2269 = vmatprep.subr.bf16.mxu0 0
      %2270 = vmatpush1.bf16.msra.mxu0 0
      %2271 = vmatprep.mubr.bf16.mxu0 0
      %2272 = vmatmul.mubr.bf16.gmra.mrb[0].mxu0 %v2065
      %v2273 = vpop.f32.mrb[0].mxu0
      %v2274 = vadd.f32 %v1966, %v2273
      %v2275 = vpop.f32.mrb[0].mxu0
      %v2276 = vadd.f32 %v1968, %v2275
      %v2277 = vpop.f32.mrb[0].mxu0
      %v2278 = vadd.f32 %v1970, %v2277
      %v2279 = vpop.f32.mrb[0].mxu0
      %v2280 = vadd.f32 %v1972, %v2279
      %2281 = vdwg.mxu0
      %v2282 = vld [vmem:[%s2 + $0x10] sm:$0xf]
      %v2283 = vld [vmem:[%s2 + $0x14] sm:$0xf]
      %v2286 = vunpack.c.l.b16 %v2282
      %v2287 = vunpack.c.l.b16 %v2283
      %v2288 = vpack.c.b16 %v2287, %v2286
      %2289 = vrot.lane.b32.xlu0 %v1619, 33
      %v2290 = vpop.permute.xlu0 %2289
      %2291 = vrot.lane.b32.xlu0 %v1620, 33
      %v2292 = vpop.permute.xlu0 %2291
      %2293 = vrot.lane.b32.xlu0 %v1621, 33
      %v2294 = vpop.permute.xlu0 %2293
      %2295 = vrot.lane.b32.xlu0 %v1622, 33
      %v2296 = vpop.permute.xlu0 %2295
      %2297 = vrot.lane.b32.xlu0 %v1623, 33
      %v2298 = vpop.permute.xlu0 %2297
      %2299 = vrot.lane.b32.xlu0 %v1624, 33
      %v2300 = vpop.permute.xlu0 %2299
      %2301 = vrot.lane.b32.xlu0 %v1625, 33
      %v2302 = vpop.permute.xlu0 %2301
      %2303 = vrot.lane.b32.xlu0 %v1626, 33
      %v2304 = vpop.permute.xlu0 %2303
      %2305 = vrot.lane.b32.xlu0 %v1627, 33
      %v2306 = vpop.permute.xlu0 %2305
      %2307 = vrot.lane.b32.xlu0 %v1628, 33
      %v2308 = vpop.permute.xlu0 %2307
      %2309 = vrot.lane.b32.xlu0 %v1629, 33
      %v2310 = vpop.permute.xlu0 %2309
      %2311 = vrot.lane.b32.xlu0 %v1630, 33
      %v2312 = vpop.permute.xlu0 %2311
      %2313 = vrot.lane.b32.xlu0 %v1631, 33
      %v2314 = vpop.permute.xlu0 %2313
      %2315 = vrot.lane.b32.xlu0 %v1632, 33
      %v2316 = vpop.permute.xlu0 %2315
      %2317 = vrot.lane.b32.xlu0 %v1633, 33
      %v2318 = vpop.permute.xlu0 %2317
      %2319 = vrot.lane.b32.xlu0 %v1634, 33
      %v2320 = vpop.permute.xlu0 %2319
      %2321 = vrot.lane.b32.xlu0 %v1635, 33
      %v2322 = vpop.permute.xlu0 %2321
      %2323 = vrot.lane.b32.xlu0 %v1636, 33
      %v2324 = vpop.permute.xlu0 %2323
      %2325 = vrot.lane.b32.xlu0 %v1637, 33
      %v2326 = vpop.permute.xlu0 %2325
      %2327 = vrot.lane.b32.xlu0 %v1638, 33
      %v2328 = vpop.permute.xlu0 %2327
      %2329 = vrot.lane.b32.xlu0 %v1639, 33
      %v2330 = vpop.permute.xlu0 %2329
      %2331 = vrot.lane.b32.xlu0 %v1640, 33
      %v2332 = vpop.permute.xlu0 %2331
      %vm2333 = vcmask 269312
      %v2334 = vsel %vm2333, %v2290, %v2292
      %v2335 = vsel %vm2333, %v2292, %v2294
      %v2336 = vsel %vm2333, %v2294, %v2296
      %v2337 = vsel %vm2333, %v2296, %v2298
      %v2338 = vsel %vm2333, %v2298, %v2300
      %v2339 = vsel %vm2333, %v2300, %v2302
      %v2340 = vsel %vm2333, %v2302, %v2304
      %v2341 = vsel %vm2333, %v2304, %v2306
      %v2342 = vsel %vm2333, %v2306, %v2308
      %v2343 = vsel %vm2333, %v2308, %v2310
      %v2344 = vsel %vm2333, %v2312, %v2314
      %v2345 = vsel %vm2333, %v2314, %v2316
      %v2346 = vsel %vm2333, %v2316, %v2318
      %v2347 = vsel %vm2333, %v2318, %v2320
      %v2348 = vsel %vm2333, %v2320, %v2322
      %v2349 = vsel %vm2333, %v2322, %v2324
      %v2350 = vsel %vm2333, %v2324, %v2326
      %v2351 = vsel %vm2333, %v2326, %v2328
      %v2352 = vsel %vm2333, %v2328, %v2330
      %v2353 = vsel %vm2333, %v2330, %v2332
      %v2375 = vsel %vm1755, %v2288, 0
      %2377 = vmatprep.subr.bf16.mxu0 %v2335
      %2378 = vmatpush1.bf16.msra.mxu0 %v2334
      %2379 = vmatprep.subr.bf16.mxu0 %v2345
      %2380 = vmatpush1.bf16.msra.mxu0 %v2344
      %2381 = vmatprep.subr.bf16.mxu0 0
      %2382 = vmatpush1.bf16.msra.mxu0 0
      %2383 = vmatprep.subr.bf16.mxu0 0
      %2384 = vmatpush1.bf16.msra.mxu0 0
      %2385 = vmatprep.subr.bf16.mxu0 0
      %2386 = vmatpush1.bf16.msra.mxu0 0
      %2387 = vmatprep.subr.bf16.mxu0 0
      %2388 = vmatpush1.bf16.msra.mxu0 0
      %2389 = vmatprep.subr.bf16.mxu0 0
      %2390 = vmatpush1.bf16.msra.mxu0 0
      %2391 = vmatprep.subr.bf16.mxu0 0
      %2392 = vmatpush1.bf16.msra.mxu0 0
      %2393 = vmatprep.subr.bf16.mxu0 0
      %2394 = vmatpush1.bf16.msra.mxu0 0
      %2395 = vmatprep.subr.bf16.mxu0 0
      %2396 = vmatpush1.bf16.msra.mxu0 0
      %2397 = vmatprep.subr.bf16.mxu0 0
      %2398 = vmatpush1.bf16.msra.mxu0 0
      %2399 = vmatprep.subr.bf16.mxu0 0
      %2400 = vmatpush1.bf16.msra.mxu0 0
      %2401 = vmatprep.subr.bf16.mxu0 0
      %2402 = vmatpush1.bf16.msra.mxu0 0
      %2403 = vmatprep.subr.bf16.mxu0 0
      %2404 = vmatpush1.bf16.msra.mxu0 0
      %2405 = vmatprep.subr.bf16.mxu0 0
      %2406 = vmatpush1.bf16.msra.mxu0 0
      %2407 = vmatprep.subr.bf16.mxu0 0
      %2408 = vmatpush1.bf16.msra.mxu0 0
      %2409 = vmatprep.mubr.bf16.mxu0 0
      %2410 = vmatmul.mubr.bf16.gmra.mrb[0].mxu0 %v2375
      %v2411 = vpop.f32.mrb[0].mxu0
      %v2412 = vadd.f32 0.0, %v2411
      %v2413 = vpop.f32.mrb[0].mxu0
      %v2414 = vadd.f32 0.0, %v2413
      %v2415 = vpop.f32.mrb[0].mxu0
      %v2416 = vadd.f32 0.0, %v2415
      %v2417 = vpop.f32.mrb[0].mxu0
      %v2418 = vadd.f32 0.0, %v2417
      %2419 = vdwg.mxu0
      %2420 = vmatprep.subr.bf16.mxu0 %v2337
      %2421 = vmatpush1.bf16.msra.mxu0 %v2336
      %2422 = vmatprep.subr.bf16.mxu0 %v2347
      %2423 = vmatpush1.bf16.msra.mxu0 %v2346
      %2424 = vmatprep.subr.bf16.mxu0 0
      %2425 = vmatpush1.bf16.msra.mxu0 0
      %2426 = vmatprep.subr.bf16.mxu0 0
      %2427 = vmatpush1.bf16.msra.mxu0 0
      %2428 = vmatprep.subr.bf16.mxu0 0
      %2429 = vmatpush1.bf16.msra.mxu0 0
      %2430 = vmatprep.subr.bf16.mxu0 0
      %2431 = vmatpush1.bf16.msra.mxu0 0
      %2432 = vmatprep.subr.bf16.mxu0 0
      %2433 = vmatpush1.bf16.msra.mxu0 0
      %2434 = vmatprep.subr.bf16.mxu0 0
      %2435 = vmatpush1.bf16.msra.mxu0 0
      %2436 = vmatprep.subr.bf16.mxu0 0
      %2437 = vmatpush1.bf16.msra.mxu0 0
      %2438 = vmatprep.subr.bf16.mxu0 0
      %2439 = vmatpush1.bf16.msra.mxu0 0
      %2440 = vmatprep.subr.bf16.mxu0 0
      %2441 = vmatpush1.bf16.msra.mxu0 0
      %2442 = vmatprep.subr.bf16.mxu0 0
      %2443 = vmatpush1.bf16.msra.mxu0 0
      %2444 = vmatprep.subr.bf16.mxu0 0
      %2445 = vmatpush1.bf16.msra.mxu0 0
      %2446 = vmatprep.subr.bf16.mxu0 0
      %2447 = vmatpush1.bf16.msra.mxu0 0
      %2448 = vmatprep.subr.bf16.mxu0 0
      %2449 = vmatpush1.bf16.msra.mxu0 0
      %2450 = vmatprep.subr.bf16.mxu0 0
      %2451 = vmatpush1.bf16.msra.mxu0 0
      %2452 = vmatprep.mubr.bf16.mxu0 0
      %2453 = vmatmul.mubr.bf16.gmra.mrb[0].mxu0 %v2375
      %v2454 = vpop.f32.mrb[0].mxu0
      %v2455 = vadd.f32 0.0, %v2454
      %v2456 = vpop.f32.mrb[0].mxu0
      %v2457 = vadd.f32 0.0, %v2456
      %v2458 = vpop.f32.mrb[0].mxu0
      %v2459 = vadd.f32 0.0, %v2458
      %v2460 = vpop.f32.mrb[0].mxu0
      %v2461 = vadd.f32 0.0, %v2460
      %2462 = vdwg.mxu0
      %2463 = vmatprep.subr.bf16.mxu0 %v2339
      %2464 = vmatpush1.bf16.msra.mxu0 %v2338
      %2465 = vmatprep.subr.bf16.mxu0 %v2349
      %2466 = vmatpush1.bf16.msra.mxu0 %v2348
      %2467 = vmatprep.subr.bf16.mxu0 0
      %2468 = vmatpush1.bf16.msra.mxu0 0
      %2469 = vmatprep.subr.bf16.mxu0 0
      %2470 = vmatpush1.bf16.msra.mxu0 0
      %2471 = vmatprep.subr.bf16.mxu0 0
      %2472 = vmatpush1.bf16.msra.mxu0 0
      %2473 = vmatprep.subr.bf16.mxu0 0
      %2474 = vmatpush1.bf16.msra.mxu0 0
      %2475 = vmatprep.subr.bf16.mxu0 0
      %2476 = vmatpush1.bf16.msra.mxu0 0
      %2477 = vmatprep.subr.bf16.mxu0 0
      %2478 = vmatpush1.bf16.msra.mxu0 0
      %2479 = vmatprep.subr.bf16.mxu0 0
      %2480 = vmatpush1.bf16.msra.mxu0 0
      %2481 = vmatprep.subr.bf16.mxu0 0
      %2482 = vmatpush1.bf16.msra.mxu0 0
      %2483 = vmatprep.subr.bf16.mxu0 0
      %2484 = vmatpush1.bf16.msra.mxu0 0
      %2485 = vmatprep.subr.bf16.mxu0 0
      %2486 = vmatpush1.bf16.msra.mxu0 0
      %2487 = vmatprep.subr.bf16.mxu0 0
      %2488 = vmatpush1.bf16.msra.mxu0 0
      %2489 = vmatprep.subr.bf16.mxu0 0
      %2490 = vmatpush1.bf16.msra.mxu0 0
      %2491 = vmatprep.subr.bf16.mxu0 0
      %2492 = vmatpush1.bf16.msra.mxu0 0
      %2493 = vmatprep.subr.bf16.mxu0 0
      %2494 = vmatpush1.bf16.msra.mxu0 0
      %2495 = vmatprep.mubr.bf16.mxu0 0
      %2496 = vmatmul.mubr.bf16.gmra.mrb[0].mxu0 %v2375
      %v2497 = vpop.f32.mrb[0].mxu0
      %v2498 = vadd.f32 0.0, %v2497
      %v2499 = vpop.f32.mrb[0].mxu0
      %v2500 = vadd.f32 0.0, %v2499
      %v2501 = vpop.f32.mrb[0].mxu0
      %v2502 = vadd.f32 0.0, %v2501
      %v2503 = vpop.f32.mrb[0].mxu0
      %v2504 = vadd.f32 0.0, %v2503
      %2505 = vdwg.mxu0
      %2506 = vmatprep.subr.bf16.mxu0 %v2341
      %2507 = vmatpush1.bf16.msra.mxu0 %v2340
      %2508 = vmatprep.subr.bf16.mxu0 %v2351
      %2509 = vmatpush1.bf16.msra.mxu0 %v2350
      %2510 = vmatprep.subr.bf16.mxu0 0
      %2511 = vmatpush1.bf16.msra.mxu0 0
      %2512 = vmatprep.subr.bf16.mxu0 0
      %2513 = vmatpush1.bf16.msra.mxu0 0
      %2514 = vmatprep.subr.bf16.mxu0 0
      %2515 = vmatpush1.bf16.msra.mxu0 0
      %2516 = vmatprep.subr.bf16.mxu0 0
      %2517 = vmatpush1.bf16.msra.mxu0 0
      %2518 = vmatprep.subr.bf16.mxu0 0
      %2519 = vmatpush1.bf16.msra.mxu0 0
      %2520 = vmatprep.subr.bf16.mxu0 0
      %2521 = vmatpush1.bf16.msra.mxu0 0
      %2522 = vmatprep.subr.bf16.mxu0 0
      %2523 = vmatpush1.bf16.msra.mxu0 0
      %2524 = vmatprep.subr.bf16.mxu0 0
      %2525 = vmatpush1.bf16.msra.mxu0 0
      %2526 = vmatprep.subr.bf16.mxu0 0
      %2527 = vmatpush1.bf16.msra.mxu0 0
      %2528 = vmatprep.subr.bf16.mxu0 0
      %2529 = vmatpush1.bf16.msra.mxu0 0
      %2530 = vmatprep.subr.bf16.mxu0 0
      %2531 = vmatpush1.bf16.msra.mxu0 0
      %2532 = vmatprep.subr.bf16.mxu0 0
      %2533 = vmatpush1.bf16.msra.mxu0 0
      %2534 = vmatprep.subr.bf16.mxu0 0
      %2535 = vmatpush1.bf16.msra.mxu0 0
      %2536 = vmatprep.subr.bf16.mxu0 0
      %2537 = vmatpush1.bf16.msra.mxu0 0
      %2538 = vmatprep.mubr.bf16.mxu0 0
      %2539 = vmatmul.mubr.bf16.gmra.mrb[0].mxu0 %v2375
      %v2540 = vpop.f32.mrb[0].mxu0
      %v2541 = vadd.f32 0.0, %v2540
      %v2542 = vpop.f32.mrb[0].mxu0
      %v2543 = vadd.f32 0.0, %v2542
      %v2544 = vpop.f32.mrb[0].mxu0
      %v2545 = vadd.f32 0.0, %v2544
      %v2546 = vpop.f32.mrb[0].mxu0
      %v2547 = vadd.f32 0.0, %v2546
      %2548 = vdwg.mxu0
      %2549 = vmatprep.subr.bf16.mxu0 %v2343
      %2550 = vmatpush1.bf16.msra.mxu0 %v2342
      %2551 = vmatprep.subr.bf16.mxu0 %v2353
      %2552 = vmatpush1.bf16.msra.mxu0 %v2352
      %2553 = vmatprep.subr.bf16.mxu0 0
      %2554 = vmatpush1.bf16.msra.mxu0 0
      %2555 = vmatprep.subr.bf16.mxu0 0
      %2556 = vmatpush1.bf16.msra.mxu0 0
      %2557 = vmatprep.subr.bf16.mxu0 0
      %2558 = vmatpush1.bf16.msra.mxu0 0
      %2559 = vmatprep.subr.bf16.mxu0 0
      %2560 = vmatpush1.bf16.msra.mxu0 0
      %2561 = vmatprep.subr.bf16.mxu0 0
      %2562 = vmatpush1.bf16.msra.mxu0 0
      %2563 = vmatprep.subr.bf16.mxu0 0
      %2564 = vmatpush1.bf16.msra.mxu0 0
      %2565 = vmatprep.subr.bf16.mxu0 0
      %2566 = vmatpush1.bf16.msra.mxu0 0
      %2567 = vmatprep.subr.bf16.mxu0 0
      %2568 = vmatpush1.bf16.msra.mxu0 0
      %2569 = vmatprep.subr.bf16.mxu0 0
      %2570 = vmatpush1.bf16.msra.mxu0 0
      %2571 = vmatprep.subr.bf16.mxu0 0
      %2572 = vmatpush1.bf16.msra.mxu0 0
      %2573 = vmatprep.subr.bf16.mxu0 0
      %2574 = vmatpush1.bf16.msra.mxu0 0
      %2575 = vmatprep.subr.bf16.mxu0 0
      %2576 = vmatpush1.bf16.msra.mxu0 0
      %2577 = vmatprep.subr.bf16.mxu0 0
      %2578 = vmatpush1.bf16.msra.mxu0 0
      %2579 = vmatprep.subr.bf16.mxu0 0
      %2580 = vmatpush1.bf16.msra.mxu0 0
      %2581 = vmatprep.mubr.bf16.mxu0 0
      %2582 = vmatmul.mubr.bf16.gmra.mrb[0].mxu0 %v2375
      %v2583 = vpop.f32.mrb[0].mxu0
      %v2584 = vadd.f32 0.0, %v2583
      %v2585 = vpop.f32.mrb[0].mxu0
      %v2586 = vadd.f32 0.0, %v2585
      %v2587 = vpop.f32.mrb[0].mxu0
      %v2588 = vadd.f32 0.0, %v2587
      %v2589 = vpop.f32.mrb[0].mxu0
      %v2590 = vadd.f32 0.0, %v2589
      %2591 = vdwg.mxu0
      %v2592 = vadd.f32 %v2102, %v2412
      %v2593 = vadd.f32 %v2104, %v2414
      %v2594 = vadd.f32 %v2145, %v2455
      %v2595 = vadd.f32 %v2147, %v2457
      %v2596 = vadd.f32 %v2188, %v2498
      %v2597 = vadd.f32 %v2190, %v2500
      %v2598 = vadd.f32 %v2231, %v2541
      %v2599 = vadd.f32 %v2233, %v2543
      %v2600 = vadd.f32 %v2274, %v2584
      %v2601 = vadd.f32 %v2276, %v2586
      %v2602 = vadd.f32 %v2106, %v2416
      %v2603 = vadd.f32 %v2108, %v2418
      %v2604 = vadd.f32 %v2149, %v2459
      %v2605 = vadd.f32 %v2151, %v2461
      %v2606 = vadd.f32 %v2192, %v2502
      %v2607 = vadd.f32 %v2194, %v2504
      %v2608 = vadd.f32 %v2235, %v2545
      %v2609 = vadd.f32 %v2237, %v2547
      %v2610 = vadd.f32 %v2278, %v2588
      %v2611 = vadd.f32 %v2280, %v2590
      %v2612 = vld [vmem:[%s2 + $0x18] sm:$0xf]
      %v2613 = vld [vmem:[%s2 + $0x1c] sm:$0xf]
      %v2616 = vunpack.c.l.b16 %v2612
      %v2617 = vunpack.c.l.b16 %v2613
      %v2618 = vpack.c.b16 %v2617, %v2616
      %2619 = vrot.lane.b32.xlu0 %v1619, 1
      %v2620 = vpop.permute.xlu0 %2619
      %2621 = vrot.lane.b32.xlu0 %v1620, 1
      %v2622 = vpop.permute.xlu0 %2621
      %2623 = vrot.lane.b32.xlu0 %v1621, 1
      %v2624 = vpop.permute.xlu0 %2623
      %2625 = vrot.lane.b32.xlu0 %v1622, 1
      %v2626 = vpop.permute.xlu0 %2625
      %2627 = vrot.lane.b32.xlu0 %v1623, 1
      %v2628 = vpop.permute.xlu0 %2627
      %2629 = vrot.lane.b32.xlu0 %v1624, 1
      %v2630 = vpop.permute.xlu0 %2629
      %2631 = vrot.lane.b32.xlu0 %v1625, 1
      %v2632 = vpop.permute.xlu0 %2631
      %2633 = vrot.lane.b32.xlu0 %v1626, 1
      %v2634 = vpop.permute.xlu0 %2633
      %2635 = vrot.lane.b32.xlu0 %v1627, 1
      %v2636 = vpop.permute.xlu0 %2635
      %2637 = vrot.lane.b32.xlu0 %v1628, 1
      %v2638 = vpop.permute.xlu0 %2637
      %2639 = vrot.lane.b32.xlu0 %v1629, 1
      %v2640 = vpop.permute.xlu0 %2639
      %2641 = vrot.lane.b32.xlu0 %v1630, 1
      %v2642 = vpop.permute.xlu0 %2641
      %2643 = vrot.lane.b32.xlu0 %v1631, 1
      %v2644 = vpop.permute.xlu0 %2643
      %2645 = vrot.lane.b32.xlu0 %v1632, 1
      %v2646 = vpop.permute.xlu0 %2645
      %2647 = vrot.lane.b32.xlu0 %v1633, 1
      %v2648 = vpop.permute.xlu0 %2647
      %2649 = vrot.lane.b32.xlu0 %v1634, 1
      %v2650 = vpop.permute.xlu0 %2649
      %2651 = vrot.lane.b32.xlu0 %v1635, 1
      %v2652 = vpop.permute.xlu0 %2651
      %2653 = vrot.lane.b32.xlu0 %v1636, 1
      %v2654 = vpop.permute.xlu0 %2653
      %2655 = vrot.lane.b32.xlu0 %v1637, 1
      %v2656 = vpop.permute.xlu0 %2655
      %2657 = vrot.lane.b32.xlu0 %v1638, 1
      %v2658 = vpop.permute.xlu0 %2657
      %2659 = vrot.lane.b32.xlu0 %v1639, 1
      %v2660 = vpop.permute.xlu0 %2659
      %2661 = vrot.lane.b32.xlu0 %v1640, 1
      %v2662 = vpop.permute.xlu0 %2661
      %vm2663 = vcmask 7168
      %v2664 = vsel %vm2663, %v2620, %v2622
      %v2665 = vsel %vm2663, %v2622, %v2624
      %v2666 = vsel %vm2663, %v2624, %v2626
      %v2667 = vsel %vm2663, %v2626, %v2628
      %v2668 = vsel %vm2663, %v2628, %v2630
      %v2669 = vsel %vm2663, %v2630, %v2632
      %v2670 = vsel %vm2663, %v2632, %v2634
      %v2671 = vsel %vm2663, %v2634, %v2636
      %v2672 = vsel %vm2663, %v2636, %v2638
      %v2673 = vsel %vm2663, %v2638, %v2640
      %v2674 = vsel %vm2663, %v2642, %v2644
      %v2675 = vsel %vm2663, %v2644, %v2646
      %v2676 = vsel %vm2663, %v2646, %v2648
      %v2677 = vsel %vm2663, %v2648, %v2650
      %v2678 = vsel %vm2663, %v2650, %v2652
      %v2679 = vsel %vm2663, %v2652, %v2654
      %v2680 = vsel %vm2663, %v2654, %v2656
      %v2681 = vsel %vm2663, %v2656, %v2658
      %v2682 = vsel %vm2663, %v2658, %v2660
      %v2683 = vsel %vm2663, %v2660, %v2662
      %v2705 = vsel %vm1755, %v2618, 0
      %2707 = vmatprep.subr.bf16.mxu0 %v2665
      %2708 = vmatpush1.bf16.msra.mxu0 %v2664
      %2709 = vmatprep.subr.bf16.mxu0 %v2675
      %2710 = vmatpush1.bf16.msra.mxu0 %v2674
      %2711 = vmatprep.subr.bf16.mxu0 0
      %2712 = vmatpush1.bf16.msra.mxu0 0
      %2713 = vmatprep.subr.bf16.mxu0 0
      %2714 = vmatpush1.bf16.msra.mxu0 0
      %2715 = vmatprep.subr.bf16.mxu0 0
      %2716 = vmatpush1.bf16.msra.mxu0 0
      %2717 = vmatprep.subr.bf16.mxu0 0
      %2718 = vmatpush1.bf16.msra.mxu0 0
      %2719 = vmatprep.subr.bf16.mxu0 0
      %2720 = vmatpush1.bf16.msra.mxu0 0
      %2721 = vmatprep.subr.bf16.mxu0 0
      %2722 = vmatpush1.bf16.msra.mxu0 0
      %2723 = vmatprep.subr.bf16.mxu0 0
      %2724 = vmatpush1.bf16.msra.mxu0 0
      %2725 = vmatprep.subr.bf16.mxu0 0
      %2726 = vmatpush1.bf16.msra.mxu0 0
      %2727 = vmatprep.subr.bf16.mxu0 0
      %2728 = vmatpush1.bf16.msra.mxu0 0
      %2729 = vmatprep.subr.bf16.mxu0 0
      %2730 = vmatpush1.bf16.msra.mxu0 0
      %2731 = vmatprep.subr.bf16.mxu0 0
      %2732 = vmatpush1.bf16.msra.mxu0 0
      %2733 = vmatprep.subr.bf16.mxu0 0
      %2734 = vmatpush1.bf16.msra.mxu0 0
      %2735 = vmatprep.subr.bf16.mxu0 0
      %2736 = vmatpush1.bf16.msra.mxu0 0
      %2737 = vmatprep.subr.bf16.mxu0 0
      %2738 = vmatpush1.bf16.msra.mxu0 0
      %2739 = vmatprep.mubr.bf16.mxu0 0
      %2740 = vmatmul.mubr.bf16.gmra.mrb[0].mxu0 %v2705
      %v2741 = vpop.f32.mrb[0].mxu0
      %v2742 = vadd.f32 0.0, %v2741
      %v2743 = vpop.f32.mrb[0].mxu0
      %v2744 = vadd.f32 0.0, %v2743
      %v2745 = vpop.f32.mrb[0].mxu0
      %v2746 = vadd.f32 0.0, %v2745
      %v2747 = vpop.f32.mrb[0].mxu0
      %v2748 = vadd.f32 0.0, %v2747
      %2749 = vdwg.mxu0
      %2750 = vmatprep.subr.bf16.mxu0 %v2667
      %2751 = vmatpush1.bf16.msra.mxu0 %v2666
      %2752 = vmatprep.subr.bf16.mxu0 %v2677
      %2753 = vmatpush1.bf16.msra.mxu0 %v2676
      %2754 = vmatprep.subr.bf16.mxu0 0
      %2755 = vmatpush1.bf16.msra.mxu0 0
      %2756 = vmatprep.subr.bf16.mxu0 0
      %2757 = vmatpush1.bf16.msra.mxu0 0
      %2758 = vmatprep.subr.bf16.mxu0 0
      %2759 = vmatpush1.bf16.msra.mxu0 0
      %2760 = vmatprep.subr.bf16.mxu0 0
      %2761 = vmatpush1.bf16.msra.mxu0 0
      %2762 = vmatprep.subr.bf16.mxu0 0
      %2763 = vmatpush1.bf16.msra.mxu0 0
      %2764 = vmatprep.subr.bf16.mxu0 0
      %2765 = vmatpush1.bf16.msra.mxu0 0
      %2766 = vmatprep.subr.bf16.mxu0 0
      %2767 = vmatpush1.bf16.msra.mxu0 0
      %2768 = vmatprep.subr.bf16.mxu0 0
      %2769 = vmatpush1.bf16.msra.mxu0 0
      %2770 = vmatprep.subr.bf16.mxu0 0
      %2771 = vmatpush1.bf16.msra.mxu0 0
      %2772 = vmatprep.subr.bf16.mxu0 0
      %2773 = vmatpush1.bf16.msra.mxu0 0
      %2774 = vmatprep.subr.bf16.mxu0 0
      %2775 = vmatpush1.bf16.msra.mxu0 0
      %2776 = vmatprep.subr.bf16.mxu0 0
      %2777 = vmatpush1.bf16.msra.mxu0 0
      %2778 = vmatprep.subr.bf16.mxu0 0
      %2779 = vmatpush1.bf16.msra.mxu0 0
      %2780 = vmatprep.subr.bf16.mxu0 0
      %2781 = vmatpush1.bf16.msra.mxu0 0
      %2782 = vmatprep.mubr.bf16.mxu0 0
      %2783 = vmatmul.mubr.bf16.gmra.mrb[0].mxu0 %v2705
      %v2784 = vpop.f32.mrb[0].mxu0
      %v2785 = vadd.f32 0.0, %v2784
      %v2786 = vpop.f32.mrb[0].mxu0
      %v2787 = vadd.f32 0.0, %v2786
      %v2788 = vpop.f32.mrb[0].mxu0
      %v2789 = vadd.f32 0.0, %v2788
      %v2790 = vpop.f32.mrb[0].mxu0
      %v2791 = vadd.f32 0.0, %v2790
      %2792 = vdwg.mxu0
      %2793 = vmatprep.subr.bf16.mxu0 %v2669
      %2794 = vmatpush1.bf16.msra.mxu0 %v2668
      %2795 = vmatprep.subr.bf16.mxu0 %v2679
      %2796 = vmatpush1.bf16.msra.mxu0 %v2678
      %2797 = vmatprep.subr.bf16.mxu0 0
      %2798 = vmatpush1.bf16.msra.mxu0 0
      %2799 = vmatprep.subr.bf16.mxu0 0
      %2800 = vmatpush1.bf16.msra.mxu0 0
      %2801 = vmatprep.subr.bf16.mxu0 0
      %2802 = vmatpush1.bf16.msra.mxu0 0
      %2803 = vmatprep.subr.bf16.mxu0 0
      %2804 = vmatpush1.bf16.msra.mxu0 0
      %2805 = vmatprep.subr.bf16.mxu0 0
      %2806 = vmatpush1.bf16.msra.mxu0 0
      %2807 = vmatprep.subr.bf16.mxu0 0
      %2808 = vmatpush1.bf16.msra.mxu0 0
      %2809 = vmatprep.subr.bf16.mxu0 0
      %2810 = vmatpush1.bf16.msra.mxu0 0
      %2811 = vmatprep.subr.bf16.mxu0 0
      %2812 = vmatpush1.bf16.msra.mxu0 0
      %2813 = vmatprep.subr.bf16.mxu0 0
      %2814 = vmatpush1.bf16.msra.mxu0 0
      %2815 = vmatprep.subr.bf16.mxu0 0
      %2816 = vmatpush1.bf16.msra.mxu0 0
      %2817 = vmatprep.subr.bf16.mxu0 0
      %2818 = vmatpush1.bf16.msra.mxu0 0
      %2819 = vmatprep.subr.bf16.mxu0 0
      %2820 = vmatpush1.bf16.msra.mxu0 0
      %2821 = vmatprep.subr.bf16.mxu0 0
      %2822 = vmatpush1.bf16.msra.mxu0 0
      %2823 = vmatprep.subr.bf16.mxu0 0
      %2824 = vmatpush1.bf16.msra.mxu0 0
      %2825 = vmatprep.mubr.bf16.mxu0 0
      %2826 = vmatmul.mubr.bf16.gmra.mrb[0].mxu0 %v2705
      %v2827 = vpop.f32.mrb[0].mxu0
      %v2828 = vadd.f32 0.0, %v2827
      %v2829 = vpop.f32.mrb[0].mxu0
      %v2830 = vadd.f32 0.0, %v2829
      %v2831 = vpop.f32.mrb[0].mxu0
      %v2832 = vadd.f32 0.0, %v2831
      %v2833 = vpop.f32.mrb[0].mxu0
      %v2834 = vadd.f32 0.0, %v2833
      %2835 = vdwg.mxu0
      %2836 = vmatprep.subr.bf16.mxu0 %v2671
      %2837 = vmatpush1.bf16.msra.mxu0 %v2670
      %2838 = vmatprep.subr.bf16.mxu0 %v2681
      %2839 = vmatpush1.bf16.msra.mxu0 %v2680
      %2840 = vmatprep.subr.bf16.mxu0 0
      %2841 = vmatpush1.bf16.msra.mxu0 0
      %2842 = vmatprep.subr.bf16.mxu0 0
      %2843 = vmatpush1.bf16.msra.mxu0 0
      %2844 = vmatprep.subr.bf16.mxu0 0
      %2845 = vmatpush1.bf16.msra.mxu0 0
      %2846 = vmatprep.subr.bf16.mxu0 0
      %2847 = vmatpush1.bf16.msra.mxu0 0
      %2848 = vmatprep.subr.bf16.mxu0 0
      %2849 = vmatpush1.bf16.msra.mxu0 0
      %2850 = vmatprep.subr.bf16.mxu0 0
      %2851 = vmatpush1.bf16.msra.mxu0 0
      %2852 = vmatprep.subr.bf16.mxu0 0
      %2853 = vmatpush1.bf16.msra.mxu0 0
      %2854 = vmatprep.subr.bf16.mxu0 0
      %2855 = vmatpush1.bf16.msra.mxu0 0
      %2856 = vmatprep.subr.bf16.mxu0 0
      %2857 = vmatpush1.bf16.msra.mxu0 0
      %2858 = vmatprep.subr.bf16.mxu0 0
      %2859 = vmatpush1.bf16.msra.mxu0 0
      %2860 = vmatprep.subr.bf16.mxu0 0
      %2861 = vmatpush1.bf16.msra.mxu0 0
      %2862 = vmatprep.subr.bf16.mxu0 0
      %2863 = vmatpush1.bf16.msra.mxu0 0
      %2864 = vmatprep.subr.bf16.mxu0 0
      %2865 = vmatpush1.bf16.msra.mxu0 0
      %2866 = vmatprep.subr.bf16.mxu0 0
      %2867 = vmatpush1.bf16.msra.mxu0 0
      %2868 = vmatprep.mubr.bf16.mxu0 0
      %2869 = vmatmul.mubr.bf16.gmra.mrb[0].mxu0 %v2705
      %v2870 = vpop.f32.mrb[0].mxu0
      %v2871 = vadd.f32 0.0, %v2870
      %v2872 = vpop.f32.mrb[0].mxu0
      %v2873 = vadd.f32 0.0, %v2872
      %v2874 = vpop.f32.mrb[0].mxu0
      %v2875 = vadd.f32 0.0, %v2874
      %v2876 = vpop.f32.mrb[0].mxu0
      %v2877 = vadd.f32 0.0, %v2876
      %2878 = vdwg.mxu0
      %2879 = vmatprep.subr.bf16.mxu0 %v2673
      %2880 = vmatpush1.bf16.msra.mxu0 %v2672
      %2881 = vmatprep.subr.bf16.mxu0 %v2683
      %2882 = vmatpush1.bf16.msra.mxu0 %v2682
      %2883 = vmatprep.subr.bf16.mxu0 0
      %2884 = vmatpush1.bf16.msra.mxu0 0
      %2885 = vmatprep.subr.bf16.mxu0 0
      %2886 = vmatpush1.bf16.msra.mxu0 0
      %2887 = vmatprep.subr.bf16.mxu0 0
      %2888 = vmatpush1.bf16.msra.mxu0 0
      %2889 = vmatprep.subr.bf16.mxu0 0
      %2890 = vmatpush1.bf16.msra.mxu0 0
      %2891 = vmatprep.subr.bf16.mxu0 0
      %2892 = vmatpush1.bf16.msra.mxu0 0
      %2893 = vmatprep.subr.bf16.mxu0 0
      %2894 = vmatpush1.bf16.msra.mxu0 0
      %2895 = vmatprep.subr.bf16.mxu0 0
      %2896 = vmatpush1.bf16.msra.mxu0 0
      %2897 = vmatprep.subr.bf16.mxu0 0
      %2898 = vmatpush1.bf16.msra.mxu0 0
      %2899 = vmatprep.subr.bf16.mxu0 0
      %2900 = vmatpush1.bf16.msra.mxu0 0
      %2901 = vmatprep.subr.bf16.mxu0 0
      %2902 = vmatpush1.bf16.msra.mxu0 0
      %2903 = vmatprep.subr.bf16.mxu0 0
      %2904 = vmatpush1.bf16.msra.mxu0 0
      %2905 = vmatprep.subr.bf16.mxu0 0
      %2906 = vmatpush1.bf16.msra.mxu0 0
      %2907 = vmatprep.subr.bf16.mxu0 0
      %2908 = vmatpush1.bf16.msra.mxu0 0
      %2909 = vmatprep.subr.bf16.mxu0 0
      %2910 = vmatpush1.bf16.msra.mxu0 0
      %2911 = vmatprep.mubr.bf16.mxu0 0
      %2912 = vmatmul.mubr.bf16.gmra.mrb[0].mxu0 %v2705
      %v2913 = vpop.f32.mrb[0].mxu0
      %v2914 = vadd.f32 0.0, %v2913
      %v2915 = vpop.f32.mrb[0].mxu0
      %v2916 = vadd.f32 0.0, %v2915
      %v2917 = vpop.f32.mrb[0].mxu0
      %v2918 = vadd.f32 0.0, %v2917
      %v2919 = vpop.f32.mrb[0].mxu0
      %v2920 = vadd.f32 0.0, %v2919
      %2921 = vdwg.mxu0
      %v2922 = vadd.f32 %v2592, %v2742
      %v2923 = vadd.f32 %v2593, %v2744
      %v2924 = vadd.f32 %v2594, %v2785
      %v2925 = vadd.f32 %v2595, %v2787
      %v2926 = vadd.f32 %v2596, %v2828
      %v2927 = vadd.f32 %v2597, %v2830
      %v2928 = vadd.f32 %v2598, %v2871
      %v2929 = vadd.f32 %v2599, %v2873
      %v2930 = vadd.f32 %v2600, %v2914
      %v2931 = vadd.f32 %v2601, %v2916
      %v2932 = vadd.f32 %v2602, %v2746
      %v2933 = vadd.f32 %v2603, %v2748
      %v2934 = vadd.f32 %v2604, %v2789
      %v2935 = vadd.f32 %v2605, %v2791
      %v2936 = vadd.f32 %v2606, %v2832
      %v2937 = vadd.f32 %v2607, %v2834
      %v2938 = vadd.f32 %v2608, %v2875
      %v2939 = vadd.f32 %v2609, %v2877
      %v2940 = vadd.f32 %v2610, %v2918
      %v2941 = vadd.f32 %v2611, %v2920
      %v2942 = vld [vmem:[%s2 + $0x20] sm:$0xf]
      %v2943 = vld [vmem:[%s2 + $0x24] sm:$0xf]
      %v2946 = vunpack.c.l.b16 %v2942
      %v2947 = vunpack.c.l.b16 %v2943
      %v2948 = vpack.c.b16 %v2947, %v2946
      %v2950 = vsel %vm1755, %v2948, 0
      %2952 = vmatprep.subr.bf16.mxu0 %v1621
      %2953 = vmatpush1.bf16.msra.mxu0 %v1620
      %2954 = vmatprep.subr.bf16.mxu0 %v1632
      %2955 = vmatpush1.bf16.msra.mxu0 %v1631
      %2956 = vmatprep.subr.bf16.mxu0 0
      %2957 = vmatpush1.bf16.msra.mxu0 0
      %2958 = vmatprep.subr.bf16.mxu0 0
      %2959 = vmatpush1.bf16.msra.mxu0 0
      %2960 = vmatprep.subr.bf16.mxu0 0
      %2961 = vmatpush1.bf16.msra.mxu0 0
      %2962 = vmatprep.subr.bf16.mxu0 0
      %2963 = vmatpush1.bf16.msra.mxu0 0
      %2964 = vmatprep.subr.bf16.mxu0 0
      %2965 = vmatpush1.bf16.msra.mxu0 0
      %2966 = vmatprep.subr.bf16.mxu0 0
      %2967 = vmatpush1.bf16.msra.mxu0 0
      %2968 = vmatprep.subr.bf16.mxu0 0
      %2969 = vmatpush1.bf16.msra.mxu0 0
      %2970 = vmatprep.subr.bf16.mxu0 0
      %2971 = vmatpush1.bf16.msra.mxu0 0
      %2972 = vmatprep.subr.bf16.mxu0 0
      %2973 = vmatpush1.bf16.msra.mxu0 0
      %2974 = vmatprep.subr.bf16.mxu0 0
      %2975 = vmatpush1.bf16.msra.mxu0 0
      %2976 = vmatprep.subr.bf16.mxu0 0
      %2977 = vmatpush1.bf16.msra.mxu0 0
      %2978 = vmatprep.subr.bf16.mxu0 0
      %2979 = vmatpush1.bf16.msra.mxu0 0
      %2980 = vmatprep.subr.bf16.mxu0 0
      %2981 = vmatpush1.bf16.msra.mxu0 0
      %2982 = vmatprep.subr.bf16.mxu0 0
      %2983 = vmatpush1.bf16.msra.mxu0 0
      %2984 = vmatprep.mubr.bf16.mxu0 0
      %2985 = vmatmul.mubr.bf16.gmra.mrb[0].mxu0 %v2950
      %v2986 = vpop.f32.mrb[0].mxu0
      %v2987 = vadd.f32 0.0, %v2986
      %v2988 = vpop.f32.mrb[0].mxu0
      %v2989 = vadd.f32 0.0, %v2988
      %v2990 = vpop.f32.mrb[0].mxu0
      %v2991 = vadd.f32 0.0, %v2990
      %v2992 = vpop.f32.mrb[0].mxu0
      %v2993 = vadd.f32 0.0, %v2992
      %2994 = vdwg.mxu0
      %2995 = vmatprep.subr.bf16.mxu0 %v1623
      %2996 = vmatpush1.bf16.msra.mxu0 %v1622
      %2997 = vmatprep.subr.bf16.mxu0 %v1634
      %2998 = vmatpush1.bf16.msra.mxu0 %v1633
      %2999 = vmatprep.subr.bf16.mxu0 0
      %3000 = vmatpush1.bf16.msra.mxu0 0
      %3001 = vmatprep.subr.bf16.mxu0 0
      %3002 = vmatpush1.bf16.msra.mxu0 0
      %3003 = vmatprep.subr.bf16.mxu0 0
      %3004 = vmatpush1.bf16.msra.mxu0 0
      %3005 = vmatprep.subr.bf16.mxu0 0
      %3006 = vmatpush1.bf16.msra.mxu0 0
      %3007 = vmatprep.subr.bf16.mxu0 0
      %3008 = vmatpush1.bf16.msra.mxu0 0
      %3009 = vmatprep.subr.bf16.mxu0 0
      %3010 = vmatpush1.bf16.msra.mxu0 0
      %3011 = vmatprep.subr.bf16.mxu0 0
      %3012 = vmatpush1.bf16.msra.mxu0 0
      %3013 = vmatprep.subr.bf16.mxu0 0
      %3014 = vmatpush1.bf16.msra.mxu0 0
      %3015 = vmatprep.subr.bf16.mxu0 0
      %3016 = vmatpush1.bf16.msra.mxu0 0
      %3017 = vmatprep.subr.bf16.mxu0 0
      %3018 = vmatpush1.bf16.msra.mxu0 0
      %3019 = vmatprep.subr.bf16.mxu0 0
      %3020 = vmatpush1.bf16.msra.mxu0 0
      %3021 = vmatprep.subr.bf16.mxu0 0
      %3022 = vmatpush1.bf16.msra.mxu0 0
      %3023 = vmatprep.subr.bf16.mxu0 0
      %3024 = vmatpush1.bf16.msra.mxu0 0
      %3025 = vmatprep.subr.bf16.mxu0 0
      %3026 = vmatpush1.bf16.msra.mxu0 0
      %3027 = vmatprep.mubr.bf16.mxu0 0
      %3028 = vmatmul.mubr.bf16.gmra.mrb[0].mxu0 %v2950
      %v3029 = vpop.f32.mrb[0].mxu0
      %v3030 = vadd.f32 0.0, %v3029
      %v3031 = vpop.f32.mrb[0].mxu0
      %v3032 = vadd.f32 0.0, %v3031
      %v3033 = vpop.f32.mrb[0].mxu0
      %v3034 = vadd.f32 0.0, %v3033
      %v3035 = vpop.f32.mrb[0].mxu0
      %v3036 = vadd.f32 0.0, %v3035
      %3037 = vdwg.mxu0
      %3038 = vmatprep.subr.bf16.mxu0 %v1625
      %3039 = vmatpush1.bf16.msra.mxu0 %v1624
      %3040 = vmatprep.subr.bf16.mxu0 %v1636
      %3041 = vmatpush1.bf16.msra.mxu0 %v1635
      %3042 = vmatprep.subr.bf16.mxu0 0
      %3043 = vmatpush1.bf16.msra.mxu0 0
      %3044 = vmatprep.subr.bf16.mxu0 0
      %3045 = vmatpush1.bf16.msra.mxu0 0
      %3046 = vmatprep.subr.bf16.mxu0 0
      %3047 = vmatpush1.bf16.msra.mxu0 0
      %3048 = vmatprep.subr.bf16.mxu0 0
      %3049 = vmatpush1.bf16.msra.mxu0 0
      %3050 = vmatprep.subr.bf16.mxu0 0
      %3051 = vmatpush1.bf16.msra.mxu0 0
      %3052 = vmatprep.subr.bf16.mxu0 0
      %3053 = vmatpush1.bf16.msra.mxu0 0
      %3054 = vmatprep.subr.bf16.mxu0 0
      %3055 = vmatpush1.bf16.msra.mxu0 0
      %3056 = vmatprep.subr.bf16.mxu0 0
      %3057 = vmatpush1.bf16.msra.mxu0 0
      %3058 = vmatprep.subr.bf16.mxu0 0
      %3059 = vmatpush1.bf16.msra.mxu0 0
      %3060 = vmatprep.subr.bf16.mxu0 0
      %3061 = vmatpush1.bf16.msra.mxu0 0
      %3062 = vmatprep.subr.bf16.mxu0 0
      %3063 = vmatpush1.bf16.msra.mxu0 0
      %3064 = vmatprep.subr.bf16.mxu0 0
      %3065 = vmatpush1.bf16.msra.mxu0 0
      %3066 = vmatprep.subr.bf16.mxu0 0
      %3067 = vmatpush1.bf16.msra.mxu0 0
      %3068 = vmatprep.subr.bf16.mxu0 0
      %3069 = vmatpush1.bf16.msra.mxu0 0
      %3070 = vmatprep.mubr.bf16.mxu0 0
      %3071 = vmatmul.mubr.bf16.gmra.mrb[0].mxu0 %v2950
      %v3072 = vpop.f32.mrb[0].mxu0
      %v3073 = vadd.f32 0.0, %v3072
      %v3074 = vpop.f32.mrb[0].mxu0
      %v3075 = vadd.f32 0.0, %v3074
      %v3076 = vpop.f32.mrb[0].mxu0
      %v3077 = vadd.f32 0.0, %v3076
      %v3078 = vpop.f32.mrb[0].mxu0
      %v3079 = vadd.f32 0.0, %v3078
      %3080 = vdwg.mxu0
      %3081 = vmatprep.subr.bf16.mxu0 %v1627
      %3082 = vmatpush1.bf16.msra.mxu0 %v1626
      %3083 = vmatprep.subr.bf16.mxu0 %v1638
      %3084 = vmatpush1.bf16.msra.mxu0 %v1637
      %3085 = vmatprep.subr.bf16.mxu0 0
      %3086 = vmatpush1.bf16.msra.mxu0 0
      %3087 = vmatprep.subr.bf16.mxu0 0
      %3088 = vmatpush1.bf16.msra.mxu0 0
      %3089 = vmatprep.subr.bf16.mxu0 0
      %3090 = vmatpush1.bf16.msra.mxu0 0
      %3091 = vmatprep.subr.bf16.mxu0 0
      %3092 = vmatpush1.bf16.msra.mxu0 0
      %3093 = vmatprep.subr.bf16.mxu0 0
      %3094 = vmatpush1.bf16.msra.mxu0 0
      %3095 = vmatprep.subr.bf16.mxu0 0
      %3096 = vmatpush1.bf16.msra.mxu0 0
      %3097 = vmatprep.subr.bf16.mxu0 0
      %3098 = vmatpush1.bf16.msra.mxu0 0
      %3099 = vmatprep.subr.bf16.mxu0 0
      %3100 = vmatpush1.bf16.msra.mxu0 0
      %3101 = vmatprep.subr.bf16.mxu0 0
      %3102 = vmatpush1.bf16.msra.mxu0 0
      %3103 = vmatprep.subr.bf16.mxu0 0
      %3104 = vmatpush1.bf16.msra.mxu0 0
      %3105 = vmatprep.subr.bf16.mxu0 0
      %3106 = vmatpush1.bf16.msra.mxu0 0
      %3107 = vmatprep.subr.bf16.mxu0 0
      %3108 = vmatpush1.bf16.msra.mxu0 0
      %3109 = vmatprep.subr.bf16.mxu0 0
      %3110 = vmatpush1.bf16.msra.mxu0 0
      %3111 = vmatprep.subr.bf16.mxu0 0
      %3112 = vmatpush1.bf16.msra.mxu0 0
      %3113 = vmatprep.mubr.bf16.mxu0 0
      %3114 = vmatmul.mubr.bf16.gmra.mrb[0].mxu0 %v2950
      %v3115 = vpop.f32.mrb[0].mxu0
      %v3116 = vadd.f32 0.0, %v3115
      %v3117 = vpop.f32.mrb[0].mxu0
      %v3118 = vadd.f32 0.0, %v3117
      %v3119 = vpop.f32.mrb[0].mxu0
      %v3120 = vadd.f32 0.0, %v3119
      %v3121 = vpop.f32.mrb[0].mxu0
      %v3122 = vadd.f32 0.0, %v3121
      %3123 = vdwg.mxu0
      %3124 = vmatprep.subr.bf16.mxu0 %v1629
      %3125 = vmatpush1.bf16.msra.mxu0 %v1628
      %3126 = vmatprep.subr.bf16.mxu0 %v1640
      %3127 = vmatpush1.bf16.msra.mxu0 %v1639
      %3128 = vmatprep.subr.bf16.mxu0 0
      %3129 = vmatpush1.bf16.msra.mxu0 0
      %3130 = vmatprep.subr.bf16.mxu0 0
      %3131 = vmatpush1.bf16.msra.mxu0 0
      %3132 = vmatprep.subr.bf16.mxu0 0
      %3133 = vmatpush1.bf16.msra.mxu0 0
      %3134 = vmatprep.subr.bf16.mxu0 0
      %3135 = vmatpush1.bf16.msra.mxu0 0
      %3136 = vmatprep.subr.bf16.mxu0 0
      %3137 = vmatpush1.bf16.msra.mxu0 0
      %3138 = vmatprep.subr.bf16.mxu0 0
      %3139 = vmatpush1.bf16.msra.mxu0 0
      %3140 = vmatprep.subr.bf16.mxu0 0
      %3141 = vmatpush1.bf16.msra.mxu0 0
      %3142 = vmatprep.subr.bf16.mxu0 0
      %3143 = vmatpush1.bf16.msra.mxu0 0
      %3144 = vmatprep.subr.bf16.mxu0 0
      %3145 = vmatpush1.bf16.msra.mxu0 0
      %3146 = vmatprep.subr.bf16.mxu0 0
      %3147 = vmatpush1.bf16.msra.mxu0 0
      %3148 = vmatprep.subr.bf16.mxu0 0
      %3149 = vmatpush1.bf16.msra.mxu0 0
      %3150 = vmatprep.subr.bf16.mxu0 0
      %3151 = vmatpush1.bf16.msra.mxu0 0
      %3152 = vmatprep.subr.bf16.mxu0 0
      %3153 = vmatpush1.bf16.msra.mxu0 0
      %3154 = vmatprep.subr.bf16.mxu0 0
      %3155 = vmatpush1.bf16.msra.mxu0 0
      %3156 = vmatprep.mubr.bf16.mxu0 0
      %3157 = vmatmul.mubr.bf16.gmra.mrb[0].mxu0 %v2950
      %v3158 = vpop.f32.mrb[0].mxu0
      %v3159 = vadd.f32 0.0, %v3158
      %v3160 = vpop.f32.mrb[0].mxu0
      %v3161 = vadd.f32 0.0, %v3160
      %v3162 = vpop.f32.mrb[0].mxu0
      %v3163 = vadd.f32 0.0, %v3162
      %v3164 = vpop.f32.mrb[0].mxu0
      %v3165 = vadd.f32 0.0, %v3164
      %3166 = vdwg.mxu0
      %v3167 = vadd.f32 %v2922, %v2987
      %v3168 = vadd.f32 %v2923, %v2989
      %v3169 = vadd.f32 %v2924, %v3030
      %v3170 = vadd.f32 %v2925, %v3032
      %v3171 = vadd.f32 %v2926, %v3073
      %v3172 = vadd.f32 %v2927, %v3075
      %v3173 = vadd.f32 %v2928, %v3116
      %v3174 = vadd.f32 %v2929, %v3118
      %v3175 = vadd.f32 %v2930, %v3159
      %v3176 = vadd.f32 %v2931, %v3161
      %v3177 = vadd.f32 %v2932, %v2991
      %v3178 = vadd.f32 %v2933, %v2993
      %v3179 = vadd.f32 %v2934, %v3034
      %v3180 = vadd.f32 %v2935, %v3036
      %v3181 = vadd.f32 %v2936, %v3077
      %v3182 = vadd.f32 %v2937, %v3079
      %v3183 = vadd.f32 %v2938, %v3120
      %v3184 = vadd.f32 %v2939, %v3122
      %v3185 = vadd.f32 %v2940, %v3163
      %v3186 = vadd.f32 %v2941, %v3165
      %v3187 = vld [vmem:[%s2 + $0x28] sm:$0xf]
      %v3188 = vld [vmem:[%s2 + $0x2c] sm:$0xf]
      %v3189 = vld [vmem:[#allocation2 + $0x8] sm:$0xff]
      %v3190 = vld [vmem:[#allocation2 + $0x10] sm:$0xff]
      %v3191 = vld [vmem:[#allocation2 + $0x18] sm:$0xff]
      %v3192 = vld [vmem:[#allocation2 + $0x20] sm:$0xff]
      %v3193 = vld [vmem:[#allocation2 + $0x28] sm:$0xff]
      %v3194 = vld [vmem:[#allocation2 + $0x30] sm:$0xff]
      %v3195 = vld [vmem:[#allocation2 + $0x38] sm:$0xff]
      %v3196 = vld [vmem:[#allocation2 + $0x40] sm:$0xff]
      %v3197 = vld [vmem:[#allocation2 + $0x48] sm:$0xff]
      %v3198 = vld [vmem:[#allocation2 + $0x50] sm:$0xff]
      %v3199 = vld [vmem:[#allocation2 + $0x58] sm:$0xff]
      %v3200 = vld [vmem:[#allocation2 + $0x68] sm:$0xff]
      %v3201 = vld [vmem:[#allocation2 + $0x70] sm:$0xff]
      %v3202 = vld [vmem:[#allocation2 + $0x78] sm:$0xff]
      %v3203 = vld [vmem:[#allocation2 + $0x80] sm:$0xff]
      %v3204 = vld [vmem:[#allocation2 + $0x88] sm:$0xff]
      %v3205 = vld [vmem:[#allocation2 + $0x90] sm:$0xff]
      %v3206 = vld [vmem:[#allocation2 + $0x98] sm:$0xff]
      %v3207 = vld [vmem:[#allocation2 + $0xa0] sm:$0xff]
      %v3208 = vld [vmem:[#allocation2 + $0xa8] sm:$0xff]
      %v3209 = vld [vmem:[#allocation2 + $0xb0] sm:$0xff]
      %v3210 = vld [vmem:[#allocation2 + $0xb8] sm:$0xff]
      %v3213 = vunpack.c.l.b16 %v3187
      %v3214 = vunpack.c.l.b16 %v3188
      %v3215 = vpack.c.b16 %v3214, %v3213
      %3238 = vrot.lane.b32.xlu0 %v3189, 127
      %v3239 = vpop.permute.xlu0 %3238
      %3240 = vrot.lane.b32.xlu0 %v3190, 127
      %v3241 = vpop.permute.xlu0 %3240
      %3242 = vrot.lane.b32.xlu0 %v3191, 127
      %v3243 = vpop.permute.xlu0 %3242
      %3244 = vrot.lane.b32.xlu0 %v3192, 127
      %v3245 = vpop.permute.xlu0 %3244
      %3246 = vrot.lane.b32.xlu0 %v3193, 127
      %v3247 = vpop.permute.xlu0 %3246
      %3248 = vrot.lane.b32.xlu0 %v3194, 127
      %v3249 = vpop.permute.xlu0 %3248
      %3250 = vrot.lane.b32.xlu0 %v3195, 127
      %v3251 = vpop.permute.xlu0 %3250
      %3252 = vrot.lane.b32.xlu0 %v3196, 127
      %v3253 = vpop.permute.xlu0 %3252
      %3254 = vrot.lane.b32.xlu0 %v3197, 127
      %v3255 = vpop.permute.xlu0 %3254
      %3256 = vrot.lane.b32.xlu0 %v3198, 127
      %v3257 = vpop.permute.xlu0 %3256
      %3258 = vrot.lane.b32.xlu0 %v3199, 127
      %v3259 = vpop.permute.xlu0 %3258
      %3260 = vrot.lane.b32.xlu0 %v3200, 127
      %v3261 = vpop.permute.xlu0 %3260
      %3262 = vrot.lane.b32.xlu0 %v3201, 127
      %v3263 = vpop.permute.xlu0 %3262
      %3264 = vrot.lane.b32.xlu0 %v3202, 127
      %v3265 = vpop.permute.xlu0 %3264
      %3266 = vrot.lane.b32.xlu0 %v3203, 127
      %v3267 = vpop.permute.xlu0 %3266
      %3268 = vrot.lane.b32.xlu0 %v3204, 127
      %v3269 = vpop.permute.xlu0 %3268
      %3270 = vrot.lane.b32.xlu0 %v3205, 127
      %v3271 = vpop.permute.xlu0 %3270
      %3272 = vrot.lane.b32.xlu0 %v3206, 127
      %v3273 = vpop.permute.xlu0 %3272
      %3274 = vrot.lane.b32.xlu0 %v3207, 127
      %v3275 = vpop.permute.xlu0 %3274
      %3276 = vrot.lane.b32.xlu0 %v3208, 127
      %v3277 = vpop.permute.xlu0 %3276
      %3278 = vrot.lane.b32.xlu0 %v3209, 127
      %v3279 = vpop.permute.xlu0 %3278
      %3280 = vrot.lane.b32.xlu0 %v3210, 127
      %v3281 = vpop.permute.xlu0 %3280
      %vm3282 = vcmask 1039360
      %v3283 = vsel %vm3282, %v3239, %v3241
      %v3284 = vsel %vm3282, %v3241, %v3243
      %v3285 = vsel %vm3282, %v3243, %v3245
      %v3286 = vsel %vm3282, %v3245, %v3247
      %v3287 = vsel %vm3282, %v3247, %v3249
      %v3288 = vsel %vm3282, %v3249, %v3251
      %v3289 = vsel %vm3282, %v3251, %v3253
      %v3290 = vsel %vm3282, %v3253, %v3255
      %v3291 = vsel %vm3282, %v3255, %v3257
      %v3292 = vsel %vm3282, %v3257, %v3259
      %v3293 = vsel %vm3282, %v3261, %v3263
      %v3294 = vsel %vm3282, %v3263, %v3265
      %v3295 = vsel %vm3282, %v3265, %v3267
      %v3296 = vsel %vm3282, %v3267, %v3269
      %v3297 = vsel %vm3282, %v3269, %v3271
      %v3298 = vsel %vm3282, %v3271, %v3273
      %v3299 = vsel %vm3282, %v3273, %v3275
      %v3300 = vsel %vm3282, %v3275, %v3277
      %v3301 = vsel %vm3282, %v3277, %v3279
      %v3302 = vsel %vm3282, %v3279, %v3281
      %v3324 = vsel %vm1755, %v3215, 0
      %3326 = vmatprep.subr.bf16.mxu0 %v3284
      %3327 = vmatpush1.bf16.msra.mxu0 %v3283
      %3328 = vmatprep.subr.bf16.mxu0 %v3294
      %3329 = vmatpush1.bf16.msra.mxu0 %v3293
      %3330 = vmatprep.subr.bf16.mxu0 0
      %3331 = vmatpush1.bf16.msra.mxu0 0
      %3332 = vmatprep.subr.bf16.mxu0 0
      %3333 = vmatpush1.bf16.msra.mxu0 0
      %3334 = vmatprep.subr.bf16.mxu0 0
      %3335 = vmatpush1.bf16.msra.mxu0 0
      %3336 = vmatprep.subr.bf16.mxu0 0
      %3337 = vmatpush1.bf16.msra.mxu0 0
      %3338 = vmatprep.subr.bf16.mxu0 0
      %3339 = vmatpush1.bf16.msra.mxu0 0
      %3340 = vmatprep.subr.bf16.mxu0 0
      %3341 = vmatpush1.bf16.msra.mxu0 0
      %3342 = vmatprep.subr.bf16.mxu0 0
      %3343 = vmatpush1.bf16.msra.mxu0 0
      %3344 = vmatprep.subr.bf16.mxu0 0
      %3345 = vmatpush1.bf16.msra.mxu0 0
      %3346 = vmatprep.subr.bf16.mxu0 0
      %3347 = vmatpush1.bf16.msra.mxu0 0
      %3348 = vmatprep.subr.bf16.mxu0 0
      %3349 = vmatpush1.bf16.msra.mxu0 0
      %3350 = vmatprep.subr.bf16.mxu0 0
      %3351 = vmatpush1.bf16.msra.mxu0 0
      %3352 = vmatprep.subr.bf16.mxu0 0
      %3353 = vmatpush1.bf16.msra.mxu0 0
      %3354 = vmatprep.subr.bf16.mxu0 0
      %3355 = vmatpush1.bf16.msra.mxu0 0
      %3356 = vmatprep.subr.bf16.mxu0 0
      %3357 = vmatpush1.bf16.msra.mxu0 0
      %3358 = vmatprep.mubr.bf16.mxu0 0
      %3359 = vmatmul.mubr.bf16.gmra.mrb[0].mxu0 %v3324
      %v3360 = vpop.f32.mrb[0].mxu0
      %v3361 = vadd.f32 0.0, %v3360
      %v3362 = vpop.f32.mrb[0].mxu0
      %v3363 = vadd.f32 0.0, %v3362
      %v3364 = vpop.f32.mrb[0].mxu0
      %v3365 = vadd.f32 0.0, %v3364
      %v3366 = vpop.f32.mrb[0].mxu0
      %v3367 = vadd.f32 0.0, %v3366
      %3368 = vdwg.mxu0
      %3369 = vmatprep.subr.bf16.mxu0 %v3286
      %3370 = vmatpush1.bf16.msra.mxu0 %v3285
      %3371 = vmatprep.subr.bf16.mxu0 %v3296
      %3372 = vmatpush1.bf16.msra.mxu0 %v3295
      %3373 = vmatprep.subr.bf16.mxu0 0
      %3374 = vmatpush1.bf16.msra.mxu0 0
      %3375 = vmatprep.subr.bf16.mxu0 0
      %3376 = vmatpush1.bf16.msra.mxu0 0
      %3377 = vmatprep.subr.bf16.mxu0 0
      %3378 = vmatpush1.bf16.msra.mxu0 0
      %3379 = vmatprep.subr.bf16.mxu0 0
      %3380 = vmatpush1.bf16.msra.mxu0 0
      %3381 = vmatprep.subr.bf16.mxu0 0
      %3382 = vmatpush1.bf16.msra.mxu0 0
      %3383 = vmatprep.subr.bf16.mxu0 0
      %3384 = vmatpush1.bf16.msra.mxu0 0
      %3385 = vmatprep.subr.bf16.mxu0 0
      %3386 = vmatpush1.bf16.msra.mxu0 0
      %3387 = vmatprep.subr.bf16.mxu0 0
      %3388 = vmatpush1.bf16.msra.mxu0 0
      %3389 = vmatprep.subr.bf16.mxu0 0
      %3390 = vmatpush1.bf16.msra.mxu0 0
      %3391 = vmatprep.subr.bf16.mxu0 0
      %3392 = vmatpush1.bf16.msra.mxu0 0
      %3393 = vmatprep.subr.bf16.mxu0 0
      %3394 = vmatpush1.bf16.msra.mxu0 0
      %3395 = vmatprep.subr.bf16.mxu0 0
      %3396 = vmatpush1.bf16.msra.mxu0 0
      %3397 = vmatprep.subr.bf16.mxu0 0
      %3398 = vmatpush1.bf16.msra.mxu0 0
      %3399 = vmatprep.subr.bf16.mxu0 0
      %3400 = vmatpush1.bf16.msra.mxu0 0
      %3401 = vmatprep.mubr.bf16.mxu0 0
      %3402 = vmatmul.mubr.bf16.gmra.mrb[0].mxu0 %v3324
      %v3403 = vpop.f32.mrb[0].mxu0
      %v3404 = vadd.f32 0.0, %v3403
      %v3405 = vpop.f32.mrb[0].mxu0
      %v3406 = vadd.f32 0.0, %v3405
      %v3407 = vpop.f32.mrb[0].mxu0
      %v3408 = vadd.f32 0.0, %v3407
      %v3409 = vpop.f32.mrb[0].mxu0
      %v3410 = vadd.f32 0.0, %v3409
      %3411 = vdwg.mxu0
      %3412 = vmatprep.subr.bf16.mxu0 %v3288
      %3413 = vmatpush1.bf16.msra.mxu0 %v3287
      %3414 = vmatprep.subr.bf16.mxu0 %v3298
      %3415 = vmatpush1.bf16.msra.mxu0 %v3297
      %3416 = vmatprep.subr.bf16.mxu0 0
      %3417 = vmatpush1.bf16.msra.mxu0 0
      %3418 = vmatprep.subr.bf16.mxu0 0
      %3419 = vmatpush1.bf16.msra.mxu0 0
      %3420 = vmatprep.subr.bf16.mxu0 0
      %3421 = vmatpush1.bf16.msra.mxu0 0
      %3422 = vmatprep.subr.bf16.mxu0 0
      %3423 = vmatpush1.bf16.msra.mxu0 0
      %3424 = vmatprep.subr.bf16.mxu0 0
      %3425 = vmatpush1.bf16.msra.mxu0 0
      %3426 = vmatprep.subr.bf16.mxu0 0
      %3427 = vmatpush1.bf16.msra.mxu0 0
      %3428 = vmatprep.subr.bf16.mxu0 0
      %3429 = vmatpush1.bf16.msra.mxu0 0
      %3430 = vmatprep.subr.bf16.mxu0 0
      %3431 = vmatpush1.bf16.msra.mxu0 0
      %3432 = vmatprep.subr.bf16.mxu0 0
      %3433 = vmatpush1.bf16.msra.mxu0 0
      %3434 = vmatprep.subr.bf16.mxu0 0
      %3435 = vmatpush1.bf16.msra.mxu0 0
      %3436 = vmatprep.subr.bf16.mxu0 0
      %3437 = vmatpush1.bf16.msra.mxu0 0
      %3438 = vmatprep.subr.bf16.mxu0 0
      %3439 = vmatpush1.bf16.msra.mxu0 0
      %3440 = vmatprep.subr.bf16.mxu0 0
      %3441 = vmatpush1.bf16.msra.mxu0 0
      %3442 = vmatprep.subr.bf16.mxu0 0
      %3443 = vmatpush1.bf16.msra.mxu0 0
      %3444 = vmatprep.mubr.bf16.mxu0 0
      %3445 = vmatmul.mubr.bf16.gmra.mrb[0].mxu0 %v3324
      %v3446 = vpop.f32.mrb[0].mxu0
      %v3447 = vadd.f32 0.0, %v3446
      %v3448 = vpop.f32.mrb[0].mxu0
      %v3449 = vadd.f32 0.0, %v3448
      %v3450 = vpop.f32.mrb[0].mxu0
      %v3451 = vadd.f32 0.0, %v3450
      %v3452 = vpop.f32.mrb[0].mxu0
      %v3453 = vadd.f32 0.0, %v3452
      %3454 = vdwg.mxu0
      %3455 = vmatprep.subr.bf16.mxu0 %v3290
      %3456 = vmatpush1.bf16.msra.mxu0 %v3289
      %3457 = vmatprep.subr.bf16.mxu0 %v3300
      %3458 = vmatpush1.bf16.msra.mxu0 %v3299
      %3459 = vmatprep.subr.bf16.mxu0 0
      %3460 = vmatpush1.bf16.msra.mxu0 0
      %3461 = vmatprep.subr.bf16.mxu0 0
      %3462 = vmatpush1.bf16.msra.mxu0 0
      %3463 = vmatprep.subr.bf16.mxu0 0
      %3464 = vmatpush1.bf16.msra.mxu0 0
      %3465 = vmatprep.subr.bf16.mxu0 0
      %3466 = vmatpush1.bf16.msra.mxu0 0
      %3467 = vmatprep.subr.bf16.mxu0 0
      %3468 = vmatpush1.bf16.msra.mxu0 0
      %3469 = vmatprep.subr.bf16.mxu0 0
      %3470 = vmatpush1.bf16.msra.mxu0 0
      %3471 = vmatprep.subr.bf16.mxu0 0
      %3472 = vmatpush1.bf16.msra.mxu0 0
      %3473 = vmatprep.subr.bf16.mxu0 0
      %3474 = vmatpush1.bf16.msra.mxu0 0
      %3475 = vmatprep.subr.bf16.mxu0 0
      %3476 = vmatpush1.bf16.msra.mxu0 0
      %3477 = vmatprep.subr.bf16.mxu0 0
      %3478 = vmatpush1.bf16.msra.mxu0 0
      %3479 = vmatprep.subr.bf16.mxu0 0
      %3480 = vmatpush1.bf16.msra.mxu0 0
      %3481 = vmatprep.subr.bf16.mxu0 0
      %3482 = vmatpush1.bf16.msra.mxu0 0
      %3483 = vmatprep.subr.bf16.mxu0 0
      %3484 = vmatpush1.bf16.msra.mxu0 0
      %3485 = vmatprep.subr.bf16.mxu0 0
      %3486 = vmatpush1.bf16.msra.mxu0 0
      %3487 = vmatprep.mubr.bf16.mxu0 0
      %3488 = vmatmul.mubr.bf16.gmra.mrb[0].mxu0 %v3324
      %v3489 = vpop.f32.mrb[0].mxu0
      %v3490 = vadd.f32 0.0, %v3489
      %v3491 = vpop.f32.mrb[0].mxu0
      %v3492 = vadd.f32 0.0, %v3491
      %v3493 = vpop.f32.mrb[0].mxu0
      %v3494 = vadd.f32 0.0, %v3493
      %v3495 = vpop.f32.mrb[0].mxu0
      %v3496 = vadd.f32 0.0, %v3495
      %3497 = vdwg.mxu0
      %3498 = vmatprep.subr.bf16.mxu0 %v3292
      %3499 = vmatpush1.bf16.msra.mxu0 %v3291
      %3500 = vmatprep.subr.bf16.mxu0 %v3302
      %3501 = vmatpush1.bf16.msra.mxu0 %v3301
      %3502 = vmatprep.subr.bf16.mxu0 0
      %3503 = vmatpush1.bf16.msra.mxu0 0
      %3504 = vmatprep.subr.bf16.mxu0 0
      %3505 = vmatpush1.bf16.msra.mxu0 0
      %3506 = vmatprep.subr.bf16.mxu0 0
      %3507 = vmatpush1.bf16.msra.mxu0 0
      %3508 = vmatprep.subr.bf16.mxu0 0
      %3509 = vmatpush1.bf16.msra.mxu0 0
      %3510 = vmatprep.subr.bf16.mxu0 0
      %3511 = vmatpush1.bf16.msra.mxu0 0
      %3512 = vmatprep.subr.bf16.mxu0 0
      %3513 = vmatpush1.bf16.msra.mxu0 0
      %3514 = vmatprep.subr.bf16.mxu0 0
      %3515 = vmatpush1.bf16.msra.mxu0 0
      %3516 = vmatprep.subr.bf16.mxu0 0
      %3517 = vmatpush1.bf16.msra.mxu0 0
      %3518 = vmatprep.subr.bf16.mxu0 0
      %3519 = vmatpush1.bf16.msra.mxu0 0
      %3520 = vmatprep.subr.bf16.mxu0 0
      %3521 = vmatpush1.bf16.msra.mxu0 0
      %3522 = vmatprep.subr.bf16.mxu0 0
      %3523 = vmatpush1.bf16.msra.mxu0 0
      %3524 = vmatprep.subr.bf16.mxu0 0
      %3525 = vmatpush1.bf16.msra.mxu0 0
      %3526 = vmatprep.subr.bf16.mxu0 0
      %3527 = vmatpush1.bf16.msra.mxu0 0
      %3528 = vmatprep.subr.bf16.mxu0 0
      %3529 = vmatpush1.bf16.msra.mxu0 0
      %3530 = vmatprep.mubr.bf16.mxu0 0
      %3531 = vmatmul.mubr.bf16.gmra.mrb[0].mxu0 %v3324
      %v3532 = vpop.f32.mrb[0].mxu0
      %v3533 = vadd.f32 0.0, %v3532
      %v3534 = vpop.f32.mrb[0].mxu0
      %v3535 = vadd.f32 0.0, %v3534
      %v3536 = vpop.f32.mrb[0].mxu0
      %v3537 = vadd.f32 0.0, %v3536
      %v3538 = vpop.f32.mrb[0].mxu0
      %v3539 = vadd.f32 0.0, %v3538
      %3540 = vdwg.mxu0
      %v3541 = vadd.f32 %v3167, %v3361
      %v3542 = vadd.f32 %v3168, %v3363
      %v3543 = vadd.f32 %v3169, %v3404
      %v3544 = vadd.f32 %v3170, %v3406
      %v3545 = vadd.f32 %v3171, %v3447
      %v3546 = vadd.f32 %v3172, %v3449
      %v3547 = vadd.f32 %v3173, %v3490
      %v3548 = vadd.f32 %v3174, %v3492
      %v3549 = vadd.f32 %v3175, %v3533
      %v3550 = vadd.f32 %v3176, %v3535
      %v3551 = vadd.f32 %v3177, %v3365
      %v3552 = vadd.f32 %v3178, %v3367
      %v3553 = vadd.f32 %v3179, %v3408
      %v3554 = vadd.f32 %v3180, %v3410
      %v3555 = vadd.f32 %v3181, %v3451
      %v3556 = vadd.f32 %v3182, %v3453
      %v3557 = vadd.f32 %v3183, %v3494
      %v3558 = vadd.f32 %v3184, %v3496
      %v3559 = vadd.f32 %v3185, %v3537
      %v3560 = vadd.f32 %v3186, %v3539
      %v3561 = vld [vmem:[%s2 + $0x30] sm:$0xf]
      %v3562 = vld [vmem:[%s2 + $0x34] sm:$0xf]
      %v3565 = vunpack.c.l.b16 %v3561
      %v3566 = vunpack.c.l.b16 %v3562
      %v3567 = vpack.c.b16 %v3566, %v3565
      %3568 = vrot.lane.b32.xlu0 %v3189, 95
      %v3569 = vpop.permute.xlu0 %3568
      %3570 = vrot.lane.b32.xlu0 %v3190, 95
      %v3571 = vpop.permute.xlu0 %3570
      %3572 = vrot.lane.b32.xlu0 %v3191, 95
      %v3573 = vpop.permute.xlu0 %3572
      %3574 = vrot.lane.b32.xlu0 %v3192, 95
      %v3575 = vpop.permute.xlu0 %3574
      %3576 = vrot.lane.b32.xlu0 %v3193, 95
      %v3577 = vpop.permute.xlu0 %3576
      %3578 = vrot.lane.b32.xlu0 %v3194, 95
      %v3579 = vpop.permute.xlu0 %3578
      %3580 = vrot.lane.b32.xlu0 %v3195, 95
      %v3581 = vpop.permute.xlu0 %3580
      %3582 = vrot.lane.b32.xlu0 %v3196, 95
      %v3583 = vpop.permute.xlu0 %3582
      %3584 = vrot.lane.b32.xlu0 %v3197, 95
      %v3585 = vpop.permute.xlu0 %3584
      %3586 = vrot.lane.b32.xlu0 %v3198, 95
      %v3587 = vpop.permute.xlu0 %3586
      %3588 = vrot.lane.b32.xlu0 %v3199, 95
      %v3589 = vpop.permute.xlu0 %3588
      %3590 = vrot.lane.b32.xlu0 %v3200, 95
      %v3591 = vpop.permute.xlu0 %3590
      %3592 = vrot.lane.b32.xlu0 %v3201, 95
      %v3593 = vpop.permute.xlu0 %3592
      %3594 = vrot.lane.b32.xlu0 %v3202, 95
      %v3595 = vpop.permute.xlu0 %3594
      %3596 = vrot.lane.b32.xlu0 %v3203, 95
      %v3597 = vpop.permute.xlu0 %3596
      %3598 = vrot.lane.b32.xlu0 %v3204, 95
      %v3599 = vpop.permute.xlu0 %3598
      %3600 = vrot.lane.b32.xlu0 %v3205, 95
      %v3601 = vpop.permute.xlu0 %3600
      %3602 = vrot.lane.b32.xlu0 %v3206, 95
      %v3603 = vpop.permute.xlu0 %3602
      %3604 = vrot.lane.b32.xlu0 %v3207, 95
      %v3605 = vpop.permute.xlu0 %3604
      %3606 = vrot.lane.b32.xlu0 %v3208, 95
      %v3607 = vpop.permute.xlu0 %3606
      %3608 = vrot.lane.b32.xlu0 %v3209, 95
      %v3609 = vpop.permute.xlu0 %3608
      %3610 = vrot.lane.b32.xlu0 %v3210, 95
      %v3611 = vpop.permute.xlu0 %3610
      %vm3612 = vcmask 777216
      %v3613 = vsel %vm3612, %v3569, %v3571
      %v3614 = vsel %vm3612, %v3571, %v3573
      %v3615 = vsel %vm3612, %v3573, %v3575
      %v3616 = vsel %vm3612, %v3575, %v3577
      %v3617 = vsel %vm3612, %v3577, %v3579
      %v3618 = vsel %vm3612, %v3579, %v3581
      %v3619 = vsel %vm3612, %v3581, %v3583
      %v3620 = vsel %vm3612, %v3583, %v3585
      %v3621 = vsel %vm3612, %v3585, %v3587
      %v3622 = vsel %vm3612, %v3587, %v3589
      %v3623 = vsel %vm3612, %v3591, %v3593
      %v3624 = vsel %vm3612, %v3593, %v3595
      %v3625 = vsel %vm3612, %v3595, %v3597
      %v3626 = vsel %vm3612, %v3597, %v3599
      %v3627 = vsel %vm3612, %v3599, %v3601
      %v3628 = vsel %vm3612, %v3601, %v3603
      %v3629 = vsel %vm3612, %v3603, %v3605
      %v3630 = vsel %vm3612, %v3605, %v3607
      %v3631 = vsel %vm3612, %v3607, %v3609
      %v3632 = vsel %vm3612, %v3609, %v3611
      %v3654 = vsel %vm1755, %v3567, 0
      %3656 = vmatprep.subr.bf16.mxu0 %v3614
      %3657 = vmatpush1.bf16.msra.mxu0 %v3613
      %3658 = vmatprep.subr.bf16.mxu0 %v3624
      %3659 = vmatpush1.bf16.msra.mxu0 %v3623
      %3660 = vmatprep.subr.bf16.mxu0 0
      %3661 = vmatpush1.bf16.msra.mxu0 0
      %3662 = vmatprep.subr.bf16.mxu0 0
      %3663 = vmatpush1.bf16.msra.mxu0 0
      %3664 = vmatprep.subr.bf16.mxu0 0
      %3665 = vmatpush1.bf16.msra.mxu0 0
      %3666 = vmatprep.subr.bf16.mxu0 0
      %3667 = vmatpush1.bf16.msra.mxu0 0
      %3668 = vmatprep.subr.bf16.mxu0 0
      %3669 = vmatpush1.bf16.msra.mxu0 0
      %3670 = vmatprep.subr.bf16.mxu0 0
      %3671 = vmatpush1.bf16.msra.mxu0 0
      %3672 = vmatprep.subr.bf16.mxu0 0
      %3673 = vmatpush1.bf16.msra.mxu0 0
      %3674 = vmatprep.subr.bf16.mxu0 0
      %3675 = vmatpush1.bf16.msra.mxu0 0
      %3676 = vmatprep.subr.bf16.mxu0 0
      %3677 = vmatpush1.bf16.msra.mxu0 0
      %3678 = vmatprep.subr.bf16.mxu0 0
      %3679 = vmatpush1.bf16.msra.mxu0 0
      %3680 = vmatprep.subr.bf16.mxu0 0
      %3681 = vmatpush1.bf16.msra.mxu0 0
      %3682 = vmatprep.subr.bf16.mxu0 0
      %3683 = vmatpush1.bf16.msra.mxu0 0
      %3684 = vmatprep.subr.bf16.mxu0 0
      %3685 = vmatpush1.bf16.msra.mxu0 0
      %3686 = vmatprep.subr.bf16.mxu0 0
      %3687 = vmatpush1.bf16.msra.mxu0 0
      %3688 = vmatprep.mubr.bf16.mxu0 0
      %3689 = vmatmul.mubr.bf16.gmra.mrb[0].mxu0 %v3654
      %v3690 = vpop.f32.mrb[0].mxu0
      %v3691 = vadd.f32 0.0, %v3690
      %v3692 = vpop.f32.mrb[0].mxu0
      %v3693 = vadd.f32 0.0, %v3692
      %v3694 = vpop.f32.mrb[0].mxu0
      %v3695 = vadd.f32 0.0, %v3694
      %v3696 = vpop.f32.mrb[0].mxu0
      %v3697 = vadd.f32 0.0, %v3696
      %3698 = vdwg.mxu0
      %3699 = vmatprep.subr.bf16.mxu0 %v3616
      %3700 = vmatpush1.bf16.msra.mxu0 %v3615
      %3701 = vmatprep.subr.bf16.mxu0 %v3626
      %3702 = vmatpush1.bf16.msra.mxu0 %v3625
      %3703 = vmatprep.subr.bf16.mxu0 0
      %3704 = vmatpush1.bf16.msra.mxu0 0
      %3705 = vmatprep.subr.bf16.mxu0 0
      %3706 = vmatpush1.bf16.msra.mxu0 0
      %3707 = vmatprep.subr.bf16.mxu0 0
      %3708 = vmatpush1.bf16.msra.mxu0 0
      %3709 = vmatprep.subr.bf16.mxu0 0
      %3710 = vmatpush1.bf16.msra.mxu0 0
      %3711 = vmatprep.subr.bf16.mxu0 0
      %3712 = vmatpush1.bf16.msra.mxu0 0
      %3713 = vmatprep.subr.bf16.mxu0 0
      %3714 = vmatpush1.bf16.msra.mxu0 0
      %3715 = vmatprep.subr.bf16.mxu0 0
      %3716 = vmatpush1.bf16.msra.mxu0 0
      %3717 = vmatprep.subr.bf16.mxu0 0
      %3718 = vmatpush1.bf16.msra.mxu0 0
      %3719 = vmatprep.subr.bf16.mxu0 0
      %3720 = vmatpush1.bf16.msra.mxu0 0
      %3721 = vmatprep.subr.bf16.mxu0 0
      %3722 = vmatpush1.bf16.msra.mxu0 0
      %3723 = vmatprep.subr.bf16.mxu0 0
      %3724 = vmatpush1.bf16.msra.mxu0 0
      %3725 = vmatprep.subr.bf16.mxu0 0
      %3726 = vmatpush1.bf16.msra.mxu0 0
      %3727 = vmatprep.subr.bf16.mxu0 0
      %3728 = vmatpush1.bf16.msra.mxu0 0
      %3729 = vmatprep.subr.bf16.mxu0 0
      %3730 = vmatpush1.bf16.msra.mxu0 0
      %3731 = vmatprep.mubr.bf16.mxu0 0
      %3732 = vmatmul.mubr.bf16.gmra.mrb[0].mxu0 %v3654
      %v3733 = vpop.f32.mrb[0].mxu0
      %v3734 = vadd.f32 0.0, %v3733
      %v3735 = vpop.f32.mrb[0].mxu0
      %v3736 = vadd.f32 0.0, %v3735
      %v3737 = vpop.f32.mrb[0].mxu0
      %v3738 = vadd.f32 0.0, %v3737
      %v3739 = vpop.f32.mrb[0].mxu0
      %v3740 = vadd.f32 0.0, %v3739
      %3741 = vdwg.mxu0
      %3742 = vmatprep.subr.bf16.mxu0 %v3618
      %3743 = vmatpush1.bf16.msra.mxu0 %v3617
      %3744 = vmatprep.subr.bf16.mxu0 %v3628
      %3745 = vmatpush1.bf16.msra.mxu0 %v3627
      %3746 = vmatprep.subr.bf16.mxu0 0
      %3747 = vmatpush1.bf16.msra.mxu0 0
      %3748 = vmatprep.subr.bf16.mxu0 0
      %3749 = vmatpush1.bf16.msra.mxu0 0
      %3750 = vmatprep.subr.bf16.mxu0 0
      %3751 = vmatpush1.bf16.msra.mxu0 0
      %3752 = vmatprep.subr.bf16.mxu0 0
      %3753 = vmatpush1.bf16.msra.mxu0 0
      %3754 = vmatprep.subr.bf16.mxu0 0
      %3755 = vmatpush1.bf16.msra.mxu0 0
      %3756 = vmatprep.subr.bf16.mxu0 0
      %3757 = vmatpush1.bf16.msra.mxu0 0
      %3758 = vmatprep.subr.bf16.mxu0 0
      %3759 = vmatpush1.bf16.msra.mxu0 0
      %3760 = vmatprep.subr.bf16.mxu0 0
      %3761 = vmatpush1.bf16.msra.mxu0 0
      %3762 = vmatprep.subr.bf16.mxu0 0
      %3763 = vmatpush1.bf16.msra.mxu0 0
      %3764 = vmatprep.subr.bf16.mxu0 0
      %3765 = vmatpush1.bf16.msra.mxu0 0
      %3766 = vmatprep.subr.bf16.mxu0 0
      %3767 = vmatpush1.bf16.msra.mxu0 0
      %3768 = vmatprep.subr.bf16.mxu0 0
      %3769 = vmatpush1.bf16.msra.mxu0 0
      %3770 = vmatprep.subr.bf16.mxu0 0
      %3771 = vmatpush1.bf16.msra.mxu0 0
      %3772 = vmatprep.subr.bf16.mxu0 0
      %3773 = vmatpush1.bf16.msra.mxu0 0
      %3774 = vmatprep.mubr.bf16.mxu0 0
      %3775 = vmatmul.mubr.bf16.gmra.mrb[0].mxu0 %v3654
      %v3776 = vpop.f32.mrb[0].mxu0
      %v3777 = vadd.f32 0.0, %v3776
      %v3778 = vpop.f32.mrb[0].mxu0
      %v3779 = vadd.f32 0.0, %v3778
      %v3780 = vpop.f32.mrb[0].mxu0
      %v3781 = vadd.f32 0.0, %v3780
      %v3782 = vpop.f32.mrb[0].mxu0
      %v3783 = vadd.f32 0.0, %v3782
      %3784 = vdwg.mxu0
      %3785 = vmatprep.subr.bf16.mxu0 %v3620
      %3786 = vmatpush1.bf16.msra.mxu0 %v3619
      %3787 = vmatprep.subr.bf16.mxu0 %v3630
      %3788 = vmatpush1.bf16.msra.mxu0 %v3629
      %3789 = vmatprep.subr.bf16.mxu0 0
      %3790 = vmatpush1.bf16.msra.mxu0 0
      %3791 = vmatprep.subr.bf16.mxu0 0
      %3792 = vmatpush1.bf16.msra.mxu0 0
      %3793 = vmatprep.subr.bf16.mxu0 0
      %3794 = vmatpush1.bf16.msra.mxu0 0
      %3795 = vmatprep.subr.bf16.mxu0 0
      %3796 = vmatpush1.bf16.msra.mxu0 0
      %3797 = vmatprep.subr.bf16.mxu0 0
      %3798 = vmatpush1.bf16.msra.mxu0 0
      %3799 = vmatprep.subr.bf16.mxu0 0
      %3800 = vmatpush1.bf16.msra.mxu0 0
      %3801 = vmatprep.subr.bf16.mxu0 0
      %3802 = vmatpush1.bf16.msra.mxu0 0
      %3803 = vmatprep.subr.bf16.mxu0 0
      %3804 = vmatpush1.bf16.msra.mxu0 0
      %3805 = vmatprep.subr.bf16.mxu0 0
      %3806 = vmatpush1.bf16.msra.mxu0 0
      %3807 = vmatprep.subr.bf16.mxu0 0
      %3808 = vmatpush1.bf16.msra.mxu0 0
      %3809 = vmatprep.subr.bf16.mxu0 0
      %3810 = vmatpush1.bf16.msra.mxu0 0
      %3811 = vmatprep.subr.bf16.mxu0 0
      %3812 = vmatpush1.bf16.msra.mxu0 0
      %3813 = vmatprep.subr.bf16.mxu0 0
      %3814 = vmatpush1.bf16.msra.mxu0 0
      %3815 = vmatprep.subr.bf16.mxu0 0
      %3816 = vmatpush1.bf16.msra.mxu0 0
      %3817 = vmatprep.mubr.bf16.mxu0 0
      %3818 = vmatmul.mubr.bf16.gmra.mrb[0].mxu0 %v3654
      %v3819 = vpop.f32.mrb[0].mxu0
      %v3820 = vadd.f32 0.0, %v3819
      %v3821 = vpop.f32.mrb[0].mxu0
      %v3822 = vadd.f32 0.0, %v3821
      %v3823 = vpop.f32.mrb[0].mxu0
      %v3824 = vadd.f32 0.0, %v3823
      %v3825 = vpop.f32.mrb[0].mxu0
      %v3826 = vadd.f32 0.0, %v3825
      %3827 = vdwg.mxu0
      %3828 = vmatprep.subr.bf16.mxu0 %v3622
      %3829 = vmatpush1.bf16.msra.mxu0 %v3621
      %3830 = vmatprep.subr.bf16.mxu0 %v3632
      %3831 = vmatpush1.bf16.msra.mxu0 %v3631
      %3832 = vmatprep.subr.bf16.mxu0 0
      %3833 = vmatpush1.bf16.msra.mxu0 0
      %3834 = vmatprep.subr.bf16.mxu0 0
      %3835 = vmatpush1.bf16.msra.mxu0 0
      %3836 = vmatprep.subr.bf16.mxu0 0
      %3837 = vmatpush1.bf16.msra.mxu0 0
      %3838 = vmatprep.subr.bf16.mxu0 0
      %3839 = vmatpush1.bf16.msra.mxu0 0
      %3840 = vmatprep.subr.bf16.mxu0 0
      %3841 = vmatpush1.bf16.msra.mxu0 0
      %3842 = vmatprep.subr.bf16.mxu0 0
      %3843 = vmatpush1.bf16.msra.mxu0 0
      %3844 = vmatprep.subr.bf16.mxu0 0
      %3845 = vmatpush1.bf16.msra.mxu0 0
      %3846 = vmatprep.subr.bf16.mxu0 0
      %3847 = vmatpush1.bf16.msra.mxu0 0
      %3848 = vmatprep.subr.bf16.mxu0 0
      %3849 = vmatpush1.bf16.msra.mxu0 0
      %3850 = vmatprep.subr.bf16.mxu0 0
      %3851 = vmatpush1.bf16.msra.mxu0 0
      %3852 = vmatprep.subr.bf16.mxu0 0
      %3853 = vmatpush1.bf16.msra.mxu0 0
      %3854 = vmatprep.subr.bf16.mxu0 0
      %3855 = vmatpush1.bf16.msra.mxu0 0
      %3856 = vmatprep.subr.bf16.mxu0 0
      %3857 = vmatpush1.bf16.msra.mxu0 0
      %3858 = vmatprep.subr.bf16.mxu0 0
      %3859 = vmatpush1.bf16.msra.mxu0 0
      %3860 = vmatprep.mubr.bf16.mxu0 0
      %3861 = vmatmul.mubr.bf16.gmra.mrb[0].mxu0 %v3654
      %v3862 = vpop.f32.mrb[0].mxu0
      %v3863 = vadd.f32 0.0, %v3862
      %v3864 = vpop.f32.mrb[0].mxu0
      %v3865 = vadd.f32 0.0, %v3864
      %v3866 = vpop.f32.mrb[0].mxu0
      %v3867 = vadd.f32 0.0, %v3866
      %v3868 = vpop.f32.mrb[0].mxu0
      %v3869 = vadd.f32 0.0, %v3868
      %3870 = vdwg.mxu0
      %v3871 = vadd.f32 %v3541, %v3691
      %v3872 = vadd.f32 %v3542, %v3693
      %v3873 = vadd.f32 %v3543, %v3734
      %v3874 = vadd.f32 %v3544, %v3736
      %v3875 = vadd.f32 %v3545, %v3777
      %v3876 = vadd.f32 %v3546, %v3779
      %v3877 = vadd.f32 %v3547, %v3820
      %v3878 = vadd.f32 %v3548, %v3822
      %v3879 = vadd.f32 %v3549, %v3863
      %v3880 = vadd.f32 %v3550, %v3865
      %v3881 = vadd.f32 %v3551, %v3695
      %v3882 = vadd.f32 %v3552, %v3697
      %v3883 = vadd.f32 %v3553, %v3738
      %v3884 = vadd.f32 %v3554, %v3740
      %v3885 = vadd.f32 %v3555, %v3781
      %v3886 = vadd.f32 %v3556, %v3783
      %v3887 = vadd.f32 %v3557, %v3824
      %v3888 = vadd.f32 %v3558, %v3826
      %v3889 = vadd.f32 %v3559, %v3867
      %v3890 = vadd.f32 %v3560, %v3869
      %v3891 = vld [vmem:[%s2 + $0x38] sm:$0xf]
      %v3892 = vld [vmem:[%s2 + $0x3c] sm:$0xf]
      %v3895 = vunpack.c.l.b16 %v3891
      %v3896 = vunpack.c.l.b16 %v3892
      %v3897 = vpack.c.b16 %v3896, %v3895
      %3898 = vrot.lane.b32.xlu0 %v3189, 94
      %v3899 = vpop.permute.xlu0 %3898
      %3900 = vrot.lane.b32.xlu0 %v3190, 94
      %v3901 = vpop.permute.xlu0 %3900
      %3902 = vrot.lane.b32.xlu0 %v3191, 94
      %v3903 = vpop.permute.xlu0 %3902
      %3904 = vrot.lane.b32.xlu0 %v3192, 94
      %v3905 = vpop.permute.xlu0 %3904
      %3906 = vrot.lane.b32.xlu0 %v3193, 94
      %v3907 = vpop.permute.xlu0 %3906
      %3908 = vrot.lane.b32.xlu0 %v3194, 94
      %v3909 = vpop.permute.xlu0 %3908
      %3910 = vrot.lane.b32.xlu0 %v3195, 94
      %v3911 = vpop.permute.xlu0 %3910
      %3912 = vrot.lane.b32.xlu0 %v3196, 94
      %v3913 = vpop.permute.xlu0 %3912
      %3914 = vrot.lane.b32.xlu0 %v3197, 94
      %v3915 = vpop.permute.xlu0 %3914
      %3916 = vrot.lane.b32.xlu0 %v3198, 94
      %v3917 = vpop.permute.xlu0 %3916
      %3918 = vrot.lane.b32.xlu0 %v3199, 94
      %v3919 = vpop.permute.xlu0 %3918
      %3920 = vrot.lane.b32.xlu0 %v3200, 94
      %v3921 = vpop.permute.xlu0 %3920
      %3922 = vrot.lane.b32.xlu0 %v3201, 94
      %v3923 = vpop.permute.xlu0 %3922
      %3924 = vrot.lane.b32.xlu0 %v3202, 94
      %v3925 = vpop.permute.xlu0 %3924
      %3926 = vrot.lane.b32.xlu0 %v3203, 94
      %v3927 = vpop.permute.xlu0 %3926
      %3928 = vrot.lane.b32.xlu0 %v3204, 94
      %v3929 = vpop.permute.xlu0 %3928
      %3930 = vrot.lane.b32.xlu0 %v3205, 94
      %v3931 = vpop.permute.xlu0 %3930
      %3932 = vrot.lane.b32.xlu0 %v3206, 94
      %v3933 = vpop.permute.xlu0 %3932
      %3934 = vrot.lane.b32.xlu0 %v3207, 94
      %v3935 = vpop.permute.xlu0 %3934
      %3936 = vrot.lane.b32.xlu0 %v3208, 94
      %v3937 = vpop.permute.xlu0 %3936
      %3938 = vrot.lane.b32.xlu0 %v3209, 94
      %v3939 = vpop.permute.xlu0 %3938
      %3940 = vrot.lane.b32.xlu0 %v3210, 94
      %v3941 = vpop.permute.xlu0 %3940
      %vm3942 = vcmask 769024
      %v3943 = vsel %vm3942, %v3899, %v3901
      %v3944 = vsel %vm3942, %v3901, %v3903
      %v3945 = vsel %vm3942, %v3903, %v3905
      %v3946 = vsel %vm3942, %v3905, %v3907
      %v3947 = vsel %vm3942, %v3907, %v3909
      %v3948 = vsel %vm3942, %v3909, %v3911
      %v3949 = vsel %vm3942, %v3911, %v3913
      %v3950 = vsel %vm3942, %v3913, %v3915
      %v3951 = vsel %vm3942, %v3915, %v3917
      %v3952 = vsel %vm3942, %v3917, %v3919
      %v3953 = vsel %vm3942, %v3921, %v3923
      %v3954 = vsel %vm3942, %v3923, %v3925
      %v3955 = vsel %vm3942, %v3925, %v3927
      %v3956 = vsel %vm3942, %v3927, %v3929
      %v3957 = vsel %vm3942, %v3929, %v3931
      %v3958 = vsel %vm3942, %v3931, %v3933
      %v3959 = vsel %vm3942, %v3933, %v3935
      %v3960 = vsel %vm3942, %v3935, %v3937
      %v3961 = vsel %vm3942, %v3937, %v3939
      %v3962 = vsel %vm3942, %v3939, %v3941
      %v3984 = vsel %vm1755, %v3897, 0
      %3986 = vmatprep.subr.bf16.mxu0 %v3944
      %3987 = vmatpush1.bf16.msra.mxu0 %v3943
      %3988 = vmatprep.subr.bf16.mxu0 %v3954
      %3989 = vmatpush1.bf16.msra.mxu0 %v3953
      %3990 = vmatprep.subr.bf16.mxu0 0
      %3991 = vmatpush1.bf16.msra.mxu0 0
      %3992 = vmatprep.subr.bf16.mxu0 0
      %3993 = vmatpush1.bf16.msra.mxu0 0
      %3994 = vmatprep.subr.bf16.mxu0 0
      %3995 = vmatpush1.bf16.msra.mxu0 0
      %3996 = vmatprep.subr.bf16.mxu0 0
      %3997 = vmatpush1.bf16.msra.mxu0 0
      %3998 = vmatprep.subr.bf16.mxu0 0
      %3999 = vmatpush1.bf16.msra.mxu0 0
      %4000 = vmatprep.subr.bf16.mxu0 0
      %4001 = vmatpush1.bf16.msra.mxu0 0
      %4002 = vmatprep.subr.bf16.mxu0 0
      %4003 = vmatpush1.bf16.msra.mxu0 0
      %4004 = vmatprep.subr.bf16.mxu0 0
      %4005 = vmatpush1.bf16.msra.mxu0 0
      %4006 = vmatprep.subr.bf16.mxu0 0
      %4007 = vmatpush1.bf16.msra.mxu0 0
      %4008 = vmatprep.subr.bf16.mxu0 0
      %4009 = vmatpush1.bf16.msra.mxu0 0
      %4010 = vmatprep.subr.bf16.mxu0 0
      %4011 = vmatpush1.bf16.msra.mxu0 0
      %4012 = vmatprep.subr.bf16.mxu0 0
      %4013 = vmatpush1.bf16.msra.mxu0 0
      %4014 = vmatprep.subr.bf16.mxu0 0
      %4015 = vmatpush1.bf16.msra.mxu0 0
      %4016 = vmatprep.subr.bf16.mxu0 0
      %4017 = vmatpush1.bf16.msra.mxu0 0
      %4018 = vmatprep.mubr.bf16.mxu0 0
      %4019 = vmatmul.mubr.bf16.gmra.mrb[0].mxu0 %v3984
      %v4020 = vpop.f32.mrb[0].mxu0
      %v4021 = vadd.f32 0.0, %v4020
      %v4022 = vpop.f32.mrb[0].mxu0
      %v4023 = vadd.f32 0.0, %v4022
      %v4024 = vpop.f32.mrb[0].mxu0
      %v4025 = vadd.f32 0.0, %v4024
      %v4026 = vpop.f32.mrb[0].mxu0
      %v4027 = vadd.f32 0.0, %v4026
      %4028 = vdwg.mxu0
      %4029 = vmatprep.subr.bf16.mxu0 %v3946
      %4030 = vmatpush1.bf16.msra.mxu0 %v3945
      %4031 = vmatprep.subr.bf16.mxu0 %v3956
      %4032 = vmatpush1.bf16.msra.mxu0 %v3955
      %4033 = vmatprep.subr.bf16.mxu0 0
      %4034 = vmatpush1.bf16.msra.mxu0 0
      %4035 = vmatprep.subr.bf16.mxu0 0
      %4036 = vmatpush1.bf16.msra.mxu0 0
      %4037 = vmatprep.subr.bf16.mxu0 0
      %4038 = vmatpush1.bf16.msra.mxu0 0
      %4039 = vmatprep.subr.bf16.mxu0 0
      %4040 = vmatpush1.bf16.msra.mxu0 0
      %4041 = vmatprep.subr.bf16.mxu0 0
      %4042 = vmatpush1.bf16.msra.mxu0 0
      %4043 = vmatprep.subr.bf16.mxu0 0
      %4044 = vmatpush1.bf16.msra.mxu0 0
      %4045 = vmatprep.subr.bf16.mxu0 0
      %4046 = vmatpush1.bf16.msra.mxu0 0
      %4047 = vmatprep.subr.bf16.mxu0 0
      %4048 = vmatpush1.bf16.msra.mxu0 0
      %4049 = vmatprep.subr.bf16.mxu0 0
      %4050 = vmatpush1.bf16.msra.mxu0 0
      %4051 = vmatprep.subr.bf16.mxu0 0
      %4052 = vmatpush1.bf16.msra.mxu0 0
      %4053 = vmatprep.subr.bf16.mxu0 0
      %4054 = vmatpush1.bf16.msra.mxu0 0
      %4055 = vmatprep.subr.bf16.mxu0 0
      %4056 = vmatpush1.bf16.msra.mxu0 0
      %4057 = vmatprep.subr.bf16.mxu0 0
      %4058 = vmatpush1.bf16.msra.mxu0 0
      %4059 = vmatprep.subr.bf16.mxu0 0
      %4060 = vmatpush1.bf16.msra.mxu0 0
      %4061 = vmatprep.mubr.bf16.mxu0 0
      %4062 = vmatmul.mubr.bf16.gmra.mrb[0].mxu0 %v3984
      %v4063 = vpop.f32.mrb[0].mxu0
      %v4064 = vadd.f32 0.0, %v4063
      %v4065 = vpop.f32.mrb[0].mxu0
      %v4066 = vadd.f32 0.0, %v4065
      %v4067 = vpop.f32.mrb[0].mxu0
      %v4068 = vadd.f32 0.0, %v4067
      %v4069 = vpop.f32.mrb[0].mxu0
      %v4070 = vadd.f32 0.0, %v4069
      %4071 = vdwg.mxu0
      %4072 = vmatprep.subr.bf16.mxu0 %v3948
      %4073 = vmatpush1.bf16.msra.mxu0 %v3947
      %4074 = vmatprep.subr.bf16.mxu0 %v3958
      %4075 = vmatpush1.bf16.msra.mxu0 %v3957
      %4076 = vmatprep.subr.bf16.mxu0 0
      %4077 = vmatpush1.bf16.msra.mxu0 0
      %4078 = vmatprep.subr.bf16.mxu0 0
      %4079 = vmatpush1.bf16.msra.mxu0 0
      %4080 = vmatprep.subr.bf16.mxu0 0
      %4081 = vmatpush1.bf16.msra.mxu0 0
      %4082 = vmatprep.subr.bf16.mxu0 0
      %4083 = vmatpush1.bf16.msra.mxu0 0
      %4084 = vmatprep.subr.bf16.mxu0 0
      %4085 = vmatpush1.bf16.msra.mxu0 0
      %4086 = vmatprep.subr.bf16.mxu0 0
      %4087 = vmatpush1.bf16.msra.mxu0 0
      %4088 = vmatprep.subr.bf16.mxu0 0
      %4089 = vmatpush1.bf16.msra.mxu0 0
      %4090 = vmatprep.subr.bf16.mxu0 0
      %4091 = vmatpush1.bf16.msra.mxu0 0
      %4092 = vmatprep.subr.bf16.mxu0 0
      %4093 = vmatpush1.bf16.msra.mxu0 0
      %4094 = vmatprep.subr.bf16.mxu0 0
      %4095 = vmatpush1.bf16.msra.mxu0 0
      %4096 = vmatprep.subr.bf16.mxu0 0
      %4097 = vmatpush1.bf16.msra.mxu0 0
      %4098 = vmatprep.subr.bf16.mxu0 0
      %4099 = vmatpush1.bf16.msra.mxu0 0
      %4100 = vmatprep.subr.bf16.mxu0 0
      %4101 = vmatpush1.bf16.msra.mxu0 0
      %4102 = vmatprep.subr.bf16.mxu0 0
      %4103 = vmatpush1.bf16.msra.mxu0 0
      %4104 = vmatprep.mubr.bf16.mxu0 0
      %4105 = vmatmul.mubr.bf16.gmra.mrb[0].mxu0 %v3984
      %v4106 = vpop.f32.mrb[0].mxu0
      %v4107 = vadd.f32 0.0, %v4106
      %v4108 = vpop.f32.mrb[0].mxu0
      %v4109 = vadd.f32 0.0, %v4108
      %v4110 = vpop.f32.mrb[0].mxu0
      %v4111 = vadd.f32 0.0, %v4110
      %v4112 = vpop.f32.mrb[0].mxu0
      %v4113 = vadd.f32 0.0, %v4112
      %4114 = vdwg.mxu0
      %4115 = vmatprep.subr.bf16.mxu0 %v3950
      %4116 = vmatpush1.bf16.msra.mxu0 %v3949
      %4117 = vmatprep.subr.bf16.mxu0 %v3960
      %4118 = vmatpush1.bf16.msra.mxu0 %v3959
      %4119 = vmatprep.subr.bf16.mxu0 0
      %4120 = vmatpush1.bf16.msra.mxu0 0
      %4121 = vmatprep.subr.bf16.mxu0 0
      %4122 = vmatpush1.bf16.msra.mxu0 0
      %4123 = vmatprep.subr.bf16.mxu0 0
      %4124 = vmatpush1.bf16.msra.mxu0 0
      %4125 = vmatprep.subr.bf16.mxu0 0
      %4126 = vmatpush1.bf16.msra.mxu0 0
      %4127 = vmatprep.subr.bf16.mxu0 0
      %4128 = vmatpush1.bf16.msra.mxu0 0
      %4129 = vmatprep.subr.bf16.mxu0 0
      %4130 = vmatpush1.bf16.msra.mxu0 0
      %4131 = vmatprep.subr.bf16.mxu0 0
      %4132 = vmatpush1.bf16.msra.mxu0 0
      %4133 = vmatprep.subr.bf16.mxu0 0
      %4134 = vmatpush1.bf16.msra.mxu0 0
      %4135 = vmatprep.subr.bf16.mxu0 0
      %4136 = vmatpush1.bf16.msra.mxu0 0
      %4137 = vmatprep.subr.bf16.mxu0 0
      %4138 = vmatpush1.bf16.msra.mxu0 0
      %4139 = vmatprep.subr.bf16.mxu0 0
      %4140 = vmatpush1.bf16.msra.mxu0 0
      %4141 = vmatprep.subr.bf16.mxu0 0
      %4142 = vmatpush1.bf16.msra.mxu0 0
      %4143 = vmatprep.subr.bf16.mxu0 0
      %4144 = vmatpush1.bf16.msra.mxu0 0
      %4145 = vmatprep.subr.bf16.mxu0 0
      %4146 = vmatpush1.bf16.msra.mxu0 0
      %4147 = vmatprep.mubr.bf16.mxu0 0
      %4148 = vmatmul.mubr.bf16.gmra.mrb[0].mxu0 %v3984
      %v4149 = vpop.f32.mrb[0].mxu0
      %v4150 = vadd.f32 0.0, %v4149
      %v4151 = vpop.f32.mrb[0].mxu0
      %v4152 = vadd.f32 0.0, %v4151
      %v4153 = vpop.f32.mrb[0].mxu0
      %v4154 = vadd.f32 0.0, %v4153
      %v4155 = vpop.f32.mrb[0].mxu0
      %v4156 = vadd.f32 0.0, %v4155
      %4157 = vdwg.mxu0
      %4158 = vmatprep.subr.bf16.mxu0 %v3952
      %4159 = vmatpush1.bf16.msra.mxu0 %v3951
      %4160 = vmatprep.subr.bf16.mxu0 %v3962
      %4161 = vmatpush1.bf16.msra.mxu0 %v3961
      %4162 = vmatprep.subr.bf16.mxu0 0
      %4163 = vmatpush1.bf16.msra.mxu0 0
      %4164 = vmatprep.subr.bf16.mxu0 0
      %4165 = vmatpush1.bf16.msra.mxu0 0
      %4166 = vmatprep.subr.bf16.mxu0 0
      %4167 = vmatpush1.bf16.msra.mxu0 0
      %4168 = vmatprep.subr.bf16.mxu0 0
      %4169 = vmatpush1.bf16.msra.mxu0 0
      %4170 = vmatprep.subr.bf16.mxu0 0
      %4171 = vmatpush1.bf16.msra.mxu0 0
      %4172 = vmatprep.subr.bf16.mxu0 0
      %4173 = vmatpush1.bf16.msra.mxu0 0
      %4174 = vmatprep.subr.bf16.mxu0 0
      %4175 = vmatpush1.bf16.msra.mxu0 0
      %4176 = vmatprep.subr.bf16.mxu0 0
      %4177 = vmatpush1.bf16.msra.mxu0 0
      %4178 = vmatprep.subr.bf16.mxu0 0
      %4179 = vmatpush1.bf16.msra.mxu0 0
      %4180 = vmatprep.subr.bf16.mxu0 0
      %4181 = vmatpush1.bf16.msra.mxu0 0
      %4182 = vmatprep.subr.bf16.mxu0 0
      %4183 = vmatpush1.bf16.msra.mxu0 0
      %4184 = vmatprep.subr.bf16.mxu0 0
      %4185 = vmatpush1.bf16.msra.mxu0 0
      %4186 = vmatprep.subr.bf16.mxu0 0
      %4187 = vmatpush1.bf16.msra.mxu0 0
      %4188 = vmatprep.subr.bf16.mxu0 0
      %4189 = vmatpush1.bf16.msra.mxu0 0
      %4190 = vmatprep.mubr.bf16.mxu0 0
      %4191 = vmatmul.mubr.bf16.gmra.mrb[0].mxu0 %v3984
      %v4192 = vpop.f32.mrb[0].mxu0
      %v4193 = vadd.f32 0.0, %v4192
      %v4194 = vpop.f32.mrb[0].mxu0
      %v4195 = vadd.f32 0.0, %v4194
      %v4196 = vpop.f32.mrb[0].mxu0
      %v4197 = vadd.f32 0.0, %v4196
      %v4198 = vpop.f32.mrb[0].mxu0
      %v4199 = vadd.f32 0.0, %v4198
      %4200 = vdwg.mxu0
      %v4201 = vadd.f32 %v3871, %v4021
      %v4202 = vadd.f32 %v3872, %v4023
      %v4203 = vadd.f32 %v3873, %v4064
      %v4204 = vadd.f32 %v3874, %v4066
      %v4205 = vadd.f32 %v3875, %v4107
      %v4206 = vadd.f32 %v3876, %v4109
      %v4207 = vadd.f32 %v3877, %v4150
      %v4208 = vadd.f32 %v3878, %v4152
      %v4209 = vadd.f32 %v3879, %v4193
      %v4210 = vadd.f32 %v3880, %v4195
      %v4211 = vadd.f32 %v3881, %v4025
      %v4212 = vadd.f32 %v3882, %v4027
      %v4213 = vadd.f32 %v3883, %v4068
      %v4214 = vadd.f32 %v3884, %v4070
      %v4215 = vadd.f32 %v3885, %v4111
      %v4216 = vadd.f32 %v3886, %v4113
      %v4217 = vadd.f32 %v3887, %v4154
      %v4218 = vadd.f32 %v3888, %v4156
      %v4219 = vadd.f32 %v3889, %v4197
      %v4220 = vadd.f32 %v3890, %v4199
      %v4221 = vld [vmem:[%s2 + $0x40] sm:$0xf]
      %v4222 = vld [vmem:[%s2 + $0x44] sm:$0xf]
      %v4225 = vunpack.c.l.b16 %v4221
      %v4226 = vunpack.c.l.b16 %v4222
      %v4227 = vpack.c.b16 %v4226, %v4225
      %4228 = vrot.lane.b32.xlu0 %v3189, 93
      %v4229 = vpop.permute.xlu0 %4228
      %4230 = vrot.lane.b32.xlu0 %v3190, 93
      %v4231 = vpop.permute.xlu0 %4230
      %4232 = vrot.lane.b32.xlu0 %v3191, 93
      %v4233 = vpop.permute.xlu0 %4232
      %4234 = vrot.lane.b32.xlu0 %v3192, 93
      %v4235 = vpop.permute.xlu0 %4234
      %4236 = vrot.lane.b32.xlu0 %v3193, 93
      %v4237 = vpop.permute.xlu0 %4236
      %4238 = vrot.lane.b32.xlu0 %v3194, 93
      %v4239 = vpop.permute.xlu0 %4238
      %4240 = vrot.lane.b32.xlu0 %v3195, 93
      %v4241 = vpop.permute.xlu0 %4240
      %4242 = vrot.lane.b32.xlu0 %v3196, 93
      %v4243 = vpop.permute.xlu0 %4242
      %4244 = vrot.lane.b32.xlu0 %v3197, 93
      %v4245 = vpop.permute.xlu0 %4244
      %4246 = vrot.lane.b32.xlu0 %v3198, 93
      %v4247 = vpop.permute.xlu0 %4246
      %4248 = vrot.lane.b32.xlu0 %v3199, 93
      %v4249 = vpop.permute.xlu0 %4248
      %4250 = vrot.lane.b32.xlu0 %v3200, 93
      %v4251 = vpop.permute.xlu0 %4250
      %4252 = vrot.lane.b32.xlu0 %v3201, 93
      %v4253 = vpop.permute.xlu0 %4252
      %4254 = vrot.lane.b32.xlu0 %v3202, 93
      %v4255 = vpop.permute.xlu0 %4254
      %4256 = vrot.lane.b32.xlu0 %v3203, 93
      %v4257 = vpop.permute.xlu0 %4256
      %4258 = vrot.lane.b32.xlu0 %v3204, 93
      %v4259 = vpop.permute.xlu0 %4258
      %4260 = vrot.lane.b32.xlu0 %v3205, 93
      %v4261 = vpop.permute.xlu0 %4260
      %4262 = vrot.lane.b32.xlu0 %v3206, 93
      %v4263 = vpop.permute.xlu0 %4262
      %4264 = vrot.lane.b32.xlu0 %v3207, 93
      %v4265 = vpop.permute.xlu0 %4264
      %4266 = vrot.lane.b32.xlu0 %v3208, 93
      %v4267 = vpop.permute.xlu0 %4266
      %4268 = vrot.lane.b32.xlu0 %v3209, 93
      %v4269 = vpop.permute.xlu0 %4268
      %4270 = vrot.lane.b32.xlu0 %v3210, 93
      %v4271 = vpop.permute.xlu0 %4270
      %vm4272 = vcmask 760832
      %v4273 = vsel %vm4272, %v4229, %v4231
      %v4274 = vsel %vm4272, %v4231, %v4233
      %v4275 = vsel %vm4272, %v4233, %v4235
      %v4276 = vsel %vm4272, %v4235, %v4237
      %v4277 = vsel %vm4272, %v4237, %v4239
      %v4278 = vsel %vm4272, %v4239, %v4241
      %v4279 = vsel %vm4272, %v4241, %v4243
      %v4280 = vsel %vm4272, %v4243, %v4245
      %v4281 = vsel %vm4272, %v4245, %v4247
      %v4282 = vsel %vm4272, %v4247, %v4249
      %v4283 = vsel %vm4272, %v4251, %v4253
      %v4284 = vsel %vm4272, %v4253, %v4255
      %v4285 = vsel %vm4272, %v4255, %v4257
      %v4286 = vsel %vm4272, %v4257, %v4259
      %v4287 = vsel %vm4272, %v4259, %v4261
      %v4288 = vsel %vm4272, %v4261, %v4263
      %v4289 = vsel %vm4272, %v4263, %v4265
      %v4290 = vsel %vm4272, %v4265, %v4267
      %v4291 = vsel %vm4272, %v4267, %v4269
      %v4292 = vsel %vm4272, %v4269, %v4271
      %v4314 = vsel %vm1755, %v4227, 0
      %4316 = vmatprep.subr.bf16.mxu0 %v4274
      %4317 = vmatpush1.bf16.msra.mxu0 %v4273
      %4318 = vmatprep.subr.bf16.mxu0 %v4284
      %4319 = vmatpush1.bf16.msra.mxu0 %v4283
      %4320 = vmatprep.subr.bf16.mxu0 0
      %4321 = vmatpush1.bf16.msra.mxu0 0
      %4322 = vmatprep.subr.bf16.mxu0 0
      %4323 = vmatpush1.bf16.msra.mxu0 0
      %4324 = vmatprep.subr.bf16.mxu0 0
      %4325 = vmatpush1.bf16.msra.mxu0 0
      %4326 = vmatprep.subr.bf16.mxu0 0
      %4327 = vmatpush1.bf16.msra.mxu0 0
      %4328 = vmatprep.subr.bf16.mxu0 0
      %4329 = vmatpush1.bf16.msra.mxu0 0
      %4330 = vmatprep.subr.bf16.mxu0 0
      %4331 = vmatpush1.bf16.msra.mxu0 0
      %4332 = vmatprep.subr.bf16.mxu0 0
      %4333 = vmatpush1.bf16.msra.mxu0 0
      %4334 = vmatprep.subr.bf16.mxu0 0
      %4335 = vmatpush1.bf16.msra.mxu0 0
      %4336 = vmatprep.subr.bf16.mxu0 0
      %4337 = vmatpush1.bf16.msra.mxu0 0
      %4338 = vmatprep.subr.bf16.mxu0 0
      %4339 = vmatpush1.bf16.msra.mxu0 0
      %4340 = vmatprep.subr.bf16.mxu0 0
      %4341 = vmatpush1.bf16.msra.mxu0 0
      %4342 = vmatprep.subr.bf16.mxu0 0
      %4343 = vmatpush1.bf16.msra.mxu0 0
      %4344 = vmatprep.subr.bf16.mxu0 0
      %4345 = vmatpush1.bf16.msra.mxu0 0
      %4346 = vmatprep.subr.bf16.mxu0 0
      %4347 = vmatpush1.bf16.msra.mxu0 0
      %4348 = vmatprep.mubr.bf16.mxu0 0
      %4349 = vmatmul.mubr.bf16.gmra.mrb[0].mxu0 %v4314
      %v4350 = vpop.f32.mrb[0].mxu0
      %v4351 = vadd.f32 0.0, %v4350
      %v4352 = vpop.f32.mrb[0].mxu0
      %v4353 = vadd.f32 0.0, %v4352
      %v4354 = vpop.f32.mrb[0].mxu0
      %v4355 = vadd.f32 0.0, %v4354
      %v4356 = vpop.f32.mrb[0].mxu0
      %v4357 = vadd.f32 0.0, %v4356
      %4358 = vdwg.mxu0
      %4359 = vmatprep.subr.bf16.mxu0 %v4276
      %4360 = vmatpush1.bf16.msra.mxu0 %v4275
      %4361 = vmatprep.subr.bf16.mxu0 %v4286
      %4362 = vmatpush1.bf16.msra.mxu0 %v4285
      %4363 = vmatprep.subr.bf16.mxu0 0
      %4364 = vmatpush1.bf16.msra.mxu0 0
      %4365 = vmatprep.subr.bf16.mxu0 0
      %4366 = vmatpush1.bf16.msra.mxu0 0
      %4367 = vmatprep.subr.bf16.mxu0 0
      %4368 = vmatpush1.bf16.msra.mxu0 0
      %4369 = vmatprep.subr.bf16.mxu0 0
      %4370 = vmatpush1.bf16.msra.mxu0 0
      %4371 = vmatprep.subr.bf16.mxu0 0
      %4372 = vmatpush1.bf16.msra.mxu0 0
      %4373 = vmatprep.subr.bf16.mxu0 0
      %4374 = vmatpush1.bf16.msra.mxu0 0
      %4375 = vmatprep.subr.bf16.mxu0 0
      %4376 = vmatpush1.bf16.msra.mxu0 0
      %4377 = vmatprep.subr.bf16.mxu0 0
      %4378 = vmatpush1.bf16.msra.mxu0 0
      %4379 = vmatprep.subr.bf16.mxu0 0
      %4380 = vmatpush1.bf16.msra.mxu0 0
      %4381 = vmatprep.subr.bf16.mxu0 0
      %4382 = vmatpush1.bf16.msra.mxu0 0
      %4383 = vmatprep.subr.bf16.mxu0 0
      %4384 = vmatpush1.bf16.msra.mxu0 0
      %4385 = vmatprep.subr.bf16.mxu0 0
      %4386 = vmatpush1.bf16.msra.mxu0 0
      %4387 = vmatprep.subr.bf16.mxu0 0
      %4388 = vmatpush1.bf16.msra.mxu0 0
      %4389 = vmatprep.subr.bf16.mxu0 0
      %4390 = vmatpush1.bf16.msra.mxu0 0
      %4391 = vmatprep.mubr.bf16.mxu0 0
      %4392 = vmatmul.mubr.bf16.gmra.mrb[0].mxu0 %v4314
      %v4393 = vpop.f32.mrb[0].mxu0
      %v4394 = vadd.f32 0.0, %v4393
      %v4395 = vpop.f32.mrb[0].mxu0
      %v4396 = vadd.f32 0.0, %v4395
      %v4397 = vpop.f32.mrb[0].mxu0
      %v4398 = vadd.f32 0.0, %v4397
      %v4399 = vpop.f32.mrb[0].mxu0
      %v4400 = vadd.f32 0.0, %v4399
      %4401 = vdwg.mxu0
      %4402 = vmatprep.subr.bf16.mxu0 %v4278
      %4403 = vmatpush1.bf16.msra.mxu0 %v4277
      %4404 = vmatprep.subr.bf16.mxu0 %v4288
      %4405 = vmatpush1.bf16.msra.mxu0 %v4287
      %4406 = vmatprep.subr.bf16.mxu0 0
      %4407 = vmatpush1.bf16.msra.mxu0 0
      %4408 = vmatprep.subr.bf16.mxu0 0
      %4409 = vmatpush1.bf16.msra.mxu0 0
      %4410 = vmatprep.subr.bf16.mxu0 0
      %4411 = vmatpush1.bf16.msra.mxu0 0
      %4412 = vmatprep.subr.bf16.mxu0 0
      %4413 = vmatpush1.bf16.msra.mxu0 0
      %4414 = vmatprep.subr.bf16.mxu0 0
      %4415 = vmatpush1.bf16.msra.mxu0 0
      %4416 = vmatprep.subr.bf16.mxu0 0
      %4417 = vmatpush1.bf16.msra.mxu0 0
      %4418 = vmatprep.subr.bf16.mxu0 0
      %4419 = vmatpush1.bf16.msra.mxu0 0
      %4420 = vmatprep.subr.bf16.mxu0 0
      %4421 = vmatpush1.bf16.msra.mxu0 0
      %4422 = vmatprep.subr.bf16.mxu0 0
      %4423 = vmatpush1.bf16.msra.mxu0 0
      %4424 = vmatprep.subr.bf16.mxu0 0
      %4425 = vmatpush1.bf16.msra.mxu0 0
      %4426 = vmatprep.subr.bf16.mxu0 0
      %4427 = vmatpush1.bf16.msra.mxu0 0
      %4428 = vmatprep.subr.bf16.mxu0 0
      %4429 = vmatpush1.bf16.msra.mxu0 0
      %4430 = vmatprep.subr.bf16.mxu0 0
      %4431 = vmatpush1.bf16.msra.mxu0 0
      %4432 = vmatprep.subr.bf16.mxu0 0
      %4433 = vmatpush1.bf16.msra.mxu0 0
      %4434 = vmatprep.mubr.bf16.mxu0 0
      %4435 = vmatmul.mubr.bf16.gmra.mrb[0].mxu0 %v4314
      %v4436 = vpop.f32.mrb[0].mxu0
      %v4437 = vadd.f32 0.0, %v4436
      %v4438 = vpop.f32.mrb[0].mxu0
      %v4439 = vadd.f32 0.0, %v4438
      %v4440 = vpop.f32.mrb[0].mxu0
      %v4441 = vadd.f32 0.0, %v4440
      %v4442 = vpop.f32.mrb[0].mxu0
      %v4443 = vadd.f32 0.0, %v4442
      %4444 = vdwg.mxu0
      %4445 = vmatprep.subr.bf16.mxu0 %v4280
      %4446 = vmatpush1.bf16.msra.mxu0 %v4279
      %4447 = vmatprep.subr.bf16.mxu0 %v4290
      %4448 = vmatpush1.bf16.msra.mxu0 %v4289
      %4449 = vmatprep.subr.bf16.mxu0 0
      %4450 = vmatpush1.bf16.msra.mxu0 0
      %4451 = vmatprep.subr.bf16.mxu0 0
      %4452 = vmatpush1.bf16.msra.mxu0 0
      %4453 = vmatprep.subr.bf16.mxu0 0
      %4454 = vmatpush1.bf16.msra.mxu0 0
      %4455 = vmatprep.subr.bf16.mxu0 0
      %4456 = vmatpush1.bf16.msra.mxu0 0
      %4457 = vmatprep.subr.bf16.mxu0 0
      %4458 = vmatpush1.bf16.msra.mxu0 0
      %4459 = vmatprep.subr.bf16.mxu0 0
      %4460 = vmatpush1.bf16.msra.mxu0 0
      %4461 = vmatprep.subr.bf16.mxu0 0
      %4462 = vmatpush1.bf16.msra.mxu0 0
      %4463 = vmatprep.subr.bf16.mxu0 0
      %4464 = vmatpush1.bf16.msra.mxu0 0
      %4465 = vmatprep.subr.bf16.mxu0 0
      %4466 = vmatpush1.bf16.msra.mxu0 0
      %4467 = vmatprep.subr.bf16.mxu0 0
      %4468 = vmatpush1.bf16.msra.mxu0 0
      %4469 = vmatprep.subr.bf16.mxu0 0
      %4470 = vmatpush1.bf16.msra.mxu0 0
      %4471 = vmatprep.subr.bf16.mxu0 0
      %4472 = vmatpush1.bf16.msra.mxu0 0
      %4473 = vmatprep.subr.bf16.mxu0 0
      %4474 = vmatpush1.bf16.msra.mxu0 0
      %4475 = vmatprep.subr.bf16.mxu0 0
      %4476 = vmatpush1.bf16.msra.mxu0 0
      %4477 = vmatprep.mubr.bf16.mxu0 0
      %4478 = vmatmul.mubr.bf16.gmra.mrb[0].mxu0 %v4314
      %v4479 = vpop.f32.mrb[0].mxu0
      %v4480 = vadd.f32 0.0, %v4479
      %v4481 = vpop.f32.mrb[0].mxu0
      %v4482 = vadd.f32 0.0, %v4481
      %v4483 = vpop.f32.mrb[0].mxu0
      %v4484 = vadd.f32 0.0, %v4483
      %v4485 = vpop.f32.mrb[0].mxu0
      %v4486 = vadd.f32 0.0, %v4485
      %4487 = vdwg.mxu0
      %4488 = vmatprep.subr.bf16.mxu0 %v4282
      %4489 = vmatpush1.bf16.msra.mxu0 %v4281
      %4490 = vmatprep.subr.bf16.mxu0 %v4292
      %4491 = vmatpush1.bf16.msra.mxu0 %v4291
      %4492 = vmatprep.subr.bf16.mxu0 0
      %4493 = vmatpush1.bf16.msra.mxu0 0
      %4494 = vmatprep.subr.bf16.mxu0 0
      %4495 = vmatpush1.bf16.msra.mxu0 0
      %4496 = vmatprep.subr.bf16.mxu0 0
      %4497 = vmatpush1.bf16.msra.mxu0 0
      %4498 = vmatprep.subr.bf16.mxu0 0
      %4499 = vmatpush1.bf16.msra.mxu0 0
      %4500 = vmatprep.subr.bf16.mxu0 0
      %4501 = vmatpush1.bf16.msra.mxu0 0
      %4502 = vmatprep.subr.bf16.mxu0 0
      %4503 = vmatpush1.bf16.msra.mxu0 0
      %4504 = vmatprep.subr.bf16.mxu0 0
      %4505 = vmatpush1.bf16.msra.mxu0 0
      %4506 = vmatprep.subr.bf16.mxu0 0
      %4507 = vmatpush1.bf16.msra.mxu0 0
      %4508 = vmatprep.subr.bf16.mxu0 0
      %4509 = vmatpush1.bf16.msra.mxu0 0
      %4510 = vmatprep.subr.bf16.mxu0 0
      %4511 = vmatpush1.bf16.msra.mxu0 0
      %4512 = vmatprep.subr.bf16.mxu0 0
      %4513 = vmatpush1.bf16.msra.mxu0 0
      %4514 = vmatprep.subr.bf16.mxu0 0
      %4515 = vmatpush1.bf16.msra.mxu0 0
      %4516 = vmatprep.subr.bf16.mxu0 0
      %4517 = vmatpush1.bf16.msra.mxu0 0
      %4518 = vmatprep.subr.bf16.mxu0 0
      %4519 = vmatpush1.bf16.msra.mxu0 0
      %4520 = vmatprep.mubr.bf16.mxu0 0
      %4521 = vmatmul.mubr.bf16.gmra.mrb[0].mxu0 %v4314
      %v4522 = vpop.f32.mrb[0].mxu0
      %v4523 = vadd.f32 0.0, %v4522
      %v4524 = vpop.f32.mrb[0].mxu0
      %v4525 = vadd.f32 0.0, %v4524
      %v4526 = vpop.f32.mrb[0].mxu0
      %v4527 = vadd.f32 0.0, %v4526
      %v4528 = vpop.f32.mrb[0].mxu0
      %v4529 = vadd.f32 0.0, %v4528
      %4530 = vdwg.mxu0
      %v4531 = vadd.f32 %v4201, %v4351
      %v4532 = vadd.f32 %v4202, %v4353
      %v4533 = vadd.f32 %v4203, %v4394
      %v4534 = vadd.f32 %v4204, %v4396
      %v4535 = vadd.f32 %v4205, %v4437
      %v4536 = vadd.f32 %v4206, %v4439
      %v4537 = vadd.f32 %v4207, %v4480
      %v4538 = vadd.f32 %v4208, %v4482
      %v4539 = vadd.f32 %v4209, %v4523
      %v4540 = vadd.f32 %v4210, %v4525
      %v4541 = vadd.f32 %v4211, %v4355
      %v4542 = vadd.f32 %v4212, %v4357
      %v4543 = vadd.f32 %v4213, %v4398
      %v4544 = vadd.f32 %v4214, %v4400
      %v4545 = vadd.f32 %v4215, %v4441
      %v4546 = vadd.f32 %v4216, %v4443
      %v4547 = vadd.f32 %v4217, %v4484
      %v4548 = vadd.f32 %v4218, %v4486
      %v4549 = vadd.f32 %v4219, %v4527
      %v4550 = vadd.f32 %v4220, %v4529
      %v4551 = vld [vmem:[%s3] sm:$0xff]
      %v4552 = vld [vmem:[%s3 + $0x8] sm:$0xff]
      %4554 = vset.pattern.permute.xlu0 0
      %4555 = vperm.xlu0 %4554, %v4551
      %v4556 = vpop.permute.xlu0 %4555
      %4559 = vset.pattern.permute.xlu0 0
      %4560 = vperm.xlu0 %4559, %v4552
      %v4561 = vpop.permute.xlu0 %4560
      %v4563 = vmul.f32 %v4531, %v4556
      %v4564 = vmul.f32 %v4532, %v4556
      %v4565 = vmul.f32 %v4533, %v4556
      %v4566 = vmul.f32 %v4534, %v4556
      %v4567 = vmul.f32 %v4535, %v4556
      %v4568 = vmul.f32 %v4536, %v4556
      %v4569 = vmul.f32 %v4537, %v4556
      %v4570 = vmul.f32 %v4538, %v4556
      %v4571 = vmul.f32 %v4539, %v4556
      %v4572 = vmul.f32 %v4540, %v4556
      %v4573 = vmul.f32 %v4541, %v4561
      %v4574 = vmul.f32 %v4542, %v4561
      %v4575 = vmul.f32 %v4543, %v4561
      %v4576 = vmul.f32 %v4544, %v4561
      %v4577 = vmul.f32 %v4545, %v4561
      %v4578 = vmul.f32 %v4546, %v4561
      %v4579 = vmul.f32 %v4547, %v4561
      %v4580 = vmul.f32 %v4548, %v4561
      %v4581 = vmul.f32 %v4549, %v4561
      %v4582 = vmul.f32 %v4550, %v4561
      %v4583 = vld [vmem:[%s4] sm:$0xff]
      %v4584 = vld [vmem:[%s4 + $0x8] sm:$0xff]
      %4586 = vset.pattern.permute.xlu0 0
      %4587 = vperm.xlu0 %4586, %v4583
      %v4588 = vpop.permute.xlu0 %4587
      %4591 = vset.pattern.permute.xlu0 0
      %4592 = vperm.xlu0 %4591, %v4584
      %v4593 = vpop.permute.xlu0 %4592
      %v4595 = vadd.f32 %v4563, %v4588
      %v4596 = vadd.f32 %v4564, %v4588
      %v4597 = vadd.f32 %v4565, %v4588
      %v4598 = vadd.f32 %v4566, %v4588
      %v4599 = vadd.f32 %v4567, %v4588
      %v4600 = vadd.f32 %v4568, %v4588
      %v4601 = vadd.f32 %v4569, %v4588
      %v4602 = vadd.f32 %v4570, %v4588
      %v4603 = vadd.f32 %v4571, %v4588
      %v4604 = vadd.f32 %v4572, %v4588
      %v4605 = vadd.f32 %v4573, %v4593
      %v4606 = vadd.f32 %v4574, %v4593
      %v4607 = vadd.f32 %v4575, %v4593
      %v4608 = vadd.f32 %v4576, %v4593
      %v4609 = vadd.f32 %v4577, %v4593
      %v4610 = vadd.f32 %v4578, %v4593
      %v4611 = vadd.f32 %v4579, %v4593
      %v4612 = vadd.f32 %v4580, %v4593
      %v4613 = vadd.f32 %v4581, %v4593
      %v4614 = vadd.f32 %v4582, %v4593
      %v4615 = vmax.f32 %v4595, 0.0
      %v4616 = vmax.f32 %v4596, 0.0
      %v4617 = vmax.f32 %v4597, 0.0
      %v4618 = vmax.f32 %v4598, 0.0
      %v4619 = vmax.f32 %v4599, 0.0
      %v4620 = vmax.f32 %v4600, 0.0
      %v4621 = vmax.f32 %v4601, 0.0
      %v4622 = vmax.f32 %v4602, 0.0
      %v4623 = vmax.f32 %v4603, 0.0
      %v4624 = vmax.f32 %v4604, 0.0
      %v4625 = vmax.f32 %v4605, 0.0
      %v4626 = vmax.f32 %v4606, 0.0
      %v4627 = vmax.f32 %v4607, 0.0
      %v4628 = vmax.f32 %v4608, 0.0
      %v4629 = vmax.f32 %v4609, 0.0
      %v4630 = vmax.f32 %v4610, 0.0
      %v4631 = vmax.f32 %v4611, 0.0
      %v4632 = vmax.f32 %v4612, 0.0
      %v4633 = vmax.f32 %v4613, 0.0
      %v4634 = vmax.f32 %v4614, 0.0
      %v4635 = vld [vmem:[%s8] sm:$0xff]
      %v4636 = vld [vmem:[%s8 + $0x8] sm:$0x3]
      %v4639 = vlaneseq
      %v4640 = vshrl.u32 %v4639, 7
      %v4641 = vsub.s32 0, %v4640
      %v4642 = vrot.slane %v4635, %v4641
      %v4643 = vlaneseq
      %v4644 = vshrl.u32 %v4643, 7
      %v4645 = vsub.s32 1, %v4644
      %v4646 = vrot.slane %v4635, %v4645
      %v4647 = vlaneseq
      %v4648 = vshrl.u32 %v4647, 7
      %v4649 = vsub.s32 2, %v4648
      %v4650 = vrot.slane %v4635, %v4649
      %v4651 = vlaneseq
      %v4652 = vshrl.u32 %v4651, 7
      %v4653 = vsub.s32 3, %v4652
      %v4654 = vrot.slane %v4635, %v4653
      %v4655 = vlaneseq
      %v4656 = vshrl.u32 %v4655, 7
      %v4657 = vsub.s32 4, %v4656
      %v4658 = vrot.slane %v4635, %v4657
      %v4659 = vlaneseq
      %v4660 = vshrl.u32 %v4659, 7
      %v4661 = vsub.s32 5, %v4660
      %v4662 = vrot.slane %v4635, %v4661
      %v4663 = vlaneseq
      %v4664 = vshrl.u32 %v4663, 7
      %v4665 = vsub.s32 6, %v4664
      %v4666 = vrot.slane %v4635, %v4665
      %v4667 = vlaneseq
      %v4668 = vshrl.u32 %v4667, 7
      %v4669 = vsub.s32 7, %v4668
      %v4670 = vrot.slane %v4635, %v4669
      %v4671 = vlaneseq
      %v4672 = vshrl.u32 %v4671, 7
      %v4673 = vsub.s32 0, %v4672
      %v4674 = vrot.slane %v4636, %v4673
      %v4675 = vlaneseq
      %v4676 = vshrl.u32 %v4675, 7
      %v4677 = vsub.s32 1, %v4676
      %v4678 = vrot.slane %v4636, %v4677
      %v4689 = vmul.f32 %v4615, %v4642
      %v4690 = vmul.f32 %v4616, %v4646
      %v4691 = vmul.f32 %v4617, %v4650
      %v4692 = vmul.f32 %v4618, %v4654
      %v4693 = vmul.f32 %v4619, %v4658
      %v4694 = vmul.f32 %v4620, %v4662
      %v4695 = vmul.f32 %v4621, %v4666
      %v4696 = vmul.f32 %v4622, %v4670
      %v4697 = vmul.f32 %v4623, %v4674
      %v4698 = vmul.f32 %v4624, %v4678
      %v4699 = vmul.f32 %v4625, %v4642
      %v4700 = vmul.f32 %v4626, %v4646
      %v4701 = vmul.f32 %v4627, %v4650
      %v4702 = vmul.f32 %v4628, %v4654
      %v4703 = vmul.f32 %v4629, %v4658
      %v4704 = vmul.f32 %v4630, %v4662
      %v4705 = vmul.f32 %v4631, %v4666
      %v4706 = vmul.f32 %v4632, %v4670
      %v4707 = vmul.f32 %v4633, %v4674
      %v4708 = vmul.f32 %v4634, %v4678
      %v4709 = vpack.c.bf16 %v4699, %v4689
      %v4710 = vpack.c.bf16 %v4700, %v4690
      %v4711 = vpack.c.bf16 %v4701, %v4691
      %v4712 = vpack.c.bf16 %v4702, %v4692
      %v4713 = vpack.c.bf16 %v4703, %v4693
      %v4714 = vpack.c.bf16 %v4704, %v4694
      %v4715 = vpack.c.bf16 %v4705, %v4695
      %v4716 = vpack.c.bf16 %v4706, %v4696
      %v4717 = vpack.c.bf16 %v4707, %v4697
      %v4718 = vpack.c.bf16 %v4708, %v4698
      %4719 = vst [vmem:[#allocation3 + $0x8] sm:$0xff] %v4709
      %4720 = vst [vmem:[#allocation3 + $0x10] sm:$0xff] %v4710
      %4721 = vst [vmem:[#allocation3 + $0x18] sm:$0xff] %v4711
      %4722 = vst [vmem:[#allocation3 + $0x20] sm:$0xff] %v4712
      %4723 = vst [vmem:[#allocation3 + $0x28] sm:$0xff] %v4713
      %4724 = vst [vmem:[#allocation3 + $0x30] sm:$0xff] %v4714
      %4725 = vst [vmem:[#allocation3 + $0x38] sm:$0xff] %v4715
      %4726 = vst [vmem:[#allocation3 + $0x40] sm:$0xff] %v4716
      %4727 = vst [vmem:[#allocation3 + $0x48] sm:$0xff] %v4717
      %4728 = vst [vmem:[#allocation3 + $0x50] sm:$0xff] %v4718
      %v4729 = vld [vmem:[%s5] sm:$0xf]
      %v4730 = vld [vmem:[%s5 + $0x4] sm:$0xf]
      %v4731 = vld [vmem:[#allocation3] sm:$0xff]
      %v4732 = vld [vmem:[#allocation3 + $0x8] sm:$0xff]
      %v4733 = vld [vmem:[#allocation3 + $0x10] sm:$0xff]
      %v4734 = vld [vmem:[#allocation3 + $0x18] sm:$0xff]
      %v4735 = vld [vmem:[#allocation3 + $0x20] sm:$0xff]
      %v4736 = vld [vmem:[#allocation3 + $0x28] sm:$0xff]
      %v4737 = vld [vmem:[#allocation3 + $0x30] sm:$0xff]
      %v4738 = vld [vmem:[#allocation3 + $0x38] sm:$0xff]
      %v4739 = vld [vmem:[#allocation3 + $0x40] sm:$0xff]
      %v4740 = vld [vmem:[#allocation3 + $0x48] sm:$0xff]
      %v4741 = vld [vmem:[#allocation3 + $0x50] sm:$0xff]
      %v4742 = vld [vmem:[%s5 + $0x8] sm:$0xf]
      %v4743 = vld [vmem:[%s5 + $0xc] sm:$0xf]
      %v4746 = vunpack.c.l.b16 %v4742
      %v4747 = vunpack.c.l.b16 %v4743
      %v4748 = vpack.c.b16 %v4747, %v4746
      %4760 = vrot.lane.b32.xlu0 %v4731, 34
      %v4761 = vpop.permute.xlu0 %4760
      %4762 = vrot.lane.b32.xlu0 %v4732, 34
      %v4763 = vpop.permute.xlu0 %4762
      %4764 = vrot.lane.b32.xlu0 %v4733, 34
      %v4765 = vpop.permute.xlu0 %4764
      %4766 = vrot.lane.b32.xlu0 %v4734, 34
      %v4767 = vpop.permute.xlu0 %4766
      %4768 = vrot.lane.b32.xlu0 %v4735, 34
      %v4769 = vpop.permute.xlu0 %4768
      %4770 = vrot.lane.b32.xlu0 %v4736, 34
      %v4771 = vpop.permute.xlu0 %4770
      %4772 = vrot.lane.b32.xlu0 %v4737, 34
      %v4773 = vpop.permute.xlu0 %4772
      %4774 = vrot.lane.b32.xlu0 %v4738, 34
      %v4775 = vpop.permute.xlu0 %4774
      %4776 = vrot.lane.b32.xlu0 %v4739, 34
      %v4777 = vpop.permute.xlu0 %4776
      %4778 = vrot.lane.b32.xlu0 %v4740, 34
      %v4779 = vpop.permute.xlu0 %4778
      %4780 = vrot.lane.b32.xlu0 %v4741, 34
      %v4781 = vpop.permute.xlu0 %4780
      %v4782 = vsel %vm1714, %v4761, %v4763
      %v4783 = vsel %vm1714, %v4763, %v4765
      %v4784 = vsel %vm1714, %v4765, %v4767
      %v4785 = vsel %vm1714, %v4767, %v4769
      %v4786 = vsel %vm1714, %v4769, %v4771
      %v4787 = vsel %vm1714, %v4771, %v4773
      %v4788 = vsel %vm1714, %v4773, %v4775
      %v4789 = vsel %vm1714, %v4775, %v4777
      %v4790 = vsel %vm1714, %v4777, %v4779
      %v4791 = vsel %vm1714, %v4779, %v4781
      %vm4802 = vcmask 130048
      %v4804 = vsel %vm4802, %v4748, 0
      %4806 = vmatprep.subr.bf16.mxu0 %v4783
      %4807 = vmatpush1.bf16.msra.mxu0 %v4782
      %4808 = vmatprep.subr.bf16.mxu0 0
      %4809 = vmatpush1.bf16.msra.mxu0 0
      %4810 = vmatprep.subr.bf16.mxu0 0
      %4811 = vmatpush1.bf16.msra.mxu0 0
      %4812 = vmatprep.subr.bf16.mxu0 0
      %4813 = vmatpush1.bf16.msra.mxu0 0
      %4814 = vmatprep.subr.bf16.mxu0 0
      %4815 = vmatpush1.bf16.msra.mxu0 0
      %4816 = vmatprep.subr.bf16.mxu0 0
      %4817 = vmatpush1.bf16.msra.mxu0 0
      %4818 = vmatprep.subr.bf16.mxu0 0
      %4819 = vmatpush1.bf16.msra.mxu0 0
      %4820 = vmatprep.subr.bf16.mxu0 0
      %4821 = vmatpush1.bf16.msra.mxu0 0
      %4822 = vmatprep.subr.bf16.mxu0 0
      %4823 = vmatpush1.bf16.msra.mxu0 0
      %4824 = vmatprep.subr.bf16.mxu0 0
      %4825 = vmatpush1.bf16.msra.mxu0 0
      %4826 = vmatprep.subr.bf16.mxu0 0
      %4827 = vmatpush1.bf16.msra.mxu0 0
      %4828 = vmatprep.subr.bf16.mxu0 0
      %4829 = vmatpush1.bf16.msra.mxu0 0
      %4830 = vmatprep.subr.bf16.mxu0 0
      %4831 = vmatpush1.bf16.msra.mxu0 0
      %4832 = vmatprep.subr.bf16.mxu0 0
      %4833 = vmatpush1.bf16.msra.mxu0 0
      %4834 = vmatprep.subr.bf16.mxu0 0
      %4835 = vmatpush1.bf16.msra.mxu0 0
      %4836 = vmatprep.subr.bf16.mxu0 0
      %4837 = vmatpush1.bf16.msra.mxu0 0
      %4838 = vmatprep.mubr.bf16.mxu0 0
      %4839 = vmatmul.mubr.bf16.gmra.mrb[0].mxu0 %v4804
      %v4840 = vpop.f32.mrb[0].mxu0
      %v4841 = vadd.f32 0.0, %v4840
      %v4842 = vpop.f32.mrb[0].mxu0
      %v4843 = vadd.f32 0.0, %v4842
      %v4844 = vpop.f32.mrb[0].mxu0
      %v4845 = vadd.f32 0.0, %v4844
      %v4846 = vpop.f32.mrb[0].mxu0
      %v4847 = vadd.f32 0.0, %v4846
      %4848 = vdwg.mxu0
      %4849 = vmatprep.subr.bf16.mxu0 %v4785
      %4850 = vmatpush1.bf16.msra.mxu0 %v4784
      %4851 = vmatprep.subr.bf16.mxu0 0
      %4852 = vmatpush1.bf16.msra.mxu0 0
      %4853 = vmatprep.subr.bf16.mxu0 0
      %4854 = vmatpush1.bf16.msra.mxu0 0
      %4855 = vmatprep.subr.bf16.mxu0 0
      %4856 = vmatpush1.bf16.msra.mxu0 0
      %4857 = vmatprep.subr.bf16.mxu0 0
      %4858 = vmatpush1.bf16.msra.mxu0 0
      %4859 = vmatprep.subr.bf16.mxu0 0
      %4860 = vmatpush1.bf16.msra.mxu0 0
      %4861 = vmatprep.subr.bf16.mxu0 0
      %4862 = vmatpush1.bf16.msra.mxu0 0
      %4863 = vmatprep.subr.bf16.mxu0 0
      %4864 = vmatpush1.bf16.msra.mxu0 0
      %4865 = vmatprep.subr.bf16.mxu0 0
      %4866 = vmatpush1.bf16.msra.mxu0 0
      %4867 = vmatprep.subr.bf16.mxu0 0
      %4868 = vmatpush1.bf16.msra.mxu0 0
      %4869 = vmatprep.subr.bf16.mxu0 0
      %4870 = vmatpush1.bf16.msra.mxu0 0
      %4871 = vmatprep.subr.bf16.mxu0 0
      %4872 = vmatpush1.bf16.msra.mxu0 0
      %4873 = vmatprep.subr.bf16.mxu0 0
      %4874 = vmatpush1.bf16.msra.mxu0 0
      %4875 = vmatprep.subr.bf16.mxu0 0
      %4876 = vmatpush1.bf16.msra.mxu0 0
      %4877 = vmatprep.subr.bf16.mxu0 0
      %4878 = vmatpush1.bf16.msra.mxu0 0
      %4879 = vmatprep.subr.bf16.mxu0 0
      %4880 = vmatpush1.bf16.msra.mxu0 0
      %4881 = vmatprep.mubr.bf16.mxu0 0
      %4882 = vmatmul.mubr.bf16.gmra.mrb[0].mxu0 %v4804
      %v4883 = vpop.f32.mrb[0].mxu0
      %v4884 = vadd.f32 0.0, %v4883
      %v4885 = vpop.f32.mrb[0].mxu0
      %v4886 = vadd.f32 0.0, %v4885
      %v4887 = vpop.f32.mrb[0].mxu0
      %v4888 = vadd.f32 0.0, %v4887
      %v4889 = vpop.f32.mrb[0].mxu0
      %v4890 = vadd.f32 0.0, %v4889
      %4891 = vdwg.mxu0
      %4892 = vmatprep.subr.bf16.mxu0 %v4787
      %4893 = vmatpush1.bf16.msra.mxu0 %v4786
      %4894 = vmatprep.subr.bf16.mxu0 0
      %4895 = vmatpush1.bf16.msra.mxu0 0
      %4896 = vmatprep.subr.bf16.mxu0 0
      %4897 = vmatpush1.bf16.msra.mxu0 0
      %4898 = vmatprep.subr.bf16.mxu0 0
      %4899 = vmatpush1.bf16.msra.mxu0 0
      %4900 = vmatprep.subr.bf16.mxu0 0
      %4901 = vmatpush1.bf16.msra.mxu0 0
      %4902 = vmatprep.subr.bf16.mxu0 0
      %4903 = vmatpush1.bf16.msra.mxu0 0
      %4904 = vmatprep.subr.bf16.mxu0 0
      %4905 = vmatpush1.bf16.msra.mxu0 0
      %4906 = vmatprep.subr.bf16.mxu0 0
      %4907 = vmatpush1.bf16.msra.mxu0 0
      %4908 = vmatprep.subr.bf16.mxu0 0
      %4909 = vmatpush1.bf16.msra.mxu0 0
      %4910 = vmatprep.subr.bf16.mxu0 0
      %4911 = vmatpush1.bf16.msra.mxu0 0
      %4912 = vmatprep.subr.bf16.mxu0 0
      %4913 = vmatpush1.bf16.msra.mxu0 0
      %4914 = vmatprep.subr.bf16.mxu0 0
      %4915 = vmatpush1.bf16.msra.mxu0 0
      %4916 = vmatprep.subr.bf16.mxu0 0
      %4917 = vmatpush1.bf16.msra.mxu0 0
      %4918 = vmatprep.subr.bf16.mxu0 0
      %4919 = vmatpush1.bf16.msra.mxu0 0
      %4920 = vmatprep.subr.bf16.mxu0 0
      %4921 = vmatpush1.bf16.msra.mxu0 0
      %4922 = vmatprep.subr.bf16.mxu0 0
      %4923 = vmatpush1.bf16.msra.mxu0 0
      %4924 = vmatprep.mubr.bf16.mxu0 0
      %4925 = vmatmul.mubr.bf16.gmra.mrb[0].mxu0 %v4804
      %v4926 = vpop.f32.mrb[0].mxu0
      %v4927 = vadd.f32 0.0, %v4926
      %v4928 = vpop.f32.mrb[0].mxu0
      %v4929 = vadd.f32 0.0, %v4928
      %v4930 = vpop.f32.mrb[0].mxu0
      %v4931 = vadd.f32 0.0, %v4930
      %v4932 = vpop.f32.mrb[0].mxu0
      %v4933 = vadd.f32 0.0, %v4932
      %4934 = vdwg.mxu0
      %4935 = vmatprep.subr.bf16.mxu0 %v4789
      %4936 = vmatpush1.bf16.msra.mxu0 %v4788
      %4937 = vmatprep.subr.bf16.mxu0 0
      %4938 = vmatpush1.bf16.msra.mxu0 0
      %4939 = vmatprep.subr.bf16.mxu0 0
      %4940 = vmatpush1.bf16.msra.mxu0 0
      %4941 = vmatprep.subr.bf16.mxu0 0
      %4942 = vmatpush1.bf16.msra.mxu0 0
      %4943 = vmatprep.subr.bf16.mxu0 0
      %4944 = vmatpush1.bf16.msra.mxu0 0
      %4945 = vmatprep.subr.bf16.mxu0 0
      %4946 = vmatpush1.bf16.msra.mxu0 0
      %4947 = vmatprep.subr.bf16.mxu0 0
      %4948 = vmatpush1.bf16.msra.mxu0 0
      %4949 = vmatprep.subr.bf16.mxu0 0
      %4950 = vmatpush1.bf16.msra.mxu0 0
      %4951 = vmatprep.subr.bf16.mxu0 0
      %4952 = vmatpush1.bf16.msra.mxu0 0
      %4953 = vmatprep.subr.bf16.mxu0 0
      %4954 = vmatpush1.bf16.msra.mxu0 0
      %4955 = vmatprep.subr.bf16.mxu0 0
      %4956 = vmatpush1.bf16.msra.mxu0 0
      %4957 = vmatprep.subr.bf16.mxu0 0
      %4958 = vmatpush1.bf16.msra.mxu0 0
      %4959 = vmatprep.subr.bf16.mxu0 0
      %4960 = vmatpush1.bf16.msra.mxu0 0
      %4961 = vmatprep.subr.bf16.mxu0 0
      %4962 = vmatpush1.bf16.msra.mxu0 0
      %4963 = vmatprep.subr.bf16.mxu0 0
      %4964 = vmatpush1.bf16.msra.mxu0 0
      %4965 = vmatprep.subr.bf16.mxu0 0
      %4966 = vmatpush1.bf16.msra.mxu0 0
      %4967 = vmatprep.mubr.bf16.mxu0 0
      %4968 = vmatmul.mubr.bf16.gmra.mrb[0].mxu0 %v4804
      %v4969 = vpop.f32.mrb[0].mxu0
      %v4970 = vadd.f32 0.0, %v4969
      %v4971 = vpop.f32.mrb[0].mxu0
      %v4972 = vadd.f32 0.0, %v4971
      %v4973 = vpop.f32.mrb[0].mxu0
      %v4974 = vadd.f32 0.0, %v4973
      %v4975 = vpop.f32.mrb[0].mxu0
      %v4976 = vadd.f32 0.0, %v4975
      %4977 = vdwg.mxu0
      %4978 = vmatprep.subr.bf16.mxu0 %v4791
      %4979 = vmatpush1.bf16.msra.mxu0 %v4790
      %4980 = vmatprep.subr.bf16.mxu0 0
      %4981 = vmatpush1.bf16.msra.mxu0 0
      %4982 = vmatprep.subr.bf16.mxu0 0
      %4983 = vmatpush1.bf16.msra.mxu0 0
      %4984 = vmatprep.subr.bf16.mxu0 0
      %4985 = vmatpush1.bf16.msra.mxu0 0
      %4986 = vmatprep.subr.bf16.mxu0 0
      %4987 = vmatpush1.bf16.msra.mxu0 0
      %4988 = vmatprep.subr.bf16.mxu0 0
      %4989 = vmatpush1.bf16.msra.mxu0 0
      %4990 = vmatprep.subr.bf16.mxu0 0
      %4991 = vmatpush1.bf16.msra.mxu0 0
      %4992 = vmatprep.subr.bf16.mxu0 0
      %4993 = vmatpush1.bf16.msra.mxu0 0
      %4994 = vmatprep.subr.bf16.mxu0 0
      %4995 = vmatpush1.bf16.msra.mxu0 0
      %4996 = vmatprep.subr.bf16.mxu0 0
      %4997 = vmatpush1.bf16.msra.mxu0 0
      %4998 = vmatprep.subr.bf16.mxu0 0
      %4999 = vmatpush1.bf16.msra.mxu0 0
      %5000 = vmatprep.subr.bf16.mxu0 0
      %5001 = vmatpush1.bf16.msra.mxu0 0
      %5002 = vmatprep.subr.bf16.mxu0 0
      %5003 = vmatpush1.bf16.msra.mxu0 0
      %5004 = vmatprep.subr.bf16.mxu0 0
      %5005 = vmatpush1.bf16.msra.mxu0 0
      %5006 = vmatprep.subr.bf16.mxu0 0
      %5007 = vmatpush1.bf16.msra.mxu0 0
      %5008 = vmatprep.subr.bf16.mxu0 0
      %5009 = vmatpush1.bf16.msra.mxu0 0
      %5010 = vmatprep.mubr.bf16.mxu0 0
      %5011 = vmatmul.mubr.bf16.gmra.mrb[0].mxu0 %v4804
      %v5012 = vpop.f32.mrb[0].mxu0
      %v5013 = vadd.f32 0.0, %v5012
      %v5014 = vpop.f32.mrb[0].mxu0
      %v5015 = vadd.f32 0.0, %v5014
      %v5016 = vpop.f32.mrb[0].mxu0
      %v5017 = vadd.f32 0.0, %v5016
      %v5018 = vpop.f32.mrb[0].mxu0
      %v5019 = vadd.f32 0.0, %v5018
      %5020 = vdwg.mxu0
      %v5023 = vunpack.c.l.b16 %v4729
      %v5024 = vunpack.c.l.b16 %v4730
      %v5025 = vpack.c.b16 %v5024, %v5023
      %5026 = vrot.lane.b32.xlu0 %v4731, 35
      %v5027 = vpop.permute.xlu0 %5026
      %5028 = vrot.lane.b32.xlu0 %v4732, 35
      %v5029 = vpop.permute.xlu0 %5028
      %5030 = vrot.lane.b32.xlu0 %v4733, 35
      %v5031 = vpop.permute.xlu0 %5030
      %5032 = vrot.lane.b32.xlu0 %v4734, 35
      %v5033 = vpop.permute.xlu0 %5032
      %5034 = vrot.lane.b32.xlu0 %v4735, 35
      %v5035 = vpop.permute.xlu0 %5034
      %5036 = vrot.lane.b32.xlu0 %v4736, 35
      %v5037 = vpop.permute.xlu0 %5036
      %5038 = vrot.lane.b32.xlu0 %v4737, 35
      %v5039 = vpop.permute.xlu0 %5038
      %5040 = vrot.lane.b32.xlu0 %v4738, 35
      %v5041 = vpop.permute.xlu0 %5040
      %5042 = vrot.lane.b32.xlu0 %v4739, 35
      %v5043 = vpop.permute.xlu0 %5042
      %5044 = vrot.lane.b32.xlu0 %v4740, 35
      %v5045 = vpop.permute.xlu0 %5044
      %5046 = vrot.lane.b32.xlu0 %v4741, 35
      %v5047 = vpop.permute.xlu0 %5046
      %v5048 = vsel %vm2023, %v5027, %v5029
      %v5049 = vsel %vm2023, %v5029, %v5031
      %v5050 = vsel %vm2023, %v5031, %v5033
      %v5051 = vsel %vm2023, %v5033, %v5035
      %v5052 = vsel %vm2023, %v5035, %v5037
      %v5053 = vsel %vm2023, %v5037, %v5039
      %v5054 = vsel %vm2023, %v5039, %v5041
      %v5055 = vsel %vm2023, %v5041, %v5043
      %v5056 = vsel %vm2023, %v5043, %v5045
      %v5057 = vsel %vm2023, %v5045, %v5047
      %v5069 = vsel %vm4802, %v5025, 0
      %5071 = vmatprep.subr.bf16.mxu0 %v5049
      %5072 = vmatpush1.bf16.msra.mxu0 %v5048
      %5073 = vmatprep.subr.bf16.mxu0 0
      %5074 = vmatpush1.bf16.msra.mxu0 0
      %5075 = vmatprep.subr.bf16.mxu0 0
      %5076 = vmatpush1.bf16.msra.mxu0 0
      %5077 = vmatprep.subr.bf16.mxu0 0
      %5078 = vmatpush1.bf16.msra.mxu0 0
      %5079 = vmatprep.subr.bf16.mxu0 0
      %5080 = vmatpush1.bf16.msra.mxu0 0
      %5081 = vmatprep.subr.bf16.mxu0 0
      %5082 = vmatpush1.bf16.msra.mxu0 0
      %5083 = vmatprep.subr.bf16.mxu0 0
      %5084 = vmatpush1.bf16.msra.mxu0 0
      %5085 = vmatprep.subr.bf16.mxu0 0
      %5086 = vmatpush1.bf16.msra.mxu0 0
      %5087 = vmatprep.subr.bf16.mxu0 0
      %5088 = vmatpush1.bf16.msra.mxu0 0
      %5089 = vmatprep.subr.bf16.mxu0 0
      %5090 = vmatpush1.bf16.msra.mxu0 0
      %5091 = vmatprep.subr.bf16.mxu0 0
      %5092 = vmatpush1.bf16.msra.mxu0 0
      %5093 = vmatprep.subr.bf16.mxu0 0
      %5094 = vmatpush1.bf16.msra.mxu0 0
      %5095 = vmatprep.subr.bf16.mxu0 0
      %5096 = vmatpush1.bf16.msra.mxu0 0
      %5097 = vmatprep.subr.bf16.mxu0 0
      %5098 = vmatpush1.bf16.msra.mxu0 0
      %5099 = vmatprep.subr.bf16.mxu0 0
      %5100 = vmatpush1.bf16.msra.mxu0 0
      %5101 = vmatprep.subr.bf16.mxu0 0
      %5102 = vmatpush1.bf16.msra.mxu0 0
      %5103 = vmatprep.mubr.bf16.mxu0 0
      %5104 = vmatmul.mubr.bf16.gmra.mrb[0].mxu0 %v5069
      %v5105 = vpop.f32.mrb[0].mxu0
      %v5106 = vadd.f32 %v4841, %v5105
      %v5107 = vpop.f32.mrb[0].mxu0
      %v5108 = vadd.f32 %v4843, %v5107
      %v5109 = vpop.f32.mrb[0].mxu0
      %v5110 = vadd.f32 %v4845, %v5109
      %v5111 = vpop.f32.mrb[0].mxu0
      %v5112 = vadd.f32 %v4847, %v5111
      %5113 = vdwg.mxu0
      %5114 = vmatprep.subr.bf16.mxu0 %v5051
      %5115 = vmatpush1.bf16.msra.mxu0 %v5050
      %5116 = vmatprep.subr.bf16.mxu0 0
      %5117 = vmatpush1.bf16.msra.mxu0 0
      %5118 = vmatprep.subr.bf16.mxu0 0
      %5119 = vmatpush1.bf16.msra.mxu0 0
      %5120 = vmatprep.subr.bf16.mxu0 0
      %5121 = vmatpush1.bf16.msra.mxu0 0
      %5122 = vmatprep.subr.bf16.mxu0 0
      %5123 = vmatpush1.bf16.msra.mxu0 0
      %5124 = vmatprep.subr.bf16.mxu0 0
      %5125 = vmatpush1.bf16.msra.mxu0 0
      %5126 = vmatprep.subr.bf16.mxu0 0
      %5127 = vmatpush1.bf16.msra.mxu0 0
      %5128 = vmatprep.subr.bf16.mxu0 0
      %5129 = vmatpush1.bf16.msra.mxu0 0
      %5130 = vmatprep.subr.bf16.mxu0 0
      %5131 = vmatpush1.bf16.msra.mxu0 0
      %5132 = vmatprep.subr.bf16.mxu0 0
      %5133 = vmatpush1.bf16.msra.mxu0 0
      %5134 = vmatprep.subr.bf16.mxu0 0
      %5135 = vmatpush1.bf16.msra.mxu0 0
      %5136 = vmatprep.subr.bf16.mxu0 0
      %5137 = vmatpush1.bf16.msra.mxu0 0
      %5138 = vmatprep.subr.bf16.mxu0 0
      %5139 = vmatpush1.bf16.msra.mxu0 0
      %5140 = vmatprep.subr.bf16.mxu0 0
      %5141 = vmatpush1.bf16.msra.mxu0 0
      %5142 = vmatprep.subr.bf16.mxu0 0
      %5143 = vmatpush1.bf16.msra.mxu0 0
      %5144 = vmatprep.subr.bf16.mxu0 0
      %5145 = vmatpush1.bf16.msra.mxu0 0
      %5146 = vmatprep.mubr.bf16.mxu0 0
      %5147 = vmatmul.mubr.bf16.gmra.mrb[0].mxu0 %v5069
      %v5148 = vpop.f32.mrb[0].mxu0
      %v5149 = vadd.f32 %v4884, %v5148
      %v5150 = vpop.f32.mrb[0].mxu0
      %v5151 = vadd.f32 %v4886, %v5150
      %v5152 = vpop.f32.mrb[0].mxu0
      %v5153 = vadd.f32 %v4888, %v5152
      %v5154 = vpop.f32.mrb[0].mxu0
      %v5155 = vadd.f32 %v4890, %v5154
      %5156 = vdwg.mxu0
      %5157 = vmatprep.subr.bf16.mxu0 %v5053
      %5158 = vmatpush1.bf16.msra.mxu0 %v5052
      %5159 = vmatprep.subr.bf16.mxu0 0
      %5160 = vmatpush1.bf16.msra.mxu0 0
      %5161 = vmatprep.subr.bf16.mxu0 0
      %5162 = vmatpush1.bf16.msra.mxu0 0
      %5163 = vmatprep.subr.bf16.mxu0 0
      %5164 = vmatpush1.bf16.msra.mxu0 0
      %5165 = vmatprep.subr.bf16.mxu0 0
      %5166 = vmatpush1.bf16.msra.mxu0 0
      %5167 = vmatprep.subr.bf16.mxu0 0
      %5168 = vmatpush1.bf16.msra.mxu0 0
      %5169 = vmatprep.subr.bf16.mxu0 0
      %5170 = vmatpush1.bf16.msra.mxu0 0
      %5171 = vmatprep.subr.bf16.mxu0 0
      %5172 = vmatpush1.bf16.msra.mxu0 0
      %5173 = vmatprep.subr.bf16.mxu0 0
      %5174 = vmatpush1.bf16.msra.mxu0 0
      %5175 = vmatprep.subr.bf16.mxu0 0
      %5176 = vmatpush1.bf16.msra.mxu0 0
      %5177 = vmatprep.subr.bf16.mxu0 0
      %5178 = vmatpush1.bf16.msra.mxu0 0
      %5179 = vmatprep.subr.bf16.mxu0 0
      %5180 = vmatpush1.bf16.msra.mxu0 0
      %5181 = vmatprep.subr.bf16.mxu0 0
      %5182 = vmatpush1.bf16.msra.mxu0 0
      %5183 = vmatprep.subr.bf16.mxu0 0
      %5184 = vmatpush1.bf16.msra.mxu0 0
      %5185 = vmatprep.subr.bf16.mxu0 0
      %5186 = vmatpush1.bf16.msra.mxu0 0
      %5187 = vmatprep.subr.bf16.mxu0 0
      %5188 = vmatpush1.bf16.msra.mxu0 0
      %5189 = vmatprep.mubr.bf16.mxu0 0
      %5190 = vmatmul.mubr.bf16.gmra.mrb[0].mxu0 %v5069
      %v5191 = vpop.f32.mrb[0].mxu0
      %v5192 = vadd.f32 %v4927, %v5191
      %v5193 = vpop.f32.mrb[0].mxu0
      %v5194 = vadd.f32 %v4929, %v5193
      %v5195 = vpop.f32.mrb[0].mxu0
      %v5196 = vadd.f32 %v4931, %v5195
      %v5197 = vpop.f32.mrb[0].mxu0
      %v5198 = vadd.f32 %v4933, %v5197
      %5199 = vdwg.mxu0
      %5200 = vmatprep.subr.bf16.mxu0 %v5055
      %5201 = vmatpush1.bf16.msra.mxu0 %v5054
      %5202 = vmatprep.subr.bf16.mxu0 0
      %5203 = vmatpush1.bf16.msra.mxu0 0
      %5204 = vmatprep.subr.bf16.mxu0 0
      %5205 = vmatpush1.bf16.msra.mxu0 0
      %5206 = vmatprep.subr.bf16.mxu0 0
      %5207 = vmatpush1.bf16.msra.mxu0 0
      %5208 = vmatprep.subr.bf16.mxu0 0
      %5209 = vmatpush1.bf16.msra.mxu0 0
      %5210 = vmatprep.subr.bf16.mxu0 0
      %5211 = vmatpush1.bf16.msra.mxu0 0
      %5212 = vmatprep.subr.bf16.mxu0 0
      %5213 = vmatpush1.bf16.msra.mxu0 0
      %5214 = vmatprep.subr.bf16.mxu0 0
      %5215 = vmatpush1.bf16.msra.mxu0 0
      %5216 = vmatprep.subr.bf16.mxu0 0
      %5217 = vmatpush1.bf16.msra.mxu0 0
      %5218 = vmatprep.subr.bf16.mxu0 0
      %5219 = vmatpush1.bf16.msra.mxu0 0
      %5220 = vmatprep.subr.bf16.mxu0 0
      %5221 = vmatpush1.bf16.msra.mxu0 0
      %5222 = vmatprep.subr.bf16.mxu0 0
      %5223 = vmatpush1.bf16.msra.mxu0 0
      %5224 = vmatprep.subr.bf16.mxu0 0
      %5225 = vmatpush1.bf16.msra.mxu0 0
      %5226 = vmatprep.subr.bf16.mxu0 0
      %5227 = vmatpush1.bf16.msra.mxu0 0
      %5228 = vmatprep.subr.bf16.mxu0 0
      %5229 = vmatpush1.bf16.msra.mxu0 0
      %5230 = vmatprep.subr.bf16.mxu0 0
      %5231 = vmatpush1.bf16.msra.mxu0 0
      %5232 = vmatprep.mubr.bf16.mxu0 0
      %5233 = vmatmul.mubr.bf16.gmra.mrb[0].mxu0 %v5069
      %v5234 = vpop.f32.mrb[0].mxu0
      %v5235 = vadd.f32 %v4970, %v5234
      %v5236 = vpop.f32.mrb[0].mxu0
      %v5237 = vadd.f32 %v4972, %v5236
      %v5238 = vpop.f32.mrb[0].mxu0
      %v5239 = vadd.f32 %v4974, %v5238
      %v5240 = vpop.f32.mrb[0].mxu0
      %v5241 = vadd.f32 %v4976, %v5240
      %5242 = vdwg.mxu0
      %5243 = vmatprep.subr.bf16.mxu0 %v5057
      %5244 = vmatpush1.bf16.msra.mxu0 %v5056
      %5245 = vmatprep.subr.bf16.mxu0 0
      %5246 = vmatpush1.bf16.msra.mxu0 0
      %5247 = vmatprep.subr.bf16.mxu0 0
      %5248 = vmatpush1.bf16.msra.mxu0 0
      %5249 = vmatprep.subr.bf16.mxu0 0
      %5250 = vmatpush1.bf16.msra.mxu0 0
      %5251 = vmatprep.subr.bf16.mxu0 0
      %5252 = vmatpush1.bf16.msra.mxu0 0
      %5253 = vmatprep.subr.bf16.mxu0 0
      %5254 = vmatpush1.bf16.msra.mxu0 0
      %5255 = vmatprep.subr.bf16.mxu0 0
      %5256 = vmatpush1.bf16.msra.mxu0 0
      %5257 = vmatprep.subr.bf16.mxu0 0
      %5258 = vmatpush1.bf16.msra.mxu0 0
      %5259 = vmatprep.subr.bf16.mxu0 0
      %5260 = vmatpush1.bf16.msra.mxu0 0
      %5261 = vmatprep.subr.bf16.mxu0 0
      %5262 = vmatpush1.bf16.msra.mxu0 0
      %5263 = vmatprep.subr.bf16.mxu0 0
      %5264 = vmatpush1.bf16.msra.mxu0 0
      %5265 = vmatprep.subr.bf16.mxu0 0
      %5266 = vmatpush1.bf16.msra.mxu0 0
      %5267 = vmatprep.subr.bf16.mxu0 0
      %5268 = vmatpush1.bf16.msra.mxu0 0
      %5269 = vmatprep.subr.bf16.mxu0 0
      %5270 = vmatpush1.bf16.msra.mxu0 0
      %5271 = vmatprep.subr.bf16.mxu0 0
      %5272 = vmatpush1.bf16.msra.mxu0 0
      %5273 = vmatprep.subr.bf16.mxu0 0
      %5274 = vmatpush1.bf16.msra.mxu0 0
      %5275 = vmatprep.mubr.bf16.mxu0 0
      %5276 = vmatmul.mubr.bf16.gmra.mrb[0].mxu0 %v5069
      %v5277 = vpop.f32.mrb[0].mxu0
      %v5278 = vadd.f32 %v5013, %v5277
      %v5279 = vpop.f32.mrb[0].mxu0
      %v5280 = vadd.f32 %v5015, %v5279
      %v5281 = vpop.f32.mrb[0].mxu0
      %v5282 = vadd.f32 %v5017, %v5281
      %v5283 = vpop.f32.mrb[0].mxu0
      %v5284 = vadd.f32 %v5019, %v5283
      %5285 = vdwg.mxu0
      %v5286 = vld [vmem:[%s5 + $0x10] sm:$0xf]
      %v5287 = vld [vmem:[%s5 + $0x14] sm:$0xf]
      %v5290 = vunpack.c.l.b16 %v5286
      %v5291 = vunpack.c.l.b16 %v5287
      %v5292 = vpack.c.b16 %v5291, %v5290
      %5293 = vrot.lane.b32.xlu0 %v4731, 33
      %v5294 = vpop.permute.xlu0 %5293
      %5295 = vrot.lane.b32.xlu0 %v4732, 33
      %v5296 = vpop.permute.xlu0 %5295
      %5297 = vrot.lane.b32.xlu0 %v4733, 33
      %v5298 = vpop.permute.xlu0 %5297
      %5299 = vrot.lane.b32.xlu0 %v4734, 33
      %v5300 = vpop.permute.xlu0 %5299
      %5301 = vrot.lane.b32.xlu0 %v4735, 33
      %v5302 = vpop.permute.xlu0 %5301
      %5303 = vrot.lane.b32.xlu0 %v4736, 33
      %v5304 = vpop.permute.xlu0 %5303
      %5305 = vrot.lane.b32.xlu0 %v4737, 33
      %v5306 = vpop.permute.xlu0 %5305
      %5307 = vrot.lane.b32.xlu0 %v4738, 33
      %v5308 = vpop.permute.xlu0 %5307
      %5309 = vrot.lane.b32.xlu0 %v4739, 33
      %v5310 = vpop.permute.xlu0 %5309
      %5311 = vrot.lane.b32.xlu0 %v4740, 33
      %v5312 = vpop.permute.xlu0 %5311
      %5313 = vrot.lane.b32.xlu0 %v4741, 33
      %v5314 = vpop.permute.xlu0 %5313
      %v5315 = vsel %vm2333, %v5294, %v5296
      %v5316 = vsel %vm2333, %v5296, %v5298
      %v5317 = vsel %vm2333, %v5298, %v5300
      %v5318 = vsel %vm2333, %v5300, %v5302
      %v5319 = vsel %vm2333, %v5302, %v5304
      %v5320 = vsel %vm2333, %v5304, %v5306
      %v5321 = vsel %vm2333, %v5306, %v5308
      %v5322 = vsel %vm2333, %v5308, %v5310
      %v5323 = vsel %vm2333, %v5310, %v5312
      %v5324 = vsel %vm2333, %v5312, %v5314
      %v5336 = vsel %vm4802, %v5292, 0
      %5338 = vmatprep.subr.bf16.mxu0 %v5316
      %5339 = vmatpush1.bf16.msra.mxu0 %v5315
      %5340 = vmatprep.subr.bf16.mxu0 0
      %5341 = vmatpush1.bf16.msra.mxu0 0
      %5342 = vmatprep.subr.bf16.mxu0 0
      %5343 = vmatpush1.bf16.msra.mxu0 0
      %5344 = vmatprep.subr.bf16.mxu0 0
      %5345 = vmatpush1.bf16.msra.mxu0 0
      %5346 = vmatprep.subr.bf16.mxu0 0
      %5347 = vmatpush1.bf16.msra.mxu0 0
      %5348 = vmatprep.subr.bf16.mxu0 0
      %5349 = vmatpush1.bf16.msra.mxu0 0
      %5350 = vmatprep.subr.bf16.mxu0 0
      %5351 = vmatpush1.bf16.msra.mxu0 0
      %5352 = vmatprep.subr.bf16.mxu0 0
      %5353 = vmatpush1.bf16.msra.mxu0 0
      %5354 = vmatprep.subr.bf16.mxu0 0
      %5355 = vmatpush1.bf16.msra.mxu0 0
      %5356 = vmatprep.subr.bf16.mxu0 0
      %5357 = vmatpush1.bf16.msra.mxu0 0
      %5358 = vmatprep.subr.bf16.mxu0 0
      %5359 = vmatpush1.bf16.msra.mxu0 0
      %5360 = vmatprep.subr.bf16.mxu0 0
      %5361 = vmatpush1.bf16.msra.mxu0 0
      %5362 = vmatprep.subr.bf16.mxu0 0
      %5363 = vmatpush1.bf16.msra.mxu0 0
      %5364 = vmatprep.subr.bf16.mxu0 0
      %5365 = vmatpush1.bf16.msra.mxu0 0
      %5366 = vmatprep.subr.bf16.mxu0 0
      %5367 = vmatpush1.bf16.msra.mxu0 0
      %5368 = vmatprep.subr.bf16.mxu0 0
      %5369 = vmatpush1.bf16.msra.mxu0 0
      %5370 = vmatprep.mubr.bf16.mxu0 0
      %5371 = vmatmul.mubr.bf16.gmra.mrb[0].mxu0 %v5336
      %v5372 = vpop.f32.mrb[0].mxu0
      %v5373 = vadd.f32 0.0, %v5372
      %v5374 = vpop.f32.mrb[0].mxu0
      %v5375 = vadd.f32 0.0, %v5374
      %v5376 = vpop.f32.mrb[0].mxu0
      %v5377 = vadd.f32 0.0, %v5376
      %v5378 = vpop.f32.mrb[0].mxu0
      %v5379 = vadd.f32 0.0, %v5378
      %5380 = vdwg.mxu0
      %5381 = vmatprep.subr.bf16.mxu0 %v5318
      %5382 = vmatpush1.bf16.msra.mxu0 %v5317
      %5383 = vmatprep.subr.bf16.mxu0 0
      %5384 = vmatpush1.bf16.msra.mxu0 0
      %5385 = vmatprep.subr.bf16.mxu0 0
      %5386 = vmatpush1.bf16.msra.mxu0 0
      %5387 = vmatprep.subr.bf16.mxu0 0
      %5388 = vmatpush1.bf16.msra.mxu0 0
      %5389 = vmatprep.subr.bf16.mxu0 0
      %5390 = vmatpush1.bf16.msra.mxu0 0
      %5391 = vmatprep.subr.bf16.mxu0 0
      %5392 = vmatpush1.bf16.msra.mxu0 0
      %5393 = vmatprep.subr.bf16.mxu0 0
      %5394 = vmatpush1.bf16.msra.mxu0 0
      %5395 = vmatprep.subr.bf16.mxu0 0
      %5396 = vmatpush1.bf16.msra.mxu0 0
      %5397 = vmatprep.subr.bf16.mxu0 0
      %5398 = vmatpush1.bf16.msra.mxu0 0
      %5399 = vmatprep.subr.bf16.mxu0 0
      %5400 = vmatpush1.bf16.msra.mxu0 0
      %5401 = vmatprep.subr.bf16.mxu0 0
      %5402 = vmatpush1.bf16.msra.mxu0 0
      %5403 = vmatprep.subr.bf16.mxu0 0
      %5404 = vmatpush1.bf16.msra.mxu0 0
      %5405 = vmatprep.subr.bf16.mxu0 0
      %5406 = vmatpush1.bf16.msra.mxu0 0
      %5407 = vmatprep.subr.bf16.mxu0 0
      %5408 = vmatpush1.bf16.msra.mxu0 0
      %5409 = vmatprep.subr.bf16.mxu0 0
      %5410 = vmatpush1.bf16.msra.mxu0 0
      %5411 = vmatprep.subr.bf16.mxu0 0
      %5412 = vmatpush1.bf16.msra.mxu0 0
      %5413 = vmatprep.mubr.bf16.mxu0 0
      %5414 = vmatmul.mubr.bf16.gmra.mrb[0].mxu0 %v5336
      %v5415 = vpop.f32.mrb[0].mxu0
      %v5416 = vadd.f32 0.0, %v5415
      %v5417 = vpop.f32.mrb[0].mxu0
      %v5418 = vadd.f32 0.0, %v5417
      %v5419 = vpop.f32.mrb[0].mxu0
      %v5420 = vadd.f32 0.0, %v5419
      %v5421 = vpop.f32.mrb[0].mxu0
      %v5422 = vadd.f32 0.0, %v5421
      %5423 = vdwg.mxu0
      %5424 = vmatprep.subr.bf16.mxu0 %v5320
      %5425 = vmatpush1.bf16.msra.mxu0 %v5319
      %5426 = vmatprep.subr.bf16.mxu0 0
      %5427 = vmatpush1.bf16.msra.mxu0 0
      %5428 = vmatprep.subr.bf16.mxu0 0
      %5429 = vmatpush1.bf16.msra.mxu0 0
      %5430 = vmatprep.subr.bf16.mxu0 0
      %5431 = vmatpush1.bf16.msra.mxu0 0
      %5432 = vmatprep.subr.bf16.mxu0 0
      %5433 = vmatpush1.bf16.msra.mxu0 0
      %5434 = vmatprep.subr.bf16.mxu0 0
      %5435 = vmatpush1.bf16.msra.mxu0 0
      %5436 = vmatprep.subr.bf16.mxu0 0
      %5437 = vmatpush1.bf16.msra.mxu0 0
      %5438 = vmatprep.subr.bf16.mxu0 0
      %5439 = vmatpush1.bf16.msra.mxu0 0
      %5440 = vmatprep.subr.bf16.mxu0 0
      %5441 = vmatpush1.bf16.msra.mxu0 0
      %5442 = vmatprep.subr.bf16.mxu0 0
      %5443 = vmatpush1.bf16.msra.mxu0 0
      %5444 = vmatprep.subr.bf16.mxu0 0
      %5445 = vmatpush1.bf16.msra.mxu0 0
      %5446 = vmatprep.subr.bf16.mxu0 0
      %5447 = vmatpush1.bf16.msra.mxu0 0
      %5448 = vmatprep.subr.bf16.mxu0 0
      %5449 = vmatpush1.bf16.msra.mxu0 0
      %5450 = vmatprep.subr.bf16.mxu0 0
      %5451 = vmatpush1.bf16.msra.mxu0 0
      %5452 = vmatprep.subr.bf16.mxu0 0
      %5453 = vmatpush1.bf16.msra.mxu0 0
      %5454 = vmatprep.subr.bf16.mxu0 0
      %5455 = vmatpush1.bf16.msra.mxu0 0
      %5456 = vmatprep.mubr.bf16.mxu0 0
      %5457 = vmatmul.mubr.bf16.gmra.mrb[0].mxu0 %v5336
      %v5458 = vpop.f32.mrb[0].mxu0
      %v5459 = vadd.f32 0.0, %v5458
      %v5460 = vpop.f32.mrb[0].mxu0
      %v5461 = vadd.f32 0.0, %v5460
      %v5462 = vpop.f32.mrb[0].mxu0
      %v5463 = vadd.f32 0.0, %v5462
      %v5464 = vpop.f32.mrb[0].mxu0
      %v5465 = vadd.f32 0.0, %v5464
      %5466 = vdwg.mxu0
      %5467 = vmatprep.subr.bf16.mxu0 %v5322
      %5468 = vmatpush1.bf16.msra.mxu0 %v5321
      %5469 = vmatprep.subr.bf16.mxu0 0
      %5470 = vmatpush1.bf16.msra.mxu0 0
      %5471 = vmatprep.subr.bf16.mxu0 0
      %5472 = vmatpush1.bf16.msra.mxu0 0
      %5473 = vmatprep.subr.bf16.mxu0 0
      %5474 = vmatpush1.bf16.msra.mxu0 0
      %5475 = vmatprep.subr.bf16.mxu0 0
      %5476 = vmatpush1.bf16.msra.mxu0 0
      %5477 = vmatprep.subr.bf16.mxu0 0
      %5478 = vmatpush1.bf16.msra.mxu0 0
      %5479 = vmatprep.subr.bf16.mxu0 0
      %5480 = vmatpush1.bf16.msra.mxu0 0
      %5481 = vmatprep.subr.bf16.mxu0 0
      %5482 = vmatpush1.bf16.msra.mxu0 0
      %5483 = vmatprep.subr.bf16.mxu0 0
      %5484 = vmatpush1.bf16.msra.mxu0 0
      %5485 = vmatprep.subr.bf16.mxu0 0
      %5486 = vmatpush1.bf16.msra.mxu0 0
      %5487 = vmatprep.subr.bf16.mxu0 0
      %5488 = vmatpush1.bf16.msra.mxu0 0
      %5489 = vmatprep.subr.bf16.mxu0 0
      %5490 = vmatpush1.bf16.msra.mxu0 0
      %5491 = vmatprep.subr.bf16.mxu0 0
      %5492 = vmatpush1.bf16.msra.mxu0 0
      %5493 = vmatprep.subr.bf16.mxu0 0
      %5494 = vmatpush1.bf16.msra.mxu0 0
      %5495 = vmatprep.subr.bf16.mxu0 0
      %5496 = vmatpush1.bf16.msra.mxu0 0
      %5497 = vmatprep.subr.bf16.mxu0 0
      %5498 = vmatpush1.bf16.msra.mxu0 0
      %5499 = vmatprep.mubr.bf16.mxu0 0
      %5500 = vmatmul.mubr.bf16.gmra.mrb[0].mxu0 %v5336
      %v5501 = vpop.f32.mrb[0].mxu0
      %v5502 = vadd.f32 0.0, %v5501
      %v5503 = vpop.f32.mrb[0].mxu0
      %v5504 = vadd.f32 0.0, %v5503
      %v5505 = vpop.f32.mrb[0].mxu0
      %v5506 = vadd.f32 0.0, %v5505
      %v5507 = vpop.f32.mrb[0].mxu0
      %v5508 = vadd.f32 0.0, %v5507
      %5509 = vdwg.mxu0
      %5510 = vmatprep.subr.bf16.mxu0 %v5324
      %5511 = vmatpush1.bf16.msra.mxu0 %v5323
      %5512 = vmatprep.subr.bf16.mxu0 0
      %5513 = vmatpush1.bf16.msra.mxu0 0
      %5514 = vmatprep.subr.bf16.mxu0 0
      %5515 = vmatpush1.bf16.msra.mxu0 0
      %5516 = vmatprep.subr.bf16.mxu0 0
      %5517 = vmatpush1.bf16.msra.mxu0 0
      %5518 = vmatprep.subr.bf16.mxu0 0
      %5519 = vmatpush1.bf16.msra.mxu0 0
      %5520 = vmatprep.subr.bf16.mxu0 0
      %5521 = vmatpush1.bf16.msra.mxu0 0
      %5522 = vmatprep.subr.bf16.mxu0 0
      %5523 = vmatpush1.bf16.msra.mxu0 0
      %5524 = vmatprep.subr.bf16.mxu0 0
      %5525 = vmatpush1.bf16.msra.mxu0 0
      %5526 = vmatprep.subr.bf16.mxu0 0
      %5527 = vmatpush1.bf16.msra.mxu0 0
      %5528 = vmatprep.subr.bf16.mxu0 0
      %5529 = vmatpush1.bf16.msra.mxu0 0
      %5530 = vmatprep.subr.bf16.mxu0 0
      %5531 = vmatpush1.bf16.msra.mxu0 0
      %5532 = vmatprep.subr.bf16.mxu0 0
      %5533 = vmatpush1.bf16.msra.mxu0 0
      %5534 = vmatprep.subr.bf16.mxu0 0
      %5535 = vmatpush1.bf16.msra.mxu0 0
      %5536 = vmatprep.subr.bf16.mxu0 0
      %5537 = vmatpush1.bf16.msra.mxu0 0
      %5538 = vmatprep.subr.bf16.mxu0 0
      %5539 = vmatpush1.bf16.msra.mxu0 0
      %5540 = vmatprep.subr.bf16.mxu0 0
      %5541 = vmatpush1.bf16.msra.mxu0 0
      %5542 = vmatprep.mubr.bf16.mxu0 0
      %5543 = vmatmul.mubr.bf16.gmra.mrb[0].mxu0 %v5336
      %v5544 = vpop.f32.mrb[0].mxu0
      %v5545 = vadd.f32 0.0, %v5544
      %v5546 = vpop.f32.mrb[0].mxu0
      %v5547 = vadd.f32 0.0, %v5546
      %v5548 = vpop.f32.mrb[0].mxu0
      %v5549 = vadd.f32 0.0, %v5548
      %v5550 = vpop.f32.mrb[0].mxu0
      %v5551 = vadd.f32 0.0, %v5550
      %5552 = vdwg.mxu0
      %v5553 = vadd.f32 %v5106, %v5373
      %v5554 = vadd.f32 %v5108, %v5375
      %v5555 = vadd.f32 %v5149, %v5416
      %v5556 = vadd.f32 %v5151, %v5418
      %v5557 = vadd.f32 %v5192, %v5459
      %v5558 = vadd.f32 %v5194, %v5461
      %v5559 = vadd.f32 %v5235, %v5502
      %v5560 = vadd.f32 %v5237, %v5504
      %v5561 = vadd.f32 %v5278, %v5545
      %v5562 = vadd.f32 %v5280, %v5547
      %v5563 = vadd.f32 %v5110, %v5377
      %v5564 = vadd.f32 %v5112, %v5379
      %v5565 = vadd.f32 %v5153, %v5420
      %v5566 = vadd.f32 %v5155, %v5422
      %v5567 = vadd.f32 %v5196, %v5463
      %v5568 = vadd.f32 %v5198, %v5465
      %v5569 = vadd.f32 %v5239, %v5506
      %v5570 = vadd.f32 %v5241, %v5508
      %v5571 = vadd.f32 %v5282, %v5549
      %v5572 = vadd.f32 %v5284, %v5551
      %v5573 = vld [vmem:[%s5 + $0x18] sm:$0xf]
      %v5574 = vld [vmem:[%s5 + $0x1c] sm:$0xf]
      %v5577 = vunpack.c.l.b16 %v5573
      %v5578 = vunpack.c.l.b16 %v5574
      %v5579 = vpack.c.b16 %v5578, %v5577
      %5580 = vrot.lane.b32.xlu0 %v4731, 1
      %v5581 = vpop.permute.xlu0 %5580
      %5582 = vrot.lane.b32.xlu0 %v4732, 1
      %v5583 = vpop.permute.xlu0 %5582
      %5584 = vrot.lane.b32.xlu0 %v4733, 1
      %v5585 = vpop.permute.xlu0 %5584
      %5586 = vrot.lane.b32.xlu0 %v4734, 1
      %v5587 = vpop.permute.xlu0 %5586
      %5588 = vrot.lane.b32.xlu0 %v4735, 1
      %v5589 = vpop.permute.xlu0 %5588
      %5590 = vrot.lane.b32.xlu0 %v4736, 1
      %v5591 = vpop.permute.xlu0 %5590
      %5592 = vrot.lane.b32.xlu0 %v4737, 1
      %v5593 = vpop.permute.xlu0 %5592
      %5594 = vrot.lane.b32.xlu0 %v4738, 1
      %v5595 = vpop.permute.xlu0 %5594
      %5596 = vrot.lane.b32.xlu0 %v4739, 1
      %v5597 = vpop.permute.xlu0 %5596
      %5598 = vrot.lane.b32.xlu0 %v4740, 1
      %v5599 = vpop.permute.xlu0 %5598
      %5600 = vrot.lane.b32.xlu0 %v4741, 1
      %v5601 = vpop.permute.xlu0 %5600
      %v5602 = vsel %vm2663, %v5581, %v5583
      %v5603 = vsel %vm2663, %v5583, %v5585
      %v5604 = vsel %vm2663, %v5585, %v5587
      %v5605 = vsel %vm2663, %v5587, %v5589
      %v5606 = vsel %vm2663, %v5589, %v5591
      %v5607 = vsel %vm2663, %v5591, %v5593
      %v5608 = vsel %vm2663, %v5593, %v5595
      %v5609 = vsel %vm2663, %v5595, %v5597
      %v5610 = vsel %vm2663, %v5597, %v5599
      %v5611 = vsel %vm2663, %v5599, %v5601
      %v5623 = vsel %vm4802, %v5579, 0
      %5625 = vmatprep.subr.bf16.mxu0 %v5603
      %5626 = vmatpush1.bf16.msra.mxu0 %v5602
      %5627 = vmatprep.subr.bf16.mxu0 0
      %5628 = vmatpush1.bf16.msra.mxu0 0
      %5629 = vmatprep.subr.bf16.mxu0 0
      %5630 = vmatpush1.bf16.msra.mxu0 0
      %5631 = vmatprep.subr.bf16.mxu0 0
      %5632 = vmatpush1.bf16.msra.mxu0 0
      %5633 = vmatprep.subr.bf16.mxu0 0
      %5634 = vmatpush1.bf16.msra.mxu0 0
      %5635 = vmatprep.subr.bf16.mxu0 0
      %5636 = vmatpush1.bf16.msra.mxu0 0
      %5637 = vmatprep.subr.bf16.mxu0 0
      %5638 = vmatpush1.bf16.msra.mxu0 0
      %5639 = vmatprep.subr.bf16.mxu0 0
      %5640 = vmatpush1.bf16.msra.mxu0 0
      %5641 = vmatprep.subr.bf16.mxu0 0
      %5642 = vmatpush1.bf16.msra.mxu0 0
      %5643 = vmatprep.subr.bf16.mxu0 0
      %5644 = vmatpush1.bf16.msra.mxu0 0
      %5645 = vmatprep.subr.bf16.mxu0 0
      %5646 = vmatpush1.bf16.msra.mxu0 0
      %5647 = vmatprep.subr.bf16.mxu0 0
      %5648 = vmatpush1.bf16.msra.mxu0 0
      %5649 = vmatprep.subr.bf16.mxu0 0
      %5650 = vmatpush1.bf16.msra.mxu0 0
      %5651 = vmatprep.subr.bf16.mxu0 0
      %5652 = vmatpush1.bf16.msra.mxu0 0
      %5653 = vmatprep.subr.bf16.mxu0 0
      %5654 = vmatpush1.bf16.msra.mxu0 0
      %5655 = vmatprep.subr.bf16.mxu0 0
      %5656 = vmatpush1.bf16.msra.mxu0 0
      %5657 = vmatprep.mubr.bf16.mxu0 0
      %5658 = vmatmul.mubr.bf16.gmra.mrb[0].mxu0 %v5623
      %v5659 = vpop.f32.mrb[0].mxu0
      %v5660 = vadd.f32 0.0, %v5659
      %v5661 = vpop.f32.mrb[0].mxu0
      %v5662 = vadd.f32 0.0, %v5661
      %v5663 = vpop.f32.mrb[0].mxu0
      %v5664 = vadd.f32 0.0, %v5663
      %v5665 = vpop.f32.mrb[0].mxu0
      %v5666 = vadd.f32 0.0, %v5665
      %5667 = vdwg.mxu0
      %5668 = vmatprep.subr.bf16.mxu0 %v5605
      %5669 = vmatpush1.bf16.msra.mxu0 %v5604
      %5670 = vmatprep.subr.bf16.mxu0 0
      %5671 = vmatpush1.bf16.msra.mxu0 0
      %5672 = vmatprep.subr.bf16.mxu0 0
      %5673 = vmatpush1.bf16.msra.mxu0 0
      %5674 = vmatprep.subr.bf16.mxu0 0
      %5675 = vmatpush1.bf16.msra.mxu0 0
      %5676 = vmatprep.subr.bf16.mxu0 0
      %5677 = vmatpush1.bf16.msra.mxu0 0
      %5678 = vmatprep.subr.bf16.mxu0 0
      %5679 = vmatpush1.bf16.msra.mxu0 0
      %5680 = vmatprep.subr.bf16.mxu0 0
      %5681 = vmatpush1.bf16.msra.mxu0 0
      %5682 = vmatprep.subr.bf16.mxu0 0
      %5683 = vmatpush1.bf16.msra.mxu0 0
      %5684 = vmatprep.subr.bf16.mxu0 0
      %5685 = vmatpush1.bf16.msra.mxu0 0
      %5686 = vmatprep.subr.bf16.mxu0 0
      %5687 = vmatpush1.bf16.msra.mxu0 0
      %5688 = vmatprep.subr.bf16.mxu0 0
      %5689 = vmatpush1.bf16.msra.mxu0 0
      %5690 = vmatprep.subr.bf16.mxu0 0
      %5691 = vmatpush1.bf16.msra.mxu0 0
      %5692 = vmatprep.subr.bf16.mxu0 0
      %5693 = vmatpush1.bf16.msra.mxu0 0
      %5694 = vmatprep.subr.bf16.mxu0 0
      %5695 = vmatpush1.bf16.msra.mxu0 0
      %5696 = vmatprep.subr.bf16.mxu0 0
      %5697 = vmatpush1.bf16.msra.mxu0 0
      %5698 = vmatprep.subr.bf16.mxu0 0
      %5699 = vmatpush1.bf16.msra.mxu0 0
      %5700 = vmatprep.mubr.bf16.mxu0 0
      %5701 = vmatmul.mubr.bf16.gmra.mrb[0].mxu0 %v5623
      %v5702 = vpop.f32.mrb[0].mxu0
      %v5703 = vadd.f32 0.0, %v5702
      %v5704 = vpop.f32.mrb[0].mxu0
      %v5705 = vadd.f32 0.0, %v5704
      %v5706 = vpop.f32.mrb[0].mxu0
      %v5707 = vadd.f32 0.0, %v5706
      %v5708 = vpop.f32.mrb[0].mxu0
      %v5709 = vadd.f32 0.0, %v5708
      %5710 = vdwg.mxu0
      %5711 = vmatprep.subr.bf16.mxu0 %v5607
      %5712 = vmatpush1.bf16.msra.mxu0 %v5606
      %5713 = vmatprep.subr.bf16.mxu0 0
      %5714 = vmatpush1.bf16.msra.mxu0 0
      %5715 = vmatprep.subr.bf16.mxu0 0
      %5716 = vmatpush1.bf16.msra.mxu0 0
      %5717 = vmatprep.subr.bf16.mxu0 0
      %5718 = vmatpush1.bf16.msra.mxu0 0
      %5719 = vmatprep.subr.bf16.mxu0 0
      %5720 = vmatpush1.bf16.msra.mxu0 0
      %5721 = vmatprep.subr.bf16.mxu0 0
      %5722 = vmatpush1.bf16.msra.mxu0 0
      %5723 = vmatprep.subr.bf16.mxu0 0
      %5724 = vmatpush1.bf16.msra.mxu0 0
      %5725 = vmatprep.subr.bf16.mxu0 0
      %5726 = vmatpush1.bf16.msra.mxu0 0
      %5727 = vmatprep.subr.bf16.mxu0 0
      %5728 = vmatpush1.bf16.msra.mxu0 0
      %5729 = vmatprep.subr.bf16.mxu0 0
      %5730 = vmatpush1.bf16.msra.mxu0 0
      %5731 = vmatprep.subr.bf16.mxu0 0
      %5732 = vmatpush1.bf16.msra.mxu0 0
      %5733 = vmatprep.subr.bf16.mxu0 0
      %5734 = vmatpush1.bf16.msra.mxu0 0
      %5735 = vmatprep.subr.bf16.mxu0 0
      %5736 = vmatpush1.bf16.msra.mxu0 0
      %5737 = vmatprep.subr.bf16.mxu0 0
      %5738 = vmatpush1.bf16.msra.mxu0 0
      %5739 = vmatprep.subr.bf16.mxu0 0
      %5740 = vmatpush1.bf16.msra.mxu0 0
      %5741 = vmatprep.subr.bf16.mxu0 0
      %5742 = vmatpush1.bf16.msra.mxu0 0
      %5743 = vmatprep.mubr.bf16.mxu0 0
      %5744 = vmatmul.mubr.bf16.gmra.mrb[0].mxu0 %v5623
      %v5745 = vpop.f32.mrb[0].mxu0
      %v5746 = vadd.f32 0.0, %v5745
      %v5747 = vpop.f32.mrb[0].mxu0
      %v5748 = vadd.f32 0.0, %v5747
      %v5749 = vpop.f32.mrb[0].mxu0
      %v5750 = vadd.f32 0.0, %v5749
      %v5751 = vpop.f32.mrb[0].mxu0
      %v5752 = vadd.f32 0.0, %v5751
      %5753 = vdwg.mxu0
      %5754 = vmatprep.subr.bf16.mxu0 %v5609
      %5755 = vmatpush1.bf16.msra.mxu0 %v5608
      %5756 = vmatprep.subr.bf16.mxu0 0
      %5757 = vmatpush1.bf16.msra.mxu0 0
      %5758 = vmatprep.subr.bf16.mxu0 0
      %5759 = vmatpush1.bf16.msra.mxu0 0
      %5760 = vmatprep.subr.bf16.mxu0 0
      %5761 = vmatpush1.bf16.msra.mxu0 0
      %5762 = vmatprep.subr.bf16.mxu0 0
      %5763 = vmatpush1.bf16.msra.mxu0 0
      %5764 = vmatprep.subr.bf16.mxu0 0
      %5765 = vmatpush1.bf16.msra.mxu0 0
      %5766 = vmatprep.subr.bf16.mxu0 0
      %5767 = vmatpush1.bf16.msra.mxu0 0
      %5768 = vmatprep.subr.bf16.mxu0 0
      %5769 = vmatpush1.bf16.msra.mxu0 0
      %5770 = vmatprep.subr.bf16.mxu0 0
      %5771 = vmatpush1.bf16.msra.mxu0 0
      %5772 = vmatprep.subr.bf16.mxu0 0
      %5773 = vmatpush1.bf16.msra.mxu0 0
      %5774 = vmatprep.subr.bf16.mxu0 0
      %5775 = vmatpush1.bf16.msra.mxu0 0
      %5776 = vmatprep.subr.bf16.mxu0 0
      %5777 = vmatpush1.bf16.msra.mxu0 0
      %5778 = vmatprep.subr.bf16.mxu0 0
      %5779 = vmatpush1.bf16.msra.mxu0 0
      %5780 = vmatprep.subr.bf16.mxu0 0
      %5781 = vmatpush1.bf16.msra.mxu0 0
      %5782 = vmatprep.subr.bf16.mxu0 0
      %5783 = vmatpush1.bf16.msra.mxu0 0
      %5784 = vmatprep.subr.bf16.mxu0 0
      %5785 = vmatpush1.bf16.msra.mxu0 0
      %5786 = vmatprep.mubr.bf16.mxu0 0
      %5787 = vmatmul.mubr.bf16.gmra.mrb[0].mxu0 %v5623
      %v5788 = vpop.f32.mrb[0].mxu0
      %v5789 = vadd.f32 0.0, %v5788
      %v5790 = vpop.f32.mrb[0].mxu0
      %v5791 = vadd.f32 0.0, %v5790
      %v5792 = vpop.f32.mrb[0].mxu0
      %v5793 = vadd.f32 0.0, %v5792
      %v5794 = vpop.f32.mrb[0].mxu0
      %v5795 = vadd.f32 0.0, %v5794
      %5796 = vdwg.mxu0
      %5797 = vmatprep.subr.bf16.mxu0 %v5611
      %5798 = vmatpush1.bf16.msra.mxu0 %v5610
      %5799 = vmatprep.subr.bf16.mxu0 0
      %5800 = vmatpush1.bf16.msra.mxu0 0
      %5801 = vmatprep.subr.bf16.mxu0 0
      %5802 = vmatpush1.bf16.msra.mxu0 0
      %5803 = vmatprep.subr.bf16.mxu0 0
      %5804 = vmatpush1.bf16.msra.mxu0 0
      %5805 = vmatprep.subr.bf16.mxu0 0
      %5806 = vmatpush1.bf16.msra.mxu0 0
      %5807 = vmatprep.subr.bf16.mxu0 0
      %5808 = vmatpush1.bf16.msra.mxu0 0
      %5809 = vmatprep.subr.bf16.mxu0 0
      %5810 = vmatpush1.bf16.msra.mxu0 0
      %5811 = vmatprep.subr.bf16.mxu0 0
      %5812 = vmatpush1.bf16.msra.mxu0 0
      %5813 = vmatprep.subr.bf16.mxu0 0
      %5814 = vmatpush1.bf16.msra.mxu0 0
      %5815 = vmatprep.subr.bf16.mxu0 0
      %5816 = vmatpush1.bf16.msra.mxu0 0
      %5817 = vmatprep.subr.bf16.mxu0 0
      %5818 = vmatpush1.bf16.msra.mxu0 0
      %5819 = vmatprep.subr.bf16.mxu0 0
      %5820 = vmatpush1.bf16.msra.mxu0 0
      %5821 = vmatprep.subr.bf16.mxu0 0
      %5822 = vmatpush1.bf16.msra.mxu0 0
      %5823 = vmatprep.subr.bf16.mxu0 0
      %5824 = vmatpush1.bf16.msra.mxu0 0
      %5825 = vmatprep.subr.bf16.mxu0 0
      %5826 = vmatpush1.bf16.msra.mxu0 0
      %5827 = vmatprep.subr.bf16.mxu0 0
      %5828 = vmatpush1.bf16.msra.mxu0 0
      %5829 = vmatprep.mubr.bf16.mxu0 0
      %5830 = vmatmul.mubr.bf16.gmra.mrb[0].mxu0 %v5623
      %v5831 = vpop.f32.mrb[0].mxu0
      %v5832 = vadd.f32 0.0, %v5831
      %v5833 = vpop.f32.mrb[0].mxu0
      %v5834 = vadd.f32 0.0, %v5833
      %v5835 = vpop.f32.mrb[0].mxu0
      %v5836 = vadd.f32 0.0, %v5835
      %v5837 = vpop.f32.mrb[0].mxu0
      %v5838 = vadd.f32 0.0, %v5837
      %5839 = vdwg.mxu0
      %v5840 = vadd.f32 %v5553, %v5660
      %v5841 = vadd.f32 %v5554, %v5662
      %v5842 = vadd.f32 %v5555, %v5703
      %v5843 = vadd.f32 %v5556, %v5705
      %v5844 = vadd.f32 %v5557, %v5746
      %v5845 = vadd.f32 %v5558, %v5748
      %v5846 = vadd.f32 %v5559, %v5789
      %v5847 = vadd.f32 %v5560, %v5791
      %v5848 = vadd.f32 %v5561, %v5832
      %v5849 = vadd.f32 %v5562, %v5834
      %v5850 = vadd.f32 %v5563, %v5664
      %v5851 = vadd.f32 %v5564, %v5666
      %v5852 = vadd.f32 %v5565, %v5707
      %v5853 = vadd.f32 %v5566, %v5709
      %v5854 = vadd.f32 %v5567, %v5750
      %v5855 = vadd.f32 %v5568, %v5752
      %v5856 = vadd.f32 %v5569, %v5793
      %v5857 = vadd.f32 %v5570, %v5795
      %v5858 = vadd.f32 %v5571, %v5836
      %v5859 = vadd.f32 %v5572, %v5838
      %v5860 = vld [vmem:[%s5 + $0x20] sm:$0xf]
      %v5861 = vld [vmem:[%s5 + $0x24] sm:$0xf]
      %v5864 = vunpack.c.l.b16 %v5860
      %v5865 = vunpack.c.l.b16 %v5861
      %v5866 = vpack.c.b16 %v5865, %v5864
      %v5868 = vsel %vm4802, %v5866, 0
      %5870 = vmatprep.subr.bf16.mxu0 %v4733
      %5871 = vmatpush1.bf16.msra.mxu0 %v4732
      %5872 = vmatprep.subr.bf16.mxu0 0
      %5873 = vmatpush1.bf16.msra.mxu0 0
      %5874 = vmatprep.subr.bf16.mxu0 0
      %5875 = vmatpush1.bf16.msra.mxu0 0
      %5876 = vmatprep.subr.bf16.mxu0 0
      %5877 = vmatpush1.bf16.msra.mxu0 0
      %5878 = vmatprep.subr.bf16.mxu0 0
      %5879 = vmatpush1.bf16.msra.mxu0 0
      %5880 = vmatprep.subr.bf16.mxu0 0
      %5881 = vmatpush1.bf16.msra.mxu0 0
      %5882 = vmatprep.subr.bf16.mxu0 0
      %5883 = vmatpush1.bf16.msra.mxu0 0
      %5884 = vmatprep.subr.bf16.mxu0 0
      %5885 = vmatpush1.bf16.msra.mxu0 0
      %5886 = vmatprep.subr.bf16.mxu0 0
      %5887 = vmatpush1.bf16.msra.mxu0 0
      %5888 = vmatprep.subr.bf16.mxu0 0
      %5889 = vmatpush1.bf16.msra.mxu0 0
      %5890 = vmatprep.subr.bf16.mxu0 0
      %5891 = vmatpush1.bf16.msra.mxu0 0
      %5892 = vmatprep.subr.bf16.mxu0 0
      %5893 = vmatpush1.bf16.msra.mxu0 0
      %5894 = vmatprep.subr.bf16.mxu0 0
      %5895 = vmatpush1.bf16.msra.mxu0 0
      %5896 = vmatprep.subr.bf16.mxu0 0
      %5897 = vmatpush1.bf16.msra.mxu0 0
      %5898 = vmatprep.subr.bf16.mxu0 0
      %5899 = vmatpush1.bf16.msra.mxu0 0
      %5900 = vmatprep.subr.bf16.mxu0 0
      %5901 = vmatpush1.bf16.msra.mxu0 0
      %5902 = vmatprep.mubr.bf16.mxu0 0
      %5903 = vmatmul.mubr.bf16.gmra.mrb[0].mxu0 %v5868
      %v5904 = vpop.f32.mrb[0].mxu0
      %v5905 = vadd.f32 0.0, %v5904
      %v5906 = vpop.f32.mrb[0].mxu0
      %v5907 = vadd.f32 0.0, %v5906
      %v5908 = vpop.f32.mrb[0].mxu0
      %v5909 = vadd.f32 0.0, %v5908
      %v5910 = vpop.f32.mrb[0].mxu0
      %v5911 = vadd.f32 0.0, %v5910
      %5912 = vdwg.mxu0
      %5913 = vmatprep.subr.bf16.mxu0 %v4735
      %5914 = vmatpush1.bf16.msra.mxu0 %v4734
      %5915 = vmatprep.subr.bf16.mxu0 0
      %5916 = vmatpush1.bf16.msra.mxu0 0
      %5917 = vmatprep.subr.bf16.mxu0 0
      %5918 = vmatpush1.bf16.msra.mxu0 0
      %5919 = vmatprep.subr.bf16.mxu0 0
      %5920 = vmatpush1.bf16.msra.mxu0 0
      %5921 = vmatprep.subr.bf16.mxu0 0
      %5922 = vmatpush1.bf16.msra.mxu0 0
      %5923 = vmatprep.subr.bf16.mxu0 0
      %5924 = vmatpush1.bf16.msra.mxu0 0
      %5925 = vmatprep.subr.bf16.mxu0 0
      %5926 = vmatpush1.bf16.msra.mxu0 0
      %5927 = vmatprep.subr.bf16.mxu0 0
      %5928 = vmatpush1.bf16.msra.mxu0 0
      %5929 = vmatprep.subr.bf16.mxu0 0
      %5930 = vmatpush1.bf16.msra.mxu0 0
      %5931 = vmatprep.subr.bf16.mxu0 0
      %5932 = vmatpush1.bf16.msra.mxu0 0
      %5933 = vmatprep.subr.bf16.mxu0 0
      %5934 = vmatpush1.bf16.msra.mxu0 0
      %5935 = vmatprep.subr.bf16.mxu0 0
      %5936 = vmatpush1.bf16.msra.mxu0 0
      %5937 = vmatprep.subr.bf16.mxu0 0
      %5938 = vmatpush1.bf16.msra.mxu0 0
      %5939 = vmatprep.subr.bf16.mxu0 0
      %5940 = vmatpush1.bf16.msra.mxu0 0
      %5941 = vmatprep.subr.bf16.mxu0 0
      %5942 = vmatpush1.bf16.msra.mxu0 0
      %5943 = vmatprep.subr.bf16.mxu0 0
      %5944 = vmatpush1.bf16.msra.mxu0 0
      %5945 = vmatprep.mubr.bf16.mxu0 0
      %5946 = vmatmul.mubr.bf16.gmra.mrb[0].mxu0 %v5868
      %v5947 = vpop.f32.mrb[0].mxu0
      %v5948 = vadd.f32 0.0, %v5947
      %v5949 = vpop.f32.mrb[0].mxu0
      %v5950 = vadd.f32 0.0, %v5949
      %v5951 = vpop.f32.mrb[0].mxu0
      %v5952 = vadd.f32 0.0, %v5951
      %v5953 = vpop.f32.mrb[0].mxu0
      %v5954 = vadd.f32 0.0, %v5953
      %5955 = vdwg.mxu0
      %5956 = vmatprep.subr.bf16.mxu0 %v4737
      %5957 = vmatpush1.bf16.msra.mxu0 %v4736
      %5958 = vmatprep.subr.bf16.mxu0 0
      %5959 = vmatpush1.bf16.msra.mxu0 0
      %5960 = vmatprep.subr.bf16.mxu0 0
      %5961 = vmatpush1.bf16.msra.mxu0 0
      %5962 = vmatprep.subr.bf16.mxu0 0
      %5963 = vmatpush1.bf16.msra.mxu0 0
      %5964 = vmatprep.subr.bf16.mxu0 0
      %5965 = vmatpush1.bf16.msra.mxu0 0
      %5966 = vmatprep.subr.bf16.mxu0 0
      %5967 = vmatpush1.bf16.msra.mxu0 0
      %5968 = vmatprep.subr.bf16.mxu0 0
      %5969 = vmatpush1.bf16.msra.mxu0 0
      %5970 = vmatprep.subr.bf16.mxu0 0
      %5971 = vmatpush1.bf16.msra.mxu0 0
      %5972 = vmatprep.subr.bf16.mxu0 0
      %5973 = vmatpush1.bf16.msra.mxu0 0
      %5974 = vmatprep.subr.bf16.mxu0 0
      %5975 = vmatpush1.bf16.msra.mxu0 0
      %5976 = vmatprep.subr.bf16.mxu0 0
      %5977 = vmatpush1.bf16.msra.mxu0 0
      %5978 = vmatprep.subr.bf16.mxu0 0
      %5979 = vmatpush1.bf16.msra.mxu0 0
      %5980 = vmatprep.subr.bf16.mxu0 0
      %5981 = vmatpush1.bf16.msra.mxu0 0
      %5982 = vmatprep.subr.bf16.mxu0 0
      %5983 = vmatpush1.bf16.msra.mxu0 0
      %5984 = vmatprep.subr.bf16.mxu0 0
      %5985 = vmatpush1.bf16.msra.mxu0 0
      %5986 = vmatprep.subr.bf16.mxu0 0
      %5987 = vmatpush1.bf16.msra.mxu0 0
      %5988 = vmatprep.mubr.bf16.mxu0 0
      %5989 = vmatmul.mubr.bf16.gmra.mrb[0].mxu0 %v5868
      %v5990 = vpop.f32.mrb[0].mxu0
      %v5991 = vadd.f32 0.0, %v5990
      %v5992 = vpop.f32.mrb[0].mxu0
      %v5993 = vadd.f32 0.0, %v5992
      %v5994 = vpop.f32.mrb[0].mxu0
      %v5995 = vadd.f32 0.0, %v5994
      %v5996 = vpop.f32.mrb[0].mxu0
      %v5997 = vadd.f32 0.0, %v5996
      %5998 = vdwg.mxu0
      %5999 = vmatprep.subr.bf16.mxu0 %v4739
      %6000 = vmatpush1.bf16.msra.mxu0 %v4738
      %6001 = vmatprep.subr.bf16.mxu0 0
      %6002 = vmatpush1.bf16.msra.mxu0 0
      %6003 = vmatprep.subr.bf16.mxu0 0
      %6004 = vmatpush1.bf16.msra.mxu0 0
      %6005 = vmatprep.subr.bf16.mxu0 0
      %6006 = vmatpush1.bf16.msra.mxu0 0
      %6007 = vmatprep.subr.bf16.mxu0 0
      %6008 = vmatpush1.bf16.msra.mxu0 0
      %6009 = vmatprep.subr.bf16.mxu0 0
      %6010 = vmatpush1.bf16.msra.mxu0 0
      %6011 = vmatprep.subr.bf16.mxu0 0
      %6012 = vmatpush1.bf16.msra.mxu0 0
      %6013 = vmatprep.subr.bf16.mxu0 0
      %6014 = vmatpush1.bf16.msra.mxu0 0
      %6015 = vmatprep.subr.bf16.mxu0 0
      %6016 = vmatpush1.bf16.msra.mxu0 0
      %6017 = vmatprep.subr.bf16.mxu0 0
      %6018 = vmatpush1.bf16.msra.mxu0 0
      %6019 = vmatprep.subr.bf16.mxu0 0
      %6020 = vmatpush1.bf16.msra.mxu0 0
      %6021 = vmatprep.subr.bf16.mxu0 0
      %6022 = vmatpush1.bf16.msra.mxu0 0
      %6023 = vmatprep.subr.bf16.mxu0 0
      %6024 = vmatpush1.bf16.msra.mxu0 0
      %6025 = vmatprep.subr.bf16.mxu0 0
      %6026 = vmatpush1.bf16.msra.mxu0 0
      %6027 = vmatprep.subr.bf16.mxu0 0
      %6028 = vmatpush1.bf16.msra.mxu0 0
      %6029 = vmatprep.subr.bf16.mxu0 0
      %6030 = vmatpush1.bf16.msra.mxu0 0
      %6031 = vmatprep.mubr.bf16.mxu0 0
      %6032 = vmatmul.mubr.bf16.gmra.mrb[0].mxu0 %v5868
      %v6033 = vpop.f32.mrb[0].mxu0
      %v6034 = vadd.f32 0.0, %v6033
      %v6035 = vpop.f32.mrb[0].mxu0
      %v6036 = vadd.f32 0.0, %v6035
      %v6037 = vpop.f32.mrb[0].mxu0
      %v6038 = vadd.f32 0.0, %v6037
      %v6039 = vpop.f32.mrb[0].mxu0
      %v6040 = vadd.f32 0.0, %v6039
      %6041 = vdwg.mxu0
      %6042 = vmatprep.subr.bf16.mxu0 %v4741
      %6043 = vmatpush1.bf16.msra.mxu0 %v4740
      %6044 = vmatprep.subr.bf16.mxu0 0
      %6045 = vmatpush1.bf16.msra.mxu0 0
      %6046 = vmatprep.subr.bf16.mxu0 0
      %6047 = vmatpush1.bf16.msra.mxu0 0
      %6048 = vmatprep.subr.bf16.mxu0 0
      %6049 = vmatpush1.bf16.msra.mxu0 0
      %6050 = vmatprep.subr.bf16.mxu0 0
      %6051 = vmatpush1.bf16.msra.mxu0 0
      %6052 = vmatprep.subr.bf16.mxu0 0
      %6053 = vmatpush1.bf16.msra.mxu0 0
      %6054 = vmatprep.subr.bf16.mxu0 0
      %6055 = vmatpush1.bf16.msra.mxu0 0
      %6056 = vmatprep.subr.bf16.mxu0 0
      %6057 = vmatpush1.bf16.msra.mxu0 0
      %6058 = vmatprep.subr.bf16.mxu0 0
      %6059 = vmatpush1.bf16.msra.mxu0 0
      %6060 = vmatprep.subr.bf16.mxu0 0
      %6061 = vmatpush1.bf16.msra.mxu0 0
      %6062 = vmatprep.subr.bf16.mxu0 0
      %6063 = vmatpush1.bf16.msra.mxu0 0
      %6064 = vmatprep.subr.bf16.mxu0 0
      %6065 = vmatpush1.bf16.msra.mxu0 0
      %6066 = vmatprep.subr.bf16.mxu0 0
      %6067 = vmatpush1.bf16.msra.mxu0 0
      %6068 = vmatprep.subr.bf16.mxu0 0
      %6069 = vmatpush1.bf16.msra.mxu0 0
      %6070 = vmatprep.subr.bf16.mxu0 0
      %6071 = vmatpush1.bf16.msra.mxu0 0
      %6072 = vmatprep.subr.bf16.mxu0 0
      %6073 = vmatpush1.bf16.msra.mxu0 0
      %6074 = vmatprep.mubr.bf16.mxu0 0
      %6075 = vmatmul.mubr.bf16.gmra.mrb[0].mxu0 %v5868
      %v6076 = vpop.f32.mrb[0].mxu0
      %v6077 = vadd.f32 0.0, %v6076
      %v6078 = vpop.f32.mrb[0].mxu0
      %v6079 = vadd.f32 0.0, %v6078
      %v6080 = vpop.f32.mrb[0].mxu0
      %v6081 = vadd.f32 0.0, %v6080
      %v6082 = vpop.f32.mrb[0].mxu0
      %v6083 = vadd.f32 0.0, %v6082
      %6084 = vdwg.mxu0
      %v6085 = vadd.f32 %v5840, %v5905
      %v6086 = vadd.f32 %v5841, %v5907
      %v6087 = vadd.f32 %v5842, %v5948
      %v6088 = vadd.f32 %v5843, %v5950
      %v6089 = vadd.f32 %v5844, %v5991
      %v6090 = vadd.f32 %v5845, %v5993
      %v6091 = vadd.f32 %v5846, %v6034
      %v6092 = vadd.f32 %v5847, %v6036
      %v6093 = vadd.f32 %v5848, %v6077
      %v6094 = vadd.f32 %v5849, %v6079
      %v6095 = vadd.f32 %v5850, %v5909
      %v6096 = vadd.f32 %v5851, %v5911
      %v6097 = vadd.f32 %v5852, %v5952
      %v6098 = vadd.f32 %v5853, %v5954
      %v6099 = vadd.f32 %v5854, %v5995
      %v6100 = vadd.f32 %v5855, %v5997
      %v6101 = vadd.f32 %v5856, %v6038
      %v6102 = vadd.f32 %v5857, %v6040
      %v6103 = vadd.f32 %v5858, %v6081
      %v6104 = vadd.f32 %v5859, %v6083
      %v6105 = vld [vmem:[%s5 + $0x28] sm:$0xf]
      %v6106 = vld [vmem:[%s5 + $0x2c] sm:$0xf]
      %v6107 = vld [vmem:[#allocation3 + $0x8] sm:$0xff]
      %v6108 = vld [vmem:[#allocation3 + $0x10] sm:$0xff]
      %v6109 = vld [vmem:[#allocation3 + $0x18] sm:$0xff]
      %v6110 = vld [vmem:[#allocation3 + $0x20] sm:$0xff]
      %v6111 = vld [vmem:[#allocation3 + $0x28] sm:$0xff]
      %v6112 = vld [vmem:[#allocation3 + $0x30] sm:$0xff]
      %v6113 = vld [vmem:[#allocation3 + $0x38] sm:$0xff]
      %v6114 = vld [vmem:[#allocation3 + $0x40] sm:$0xff]
      %v6115 = vld [vmem:[#allocation3 + $0x48] sm:$0xff]
      %v6116 = vld [vmem:[#allocation3 + $0x50] sm:$0xff]
      %v6117 = vld [vmem:[#allocation3 + $0x58] sm:$0xff]
      %v6120 = vunpack.c.l.b16 %v6105
      %v6121 = vunpack.c.l.b16 %v6106
      %v6122 = vpack.c.b16 %v6121, %v6120
      %6134 = vrot.lane.b32.xlu0 %v6107, 127
      %v6135 = vpop.permute.xlu0 %6134
      %6136 = vrot.lane.b32.xlu0 %v6108, 127
      %v6137 = vpop.permute.xlu0 %6136
      %6138 = vrot.lane.b32.xlu0 %v6109, 127
      %v6139 = vpop.permute.xlu0 %6138
      %6140 = vrot.lane.b32.xlu0 %v6110, 127
      %v6141 = vpop.permute.xlu0 %6140
      %6142 = vrot.lane.b32.xlu0 %v6111, 127
      %v6143 = vpop.permute.xlu0 %6142
      %6144 = vrot.lane.b32.xlu0 %v6112, 127
      %v6145 = vpop.permute.xlu0 %6144
      %6146 = vrot.lane.b32.xlu0 %v6113, 127
      %v6147 = vpop.permute.xlu0 %6146
      %6148 = vrot.lane.b32.xlu0 %v6114, 127
      %v6149 = vpop.permute.xlu0 %6148
      %6150 = vrot.lane.b32.xlu0 %v6115, 127
      %v6151 = vpop.permute.xlu0 %6150
      %6152 = vrot.lane.b32.xlu0 %v6116, 127
      %v6153 = vpop.permute.xlu0 %6152
      %6154 = vrot.lane.b32.xlu0 %v6117, 127
      %v6155 = vpop.permute.xlu0 %6154
      %v6156 = vsel %vm3282, %v6135, %v6137
      %v6157 = vsel %vm3282, %v6137, %v6139
      %v6158 = vsel %vm3282, %v6139, %v6141
      %v6159 = vsel %vm3282, %v6141, %v6143
      %v6160 = vsel %vm3282, %v6143, %v6145
      %v6161 = vsel %vm3282, %v6145, %v6147
      %v6162 = vsel %vm3282, %v6147, %v6149
      %v6163 = vsel %vm3282, %v6149, %v6151
      %v6164 = vsel %vm3282, %v6151, %v6153
      %v6165 = vsel %vm3282, %v6153, %v6155
      %v6177 = vsel %vm4802, %v6122, 0
      %6179 = vmatprep.subr.bf16.mxu0 %v6157
      %6180 = vmatpush1.bf16.msra.mxu0 %v6156
      %6181 = vmatprep.subr.bf16.mxu0 0
      %6182 = vmatpush1.bf16.msra.mxu0 0
      %6183 = vmatprep.subr.bf16.mxu0 0
      %6184 = vmatpush1.bf16.msra.mxu0 0
      %6185 = vmatprep.subr.bf16.mxu0 0
      %6186 = vmatpush1.bf16.msra.mxu0 0
      %6187 = vmatprep.subr.bf16.mxu0 0
      %6188 = vmatpush1.bf16.msra.mxu0 0
      %6189 = vmatprep.subr.bf16.mxu0 0
      %6190 = vmatpush1.bf16.msra.mxu0 0
      %6191 = vmatprep.subr.bf16.mxu0 0
      %6192 = vmatpush1.bf16.msra.mxu0 0
      %6193 = vmatprep.subr.bf16.mxu0 0
      %6194 = vmatpush1.bf16.msra.mxu0 0
      %6195 = vmatprep.subr.bf16.mxu0 0
      %6196 = vmatpush1.bf16.msra.mxu0 0
      %6197 = vmatprep.subr.bf16.mxu0 0
      %6198 = vmatpush1.bf16.msra.mxu0 0
      %6199 = vmatprep.subr.bf16.mxu0 0
      %6200 = vmatpush1.bf16.msra.mxu0 0
      %6201 = vmatprep.subr.bf16.mxu0 0
      %6202 = vmatpush1.bf16.msra.mxu0 0
      %6203 = vmatprep.subr.bf16.mxu0 0
      %6204 = vmatpush1.bf16.msra.mxu0 0
      %6205 = vmatprep.subr.bf16.mxu0 0
      %6206 = vmatpush1.bf16.msra.mxu0 0
      %6207 = vmatprep.subr.bf16.mxu0 0
      %6208 = vmatpush1.bf16.msra.mxu0 0
      %6209 = vmatprep.subr.bf16.mxu0 0
      %6210 = vmatpush1.bf16.msra.mxu0 0
      %6211 = vmatprep.mubr.bf16.mxu0 0
      %6212 = vmatmul.mubr.bf16.gmra.mrb[0].mxu0 %v6177
      %v6213 = vpop.f32.mrb[0].mxu0
      %v6214 = vadd.f32 0.0, %v6213
      %v6215 = vpop.f32.mrb[0].mxu0
      %v6216 = vadd.f32 0.0, %v6215
      %v6217 = vpop.f32.mrb[0].mxu0
      %v6218 = vadd.f32 0.0, %v6217
      %v6219 = vpop.f32.mrb[0].mxu0
      %v6220 = vadd.f32 0.0, %v6219
      %6221 = vdwg.mxu0
      %6222 = vmatprep.subr.bf16.mxu0 %v6159
      %6223 = vmatpush1.bf16.msra.mxu0 %v6158
      %6224 = vmatprep.subr.bf16.mxu0 0
      %6225 = vmatpush1.bf16.msra.mxu0 0
      %6226 = vmatprep.subr.bf16.mxu0 0
      %6227 = vmatpush1.bf16.msra.mxu0 0
      %6228 = vmatprep.subr.bf16.mxu0 0
      %6229 = vmatpush1.bf16.msra.mxu0 0
      %6230 = vmatprep.subr.bf16.mxu0 0
      %6231 = vmatpush1.bf16.msra.mxu0 0
      %6232 = vmatprep.subr.bf16.mxu0 0
      %6233 = vmatpush1.bf16.msra.mxu0 0
      %6234 = vmatprep.subr.bf16.mxu0 0
      %6235 = vmatpush1.bf16.msra.mxu0 0
      %6236 = vmatprep.subr.bf16.mxu0 0
      %6237 = vmatpush1.bf16.msra.mxu0 0
      %6238 = vmatprep.subr.bf16.mxu0 0
      %6239 = vmatpush1.bf16.msra.mxu0 0
      %6240 = vmatprep.subr.bf16.mxu0 0
      %6241 = vmatpush1.bf16.msra.mxu0 0
      %6242 = vmatprep.subr.bf16.mxu0 0
      %6243 = vmatpush1.bf16.msra.mxu0 0
      %6244 = vmatprep.subr.bf16.mxu0 0
      %6245 = vmatpush1.bf16.msra.mxu0 0
      %6246 = vmatprep.subr.bf16.mxu0 0
      %6247 = vmatpush1.bf16.msra.mxu0 0
      %6248 = vmatprep.subr.bf16.mxu0 0
      %6249 = vmatpush1.bf16.msra.mxu0 0
      %6250 = vmatprep.subr.bf16.mxu0 0
      %6251 = vmatpush1.bf16.msra.mxu0 0
      %6252 = vmatprep.subr.bf16.mxu0 0
      %6253 = vmatpush1.bf16.msra.mxu0 0
      %6254 = vmatprep.mubr.bf16.mxu0 0
      %6255 = vmatmul.mubr.bf16.gmra.mrb[0].mxu0 %v6177
      %v6256 = vpop.f32.mrb[0].mxu0
      %v6257 = vadd.f32 0.0, %v6256
      %v6258 = vpop.f32.mrb[0].mxu0
      %v6259 = vadd.f32 0.0, %v6258
      %v6260 = vpop.f32.mrb[0].mxu0
      %v6261 = vadd.f32 0.0, %v6260
      %v6262 = vpop.f32.mrb[0].mxu0
      %v6263 = vadd.f32 0.0, %v6262
      %6264 = vdwg.mxu0
      %6265 = vmatprep.subr.bf16.mxu0 %v6161
      %6266 = vmatpush1.bf16.msra.mxu0 %v6160
      %6267 = vmatprep.subr.bf16.mxu0 0
      %6268 = vmatpush1.bf16.msra.mxu0 0
      %6269 = vmatprep.subr.bf16.mxu0 0
      %6270 = vmatpush1.bf16.msra.mxu0 0
      %6271 = vmatprep.subr.bf16.mxu0 0
      %6272 = vmatpush1.bf16.msra.mxu0 0
      %6273 = vmatprep.subr.bf16.mxu0 0
      %6274 = vmatpush1.bf16.msra.mxu0 0
      %6275 = vmatprep.subr.bf16.mxu0 0
      %6276 = vmatpush1.bf16.msra.mxu0 0
      %6277 = vmatprep.subr.bf16.mxu0 0
      %6278 = vmatpush1.bf16.msra.mxu0 0
      %6279 = vmatprep.subr.bf16.mxu0 0
      %6280 = vmatpush1.bf16.msra.mxu0 0
      %6281 = vmatprep.subr.bf16.mxu0 0
      %6282 = vmatpush1.bf16.msra.mxu0 0
      %6283 = vmatprep.subr.bf16.mxu0 0
      %6284 = vmatpush1.bf16.msra.mxu0 0
      %6285 = vmatprep.subr.bf16.mxu0 0
      %6286 = vmatpush1.bf16.msra.mxu0 0
      %6287 = vmatprep.subr.bf16.mxu0 0
      %6288 = vmatpush1.bf16.msra.mxu0 0
      %6289 = vmatprep.subr.bf16.mxu0 0
      %6290 = vmatpush1.bf16.msra.mxu0 0
      %6291 = vmatprep.subr.bf16.mxu0 0
      %6292 = vmatpush1.bf16.msra.mxu0 0
      %6293 = vmatprep.subr.bf16.mxu0 0
      %6294 = vmatpush1.bf16.msra.mxu0 0
      %6295 = vmatprep.subr.bf16.mxu0 0
      %6296 = vmatpush1.bf16.msra.mxu0 0
      %6297 = vmatprep.mubr.bf16.mxu0 0
      %6298 = vmatmul.mubr.bf16.gmra.mrb[0].mxu0 %v6177
      %v6299 = vpop.f32.mrb[0].mxu0
      %v6300 = vadd.f32 0.0, %v6299
      %v6301 = vpop.f32.mrb[0].mxu0
      %v6302 = vadd.f32 0.0, %v6301
      %v6303 = vpop.f32.mrb[0].mxu0
      %v6304 = vadd.f32 0.0, %v6303
      %v6305 = vpop.f32.mrb[0].mxu0
      %v6306 = vadd.f32 0.0, %v6305
      %6307 = vdwg.mxu0
      %6308 = vmatprep.subr.bf16.mxu0 %v6163
      %6309 = vmatpush1.bf16.msra.mxu0 %v6162
      %6310 = vmatprep.subr.bf16.mxu0 0
      %6311 = vmatpush1.bf16.msra.mxu0 0
      %6312 = vmatprep.subr.bf16.mxu0 0
      %6313 = vmatpush1.bf16.msra.mxu0 0
      %6314 = vmatprep.subr.bf16.mxu0 0
      %6315 = vmatpush1.bf16.msra.mxu0 0
      %6316 = vmatprep.subr.bf16.mxu0 0
      %6317 = vmatpush1.bf16.msra.mxu0 0
      %6318 = vmatprep.subr.bf16.mxu0 0
      %6319 = vmatpush1.bf16.msra.mxu0 0
      %6320 = vmatprep.subr.bf16.mxu0 0
      %6321 = vmatpush1.bf16.msra.mxu0 0
      %6322 = vmatprep.subr.bf16.mxu0 0
      %6323 = vmatpush1.bf16.msra.mxu0 0
      %6324 = vmatprep.subr.bf16.mxu0 0
      %6325 = vmatpush1.bf16.msra.mxu0 0
      %6326 = vmatprep.subr.bf16.mxu0 0
      %6327 = vmatpush1.bf16.msra.mxu0 0
      %6328 = vmatprep.subr.bf16.mxu0 0
      %6329 = vmatpush1.bf16.msra.mxu0 0
      %6330 = vmatprep.subr.bf16.mxu0 0
      %6331 = vmatpush1.bf16.msra.mxu0 0
      %6332 = vmatprep.subr.bf16.mxu0 0
      %6333 = vmatpush1.bf16.msra.mxu0 0
      %6334 = vmatprep.subr.bf16.mxu0 0
      %6335 = vmatpush1.bf16.msra.mxu0 0
      %6336 = vmatprep.subr.bf16.mxu0 0
      %6337 = vmatpush1.bf16.msra.mxu0 0
      %6338 = vmatprep.subr.bf16.mxu0 0
      %6339 = vmatpush1.bf16.msra.mxu0 0
      %6340 = vmatprep.mubr.bf16.mxu0 0
      %6341 = vmatmul.mubr.bf16.gmra.mrb[0].mxu0 %v6177
      %v6342 = vpop.f32.mrb[0].mxu0
      %v6343 = vadd.f32 0.0, %v6342
      %v6344 = vpop.f32.mrb[0].mxu0
      %v6345 = vadd.f32 0.0, %v6344
      %v6346 = vpop.f32.mrb[0].mxu0
      %v6347 = vadd.f32 0.0, %v6346
      %v6348 = vpop.f32.mrb[0].mxu0
      %v6349 = vadd.f32 0.0, %v6348
      %6350 = vdwg.mxu0
      %6351 = vmatprep.subr.bf16.mxu0 %v6165
      %6352 = vmatpush1.bf16.msra.mxu0 %v6164
      %6353 = vmatprep.subr.bf16.mxu0 0
      %6354 = vmatpush1.bf16.msra.mxu0 0
      %6355 = vmatprep.subr.bf16.mxu0 0
      %6356 = vmatpush1.bf16.msra.mxu0 0
      %6357 = vmatprep.subr.bf16.mxu0 0
      %6358 = vmatpush1.bf16.msra.mxu0 0
      %6359 = vmatprep.subr.bf16.mxu0 0
      %6360 = vmatpush1.bf16.msra.mxu0 0
      %6361 = vmatprep.subr.bf16.mxu0 0
      %6362 = vmatpush1.bf16.msra.mxu0 0
      %6363 = vmatprep.subr.bf16.mxu0 0
      %6364 = vmatpush1.bf16.msra.mxu0 0
      %6365 = vmatprep.subr.bf16.mxu0 0
      %6366 = vmatpush1.bf16.msra.mxu0 0
      %6367 = vmatprep.subr.bf16.mxu0 0
      %6368 = vmatpush1.bf16.msra.mxu0 0
      %6369 = vmatprep.subr.bf16.mxu0 0
      %6370 = vmatpush1.bf16.msra.mxu0 0
      %6371 = vmatprep.subr.bf16.mxu0 0
      %6372 = vmatpush1.bf16.msra.mxu0 0
      %6373 = vmatprep.subr.bf16.mxu0 0
      %6374 = vmatpush1.bf16.msra.mxu0 0
      %6375 = vmatprep.subr.bf16.mxu0 0
      %6376 = vmatpush1.bf16.msra.mxu0 0
      %6377 = vmatprep.subr.bf16.mxu0 0
      %6378 = vmatpush1.bf16.msra.mxu0 0
      %6379 = vmatprep.subr.bf16.mxu0 0
      %6380 = vmatpush1.bf16.msra.mxu0 0
      %6381 = vmatprep.subr.bf16.mxu0 0
      %6382 = vmatpush1.bf16.msra.mxu0 0
      %6383 = vmatprep.mubr.bf16.mxu0 0
      %6384 = vmatmul.mubr.bf16.gmra.mrb[0].mxu0 %v6177
      %v6385 = vpop.f32.mrb[0].mxu0
      %v6386 = vadd.f32 0.0, %v6385
      %v6387 = vpop.f32.mrb[0].mxu0
      %v6388 = vadd.f32 0.0, %v6387
      %v6389 = vpop.f32.mrb[0].mxu0
      %v6390 = vadd.f32 0.0, %v6389
      %v6391 = vpop.f32.mrb[0].mxu0
      %v6392 = vadd.f32 0.0, %v6391
      %6393 = vdwg.mxu0
      %v6394 = vadd.f32 %v6085, %v6214
      %v6395 = vadd.f32 %v6086, %v6216
      %v6396 = vadd.f32 %v6087, %v6257
      %v6397 = vadd.f32 %v6088, %v6259
      %v6398 = vadd.f32 %v6089, %v6300
      %v6399 = vadd.f32 %v6090, %v6302
      %v6400 = vadd.f32 %v6091, %v6343
      %v6401 = vadd.f32 %v6092, %v6345
      %v6402 = vadd.f32 %v6093, %v6386
      %v6403 = vadd.f32 %v6094, %v6388
      %v6404 = vadd.f32 %v6095, %v6218
      %v6405 = vadd.f32 %v6096, %v6220
      %v6406 = vadd.f32 %v6097, %v6261
      %v6407 = vadd.f32 %v6098, %v6263
      %v6408 = vadd.f32 %v6099, %v6304
      %v6409 = vadd.f32 %v6100, %v6306
      %v6410 = vadd.f32 %v6101, %v6347
      %v6411 = vadd.f32 %v6102, %v6349
      %v6412 = vadd.f32 %v6103, %v6390
      %v6413 = vadd.f32 %v6104, %v6392
      %v6414 = vld [vmem:[%s5 + $0x30] sm:$0xf]
      %v6415 = vld [vmem:[%s5 + $0x34] sm:$0xf]
      %v6418 = vunpack.c.l.b16 %v6414
      %v6419 = vunpack.c.l.b16 %v6415
      %v6420 = vpack.c.b16 %v6419, %v6418
      %6421 = vrot.lane.b32.xlu0 %v6107, 95
      %v6422 = vpop.permute.xlu0 %6421
      %6423 = vrot.lane.b32.xlu0 %v6108, 95
      %v6424 = vpop.permute.xlu0 %6423
      %6425 = vrot.lane.b32.xlu0 %v6109, 95
      %v6426 = vpop.permute.xlu0 %6425
      %6427 = vrot.lane.b32.xlu0 %v6110, 95
      %v6428 = vpop.permute.xlu0 %6427
      %6429 = vrot.lane.b32.xlu0 %v6111, 95
      %v6430 = vpop.permute.xlu0 %6429
      %6431 = vrot.lane.b32.xlu0 %v6112, 95
      %v6432 = vpop.permute.xlu0 %6431
      %6433 = vrot.lane.b32.xlu0 %v6113, 95
      %v6434 = vpop.permute.xlu0 %6433
      %6435 = vrot.lane.b32.xlu0 %v6114, 95
      %v6436 = vpop.permute.xlu0 %6435
      %6437 = vrot.lane.b32.xlu0 %v6115, 95
      %v6438 = vpop.permute.xlu0 %6437
      %6439 = vrot.lane.b32.xlu0 %v6116, 95
      %v6440 = vpop.permute.xlu0 %6439
      %6441 = vrot.lane.b32.xlu0 %v6117, 95
      %v6442 = vpop.permute.xlu0 %6441
      %v6443 = vsel %vm3612, %v6422, %v6424
      %v6444 = vsel %vm3612, %v6424, %v6426
      %v6445 = vsel %vm3612, %v6426, %v6428
      %v6446 = vsel %vm3612, %v6428, %v6430
      %v6447 = vsel %vm3612, %v6430, %v6432
      %v6448 = vsel %vm3612, %v6432, %v6434
      %v6449 = vsel %vm3612, %v6434, %v6436
      %v6450 = vsel %vm3612, %v6436, %v6438
      %v6451 = vsel %vm3612, %v6438, %v6440
      %v6452 = vsel %vm3612, %v6440, %v6442
      %v6464 = vsel %vm4802, %v6420, 0
      %6466 = vmatprep.subr.bf16.mxu0 %v6444
      %6467 = vmatpush1.bf16.msra.mxu0 %v6443
      %6468 = vmatprep.subr.bf16.mxu0 0
      %6469 = vmatpush1.bf16.msra.mxu0 0
      %6470 = vmatprep.subr.bf16.mxu0 0
      %6471 = vmatpush1.bf16.msra.mxu0 0
      %6472 = vmatprep.subr.bf16.mxu0 0
      %6473 = vmatpush1.bf16.msra.mxu0 0
      %6474 = vmatprep.subr.bf16.mxu0 0
      %6475 = vmatpush1.bf16.msra.mxu0 0
      %6476 = vmatprep.subr.bf16.mxu0 0
      %6477 = vmatpush1.bf16.msra.mxu0 0
      %6478 = vmatprep.subr.bf16.mxu0 0
      %6479 = vmatpush1.bf16.msra.mxu0 0
      %6480 = vmatprep.subr.bf16.mxu0 0
      %6481 = vmatpush1.bf16.msra.mxu0 0
      %6482 = vmatprep.subr.bf16.mxu0 0
      %6483 = vmatpush1.bf16.msra.mxu0 0
      %6484 = vmatprep.subr.bf16.mxu0 0
      %6485 = vmatpush1.bf16.msra.mxu0 0
      %6486 = vmatprep.subr.bf16.mxu0 0
      %6487 = vmatpush1.bf16.msra.mxu0 0
      %6488 = vmatprep.subr.bf16.mxu0 0
      %6489 = vmatpush1.bf16.msra.mxu0 0
      %6490 = vmatprep.subr.bf16.mxu0 0
      %6491 = vmatpush1.bf16.msra.mxu0 0
      %6492 = vmatprep.subr.bf16.mxu0 0
      %6493 = vmatpush1.bf16.msra.mxu0 0
      %6494 = vmatprep.subr.bf16.mxu0 0
      %6495 = vmatpush1.bf16.msra.mxu0 0
      %6496 = vmatprep.subr.bf16.mxu0 0
      %6497 = vmatpush1.bf16.msra.mxu0 0
      %6498 = vmatprep.mubr.bf16.mxu0 0
      %6499 = vmatmul.mubr.bf16.gmra.mrb[0].mxu0 %v6464
      %v6500 = vpop.f32.mrb[0].mxu0
      %v6501 = vadd.f32 0.0, %v6500
      %v6502 = vpop.f32.mrb[0].mxu0
      %v6503 = vadd.f32 0.0, %v6502
      %v6504 = vpop.f32.mrb[0].mxu0
      %v6505 = vadd.f32 0.0, %v6504
      %v6506 = vpop.f32.mrb[0].mxu0
      %v6507 = vadd.f32 0.0, %v6506
      %6508 = vdwg.mxu0
      %6509 = vmatprep.subr.bf16.mxu0 %v6446
      %6510 = vmatpush1.bf16.msra.mxu0 %v6445
      %6511 = vmatprep.subr.bf16.mxu0 0
      %6512 = vmatpush1.bf16.msra.mxu0 0
      %6513 = vmatprep.subr.bf16.mxu0 0
      %6514 = vmatpush1.bf16.msra.mxu0 0
      %6515 = vmatprep.subr.bf16.mxu0 0
      %6516 = vmatpush1.bf16.msra.mxu0 0
      %6517 = vmatprep.subr.bf16.mxu0 0
      %6518 = vmatpush1.bf16.msra.mxu0 0
      %6519 = vmatprep.subr.bf16.mxu0 0
      %6520 = vmatpush1.bf16.msra.mxu0 0
      %6521 = vmatprep.subr.bf16.mxu0 0
      %6522 = vmatpush1.bf16.msra.mxu0 0
      %6523 = vmatprep.subr.bf16.mxu0 0
      %6524 = vmatpush1.bf16.msra.mxu0 0
      %6525 = vmatprep.subr.bf16.mxu0 0
      %6526 = vmatpush1.bf16.msra.mxu0 0
      %6527 = vmatprep.subr.bf16.mxu0 0
      %6528 = vmatpush1.bf16.msra.mxu0 0
      %6529 = vmatprep.subr.bf16.mxu0 0
      %6530 = vmatpush1.bf16.msra.mxu0 0
      %6531 = vmatprep.subr.bf16.mxu0 0
      %6532 = vmatpush1.bf16.msra.mxu0 0
      %6533 = vmatprep.subr.bf16.mxu0 0
      %6534 = vmatpush1.bf16.msra.mxu0 0
      %6535 = vmatprep.subr.bf16.mxu0 0
      %6536 = vmatpush1.bf16.msra.mxu0 0
      %6537 = vmatprep.subr.bf16.mxu0 0
      %6538 = vmatpush1.bf16.msra.mxu0 0
      %6539 = vmatprep.subr.bf16.mxu0 0
      %6540 = vmatpush1.bf16.msra.mxu0 0
      %6541 = vmatprep.mubr.bf16.mxu0 0
      %6542 = vmatmul.mubr.bf16.gmra.mrb[0].mxu0 %v6464
      %v6543 = vpop.f32.mrb[0].mxu0
      %v6544 = vadd.f32 0.0, %v6543
      %v6545 = vpop.f32.mrb[0].mxu0
      %v6546 = vadd.f32 0.0, %v6545
      %v6547 = vpop.f32.mrb[0].mxu0
      %v6548 = vadd.f32 0.0, %v6547
      %v6549 = vpop.f32.mrb[0].mxu0
      %v6550 = vadd.f32 0.0, %v6549
      %6551 = vdwg.mxu0
      %6552 = vmatprep.subr.bf16.mxu0 %v6448
      %6553 = vmatpush1.bf16.msra.mxu0 %v6447
      %6554 = vmatprep.subr.bf16.mxu0 0
      %6555 = vmatpush1.bf16.msra.mxu0 0
      %6556 = vmatprep.subr.bf16.mxu0 0
      %6557 = vmatpush1.bf16.msra.mxu0 0
      %6558 = vmatprep.subr.bf16.mxu0 0
      %6559 = vmatpush1.bf16.msra.mxu0 0
      %6560 = vmatprep.subr.bf16.mxu0 0
      %6561 = vmatpush1.bf16.msra.mxu0 0
      %6562 = vmatprep.subr.bf16.mxu0 0
      %6563 = vmatpush1.bf16.msra.mxu0 0
      %6564 = vmatprep.subr.bf16.mxu0 0
      %6565 = vmatpush1.bf16.msra.mxu0 0
      %6566 = vmatprep.subr.bf16.mxu0 0
      %6567 = vmatpush1.bf16.msra.mxu0 0
      %6568 = vmatprep.subr.bf16.mxu0 0
      %6569 = vmatpush1.bf16.msra.mxu0 0
      %6570 = vmatprep.subr.bf16.mxu0 0
      %6571 = vmatpush1.bf16.msra.mxu0 0
      %6572 = vmatprep.subr.bf16.mxu0 0
      %6573 = vmatpush1.bf16.msra.mxu0 0
      %6574 = vmatprep.subr.bf16.mxu0 0
      %6575 = vmatpush1.bf16.msra.mxu0 0
      %6576 = vmatprep.subr.bf16.mxu0 0
      %6577 = vmatpush1.bf16.msra.mxu0 0
      %6578 = vmatprep.subr.bf16.mxu0 0
      %6579 = vmatpush1.bf16.msra.mxu0 0
      %6580 = vmatprep.subr.bf16.mxu0 0
      %6581 = vmatpush1.bf16.msra.mxu0 0
      %6582 = vmatprep.subr.bf16.mxu0 0
      %6583 = vmatpush1.bf16.msra.mxu0 0
      %6584 = vmatprep.mubr.bf16.mxu0 0
      %6585 = vmatmul.mubr.bf16.gmra.mrb[0].mxu0 %v6464
      %v6586 = vpop.f32.mrb[0].mxu0
      %v6587 = vadd.f32 0.0, %v6586
      %v6588 = vpop.f32.mrb[0].mxu0
      %v6589 = vadd.f32 0.0, %v6588
      %v6590 = vpop.f32.mrb[0].mxu0
      %v6591 = vadd.f32 0.0, %v6590
      %v6592 = vpop.f32.mrb[0].mxu0
      %v6593 = vadd.f32 0.0, %v6592
      %6594 = vdwg.mxu0
      %6595 = vmatprep.subr.bf16.mxu0 %v6450
      %6596 = vmatpush1.bf16.msra.mxu0 %v6449
      %6597 = vmatprep.subr.bf16.mxu0 0
      %6598 = vmatpush1.bf16.msra.mxu0 0
      %6599 = vmatprep.subr.bf16.mxu0 0
      %6600 = vmatpush1.bf16.msra.mxu0 0
      %6601 = vmatprep.subr.bf16.mxu0 0
      %6602 = vmatpush1.bf16.msra.mxu0 0
      %6603 = vmatprep.subr.bf16.mxu0 0
      %6604 = vmatpush1.bf16.msra.mxu0 0
      %6605 = vmatprep.subr.bf16.mxu0 0
      %6606 = vmatpush1.bf16.msra.mxu0 0
      %6607 = vmatprep.subr.bf16.mxu0 0
      %6608 = vmatpush1.bf16.msra.mxu0 0
      %6609 = vmatprep.subr.bf16.mxu0 0
      %6610 = vmatpush1.bf16.msra.mxu0 0
      %6611 = vmatprep.subr.bf16.mxu0 0
      %6612 = vmatpush1.bf16.msra.mxu0 0
      %6613 = vmatprep.subr.bf16.mxu0 0
      %6614 = vmatpush1.bf16.msra.mxu0 0
      %6615 = vmatprep.subr.bf16.mxu0 0
      %6616 = vmatpush1.bf16.msra.mxu0 0
      %6617 = vmatprep.subr.bf16.mxu0 0
      %6618 = vmatpush1.bf16.msra.mxu0 0
      %6619 = vmatprep.subr.bf16.mxu0 0
      %6620 = vmatpush1.bf16.msra.mxu0 0
      %6621 = vmatprep.subr.bf16.mxu0 0
      %6622 = vmatpush1.bf16.msra.mxu0 0
      %6623 = vmatprep.subr.bf16.mxu0 0
      %6624 = vmatpush1.bf16.msra.mxu0 0
      %6625 = vmatprep.subr.bf16.mxu0 0
      %6626 = vmatpush1.bf16.msra.mxu0 0
      %6627 = vmatprep.mubr.bf16.mxu0 0
      %6628 = vmatmul.mubr.bf16.gmra.mrb[0].mxu0 %v6464
      %v6629 = vpop.f32.mrb[0].mxu0
      %v6630 = vadd.f32 0.0, %v6629
      %v6631 = vpop.f32.mrb[0].mxu0
      %v6632 = vadd.f32 0.0, %v6631
      %v6633 = vpop.f32.mrb[0].mxu0
      %v6634 = vadd.f32 0.0, %v6633
      %v6635 = vpop.f32.mrb[0].mxu0
      %v6636 = vadd.f32 0.0, %v6635
      %6637 = vdwg.mxu0
      %6638 = vmatprep.subr.bf16.mxu0 %v6452
      %6639 = vmatpush1.bf16.msra.mxu0 %v6451
      %6640 = vmatprep.subr.bf16.mxu0 0
      %6641 = vmatpush1.bf16.msra.mxu0 0
      %6642 = vmatprep.subr.bf16.mxu0 0
      %6643 = vmatpush1.bf16.msra.mxu0 0
      %6644 = vmatprep.subr.bf16.mxu0 0
      %6645 = vmatpush1.bf16.msra.mxu0 0
      %6646 = vmatprep.subr.bf16.mxu0 0
      %6647 = vmatpush1.bf16.msra.mxu0 0
      %6648 = vmatprep.subr.bf16.mxu0 0
      %6649 = vmatpush1.bf16.msra.mxu0 0
      %6650 = vmatprep.subr.bf16.mxu0 0
      %6651 = vmatpush1.bf16.msra.mxu0 0
      %6652 = vmatprep.subr.bf16.mxu0 0
      %6653 = vmatpush1.bf16.msra.mxu0 0
      %6654 = vmatprep.subr.bf16.mxu0 0
      %6655 = vmatpush1.bf16.msra.mxu0 0
      %6656 = vmatprep.subr.bf16.mxu0 0
      %6657 = vmatpush1.bf16.msra.mxu0 0
      %6658 = vmatprep.subr.bf16.mxu0 0
      %6659 = vmatpush1.bf16.msra.mxu0 0
      %6660 = vmatprep.subr.bf16.mxu0 0
      %6661 = vmatpush1.bf16.msra.mxu0 0
      %6662 = vmatprep.subr.bf16.mxu0 0
      %6663 = vmatpush1.bf16.msra.mxu0 0
      %6664 = vmatprep.subr.bf16.mxu0 0
      %6665 = vmatpush1.bf16.msra.mxu0 0
      %6666 = vmatprep.subr.bf16.mxu0 0
      %6667 = vmatpush1.bf16.msra.mxu0 0
      %6668 = vmatprep.subr.bf16.mxu0 0
      %6669 = vmatpush1.bf16.msra.mxu0 0
      %6670 = vmatprep.mubr.bf16.mxu0 0
      %6671 = vmatmul.mubr.bf16.gmra.mrb[0].mxu0 %v6464
      %v6672 = vpop.f32.mrb[0].mxu0
      %v6673 = vadd.f32 0.0, %v6672
      %v6674 = vpop.f32.mrb[0].mxu0
      %v6675 = vadd.f32 0.0, %v6674
      %v6676 = vpop.f32.mrb[0].mxu0
      %v6677 = vadd.f32 0.0, %v6676
      %v6678 = vpop.f32.mrb[0].mxu0
      %v6679 = vadd.f32 0.0, %v6678
      %6680 = vdwg.mxu0
      %v6681 = vadd.f32 %v6394, %v6501
      %v6682 = vadd.f32 %v6395, %v6503
      %v6683 = vadd.f32 %v6396, %v6544
      %v6684 = vadd.f32 %v6397, %v6546
      %v6685 = vadd.f32 %v6398, %v6587
      %v6686 = vadd.f32 %v6399, %v6589
      %v6687 = vadd.f32 %v6400, %v6630
      %v6688 = vadd.f32 %v6401, %v6632
      %v6689 = vadd.f32 %v6402, %v6673
      %v6690 = vadd.f32 %v6403, %v6675
      %v6691 = vadd.f32 %v6404, %v6505
      %v6692 = vadd.f32 %v6405, %v6507
      %v6693 = vadd.f32 %v6406, %v6548
      %v6694 = vadd.f32 %v6407, %v6550
      %v6695 = vadd.f32 %v6408, %v6591
      %v6696 = vadd.f32 %v6409, %v6593
      %v6697 = vadd.f32 %v6410, %v6634
      %v6698 = vadd.f32 %v6411, %v6636
      %v6699 = vadd.f32 %v6412, %v6677
      %v6700 = vadd.f32 %v6413, %v6679
      %v6701 = vld [vmem:[%s5 + $0x38] sm:$0xf]
      %v6702 = vld [vmem:[%s5 + $0x3c] sm:$0xf]
      %v6705 = vunpack.c.l.b16 %v6701
      %v6706 = vunpack.c.l.b16 %v6702
      %v6707 = vpack.c.b16 %v6706, %v6705
      %6708 = vrot.lane.b32.xlu0 %v6107, 94
      %v6709 = vpop.permute.xlu0 %6708
      %6710 = vrot.lane.b32.xlu0 %v6108, 94
      %v6711 = vpop.permute.xlu0 %6710
      %6712 = vrot.lane.b32.xlu0 %v6109, 94
      %v6713 = vpop.permute.xlu0 %6712
      %6714 = vrot.lane.b32.xlu0 %v6110, 94
      %v6715 = vpop.permute.xlu0 %6714
      %6716 = vrot.lane.b32.xlu0 %v6111, 94
      %v6717 = vpop.permute.xlu0 %6716
      %6718 = vrot.lane.b32.xlu0 %v6112, 94
      %v6719 = vpop.permute.xlu0 %6718
      %6720 = vrot.lane.b32.xlu0 %v6113, 94
      %v6721 = vpop.permute.xlu0 %6720
      %6722 = vrot.lane.b32.xlu0 %v6114, 94
      %v6723 = vpop.permute.xlu0 %6722
      %6724 = vrot.lane.b32.xlu0 %v6115, 94
      %v6725 = vpop.permute.xlu0 %6724
      %6726 = vrot.lane.b32.xlu0 %v6116, 94
      %v6727 = vpop.permute.xlu0 %6726
      %6728 = vrot.lane.b32.xlu0 %v6117, 94
      %v6729 = vpop.permute.xlu0 %6728
      %v6730 = vsel %vm3942, %v6709, %v6711
      %v6731 = vsel %vm3942, %v6711, %v6713
      %v6732 = vsel %vm3942, %v6713, %v6715
      %v6733 = vsel %vm3942, %v6715, %v6717
      %v6734 = vsel %vm3942, %v6717, %v6719
      %v6735 = vsel %vm3942, %v6719, %v6721
      %v6736 = vsel %vm3942, %v6721, %v6723
      %v6737 = vsel %vm3942, %v6723, %v6725
      %v6738 = vsel %vm3942, %v6725, %v6727
      %v6739 = vsel %vm3942, %v6727, %v6729
      %v6751 = vsel %vm4802, %v6707, 0
      %6753 = vmatprep.subr.bf16.mxu0 %v6731
      %6754 = vmatpush1.bf16.msra.mxu0 %v6730
      %6755 = vmatprep.subr.bf16.mxu0 0
      %6756 = vmatpush1.bf16.msra.mxu0 0
      %6757 = vmatprep.subr.bf16.mxu0 0
      %6758 = vmatpush1.bf16.msra.mxu0 0
      %6759 = vmatprep.subr.bf16.mxu0 0
      %6760 = vmatpush1.bf16.msra.mxu0 0
      %6761 = vmatprep.subr.bf16.mxu0 0
      %6762 = vmatpush1.bf16.msra.mxu0 0
      %6763 = vmatprep.subr.bf16.mxu0 0
      %6764 = vmatpush1.bf16.msra.mxu0 0
      %6765 = vmatprep.subr.bf16.mxu0 0
      %6766 = vmatpush1.bf16.msra.mxu0 0
      %6767 = vmatprep.subr.bf16.mxu0 0
      %6768 = vmatpush1.bf16.msra.mxu0 0
      %6769 = vmatprep.subr.bf16.mxu0 0
      %6770 = vmatpush1.bf16.msra.mxu0 0
      %6771 = vmatprep.subr.bf16.mxu0 0
      %6772 = vmatpush1.bf16.msra.mxu0 0
      %6773 = vmatprep.subr.bf16.mxu0 0
      %6774 = vmatpush1.bf16.msra.mxu0 0
      %6775 = vmatprep.subr.bf16.mxu0 0
      %6776 = vmatpush1.bf16.msra.mxu0 0
      %6777 = vmatprep.subr.bf16.mxu0 0
      %6778 = vmatpush1.bf16.msra.mxu0 0
      %6779 = vmatprep.subr.bf16.mxu0 0
      %6780 = vmatpush1.bf16.msra.mxu0 0
      %6781 = vmatprep.subr.bf16.mxu0 0
      %6782 = vmatpush1.bf16.msra.mxu0 0
      %6783 = vmatprep.subr.bf16.mxu0 0
      %6784 = vmatpush1.bf16.msra.mxu0 0
      %6785 = vmatprep.mubr.bf16.mxu0 0
      %6786 = vmatmul.mubr.bf16.gmra.mrb[0].mxu0 %v6751
      %v6787 = vpop.f32.mrb[0].mxu0
      %v6788 = vadd.f32 0.0, %v6787
      %v6789 = vpop.f32.mrb[0].mxu0
      %v6790 = vadd.f32 0.0, %v6789
      %v6791 = vpop.f32.mrb[0].mxu0
      %v6792 = vadd.f32 0.0, %v6791
      %v6793 = vpop.f32.mrb[0].mxu0
      %v6794 = vadd.f32 0.0, %v6793
      %6795 = vdwg.mxu0
      %6796 = vmatprep.subr.bf16.mxu0 %v6733
      %6797 = vmatpush1.bf16.msra.mxu0 %v6732
      %6798 = vmatprep.subr.bf16.mxu0 0
      %6799 = vmatpush1.bf16.msra.mxu0 0
      %6800 = vmatprep.subr.bf16.mxu0 0
      %6801 = vmatpush1.bf16.msra.mxu0 0
      %6802 = vmatprep.subr.bf16.mxu0 0
      %6803 = vmatpush1.bf16.msra.mxu0 0
      %6804 = vmatprep.subr.bf16.mxu0 0
      %6805 = vmatpush1.bf16.msra.mxu0 0
      %6806 = vmatprep.subr.bf16.mxu0 0
      %6807 = vmatpush1.bf16.msra.mxu0 0
      %6808 = vmatprep.subr.bf16.mxu0 0
      %6809 = vmatpush1.bf16.msra.mxu0 0
      %6810 = vmatprep.subr.bf16.mxu0 0
      %6811 = vmatpush1.bf16.msra.mxu0 0
      %6812 = vmatprep.subr.bf16.mxu0 0
      %6813 = vmatpush1.bf16.msra.mxu0 0
      %6814 = vmatprep.subr.bf16.mxu0 0
      %6815 = vmatpush1.bf16.msra.mxu0 0
      %6816 = vmatprep.subr.bf16.mxu0 0
      %6817 = vmatpush1.bf16.msra.mxu0 0
      %6818 = vmatprep.subr.bf16.mxu0 0
      %6819 = vmatpush1.bf16.msra.mxu0 0
      %6820 = vmatprep.subr.bf16.mxu0 0
      %6821 = vmatpush1.bf16.msra.mxu0 0
      %6822 = vmatprep.subr.bf16.mxu0 0
      %6823 = vmatpush1.bf16.msra.mxu0 0
      %6824 = vmatprep.subr.bf16.mxu0 0
      %6825 = vmatpush1.bf16.msra.mxu0 0
      %6826 = vmatprep.subr.bf16.mxu0 0
      %6827 = vmatpush1.bf16.msra.mxu0 0
      %6828 = vmatprep.mubr.bf16.mxu0 0
      %6829 = vmatmul.mubr.bf16.gmra.mrb[0].mxu0 %v6751
      %v6830 = vpop.f32.mrb[0].mxu0
      %v6831 = vadd.f32 0.0, %v6830
      %v6832 = vpop.f32.mrb[0].mxu0
      %v6833 = vadd.f32 0.0, %v6832
      %v6834 = vpop.f32.mrb[0].mxu0
      %v6835 = vadd.f32 0.0, %v6834
      %v6836 = vpop.f32.mrb[0].mxu0
      %v6837 = vadd.f32 0.0, %v6836
      %6838 = vdwg.mxu0
      %6839 = vmatprep.subr.bf16.mxu0 %v6735
      %6840 = vmatpush1.bf16.msra.mxu0 %v6734
      %6841 = vmatprep.subr.bf16.mxu0 0
      %6842 = vmatpush1.bf16.msra.mxu0 0
      %6843 = vmatprep.subr.bf16.mxu0 0
      %6844 = vmatpush1.bf16.msra.mxu0 0
      %6845 = vmatprep.subr.bf16.mxu0 0
      %6846 = vmatpush1.bf16.msra.mxu0 0
      %6847 = vmatprep.subr.bf16.mxu0 0
      %6848 = vmatpush1.bf16.msra.mxu0 0
      %6849 = vmatprep.subr.bf16.mxu0 0
      %6850 = vmatpush1.bf16.msra.mxu0 0
      %6851 = vmatprep.subr.bf16.mxu0 0
      %6852 = vmatpush1.bf16.msra.mxu0 0
      %6853 = vmatprep.subr.bf16.mxu0 0
      %6854 = vmatpush1.bf16.msra.mxu0 0
      %6855 = vmatprep.subr.bf16.mxu0 0
      %6856 = vmatpush1.bf16.msra.mxu0 0
      %6857 = vmatprep.subr.bf16.mxu0 0
      %6858 = vmatpush1.bf16.msra.mxu0 0
      %6859 = vmatprep.subr.bf16.mxu0 0
      %6860 = vmatpush1.bf16.msra.mxu0 0
      %6861 = vmatprep.subr.bf16.mxu0 0
      %6862 = vmatpush1.bf16.msra.mxu0 0
      %6863 = vmatprep.subr.bf16.mxu0 0
      %6864 = vmatpush1.bf16.msra.mxu0 0
      %6865 = vmatprep.subr.bf16.mxu0 0
      %6866 = vmatpush1.bf16.msra.mxu0 0
      %6867 = vmatprep.subr.bf16.mxu0 0
      %6868 = vmatpush1.bf16.msra.mxu0 0
      %6869 = vmatprep.subr.bf16.mxu0 0
      %6870 = vmatpush1.bf16.msra.mxu0 0
      %6871 = vmatprep.mubr.bf16.mxu0 0
      %6872 = vmatmul.mubr.bf16.gmra.mrb[0].mxu0 %v6751
      %v6873 = vpop.f32.mrb[0].mxu0
      %v6874 = vadd.f32 0.0, %v6873
      %v6875 = vpop.f32.mrb[0].mxu0
      %v6876 = vadd.f32 0.0, %v6875
      %v6877 = vpop.f32.mrb[0].mxu0
      %v6878 = vadd.f32 0.0, %v6877
      %v6879 = vpop.f32.mrb[0].mxu0
      %v6880 = vadd.f32 0.0, %v6879
      %6881 = vdwg.mxu0
      %6882 = vmatprep.subr.bf16.mxu0 %v6737
      %6883 = vmatpush1.bf16.msra.mxu0 %v6736
      %6884 = vmatprep.subr.bf16.mxu0 0
      %6885 = vmatpush1.bf16.msra.mxu0 0
      %6886 = vmatprep.subr.bf16.mxu0 0
      %6887 = vmatpush1.bf16.msra.mxu0 0
      %6888 = vmatprep.subr.bf16.mxu0 0
      %6889 = vmatpush1.bf16.msra.mxu0 0
      %6890 = vmatprep.subr.bf16.mxu0 0
      %6891 = vmatpush1.bf16.msra.mxu0 0
      %6892 = vmatprep.subr.bf16.mxu0 0
      %6893 = vmatpush1.bf16.msra.mxu0 0
      %6894 = vmatprep.subr.bf16.mxu0 0
      %6895 = vmatpush1.bf16.msra.mxu0 0
      %6896 = vmatprep.subr.bf16.mxu0 0
      %6897 = vmatpush1.bf16.msra.mxu0 0
      %6898 = vmatprep.subr.bf16.mxu0 0
      %6899 = vmatpush1.bf16.msra.mxu0 0
      %6900 = vmatprep.subr.bf16.mxu0 0
      %6901 = vmatpush1.bf16.msra.mxu0 0
      %6902 = vmatprep.subr.bf16.mxu0 0
      %6903 = vmatpush1.bf16.msra.mxu0 0
      %6904 = vmatprep.subr.bf16.mxu0 0
      %6905 = vmatpush1.bf16.msra.mxu0 0
      %6906 = vmatprep.subr.bf16.mxu0 0
      %6907 = vmatpush1.bf16.msra.mxu0 0
      %6908 = vmatprep.subr.bf16.mxu0 0
      %6909 = vmatpush1.bf16.msra.mxu0 0
      %6910 = vmatprep.subr.bf16.mxu0 0
      %6911 = vmatpush1.bf16.msra.mxu0 0
      %6912 = vmatprep.subr.bf16.mxu0 0
      %6913 = vmatpush1.bf16.msra.mxu0 0
      %6914 = vmatprep.mubr.bf16.mxu0 0
      %6915 = vmatmul.mubr.bf16.gmra.mrb[0].mxu0 %v6751
      %v6916 = vpop.f32.mrb[0].mxu0
      %v6917 = vadd.f32 0.0, %v6916
      %v6918 = vpop.f32.mrb[0].mxu0
      %v6919 = vadd.f32 0.0, %v6918
      %v6920 = vpop.f32.mrb[0].mxu0
      %v6921 = vadd.f32 0.0, %v6920
      %v6922 = vpop.f32.mrb[0].mxu0
      %v6923 = vadd.f32 0.0, %v6922
      %6924 = vdwg.mxu0
      %6925 = vmatprep.subr.bf16.mxu0 %v6739
      %6926 = vmatpush1.bf16.msra.mxu0 %v6738
      %6927 = vmatprep.subr.bf16.mxu0 0
      %6928 = vmatpush1.bf16.msra.mxu0 0
      %6929 = vmatprep.subr.bf16.mxu0 0
      %6930 = vmatpush1.bf16.msra.mxu0 0
      %6931 = vmatprep.subr.bf16.mxu0 0
      %6932 = vmatpush1.bf16.msra.mxu0 0
      %6933 = vmatprep.subr.bf16.mxu0 0
      %6934 = vmatpush1.bf16.msra.mxu0 0
      %6935 = vmatprep.subr.bf16.mxu0 0
      %6936 = vmatpush1.bf16.msra.mxu0 0
      %6937 = vmatprep.subr.bf16.mxu0 0
      %6938 = vmatpush1.bf16.msra.mxu0 0
      %6939 = vmatprep.subr.bf16.mxu0 0
      %6940 = vmatpush1.bf16.msra.mxu0 0
      %6941 = vmatprep.subr.bf16.mxu0 0
      %6942 = vmatpush1.bf16.msra.mxu0 0
      %6943 = vmatprep.subr.bf16.mxu0 0
      %6944 = vmatpush1.bf16.msra.mxu0 0
      %6945 = vmatprep.subr.bf16.mxu0 0
      %6946 = vmatpush1.bf16.msra.mxu0 0
      %6947 = vmatprep.subr.bf16.mxu0 0
      %6948 = vmatpush1.bf16.msra.mxu0 0
      %6949 = vmatprep.subr.bf16.mxu0 0
      %6950 = vmatpush1.bf16.msra.mxu0 0
      %6951 = vmatprep.subr.bf16.mxu0 0
      %6952 = vmatpush1.bf16.msra.mxu0 0
      %6953 = vmatprep.subr.bf16.mxu0 0
      %6954 = vmatpush1.bf16.msra.mxu0 0
      %6955 = vmatprep.subr.bf16.mxu0 0
      %6956 = vmatpush1.bf16.msra.mxu0 0
      %6957 = vmatprep.mubr.bf16.mxu0 0
      %6958 = vmatmul.mubr.bf16.gmra.mrb[0].mxu0 %v6751
      %v6959 = vpop.f32.mrb[0].mxu0
      %v6960 = vadd.f32 0.0, %v6959
      %v6961 = vpop.f32.mrb[0].mxu0
      %v6962 = vadd.f32 0.0, %v6961
      %v6963 = vpop.f32.mrb[0].mxu0
      %v6964 = vadd.f32 0.0, %v6963
      %v6965 = vpop.f32.mrb[0].mxu0
      %v6966 = vadd.f32 0.0, %v6965
      %6967 = vdwg.mxu0
      %v6968 = vadd.f32 %v6681, %v6788
      %v6969 = vadd.f32 %v6682, %v6790
      %v6970 = vadd.f32 %v6683, %v6831
      %v6971 = vadd.f32 %v6684, %v6833
      %v6972 = vadd.f32 %v6685, %v6874
      %v6973 = vadd.f32 %v6686, %v6876
      %v6974 = vadd.f32 %v6687, %v6917
      %v6975 = vadd.f32 %v6688, %v6919
      %v6976 = vadd.f32 %v6689, %v6960
      %v6977 = vadd.f32 %v6690, %v6962
      %v6978 = vadd.f32 %v6691, %v6792
      %v6979 = vadd.f32 %v6692, %v6794
      %v6980 = vadd.f32 %v6693, %v6835
      %v6981 = vadd.f32 %v6694, %v6837
      %v6982 = vadd.f32 %v6695, %v6878
      %v6983 = vadd.f32 %v6696, %v6880
      %v6984 = vadd.f32 %v6697, %v6921
      %v6985 = vadd.f32 %v6698, %v6923
      %v6986 = vadd.f32 %v6699, %v6964
      %v6987 = vadd.f32 %v6700, %v6966
      %v6988 = vld [vmem:[%s5 + $0x40] sm:$0xf]
      %v6989 = vld [vmem:[%s5 + $0x44] sm:$0xf]
      %v6992 = vunpack.c.l.b16 %v6988
      %v6993 = vunpack.c.l.b16 %v6989
      %v6994 = vpack.c.b16 %v6993, %v6992
      %6995 = vrot.lane.b32.xlu0 %v6107, 93
      %v6996 = vpop.permute.xlu0 %6995
      %6997 = vrot.lane.b32.xlu0 %v6108, 93
      %v6998 = vpop.permute.xlu0 %6997
      %6999 = vrot.lane.b32.xlu0 %v6109, 93
      %v7000 = vpop.permute.xlu0 %6999
      %7001 = vrot.lane.b32.xlu0 %v6110, 93
      %v7002 = vpop.permute.xlu0 %7001
      %7003 = vrot.lane.b32.xlu0 %v6111, 93
      %v7004 = vpop.permute.xlu0 %7003
      %7005 = vrot.lane.b32.xlu0 %v6112, 93
      %v7006 = vpop.permute.xlu0 %7005
      %7007 = vrot.lane.b32.xlu0 %v6113, 93
      %v7008 = vpop.permute.xlu0 %7007
      %7009 = vrot.lane.b32.xlu0 %v6114, 93
      %v7010 = vpop.permute.xlu0 %7009
      %7011 = vrot.lane.b32.xlu0 %v6115, 93
      %v7012 = vpop.permute.xlu0 %7011
      %7013 = vrot.lane.b32.xlu0 %v6116, 93
      %v7014 = vpop.permute.xlu0 %7013
      %7015 = vrot.lane.b32.xlu0 %v6117, 93
      %v7016 = vpop.permute.xlu0 %7015
      %v7017 = vsel %vm4272, %v6996, %v6998
      %v7018 = vsel %vm4272, %v6998, %v7000
      %v7019 = vsel %vm4272, %v7000, %v7002
      %v7020 = vsel %vm4272, %v7002, %v7004
      %v7021 = vsel %vm4272, %v7004, %v7006
      %v7022 = vsel %vm4272, %v7006, %v7008
      %v7023 = vsel %vm4272, %v7008, %v7010
      %v7024 = vsel %vm4272, %v7010, %v7012
      %v7025 = vsel %vm4272, %v7012, %v7014
      %v7026 = vsel %vm4272, %v7014, %v7016
      %v7038 = vsel %vm4802, %v6994, 0
      %7040 = vmatprep.subr.bf16.mxu0 %v7018
      %7041 = vmatpush1.bf16.msra.mxu0 %v7017
      %7042 = vmatprep.subr.bf16.mxu0 0
      %7043 = vmatpush1.bf16.msra.mxu0 0
      %7044 = vmatprep.subr.bf16.mxu0 0
      %7045 = vmatpush1.bf16.msra.mxu0 0
      %7046 = vmatprep.subr.bf16.mxu0 0
      %7047 = vmatpush1.bf16.msra.mxu0 0
      %7048 = vmatprep.subr.bf16.mxu0 0
      %7049 = vmatpush1.bf16.msra.mxu0 0
      %7050 = vmatprep.subr.bf16.mxu0 0
      %7051 = vmatpush1.bf16.msra.mxu0 0
      %7052 = vmatprep.subr.bf16.mxu0 0
      %7053 = vmatpush1.bf16.msra.mxu0 0
      %7054 = vmatprep.subr.bf16.mxu0 0
      %7055 = vmatpush1.bf16.msra.mxu0 0
      %7056 = vmatprep.subr.bf16.mxu0 0
      %7057 = vmatpush1.bf16.msra.mxu0 0
      %7058 = vmatprep.subr.bf16.mxu0 0
      %7059 = vmatpush1.bf16.msra.mxu0 0
      %7060 = vmatprep.subr.bf16.mxu0 0
      %7061 = vmatpush1.bf16.msra.mxu0 0
      %7062 = vmatprep.subr.bf16.mxu0 0
      %7063 = vmatpush1.bf16.msra.mxu0 0
      %7064 = vmatprep.subr.bf16.mxu0 0
      %7065 = vmatpush1.bf16.msra.mxu0 0
      %7066 = vmatprep.subr.bf16.mxu0 0
      %7067 = vmatpush1.bf16.msra.mxu0 0
      %7068 = vmatprep.subr.bf16.mxu0 0
      %7069 = vmatpush1.bf16.msra.mxu0 0
      %7070 = vmatprep.subr.bf16.mxu0 0
      %7071 = vmatpush1.bf16.msra.mxu0 0
      %7072 = vmatprep.mubr.bf16.mxu0 0
      %7073 = vmatmul.mubr.bf16.gmra.mrb[0].mxu0 %v7038
      %v7074 = vpop.f32.mrb[0].mxu0
      %v7075 = vadd.f32 0.0, %v7074
      %v7076 = vpop.f32.mrb[0].mxu0
      %v7077 = vadd.f32 0.0, %v7076
      %v7078 = vpop.f32.mrb[0].mxu0
      %v7079 = vadd.f32 0.0, %v7078
      %v7080 = vpop.f32.mrb[0].mxu0
      %v7081 = vadd.f32 0.0, %v7080
      %7082 = vdwg.mxu0
      %7083 = vmatprep.subr.bf16.mxu0 %v7020
      %7084 = vmatpush1.bf16.msra.mxu0 %v7019
      %7085 = vmatprep.subr.bf16.mxu0 0
      %7086 = vmatpush1.bf16.msra.mxu0 0
      %7087 = vmatprep.subr.bf16.mxu0 0
      %7088 = vmatpush1.bf16.msra.mxu0 0
      %7089 = vmatprep.subr.bf16.mxu0 0
      %7090 = vmatpush1.bf16.msra.mxu0 0
      %7091 = vmatprep.subr.bf16.mxu0 0
      %7092 = vmatpush1.bf16.msra.mxu0 0
      %7093 = vmatprep.subr.bf16.mxu0 0
      %7094 = vmatpush1.bf16.msra.mxu0 0
      %7095 = vmatprep.subr.bf16.mxu0 0
      %7096 = vmatpush1.bf16.msra.mxu0 0
      %7097 = vmatprep.subr.bf16.mxu0 0
      %7098 = vmatpush1.bf16.msra.mxu0 0
      %7099 = vmatprep.subr.bf16.mxu0 0
      %7100 = vmatpush1.bf16.msra.mxu0 0
      %7101 = vmatprep.subr.bf16.mxu0 0
      %7102 = vmatpush1.bf16.msra.mxu0 0
      %7103 = vmatprep.subr.bf16.mxu0 0
      %7104 = vmatpush1.bf16.msra.mxu0 0
      %7105 = vmatprep.subr.bf16.mxu0 0
      %7106 = vmatpush1.bf16.msra.mxu0 0
      %7107 = vmatprep.subr.bf16.mxu0 0
      %7108 = vmatpush1.bf16.msra.mxu0 0
      %7109 = vmatprep.subr.bf16.mxu0 0
      %7110 = vmatpush1.bf16.msra.mxu0 0
      %7111 = vmatprep.subr.bf16.mxu0 0
      %7112 = vmatpush1.bf16.msra.mxu0 0
      %7113 = vmatprep.subr.bf16.mxu0 0
      %7114 = vmatpush1.bf16.msra.mxu0 0
      %7115 = vmatprep.mubr.bf16.mxu0 0
      %7116 = vmatmul.mubr.bf16.gmra.mrb[0].mxu0 %v7038
      %v7117 = vpop.f32.mrb[0].mxu0
      %v7118 = vadd.f32 0.0, %v7117
      %v7119 = vpop.f32.mrb[0].mxu0
      %v7120 = vadd.f32 0.0, %v7119
      %v7121 = vpop.f32.mrb[0].mxu0
      %v7122 = vadd.f32 0.0, %v7121
      %v7123 = vpop.f32.mrb[0].mxu0
      %v7124 = vadd.f32 0.0, %v7123
      %7125 = vdwg.mxu0
      %7126 = vmatprep.subr.bf16.mxu0 %v7022
      %7127 = vmatpush1.bf16.msra.mxu0 %v7021
      %7128 = vmatprep.subr.bf16.mxu0 0
      %7129 = vmatpush1.bf16.msra.mxu0 0
      %7130 = vmatprep.subr.bf16.mxu0 0
      %7131 = vmatpush1.bf16.msra.mxu0 0
      %7132 = vmatprep.subr.bf16.mxu0 0
      %7133 = vmatpush1.bf16.msra.mxu0 0
      %7134 = vmatprep.subr.bf16.mxu0 0
      %7135 = vmatpush1.bf16.msra.mxu0 0
      %7136 = vmatprep.subr.bf16.mxu0 0
      %7137 = vmatpush1.bf16.msra.mxu0 0
      %7138 = vmatprep.subr.bf16.mxu0 0
      %7139 = vmatpush1.bf16.msra.mxu0 0
      %7140 = vmatprep.subr.bf16.mxu0 0
      %7141 = vmatpush1.bf16.msra.mxu0 0
      %7142 = vmatprep.subr.bf16.mxu0 0
      %7143 = vmatpush1.bf16.msra.mxu0 0
      %7144 = vmatprep.subr.bf16.mxu0 0
      %7145 = vmatpush1.bf16.msra.mxu0 0
      %7146 = vmatprep.subr.bf16.mxu0 0
      %7147 = vmatpush1.bf16.msra.mxu0 0
      %7148 = vmatprep.subr.bf16.mxu0 0
      %7149 = vmatpush1.bf16.msra.mxu0 0
      %7150 = vmatprep.subr.bf16.mxu0 0
      %7151 = vmatpush1.bf16.msra.mxu0 0
      %7152 = vmatprep.subr.bf16.mxu0 0
      %7153 = vmatpush1.bf16.msra.mxu0 0
      %7154 = vmatprep.subr.bf16.mxu0 0
      %7155 = vmatpush1.bf16.msra.mxu0 0
      %7156 = vmatprep.subr.bf16.mxu0 0
      %7157 = vmatpush1.bf16.msra.mxu0 0
      %7158 = vmatprep.mubr.bf16.mxu0 0
      %7159 = vmatmul.mubr.bf16.gmra.mrb[0].mxu0 %v7038
      %v7160 = vpop.f32.mrb[0].mxu0
      %v7161 = vadd.f32 0.0, %v7160
      %v7162 = vpop.f32.mrb[0].mxu0
      %v7163 = vadd.f32 0.0, %v7162
      %v7164 = vpop.f32.mrb[0].mxu0
      %v7165 = vadd.f32 0.0, %v7164
      %v7166 = vpop.f32.mrb[0].mxu0
      %v7167 = vadd.f32 0.0, %v7166
      %7168 = vdwg.mxu0
      %7169 = vmatprep.subr.bf16.mxu0 %v7024
      %7170 = vmatpush1.bf16.msra.mxu0 %v7023
      %7171 = vmatprep.subr.bf16.mxu0 0
      %7172 = vmatpush1.bf16.msra.mxu0 0
      %7173 = vmatprep.subr.bf16.mxu0 0
      %7174 = vmatpush1.bf16.msra.mxu0 0
      %7175 = vmatprep.subr.bf16.mxu0 0
      %7176 = vmatpush1.bf16.msra.mxu0 0
      %7177 = vmatprep.subr.bf16.mxu0 0
      %7178 = vmatpush1.bf16.msra.mxu0 0
      %7179 = vmatprep.subr.bf16.mxu0 0
      %7180 = vmatpush1.bf16.msra.mxu0 0
      %7181 = vmatprep.subr.bf16.mxu0 0
      %7182 = vmatpush1.bf16.msra.mxu0 0
      %7183 = vmatprep.subr.bf16.mxu0 0
      %7184 = vmatpush1.bf16.msra.mxu0 0
      %7185 = vmatprep.subr.bf16.mxu0 0
      %7186 = vmatpush1.bf16.msra.mxu0 0
      %7187 = vmatprep.subr.bf16.mxu0 0
      %7188 = vmatpush1.bf16.msra.mxu0 0
      %7189 = vmatprep.subr.bf16.mxu0 0
      %7190 = vmatpush1.bf16.msra.mxu0 0
      %7191 = vmatprep.subr.bf16.mxu0 0
      %7192 = vmatpush1.bf16.msra.mxu0 0
      %7193 = vmatprep.subr.bf16.mxu0 0
      %7194 = vmatpush1.bf16.msra.mxu0 0
      %7195 = vmatprep.subr.bf16.mxu0 0
      %7196 = vmatpush1.bf16.msra.mxu0 0
      %7197 = vmatprep.subr.bf16.mxu0 0
      %7198 = vmatpush1.bf16.msra.mxu0 0
      %7199 = vmatprep.subr.bf16.mxu0 0
      %7200 = vmatpush1.bf16.msra.mxu0 0
      %7201 = vmatprep.mubr.bf16.mxu0 0
      %7202 = vmatmul.mubr.bf16.gmra.mrb[0].mxu0 %v7038
      %v7203 = vpop.f32.mrb[0].mxu0
      %v7204 = vadd.f32 0.0, %v7203
      %v7205 = vpop.f32.mrb[0].mxu0
      %v7206 = vadd.f32 0.0, %v7205
      %v7207 = vpop.f32.mrb[0].mxu0
      %v7208 = vadd.f32 0.0, %v7207
      %v7209 = vpop.f32.mrb[0].mxu0
      %v7210 = vadd.f32 0.0, %v7209
      %7211 = vdwg.mxu0
      %7212 = vmatprep.subr.bf16.mxu0 %v7026
      %7213 = vmatpush1.bf16.msra.mxu0 %v7025
      %7214 = vmatprep.subr.bf16.mxu0 0
      %7215 = vmatpush1.bf16.msra.mxu0 0
      %7216 = vmatprep.subr.bf16.mxu0 0
      %7217 = vmatpush1.bf16.msra.mxu0 0
      %7218 = vmatprep.subr.bf16.mxu0 0
      %7219 = vmatpush1.bf16.msra.mxu0 0
      %7220 = vmatprep.subr.bf16.mxu0 0
      %7221 = vmatpush1.bf16.msra.mxu0 0
      %7222 = vmatprep.subr.bf16.mxu0 0
      %7223 = vmatpush1.bf16.msra.mxu0 0
      %7224 = vmatprep.subr.bf16.mxu0 0
      %7225 = vmatpush1.bf16.msra.mxu0 0
      %7226 = vmatprep.subr.bf16.mxu0 0
      %7227 = vmatpush1.bf16.msra.mxu0 0
      %7228 = vmatprep.subr.bf16.mxu0 0
      %7229 = vmatpush1.bf16.msra.mxu0 0
      %7230 = vmatprep.subr.bf16.mxu0 0
      %7231 = vmatpush1.bf16.msra.mxu0 0
      %7232 = vmatprep.subr.bf16.mxu0 0
      %7233 = vmatpush1.bf16.msra.mxu0 0
      %7234 = vmatprep.subr.bf16.mxu0 0
      %7235 = vmatpush1.bf16.msra.mxu0 0
      %7236 = vmatprep.subr.bf16.mxu0 0
      %7237 = vmatpush1.bf16.msra.mxu0 0
      %7238 = vmatprep.subr.bf16.mxu0 0
      %7239 = vmatpush1.bf16.msra.mxu0 0
      %7240 = vmatprep.subr.bf16.mxu0 0
      %7241 = vmatpush1.bf16.msra.mxu0 0
      %7242 = vmatprep.subr.bf16.mxu0 0
      %7243 = vmatpush1.bf16.msra.mxu0 0
      %7244 = vmatprep.mubr.bf16.mxu0 0
      %7245 = vmatmul.mubr.bf16.gmra.mrb[0].mxu0 %v7038
      %v7246 = vpop.f32.mrb[0].mxu0
      %v7247 = vadd.f32 0.0, %v7246
      %v7248 = vpop.f32.mrb[0].mxu0
      %v7249 = vadd.f32 0.0, %v7248
      %v7250 = vpop.f32.mrb[0].mxu0
      %v7251 = vadd.f32 0.0, %v7250
      %v7252 = vpop.f32.mrb[0].mxu0
      %v7253 = vadd.f32 0.0, %v7252
      %7254 = vdwg.mxu0
      %v7255 = vadd.f32 %v6968, %v7075
      %v7256 = vadd.f32 %v6969, %v7077
      %v7257 = vadd.f32 %v6970, %v7118
      %v7258 = vadd.f32 %v6971, %v7120
      %v7259 = vadd.f32 %v6972, %v7161
      %v7260 = vadd.f32 %v6973, %v7163
      %v7261 = vadd.f32 %v6974, %v7204
      %v7262 = vadd.f32 %v6975, %v7206
      %v7263 = vadd.f32 %v6976, %v7247
      %v7264 = vadd.f32 %v6977, %v7249
      %v7265 = vadd.f32 %v6978, %v7079
      %v7266 = vadd.f32 %v6979, %v7081
      %v7267 = vadd.f32 %v6980, %v7122
      %v7268 = vadd.f32 %v6981, %v7124
      %v7269 = vadd.f32 %v6982, %v7165
      %v7270 = vadd.f32 %v6983, %v7167
      %v7271 = vadd.f32 %v6984, %v7208
      %v7272 = vadd.f32 %v6985, %v7210
      %v7273 = vadd.f32 %v6986, %v7251
      %v7274 = vadd.f32 %v6987, %v7253
      %v7275 = vld [vmem:[%s6] sm:$0xff]
      %v7276 = vld [vmem:[%s6 + $0x8] sm:$0xff]
      %7278 = vset.pattern.permute.xlu0 0
      %7279 = vperm.xlu0 %7278, %v7275
      %v7280 = vpop.permute.xlu0 %7279
      %7283 = vset.pattern.permute.xlu0 0
      %7284 = vperm.xlu0 %7283, %v7276
      %v7285 = vpop.permute.xlu0 %7284
      %v7287 = vmul.f32 %v7255, %v7280
      %v7288 = vmul.f32 %v7256, %v7280
      %v7289 = vmul.f32 %v7257, %v7280
      %v7290 = vmul.f32 %v7258, %v7280
      %v7291 = vmul.f32 %v7259, %v7280
      %v7292 = vmul.f32 %v7260, %v7280
      %v7293 = vmul.f32 %v7261, %v7280
      %v7294 = vmul.f32 %v7262, %v7280
      %v7295 = vmul.f32 %v7263, %v7280
      %v7296 = vmul.f32 %v7264, %v7280
      %v7297 = vmul.f32 %v7265, %v7285
      %v7298 = vmul.f32 %v7266, %v7285
      %v7299 = vmul.f32 %v7267, %v7285
      %v7300 = vmul.f32 %v7268, %v7285
      %v7301 = vmul.f32 %v7269, %v7285
      %v7302 = vmul.f32 %v7270, %v7285
      %v7303 = vmul.f32 %v7271, %v7285
      %v7304 = vmul.f32 %v7272, %v7285
      %v7305 = vmul.f32 %v7273, %v7285
      %v7306 = vmul.f32 %v7274, %v7285
      %v7307 = vld [vmem:[%s7] sm:$0xff]
      %v7308 = vld [vmem:[%s7 + $0x8] sm:$0xff]
      %7310 = vset.pattern.permute.xlu0 0
      %7311 = vperm.xlu0 %7310, %v7307
      %v7312 = vpop.permute.xlu0 %7311
      %7315 = vset.pattern.permute.xlu0 0
      %7316 = vperm.xlu0 %7315, %v7308
      %v7317 = vpop.permute.xlu0 %7316
      %v7319 = vadd.f32 %v7287, %v7312
      %v7320 = vadd.f32 %v7288, %v7312
      %v7321 = vadd.f32 %v7289, %v7312
      %v7322 = vadd.f32 %v7290, %v7312
      %v7323 = vadd.f32 %v7291, %v7312
      %v7324 = vadd.f32 %v7292, %v7312
      %v7325 = vadd.f32 %v7293, %v7312
      %v7326 = vadd.f32 %v7294, %v7312
      %v7327 = vadd.f32 %v7295, %v7312
      %v7328 = vadd.f32 %v7296, %v7312
      %v7329 = vadd.f32 %v7297, %v7317
      %v7330 = vadd.f32 %v7298, %v7317
      %v7331 = vadd.f32 %v7299, %v7317
      %v7332 = vadd.f32 %v7300, %v7317
      %v7333 = vadd.f32 %v7301, %v7317
      %v7334 = vadd.f32 %v7302, %v7317
      %v7335 = vadd.f32 %v7303, %v7317
      %v7336 = vadd.f32 %v7304, %v7317
      %v7337 = vadd.f32 %v7305, %v7317
      %v7338 = vadd.f32 %v7306, %v7317
      %v7339 = vmax.f32 %v7319, 0.0
      %v7340 = vmax.f32 %v7320, 0.0
      %v7341 = vmax.f32 %v7321, 0.0
      %v7342 = vmax.f32 %v7322, 0.0
      %v7343 = vmax.f32 %v7323, 0.0
      %v7344 = vmax.f32 %v7324, 0.0
      %v7345 = vmax.f32 %v7325, 0.0
      %v7346 = vmax.f32 %v7326, 0.0
      %v7347 = vmax.f32 %v7327, 0.0
      %v7348 = vmax.f32 %v7328, 0.0
      %v7349 = vmax.f32 %v7329, 0.0
      %v7350 = vmax.f32 %v7330, 0.0
      %v7351 = vmax.f32 %v7331, 0.0
      %v7352 = vmax.f32 %v7332, 0.0
      %v7353 = vmax.f32 %v7333, 0.0
      %v7354 = vmax.f32 %v7334, 0.0
      %v7355 = vmax.f32 %v7335, 0.0
      %v7356 = vmax.f32 %v7336, 0.0
      %v7357 = vmax.f32 %v7337, 0.0
      %v7358 = vmax.f32 %v7338, 0.0
      %7359 = vst [vmem:[%s332] sm:$0xff] %v7339
      %7360 = vst [vmem:[%s332 + $0x8] sm:$0xff] %v7340
      %7361 = vst [vmem:[%s332 + $0x10] sm:$0xff] %v7341
      %7362 = vst [vmem:[%s332 + $0x18] sm:$0xff] %v7342
      %7363 = vst [vmem:[%s332 + $0x20] sm:$0xff] %v7343
      %7364 = vst [vmem:[%s332 + $0x28] sm:$0xff] %v7344
      %7365 = vst [vmem:[%s332 + $0x30] sm:$0xff] %v7345
      %7366 = vst [vmem:[%s332 + $0x38] sm:$0xff] %v7346
      %7367 = vst [vmem:[%s332 + $0x40] sm:$0xff] %v7347
      %7368 = vst [vmem:[%s332 + $0x48] sm:$0xff] %v7348
      %7369 = vst [vmem:[%s332 + $0x50] sm:$0xff] %v7349
      %7370 = vst [vmem:[%s332 + $0x58] sm:$0xff] %v7350
      %7371 = vst [vmem:[%s332 + $0x60] sm:$0xff] %v7351
      %7372 = vst [vmem:[%s332 + $0x68] sm:$0xff] %v7352
      %7373 = vst [vmem:[%s332 + $0x70] sm:$0xff] %v7353
      %7374 = vst [vmem:[%s332 + $0x78] sm:$0xff] %v7354
      %7375 = vst [vmem:[%s332 + $0x80] sm:$0xff] %v7355
      %7376 = vst [vmem:[%s332 + $0x88] sm:$0xff] %v7356
      %7377 = vst [vmem:[%s332 + $0x90] sm:$0xff] %v7357
      %7378 = vst [vmem:[%s332 + $0x98] sm:$0xff] %v7358
      %p7379 = scmp.lt.s32.totalorder %s20, 1
      %s7380 = scalar_select %p7379, %s20, 1
      %s7381 = smul.addr %s7380, 20
      %s7382 = smul.addr %s7381, 8
      %s7383 = scalar_lea.vmem %s9, %s7382
      // Predicated region
      $region57: #{decoder_up_forward.1} parent=55 // pred_check
        %p7384 = pneg %p232
      $region58: #{decoder_up_forward.1} parent=55 // pred_check_branch
        %7386 = sbr.rel (%p7384) target = $region60
      $region59: #{decoder_up_forward.1} parent=55 // pred_region
        _
      $region60: #{decoder_up_forward.1} parent=55 // pred_fallthru
        _
    $region56: #{decoder_up_forward.1} parent=5 // pred_fallthru
      _
    %p7387 = scmp.le.s32.totalorder 2, %s15
    // Predicated region
    $region61: #{decoder_up_forward.1} parent=5 // pred_check
      %p7388 = pneg %p7387
    $region62: #{decoder_up_forward.1} parent=5 // pred_check_branch
      %7390 = sbr.rel (%p7388) target = $region64
    $region63: #{decoder_up_forward.1} parent=5 // pred_region
      %s7391 = ssub.s32 %s15, 2
      // Predicated region
      $region65: #{decoder_up_forward.1} parent=63 // pred_check
        %p7392 = pneg %p238
      $region66: #{decoder_up_forward.1} parent=63 // pred_check_branch
        %7394 = sbr.rel (%p7392) target = $region68
      $region67: #{decoder_up_forward.1} parent=63 // pred_region
        %p7395 = scmp.lt.s32.totalorder %s21, 1
        %s7396 = scalar_select %p7395, %s21, 1
        %s7397 = smul.addr %s7396, 20
        %s7398 = smul.addr %s7397, 8
        %s7399 = scalar_lea.vmem %s9, %s7398
      $region68: #{decoder_up_forward.1} parent=63 // pred_fallthru
        _
    $region64: #{decoder_up_forward.1} parent=5 // pred_fallthru
      _
  $region6: #{decoder_up_forward.1} parent=0 // loop_footer
    %s19 = sadd.s32 1, %s15
  $region7: #{decoder_up_forward.1} parent=0 // loop_footer_branch
    %14 = sbr.rel target = $region3
  $region8: #{decoder_up_forward.1} parent=0 // loop_exit
    _

</llo_original>
